<compile_context>
chip_gen: v5e
topology: v5e:2x2
jax: 0.10.0
libtpu: 0.0.40
codegen_flags: <defaults>
</compile_context>

<pallas_src>
import jax
import jax.numpy as jnp
from jax.experimental import pallas as pl
from jax.experimental.pallas import tpu as pltpu

EPS = 1e-5  # torch.nn.BatchNorm2d default


def make_fused_kernel(n, h, w, c):
    """Builds the whole-forward kernel for fixed (n, h, w, c)."""
    wp2 = w + 2
    ps = (h + 2) * wp2              # padded spatial size per image
    ptot = n * ps                   # total padded-flat lane length
    mrg = wp2 + 1                   # max |tap offset| in padded-flat coords
    inv_nhw = 1.0 / float(n * h * w)
    inv_hw = 1.0 / float(h * w)
    # tap offsets (dy,dx) relative to the output position, flattened
    offs = [(dy - 1) * wp2 + (dx - 1) for dy in range(3) for dx in range(3)]
    hi = jax.lax.Precision.HIGHEST

    def kernel(xm_ref, w_ref, bn_ref, fc_ref, out_ref):
        # xm_ref : (c+1, ptot)  rows 0..c-1 = padded-flat input, row c = mask
        # w_ref  : (3c, 9c)     stacked transposed im2col conv weights
        # bn_ref : (6c, 1)      [g1, b1, g2, b2, g3, b3] as (c,1) columns
        # fc_ref : (ncp, c+1)   cols 0..c-1 = fc weight^T, col c = fc bias
        # out_ref: (ncp, n)     logits^T (padded classes)
        x0 = xm_ref[0:c, :]                                          # (c, ptot)
        maskc = jnp.broadcast_to(xm_ref[c:c + 1, :], (c, ptot))      # hoisted once
        bn = bn_ref[...]                                             # (6c, 1)
        zmrg = jnp.zeros((c, mrg), jnp.float32)                      # hoisted once

        def conv_bn(act, s):
            # act: (c, ptot) padded-flat activation with zero halo.
            am = jnp.concatenate([zmrg, act, zmrg], axis=1)          # (c, ptot+2mrg)
            # 9 lane-shifted taps stacked on the sublane axis -> one MXU matmul.
            patches = jnp.concatenate(
                [am[:, mrg + o: mrg + o + ptot] for o in offs], axis=0)   # (9c, ptot)
            a = jnp.dot(w_ref[s * c:(s + 1) * c, :], patches,
                        preferred_element_type=jnp.float32, precision=hi)  # (c, ptot)
            a = a * maskc                                # zero garbage halo outputs
            # training-mode BN stats over the N*H*W interior (halo contributes 0)
            sums = jnp.sum(jnp.concatenate([a, a * a], axis=0),
                           axis=1, keepdims=True)                    # (2c, 1)
            mean = sums[0:c] * inv_nhw
            var = jnp.maximum(sums[c:2 * c] * inv_nhw - mean * mean, 0.0)
            scale = bn[2 * s * c:(2 * s + 1) * c] * jax.lax.rsqrt(var + EPS)
            shift = bn[(2 * s + 1) * c:(2 * s + 2) * c] - mean * scale
            return a * scale + shift                                 # (c, ptot)

        # stage 0: model.conv1 + bn1 + relu   (conv1 bias cancels under train-BN)
        y1 = jnp.maximum(conv_bn(x0, 0), 0.0) * maskc
        # stage 1: residual_block.conv1 + bn1 + relu
        y2 = jnp.maximum(conv_bn(y1, 1), 0.0) * maskc
        # stage 2: residual_block.conv2 + bn2 + identity residual + relu
        y3 = jnp.maximum(conv_bn(y2, 2) + y1, 0.0) * maskc

        # global average pool -> (c, n)
        pooled_t = jnp.concatenate(
            [jnp.sum(y3[:, i * ps:(i + 1) * ps], axis=1, keepdims=True)
             for i in range(n)], axis=1) * inv_hw

        # fc: logits^T = Wfc^T @ pooled^T + b
        logits_t = jnp.dot(fc_ref[:, 0:c], pooled_t,
                           preferred_element_type=jnp.float32,
                           precision=hi) + fc_ref[:, c:c + 1]        # (ncp, n)
        out_ref[...] = logits_t.astype(out_ref.dtype)

    return kernel


def init_params(key, channels=16, num_classes=64):
    ks = jax.random.split(key, 11)
    p = {}
    p["w1"] = 0.1 * jax.random.normal(ks[0], (3, 3, 3, channels), jnp.float32)        # HWIO
    p["w2"] = 0.1 * jax.random.normal(ks[1], (3, 3, channels, channels), jnp.float32)
    p["w3"] = 0.1 * jax.random.normal(ks[2], (3, 3, channels, channels), jnp.float32)
    p["g1"] = 1.0 + 0.05 * jax.random.normal(ks[3], (channels,), jnp.float32)
    p["be1"] = 0.05 * jax.random.normal(ks[4], (channels,), jnp.float32)
    p["g2"] = 1.0 + 0.05 * jax.random.normal(ks[5], (channels,), jnp.float32)
    p["be2"] = 0.05 * jax.random.normal(ks[6], (channels,), jnp.float32)
    p["g3"] = 1.0 + 0.05 * jax.random.normal(ks[7], (channels,), jnp.float32)
    p["be3"] = 0.05 * jax.random.normal(ks[8], (channels,), jnp.float32)
    p["wfc"] = 0.1 * jax.random.normal(ks[9], (channels, num_classes), jnp.float32)
    p["bfc"] = 0.1 * jax.random.normal(ks[10], (num_classes,), jnp.float32)
    # NOTE: conv1's nn.Conv2d bias is intentionally not materialized — with
    # training-mode BatchNorm directly after, it cancels exactly.
    return p


def modified_residual_student_forward(x_nchw, params):
    """x_nchw: (N, 3, H, W) float32 -> logits (N, num_classes)."""
    n, cin, h, w = x_nchw.shape
    c = params["w1"].shape[-1]
    num_classes = params["wfc"].shape[-1]
    ncp = ((num_classes + 127) // 128) * 128
    ps = (h + 2) * (w + 2)
    ptot = n * ps

    # --- tiny boundary glue (O(50 KiB) total), packed into 4 operands --------
    # input -> channel-major, spatially padded, flattened layout (C, P); the
    # interior mask rides along as one extra sublane row.
    xt = jnp.transpose(x_nchw.astype(jnp.float32), (1, 0, 2, 3))            # (cin,n,h,w)
    xt = jnp.pad(xt, ((0, c - cin), (0, 0), (1, 1), (1, 1)))                # (c,n,h+2,w+2)
    mask = jnp.pad(jnp.ones((1, n, h, w), jnp.float32),
                   ((0, 0), (0, 0), (1, 1), (1, 1)))
    xm = jnp.concatenate([xt, mask], axis=0).reshape(c + 1, ptot)           # (c+1, P)

    # conv weights: HWIO -> im2col (9c, c) -> transposed (c, 9c); stack stages
    w1 = jnp.pad(params["w1"],
                 ((0, 0), (0, 0), (0, c - cin), (0, 0))).reshape(9 * c, c).T
    w2 = params["w2"].reshape(9 * c, c).T
    w3 = params["w3"].reshape(9 * c, c).T
    w_all = jnp.concatenate([w1, w2, w3], axis=0)                           # (3c, 9c)

    bn_all = jnp.stack([params["g1"], params["be1"],
                        params["g2"], params["be2"],
                        params["g3"], params["be3"]], axis=0).reshape(6 * c, 1)

    wfc_t = jnp.pad(params["wfc"], ((0, 0), (0, ncp - num_classes))).T      # (ncp, c)
    bfc_t = jnp.pad(params["bfc"], (0, ncp - num_classes)).reshape(ncp, 1)
    fc_all = jnp.concatenate([wfc_t, bfc_t], axis=1)                        # (ncp, c+1)

    vm = pl.BlockSpec(memory_space=pltpu.MemorySpace.VMEM)
    logits_t = pl.pallas_call(
        make_fused_kernel(n, h, w, c),
        out_shape=jax.ShapeDtypeStruct((ncp, n), jnp.float32),
        in_specs=[vm, vm, vm, vm],
        out_specs=vm,
    )(xm, w_all, bn_all, fc_all)

    return logits_t.T[:, :num_classes]


def reference_forward(x_nchw, prm):
    """Pure-JAX reference with identical (training-mode BN) semantics."""
    x = jnp.transpose(x_nchw, (0, 2, 3, 1)).astype(jnp.float32)   # NHWC
    hi = jax.lax.Precision.HIGHEST

    def conv(a, wgt):
        return jax.lax.conv_general_dilated(
            a, wgt, (1, 1), "SAME",
            dimension_numbers=("NHWC", "HWIO", "NHWC"), precision=hi)

    def bn(y, g, b):
        mean = jnp.mean(y, axis=(0, 1, 2))
        var = jnp.mean(jnp.square(y - mean), axis=(0, 1, 2))
        return (y - mean) * (g * jax.lax.rsqrt(var + EPS)) + b

    y1 = jnp.maximum(bn(conv(x, prm["w1"]), prm["g1"], prm["be1"]), 0.0)
    y2 = jnp.maximum(bn(conv(y1, prm["w2"]), prm["g2"], prm["be2"]), 0.0)
    y3 = jnp.maximum(bn(conv(y2, prm["w3"]), prm["g3"], prm["be3"]) + y1, 0.0)
    pooled = jnp.mean(y3, axis=(1, 2))
    return jnp.dot(pooled, prm["wfc"], precision=hi) + prm["bfc"]


if __name__ == "__main__":
    key = jax.random.PRNGKey(0)
    k_x, k_p = jax.random.split(key)

    N, C_IN, H, W = 2, 3, 16, 16
    CHANNELS, NUM_CLASSES = 16, 64

    x = jax.random.normal(k_x, (N, C_IN, H, W), jnp.float32)   # PyTorch-style NCHW
    params = init_params(k_p, channels=CHANNELS, num_classes=NUM_CLASSES)

    fwd = jax.jit(modified_residual_student_forward)
    logits = fwd(x, params)
    jax.block_until_ready(logits)

    ref = jax.jit(reference_forward)(x, params)
    jax.block_until_ready(ref)

    assert logits.shape == (N, NUM_CLASSES), logits.shape
    assert bool(jnp.all(jnp.isfinite(logits)))
    assert bool(jnp.allclose(logits, ref, rtol=3e-2, atol=3e-2)), \
        float(jnp.max(jnp.abs(logits - ref)))
    print("KERNEL_OK")
</pallas_src>

<mosaic_0001>
module attributes {stable_mosaic.version = 11 : i64} {
  func.func @kernel(%arg0: memref<17x648xf32, #tpu.memory_space<vmem>>, %arg1: memref<48x144xf32, #tpu.memory_space<vmem>>, %arg2: memref<96x1xf32, #tpu.memory_space<vmem>>, %arg3: memref<128x17xf32, #tpu.memory_space<vmem>>, %arg4: memref<128x2xf32, #tpu.memory_space<vmem>>) attributes {dimension_semantics = [], scalar_prefetch = 0 : i64, scratch_operands = 0 : i64, tpu.core_type = #tpu.core_type<tc>} {
    %c0 = arith.constant 0 : index
    %c0_0 = arith.constant 0 : index
    %0 = vector.load %arg0[%c0, %c0_0] : memref<17x648xf32, #tpu.memory_space<vmem>>, vector<16x648xf32>
    %c16 = arith.constant 16 : index
    %c0_1 = arith.constant 0 : index
    %1 = vector.load %arg0[%c16, %c0_1] : memref<17x648xf32, #tpu.memory_space<vmem>>, vector<1x648xf32>
    %2 = vector.shape_cast %1 : vector<1x648xf32> to vector<1x648xf32>
    %3 = vector.broadcast %2 : vector<1x648xf32> to vector<16x648xf32>
    %c0_2 = arith.constant 0 : index
    %c0_3 = arith.constant 0 : index
    %4 = vector.load %arg2[%c0_2, %c0_3] : memref<96x1xf32, #tpu.memory_space<vmem>>, vector<96x1xf32>
    %cst = arith.constant 0.000000e+00 : f32
    %5 = vector.broadcast %cst : f32 to vector<16x19xf32>
    %6 = tpu.concatenate %5, %0, %5 in 1 : vector<16x19xf32>, vector<16x648xf32>, vector<16x19xf32> -> vector<16x686xf32>
    %7 = vector.extract_strided_slice %6 {offsets = [0, 0], sizes = [16, 648], strides = [1, 1]} : vector<16x686xf32> to vector<16x648xf32>
    %8 = vector.extract_strided_slice %6 {offsets = [0, 1], sizes = [16, 648], strides = [1, 1]} : vector<16x686xf32> to vector<16x648xf32>
    %9 = vector.extract_strided_slice %6 {offsets = [0, 2], sizes = [16, 648], strides = [1, 1]} : vector<16x686xf32> to vector<16x648xf32>
    %10 = vector.extract_strided_slice %6 {offsets = [0, 18], sizes = [16, 648], strides = [1, 1]} : vector<16x686xf32> to vector<16x648xf32>
    %11 = vector.extract_strided_slice %6 {offsets = [0, 19], sizes = [16, 648], strides = [1, 1]} : vector<16x686xf32> to vector<16x648xf32>
    %12 = vector.extract_strided_slice %6 {offsets = [0, 20], sizes = [16, 648], strides = [1, 1]} : vector<16x686xf32> to vector<16x648xf32>
    %13 = vector.extract_strided_slice %6 {offsets = [0, 36], sizes = [16, 648], strides = [1, 1]} : vector<16x686xf32> to vector<16x648xf32>
    %14 = vector.extract_strided_slice %6 {offsets = [0, 37], sizes = [16, 648], strides = [1, 1]} : vector<16x686xf32> to vector<16x648xf32>
    %15 = vector.extract_strided_slice %6 {offsets = [0, 38], sizes = [16, 648], strides = [1, 1]} : vector<16x686xf32> to vector<16x648xf32>
    %16 = tpu.concatenate %7, %8, %9, %10, %11, %12, %13, %14, %15 in 0 : vector<16x648xf32>, vector<16x648xf32>, vector<16x648xf32>, vector<16x648xf32>, vector<16x648xf32>, vector<16x648xf32>, vector<16x648xf32>, vector<16x648xf32>, vector<16x648xf32> -> vector<144x648xf32>
    %c0_4 = arith.constant 0 : index
    %c0_5 = arith.constant 0 : index
    %17 = vector.load %arg1[%c0_4, %c0_5] : memref<48x144xf32, #tpu.memory_space<vmem>>, vector<16x144xf32>
    %cst_6 = arith.constant dense<0.000000e+00> : vector<16x648xf32>
    %18 = tpu.matmul %17, %16, %cst_6 {dimension_numbers = #tpu.dot_dimension_numbers<[1], [0], [0], [1], [0, 0, 1, 1], [], []>, precision = #tpu.contract_precision<fp32>} : vector<16x144xf32>, vector<144x648xf32>, vector<16x648xf32> -> vector<16x648xf32>
    %19 = arith.mulf %18, %3 : vector<16x648xf32>
    %20 = arith.mulf %19, %19 : vector<16x648xf32>
    %21 = tpu.concatenate %19, %20 in 0 : vector<16x648xf32>, vector<16x648xf32> -> vector<32x648xf32>
    %cst_7 = arith.constant dense<0.000000e+00> : vector<32xf32>
    %22 = vector.multi_reduction <add>, %21, %cst_7 [1] : vector<32x648xf32> to vector<32xf32>
    %23 = vector.shape_cast %22 : vector<32xf32> to vector<32x1xf32>
    %24 = vector.extract_strided_slice %23 {offsets = [0, 0], sizes = [16, 1], strides = [1, 1]} : vector<32x1xf32> to vector<16x1xf32>
    %cst_8 = arith.constant 0.001953125 : f32
    %25 = vector.broadcast %cst_8 : f32 to vector<16x1xf32>
    %26 = arith.mulf %24, %25 : vector<16x1xf32>
    %27 = vector.extract_strided_slice %23 {offsets = [16, 0], sizes = [16, 1], strides = [1, 1]} : vector<32x1xf32> to vector<16x1xf32>
    %cst_9 = arith.constant 0.001953125 : f32
    %28 = vector.broadcast %cst_9 : f32 to vector<16x1xf32>
    %29 = arith.mulf %27, %28 : vector<16x1xf32>
    %30 = arith.mulf %26, %26 : vector<16x1xf32>
    %31 = arith.subf %29, %30 : vector<16x1xf32>
    %cst_10 = arith.constant 0.000000e+00 : f32
    %32 = vector.broadcast %cst_10 : f32 to vector<16x1xf32>
    %33 = arith.maximumf %31, %32 : vector<16x1xf32>
    %34 = vector.extract_strided_slice %4 {offsets = [0, 0], sizes = [16, 1], strides = [1, 1]} : vector<96x1xf32> to vector<16x1xf32>
    %cst_11 = arith.constant 9.99999974E-6 : f32
    %35 = vector.broadcast %cst_11 : f32 to vector<16x1xf32>
    %36 = arith.addf %33, %35 : vector<16x1xf32>
    %37 = math.rsqrt %36 : vector<16x1xf32>
    %38 = arith.mulf %34, %37 : vector<16x1xf32>
    %39 = vector.extract_strided_slice %4 {offsets = [16, 0], sizes = [16, 1], strides = [1, 1]} : vector<96x1xf32> to vector<16x1xf32>
    %40 = arith.mulf %26, %38 : vector<16x1xf32>
    %41 = arith.subf %39, %40 : vector<16x1xf32>
    %42 = vector.broadcast %38 : vector<16x1xf32> to vector<16x648xf32>
    %43 = arith.mulf %19, %42 : vector<16x648xf32>
    %44 = vector.broadcast %41 : vector<16x1xf32> to vector<16x648xf32>
    %45 = arith.addf %43, %44 : vector<16x648xf32>
    %cst_12 = arith.constant 0.000000e+00 : f32
    %46 = vector.broadcast %cst_12 : f32 to vector<16x648xf32>
    %47 = arith.maximumf %45, %46 : vector<16x648xf32>
    %48 = arith.mulf %47, %3 : vector<16x648xf32>
    %49 = tpu.concatenate %5, %48, %5 in 1 : vector<16x19xf32>, vector<16x648xf32>, vector<16x19xf32> -> vector<16x686xf32>
    %50 = vector.extract_strided_slice %49 {offsets = [0, 0], sizes = [16, 648], strides = [1, 1]} : vector<16x686xf32> to vector<16x648xf32>
    %51 = vector.extract_strided_slice %49 {offsets = [0, 1], sizes = [16, 648], strides = [1, 1]} : vector<16x686xf32> to vector<16x648xf32>
    %52 = vector.extract_strided_slice %49 {offsets = [0, 2], sizes = [16, 648], strides = [1, 1]} : vector<16x686xf32> to vector<16x648xf32>
    %53 = vector.extract_strided_slice %49 {offsets = [0, 18], sizes = [16, 648], strides = [1, 1]} : vector<16x686xf32> to vector<16x648xf32>
    %54 = vector.extract_strided_slice %49 {offsets = [0, 19], sizes = [16, 648], strides = [1, 1]} : vector<16x686xf32> to vector<16x648xf32>
    %55 = vector.extract_strided_slice %49 {offsets = [0, 20], sizes = [16, 648], strides = [1, 1]} : vector<16x686xf32> to vector<16x648xf32>
    %56 = vector.extract_strided_slice %49 {offsets = [0, 36], sizes = [16, 648], strides = [1, 1]} : vector<16x686xf32> to vector<16x648xf32>
    %57 = vector.extract_strided_slice %49 {offsets = [0, 37], sizes = [16, 648], strides = [1, 1]} : vector<16x686xf32> to vector<16x648xf32>
    %58 = vector.extract_strided_slice %49 {offsets = [0, 38], sizes = [16, 648], strides = [1, 1]} : vector<16x686xf32> to vector<16x648xf32>
    %59 = tpu.concatenate %50, %51, %52, %53, %54, %55, %56, %57, %58 in 0 : vector<16x648xf32>, vector<16x648xf32>, vector<16x648xf32>, vector<16x648xf32>, vector<16x648xf32>, vector<16x648xf32>, vector<16x648xf32>, vector<16x648xf32>, vector<16x648xf32> -> vector<144x648xf32>
    %c16_13 = arith.constant 16 : index
    %c0_14 = arith.constant 0 : index
    %60 = vector.load %arg1[%c16_13, %c0_14] : memref<48x144xf32, #tpu.memory_space<vmem>>, vector<16x144xf32>
    %cst_15 = arith.constant dense<0.000000e+00> : vector<16x648xf32>
    %61 = tpu.matmul %60, %59, %cst_15 {dimension_numbers = #tpu.dot_dimension_numbers<[1], [0], [0], [1], [0, 0, 1, 1], [], []>, precision = #tpu.contract_precision<fp32>} : vector<16x144xf32>, vector<144x648xf32>, vector<16x648xf32> -> vector<16x648xf32>
    %62 = arith.mulf %61, %3 : vector<16x648xf32>
    %63 = arith.mulf %62, %62 : vector<16x648xf32>
    %64 = tpu.concatenate %62, %63 in 0 : vector<16x648xf32>, vector<16x648xf32> -> vector<32x648xf32>
    %cst_16 = arith.constant dense<0.000000e+00> : vector<32xf32>
    %65 = vector.multi_reduction <add>, %64, %cst_16 [1] : vector<32x648xf32> to vector<32xf32>
    %66 = vector.shape_cast %65 : vector<32xf32> to vector<32x1xf32>
    %67 = vector.extract_strided_slice %66 {offsets = [0, 0], sizes = [16, 1], strides = [1, 1]} : vector<32x1xf32> to vector<16x1xf32>
    %cst_17 = arith.constant 0.001953125 : f32
    %68 = vector.broadcast %cst_17 : f32 to vector<16x1xf32>
    %69 = arith.mulf %67, %68 : vector<16x1xf32>
    %70 = vector.extract_strided_slice %66 {offsets = [16, 0], sizes = [16, 1], strides = [1, 1]} : vector<32x1xf32> to vector<16x1xf32>
    %cst_18 = arith.constant 0.001953125 : f32
    %71 = vector.broadcast %cst_18 : f32 to vector<16x1xf32>
    %72 = arith.mulf %70, %71 : vector<16x1xf32>
    %73 = arith.mulf %69, %69 : vector<16x1xf32>
    %74 = arith.subf %72, %73 : vector<16x1xf32>
    %cst_19 = arith.constant 0.000000e+00 : f32
    %75 = vector.broadcast %cst_19 : f32 to vector<16x1xf32>
    %76 = arith.maximumf %74, %75 : vector<16x1xf32>
    %77 = vector.extract_strided_slice %4 {offsets = [32, 0], sizes = [16, 1], strides = [1, 1]} : vector<96x1xf32> to vector<16x1xf32>
    %cst_20 = arith.constant 9.99999974E-6 : f32
    %78 = vector.broadcast %cst_20 : f32 to vector<16x1xf32>
    %79 = arith.addf %76, %78 : vector<16x1xf32>
    %80 = math.rsqrt %79 : vector<16x1xf32>
    %81 = arith.mulf %77, %80 : vector<16x1xf32>
    %82 = vector.extract_strided_slice %4 {offsets = [48, 0], sizes = [16, 1], strides = [1, 1]} : vector<96x1xf32> to vector<16x1xf32>
    %83 = arith.mulf %69, %81 : vector<16x1xf32>
    %84 = arith.subf %82, %83 : vector<16x1xf32>
    %85 = vector.broadcast %81 : vector<16x1xf32> to vector<16x648xf32>
    %86 = arith.mulf %62, %85 : vector<16x648xf32>
    %87 = vector.broadcast %84 : vector<16x1xf32> to vector<16x648xf32>
    %88 = arith.addf %86, %87 : vector<16x648xf32>
    %cst_21 = arith.constant 0.000000e+00 : f32
    %89 = vector.broadcast %cst_21 : f32 to vector<16x648xf32>
    %90 = arith.maximumf %88, %89 : vector<16x648xf32>
    %91 = arith.mulf %90, %3 : vector<16x648xf32>
    %92 = tpu.concatenate %5, %91, %5 in 1 : vector<16x19xf32>, vector<16x648xf32>, vector<16x19xf32> -> vector<16x686xf32>
    %93 = vector.extract_strided_slice %92 {offsets = [0, 0], sizes = [16, 648], strides = [1, 1]} : vector<16x686xf32> to vector<16x648xf32>
    %94 = vector.extract_strided_slice %92 {offsets = [0, 1], sizes = [16, 648], strides = [1, 1]} : vector<16x686xf32> to vector<16x648xf32>
    %95 = vector.extract_strided_slice %92 {offsets = [0, 2], sizes = [16, 648], strides = [1, 1]} : vector<16x686xf32> to vector<16x648xf32>
    %96 = vector.extract_strided_slice %92 {offsets = [0, 18], sizes = [16, 648], strides = [1, 1]} : vector<16x686xf32> to vector<16x648xf32>
    %97 = vector.extract_strided_slice %92 {offsets = [0, 19], sizes = [16, 648], strides = [1, 1]} : vector<16x686xf32> to vector<16x648xf32>
    %98 = vector.extract_strided_slice %92 {offsets = [0, 20], sizes = [16, 648], strides = [1, 1]} : vector<16x686xf32> to vector<16x648xf32>
    %99 = vector.extract_strided_slice %92 {offsets = [0, 36], sizes = [16, 648], strides = [1, 1]} : vector<16x686xf32> to vector<16x648xf32>
    %100 = vector.extract_strided_slice %92 {offsets = [0, 37], sizes = [16, 648], strides = [1, 1]} : vector<16x686xf32> to vector<16x648xf32>
    %101 = vector.extract_strided_slice %92 {offsets = [0, 38], sizes = [16, 648], strides = [1, 1]} : vector<16x686xf32> to vector<16x648xf32>
    %102 = tpu.concatenate %93, %94, %95, %96, %97, %98, %99, %100, %101 in 0 : vector<16x648xf32>, vector<16x648xf32>, vector<16x648xf32>, vector<16x648xf32>, vector<16x648xf32>, vector<16x648xf32>, vector<16x648xf32>, vector<16x648xf32>, vector<16x648xf32> -> vector<144x648xf32>
    %c32 = arith.constant 32 : index
    %c0_22 = arith.constant 0 : index
    %103 = vector.load %arg1[%c32, %c0_22] : memref<48x144xf32, #tpu.memory_space<vmem>>, vector<16x144xf32>
    %cst_23 = arith.constant dense<0.000000e+00> : vector<16x648xf32>
    %104 = tpu.matmul %103, %102, %cst_23 {dimension_numbers = #tpu.dot_dimension_numbers<[1], [0], [0], [1], [0, 0, 1, 1], [], []>, precision = #tpu.contract_precision<fp32>} : vector<16x144xf32>, vector<144x648xf32>, vector<16x648xf32> -> vector<16x648xf32>
    %105 = arith.mulf %104, %3 : vector<16x648xf32>
    %106 = arith.mulf %105, %105 : vector<16x648xf32>
    %107 = tpu.concatenate %105, %106 in 0 : vector<16x648xf32>, vector<16x648xf32> -> vector<32x648xf32>
    %cst_24 = arith.constant dense<0.000000e+00> : vector<32xf32>
    %108 = vector.multi_reduction <add>, %107, %cst_24 [1] : vector<32x648xf32> to vector<32xf32>
    %109 = vector.shape_cast %108 : vector<32xf32> to vector<32x1xf32>
    %110 = vector.extract_strided_slice %109 {offsets = [0, 0], sizes = [16, 1], strides = [1, 1]} : vector<32x1xf32> to vector<16x1xf32>
    %cst_25 = arith.constant 0.001953125 : f32
    %111 = vector.broadcast %cst_25 : f32 to vector<16x1xf32>
    %112 = arith.mulf %110, %111 : vector<16x1xf32>
    %113 = vector.extract_strided_slice %109 {offsets = [16, 0], sizes = [16, 1], strides = [1, 1]} : vector<32x1xf32> to vector<16x1xf32>
    %cst_26 = arith.constant 0.001953125 : f32
    %114 = vector.broadcast %cst_26 : f32 to vector<16x1xf32>
    %115 = arith.mulf %113, %114 : vector<16x1xf32>
    %116 = arith.mulf %112, %112 : vector<16x1xf32>
    %117 = arith.subf %115, %116 : vector<16x1xf32>
    %cst_27 = arith.constant 0.000000e+00 : f32
    %118 = vector.broadcast %cst_27 : f32 to vector<16x1xf32>
    %119 = arith.maximumf %117, %118 : vector<16x1xf32>
    %120 = vector.extract_strided_slice %4 {offsets = [64, 0], sizes = [16, 1], strides = [1, 1]} : vector<96x1xf32> to vector<16x1xf32>
    %cst_28 = arith.constant 9.99999974E-6 : f32
    %121 = vector.broadcast %cst_28 : f32 to vector<16x1xf32>
    %122 = arith.addf %119, %121 : vector<16x1xf32>
    %123 = math.rsqrt %122 : vector<16x1xf32>
    %124 = arith.mulf %120, %123 : vector<16x1xf32>
    %125 = vector.extract_strided_slice %4 {offsets = [80, 0], sizes = [16, 1], strides = [1, 1]} : vector<96x1xf32> to vector<16x1xf32>
    %126 = arith.mulf %112, %124 : vector<16x1xf32>
    %127 = arith.subf %125, %126 : vector<16x1xf32>
    %128 = vector.broadcast %124 : vector<16x1xf32> to vector<16x648xf32>
    %129 = arith.mulf %105, %128 : vector<16x648xf32>
    %130 = vector.broadcast %127 : vector<16x1xf32> to vector<16x648xf32>
    %131 = arith.addf %129, %130 : vector<16x648xf32>
    %132 = arith.addf %131, %48 : vector<16x648xf32>
    %cst_29 = arith.constant 0.000000e+00 : f32
    %133 = vector.broadcast %cst_29 : f32 to vector<16x648xf32>
    %134 = arith.maximumf %132, %133 : vector<16x648xf32>
    %135 = arith.mulf %134, %3 : vector<16x648xf32>
    %136 = vector.extract_strided_slice %135 {offsets = [0, 0], sizes = [16, 324], strides = [1, 1]} : vector<16x648xf32> to vector<16x324xf32>
    %cst_30 = arith.constant dense<0.000000e+00> : vector<16xf32>
    %137 = vector.multi_reduction <add>, %136, %cst_30 [1] : vector<16x324xf32> to vector<16xf32>
    %138 = vector.shape_cast %137 : vector<16xf32> to vector<16x1xf32>
    %139 = vector.extract_strided_slice %135 {offsets = [0, 324], sizes = [16, 324], strides = [1, 1]} : vector<16x648xf32> to vector<16x324xf32>
    %cst_31 = arith.constant dense<0.000000e+00> : vector<16xf32>
    %140 = vector.multi_reduction <add>, %139, %cst_31 [1] : vector<16x324xf32> to vector<16xf32>
    %141 = vector.shape_cast %140 : vector<16xf32> to vector<16x1xf32>
    %142 = tpu.concatenate %138, %141 in 1 : vector<16x1xf32>, vector<16x1xf32> -> vector<16x2xf32>
    %cst_32 = arith.constant 3.906250e-03 : f32
    %143 = vector.broadcast %cst_32 : f32 to vector<16x2xf32>
    %144 = arith.mulf %142, %143 : vector<16x2xf32>
    %c0_33 = arith.constant 0 : index
    %c0_34 = arith.constant 0 : index
    %145 = vector.load %arg3[%c0_33, %c0_34] : memref<128x17xf32, #tpu.memory_space<vmem>>, vector<128x16xf32>
    %cst_35 = arith.constant dense<0.000000e+00> : vector<128x2xf32>
    %146 = tpu.matmul %145, %144, %cst_35 {dimension_numbers = #tpu.dot_dimension_numbers<[1], [0], [0], [1], [0, 0, 1, 1], [], []>, precision = #tpu.contract_precision<fp32>} : vector<128x16xf32>, vector<16x2xf32>, vector<128x2xf32> -> vector<128x2xf32>
    %c0_36 = arith.constant 0 : index
    %c16_37 = arith.constant 16 : index
    %147 = vector.load %arg3[%c0_36, %c16_37] : memref<128x17xf32, #tpu.memory_space<vmem>>, vector<128x1xf32>
    %148 = vector.broadcast %147 : vector<128x1xf32> to vector<128x2xf32>
    %149 = arith.addf %146, %148 : vector<128x2xf32>
    %c0_38 = arith.constant 0 : index
    %c0_39 = arith.constant 0 : index
    %150 = vector.load %arg4[%c0_38, %c0_39] : memref<128x2xf32, #tpu.memory_space<vmem>>, vector<128x2xf32>
    tpu.vector_store %arg4[%c0_38, %c0_39], %149 {strides = array<i32>} : memref<128x2xf32, #tpu.memory_space<vmem>>, vector<128x2xf32>,
    return
  }
}

</mosaic_0001>

<llo_original>
// kernel: modified_residual_student_forward.1
$region0: #{modified_residual_student_forward.1}
  #allocation0 [shape = 'u32[]', space=smem, size = 0x4, offset = 0x4, fixed_abs, tag = 'smem constant byte address 0x4 - core index']
  #allocation1 [shape = 'u32[72,128]{1,0:T(1,128)}', space=vmem, size = 0x9000, scoped, tag = 'internal scratch']
  %s0 = inlined_call_operand.vmem [shape: f32[17,648], index: 0, kind: input, shape index: {}]
  %s1 = inlined_call_operand.vmem [shape: f32[48,144], index: 1, kind: input, shape index: {}]
  %s2 = inlined_call_operand.vmem [shape: f32[96,1], index: 2, kind: input, shape index: {}]
  %s3 = inlined_call_operand.vmem [shape: f32[128,17], index: 3, kind: input, shape index: {}]
  %s4 = inlined_call_operand.vmem [shape: f32[128,2], index: 4, kind: output, shape index: {}]
  %s5 = sld [smem:[#allocation0]]
  $region26: #{modified_residual_student_forward.1} parent=0
    _
  %s7 = ssub.s32 1, %s5
  %s8 = scalar_select 0, %s7, %s5
  // Predicated region
  $region2: #{modified_residual_student_forward.1} parent=0 // pred_check
    _
  $region3: #{modified_residual_student_forward.1} parent=0 // pred_check_branch
    %10 = sbr.rel (0) target = $region5
  $region4: #{modified_residual_student_forward.1} parent=0 // pred_region
    _
  $region5: #{modified_residual_student_forward.1} parent=0 // pred_fallthru
    _
  // Predicated region
  $region6: #{modified_residual_student_forward.1} parent=0 // pred_check
    _
  $region7: #{modified_residual_student_forward.1} parent=0 // pred_check_branch
    %12 = sbr.rel (0) target = $region9
  $region8: #{modified_residual_student_forward.1} parent=0 // pred_region
    _
  $region9: #{modified_residual_student_forward.1} parent=0 // pred_fallthru
    _
  // Predicated region
  $region10: #{modified_residual_student_forward.1} parent=0 // pred_check
    _
  $region11: #{modified_residual_student_forward.1} parent=0 // pred_check_branch
    %14 = sbr.rel (0) target = $region13
  $region12: #{modified_residual_student_forward.1} parent=0 // pred_region
    _
  $region13: #{modified_residual_student_forward.1} parent=0 // pred_fallthru
    _
  // Predicated region
  $region14: #{modified_residual_student_forward.1} parent=0 // pred_check
    _
  $region15: #{modified_residual_student_forward.1} parent=0 // pred_check_branch
    %16 = sbr.rel (0) target = $region17
  $region16: #{modified_residual_student_forward.1} parent=0 // pred_region
    _
  $region17: #{modified_residual_student_forward.1} parent=0 // pred_fallthru
    _
  %v17 = vld [vmem:[%s0] sm:$0xff]
  %v18 = vld [vmem:[%s0 + $0x8] sm:$0xff]
  %v19 = vld [vmem:[%s0 + $0x10] sm:$0xff]
  %v20 = vld [vmem:[%s0 + $0x18] sm:$0xff]
  %v21 = vld [vmem:[%s0 + $0x20] sm:$0xff]
  %v22 = vld [vmem:[%s0 + $0x28] sm:$0xff]
  %v23 = vld [vmem:[%s0 + $0x30] sm:$0xff]
  %v24 = vld [vmem:[%s0 + $0x38] sm:$0xff]
  %v25 = vld [vmem:[%s0 + $0x40] sm:$0xff]
  %v26 = vld [vmem:[%s0 + $0x48] sm:$0xff]
  %v27 = vld [vmem:[%s0 + $0x50] sm:$0xff]
  %v28 = vld [vmem:[%s0 + $0x58] sm:$0xff]
  %s29 = scalar_lea.vmem %s0, 96
  %v30 = vld [vmem:[%s29] ss:$8 sm:$0xf]
  %v31 = vld [vmem:[%s29] ss:$8 sm:$0x30]
  %v32 = vor.u32 %v30, %v31
  %v34 = vperm.slane %v32, 0
  %v35 = vperm.slane %v32, 1
  %v36 = vperm.slane %v32, 2
  %v37 = vperm.slane %v32, 3
  %v38 = vperm.slane %v32, 4
  %v39 = vperm.slane %v32, 5
  %v46 = vld [vmem:[%s2] sm:$0xff]
  %v47 = vld [vmem:[%s2 + $0x8] sm:$0xff]
  %v48 = vld [vmem:[%s2 + $0x10] sm:$0xff]
  %v49 = vld [vmem:[%s2 + $0x18] sm:$0xff]
  %v50 = vld [vmem:[%s2 + $0x20] sm:$0xff]
  %v51 = vld [vmem:[%s2 + $0x28] sm:$0xff]
  %v52 = vld [vmem:[%s2 + $0x30] sm:$0xff]
  %v53 = vld [vmem:[%s2 + $0x38] sm:$0xff]
  %v54 = vld [vmem:[%s2 + $0x40] sm:$0xff]
  %v55 = vld [vmem:[%s2 + $0x48] sm:$0xff]
  %v56 = vld [vmem:[%s2 + $0x50] sm:$0xff]
  %v57 = vld [vmem:[%s2 + $0x58] sm:$0xff]
  %70 = vrot.lane.b32.xlu0 %v17, 19
  %v71 = vpop.permute.xlu0 %70
  %72 = vrot.lane.b32.xlu0 %v18, 19
  %v73 = vpop.permute.xlu0 %72
  %74 = vrot.lane.b32.xlu0 %v19, 19
  %v75 = vpop.permute.xlu0 %74
  %76 = vrot.lane.b32.xlu0 %v20, 19
  %v77 = vpop.permute.xlu0 %76
  %78 = vrot.lane.b32.xlu0 %v21, 19
  %v79 = vpop.permute.xlu0 %78
  %80 = vrot.lane.b32.xlu0 %v22, 19
  %v81 = vpop.permute.xlu0 %80
  %82 = vrot.lane.b32.xlu0 %v23, 19
  %v83 = vpop.permute.xlu0 %82
  %84 = vrot.lane.b32.xlu0 %v24, 19
  %v85 = vpop.permute.xlu0 %84
  %86 = vrot.lane.b32.xlu0 %v25, 19
  %v87 = vpop.permute.xlu0 %86
  %88 = vrot.lane.b32.xlu0 %v26, 19
  %v89 = vpop.permute.xlu0 %88
  %90 = vrot.lane.b32.xlu0 %v27, 19
  %v91 = vpop.permute.xlu0 %90
  %92 = vrot.lane.b32.xlu0 %v28, 19
  %v93 = vpop.permute.xlu0 %92
  %vm94 = vcmask 154624
  %v95 = vsel %vm94, %v71, %v73
  %v96 = vsel %vm94, %v73, %v75
  %v97 = vsel %vm94, %v75, %v77
  %v98 = vsel %vm94, %v77, %v79
  %v99 = vsel %vm94, %v79, %v81
  %v100 = vsel %vm94, %v83, %v85
  %v101 = vsel %vm94, %v85, %v87
  %v102 = vsel %vm94, %v87, %v89
  %v103 = vsel %vm94, %v89, %v91
  %v104 = vsel %vm94, %v91, %v93
  %v117 = vsel %vm94, 0.0, %v71
  %v118 = vsel %vm94, 0.0, %v83
  %vm119 = vcmask 220160
  %v120 = vsel %vm119, %v99, 0.0
  %v121 = vsel %vm119, %v104, 0.0
  %126 = vrot.lane.b32.xlu0 %v117, 127
  %v127 = vpop.permute.xlu0 %126
  %128 = vrot.lane.b32.xlu0 %v95, 127
  %v129 = vpop.permute.xlu0 %128
  %130 = vrot.lane.b32.xlu0 %v96, 127
  %v131 = vpop.permute.xlu0 %130
  %132 = vrot.lane.b32.xlu0 %v97, 127
  %v133 = vpop.permute.xlu0 %132
  %134 = vrot.lane.b32.xlu0 %v98, 127
  %v135 = vpop.permute.xlu0 %134
  %136 = vrot.lane.b32.xlu0 %v120, 127
  %v137 = vpop.permute.xlu0 %136
  %138 = vrot.lane.b32.xlu0 %v118, 127
  %v139 = vpop.permute.xlu0 %138
  %140 = vrot.lane.b32.xlu0 %v100, 127
  %v141 = vpop.permute.xlu0 %140
  %142 = vrot.lane.b32.xlu0 %v101, 127
  %v143 = vpop.permute.xlu0 %142
  %144 = vrot.lane.b32.xlu0 %v102, 127
  %v145 = vpop.permute.xlu0 %144
  %146 = vrot.lane.b32.xlu0 %v103, 127
  %v147 = vpop.permute.xlu0 %146
  %148 = vrot.lane.b32.xlu0 %v121, 127
  %v149 = vpop.permute.xlu0 %148
  %vm150 = vcmask 1039360
  %v151 = vsel %vm150, %v127, %v129
  %v152 = vsel %vm150, %v129, %v131
  %v153 = vsel %vm150, %v131, %v133
  %v154 = vsel %vm150, %v133, %v135
  %v155 = vsel %vm150, %v135, %v137
  %v156 = vsel %vm150, %v139, %v141
  %v157 = vsel %vm150, %v141, %v143
  %v158 = vsel %vm150, %v143, %v145
  %v159 = vsel %vm150, %v145, %v147
  %v160 = vsel %vm150, %v147, %v149
  %173 = vrot.lane.b32.xlu0 %v117, 126
  %v174 = vpop.permute.xlu0 %173
  %175 = vrot.lane.b32.xlu0 %v95, 126
  %v176 = vpop.permute.xlu0 %175
  %177 = vrot.lane.b32.xlu0 %v96, 126
  %v178 = vpop.permute.xlu0 %177
  %179 = vrot.lane.b32.xlu0 %v97, 126
  %v180 = vpop.permute.xlu0 %179
  %181 = vrot.lane.b32.xlu0 %v98, 126
  %v182 = vpop.permute.xlu0 %181
  %183 = vrot.lane.b32.xlu0 %v120, 126
  %v184 = vpop.permute.xlu0 %183
  %185 = vrot.lane.b32.xlu0 %v118, 126
  %v186 = vpop.permute.xlu0 %185
  %187 = vrot.lane.b32.xlu0 %v100, 126
  %v188 = vpop.permute.xlu0 %187
  %189 = vrot.lane.b32.xlu0 %v101, 126
  %v190 = vpop.permute.xlu0 %189
  %191 = vrot.lane.b32.xlu0 %v102, 126
  %v192 = vpop.permute.xlu0 %191
  %193 = vrot.lane.b32.xlu0 %v103, 126
  %v194 = vpop.permute.xlu0 %193
  %195 = vrot.lane.b32.xlu0 %v121, 126
  %v196 = vpop.permute.xlu0 %195
  %vm197 = vcmask 1031168
  %v198 = vsel %vm197, %v174, %v176
  %v199 = vsel %vm197, %v176, %v178
  %v200 = vsel %vm197, %v178, %v180
  %v201 = vsel %vm197, %v180, %v182
  %v202 = vsel %vm197, %v182, %v184
  %v203 = vsel %vm197, %v186, %v188
  %v204 = vsel %vm197, %v188, %v190
  %v205 = vsel %vm197, %v190, %v192
  %v206 = vsel %vm197, %v192, %v194
  %v207 = vsel %vm197, %v194, %v196
  %220 = vrot.lane.b32.xlu0 %v117, 110
  %v221 = vpop.permute.xlu0 %220
  %222 = vrot.lane.b32.xlu0 %v95, 110
  %v223 = vpop.permute.xlu0 %222
  %224 = vrot.lane.b32.xlu0 %v96, 110
  %v225 = vpop.permute.xlu0 %224
  %226 = vrot.lane.b32.xlu0 %v97, 110
  %v227 = vpop.permute.xlu0 %226
  %228 = vrot.lane.b32.xlu0 %v98, 110
  %v229 = vpop.permute.xlu0 %228
  %230 = vrot.lane.b32.xlu0 %v120, 110
  %v231 = vpop.permute.xlu0 %230
  %232 = vrot.lane.b32.xlu0 %v118, 110
  %v233 = vpop.permute.xlu0 %232
  %234 = vrot.lane.b32.xlu0 %v100, 110
  %v235 = vpop.permute.xlu0 %234
  %236 = vrot.lane.b32.xlu0 %v101, 110
  %v237 = vpop.permute.xlu0 %236
  %238 = vrot.lane.b32.xlu0 %v102, 110
  %v239 = vpop.permute.xlu0 %238
  %240 = vrot.lane.b32.xlu0 %v103, 110
  %v241 = vpop.permute.xlu0 %240
  %242 = vrot.lane.b32.xlu0 %v121, 110
  %v243 = vpop.permute.xlu0 %242
  %vm244 = vcmask 900096
  %v245 = vsel %vm244, %v221, %v223
  %v246 = vsel %vm244, %v223, %v225
  %v247 = vsel %vm244, %v225, %v227
  %v248 = vsel %vm244, %v227, %v229
  %v249 = vsel %vm244, %v229, %v231
  %v250 = vsel %vm244, %v233, %v235
  %v251 = vsel %vm244, %v235, %v237
  %v252 = vsel %vm244, %v237, %v239
  %v253 = vsel %vm244, %v239, %v241
  %v254 = vsel %vm244, %v241, %v243
  %267 = vrot.lane.b32.xlu0 %v117, 109
  %v268 = vpop.permute.xlu0 %267
  %269 = vrot.lane.b32.xlu0 %v95, 109
  %v270 = vpop.permute.xlu0 %269
  %271 = vrot.lane.b32.xlu0 %v96, 109
  %v272 = vpop.permute.xlu0 %271
  %273 = vrot.lane.b32.xlu0 %v97, 109
  %v274 = vpop.permute.xlu0 %273
  %275 = vrot.lane.b32.xlu0 %v98, 109
  %v276 = vpop.permute.xlu0 %275
  %277 = vrot.lane.b32.xlu0 %v120, 109
  %v278 = vpop.permute.xlu0 %277
  %279 = vrot.lane.b32.xlu0 %v118, 109
  %v280 = vpop.permute.xlu0 %279
  %281 = vrot.lane.b32.xlu0 %v100, 109
  %v282 = vpop.permute.xlu0 %281
  %283 = vrot.lane.b32.xlu0 %v101, 109
  %v284 = vpop.permute.xlu0 %283
  %285 = vrot.lane.b32.xlu0 %v102, 109
  %v286 = vpop.permute.xlu0 %285
  %287 = vrot.lane.b32.xlu0 %v103, 109
  %v288 = vpop.permute.xlu0 %287
  %289 = vrot.lane.b32.xlu0 %v121, 109
  %v290 = vpop.permute.xlu0 %289
  %vm291 = vcmask 891904
  %v292 = vsel %vm291, %v268, %v270
  %v293 = vsel %vm291, %v270, %v272
  %v294 = vsel %vm291, %v272, %v274
  %v295 = vsel %vm291, %v274, %v276
  %v296 = vsel %vm291, %v276, %v278
  %v297 = vsel %vm291, %v280, %v282
  %v298 = vsel %vm291, %v282, %v284
  %v299 = vsel %vm291, %v284, %v286
  %v300 = vsel %vm291, %v286, %v288
  %v301 = vsel %vm291, %v288, %v290
  %314 = vrot.lane.b32.xlu0 %v117, 108
  %v315 = vpop.permute.xlu0 %314
  %316 = vrot.lane.b32.xlu0 %v95, 108
  %v317 = vpop.permute.xlu0 %316
  %318 = vrot.lane.b32.xlu0 %v96, 108
  %v319 = vpop.permute.xlu0 %318
  %320 = vrot.lane.b32.xlu0 %v97, 108
  %v321 = vpop.permute.xlu0 %320
  %322 = vrot.lane.b32.xlu0 %v98, 108
  %v323 = vpop.permute.xlu0 %322
  %324 = vrot.lane.b32.xlu0 %v120, 108
  %v325 = vpop.permute.xlu0 %324
  %326 = vrot.lane.b32.xlu0 %v118, 108
  %v327 = vpop.permute.xlu0 %326
  %328 = vrot.lane.b32.xlu0 %v100, 108
  %v329 = vpop.permute.xlu0 %328
  %330 = vrot.lane.b32.xlu0 %v101, 108
  %v331 = vpop.permute.xlu0 %330
  %332 = vrot.lane.b32.xlu0 %v102, 108
  %v333 = vpop.permute.xlu0 %332
  %334 = vrot.lane.b32.xlu0 %v103, 108
  %v335 = vpop.permute.xlu0 %334
  %336 = vrot.lane.b32.xlu0 %v121, 108
  %v337 = vpop.permute.xlu0 %336
  %vm338 = vcmask 883712
  %v339 = vsel %vm338, %v315, %v317
  %v340 = vsel %vm338, %v317, %v319
  %v341 = vsel %vm338, %v319, %v321
  %v342 = vsel %vm338, %v321, %v323
  %v343 = vsel %vm338, %v323, %v325
  %v344 = vsel %vm338, %v327, %v329
  %v345 = vsel %vm338, %v329, %v331
  %v346 = vsel %vm338, %v331, %v333
  %v347 = vsel %vm338, %v333, %v335
  %v348 = vsel %vm338, %v335, %v337
  %361 = vrot.lane.b32.xlu0 %v117, 92
  %v362 = vpop.permute.xlu0 %361
  %363 = vrot.lane.b32.xlu0 %v95, 92
  %v364 = vpop.permute.xlu0 %363
  %365 = vrot.lane.b32.xlu0 %v96, 92
  %v366 = vpop.permute.xlu0 %365
  %367 = vrot.lane.b32.xlu0 %v97, 92
  %v368 = vpop.permute.xlu0 %367
  %369 = vrot.lane.b32.xlu0 %v98, 92
  %v370 = vpop.permute.xlu0 %369
  %371 = vrot.lane.b32.xlu0 %v120, 92
  %v372 = vpop.permute.xlu0 %371
  %373 = vrot.lane.b32.xlu0 %v118, 92
  %v374 = vpop.permute.xlu0 %373
  %375 = vrot.lane.b32.xlu0 %v100, 92
  %v376 = vpop.permute.xlu0 %375
  %377 = vrot.lane.b32.xlu0 %v101, 92
  %v378 = vpop.permute.xlu0 %377
  %379 = vrot.lane.b32.xlu0 %v102, 92
  %v380 = vpop.permute.xlu0 %379
  %381 = vrot.lane.b32.xlu0 %v103, 92
  %v382 = vpop.permute.xlu0 %381
  %383 = vrot.lane.b32.xlu0 %v121, 92
  %v384 = vpop.permute.xlu0 %383
  %vm385 = vcmask 752640
  %v386 = vsel %vm385, %v362, %v364
  %v387 = vsel %vm385, %v364, %v366
  %v388 = vsel %vm385, %v366, %v368
  %v389 = vsel %vm385, %v368, %v370
  %v390 = vsel %vm385, %v370, %v372
  %v391 = vsel %vm385, %v374, %v376
  %v392 = vsel %vm385, %v376, %v378
  %v393 = vsel %vm385, %v378, %v380
  %v394 = vsel %vm385, %v380, %v382
  %v395 = vsel %vm385, %v382, %v384
  %408 = vrot.lane.b32.xlu0 %v117, 91
  %v409 = vpop.permute.xlu0 %408
  %410 = vrot.lane.b32.xlu0 %v95, 91
  %v411 = vpop.permute.xlu0 %410
  %412 = vrot.lane.b32.xlu0 %v96, 91
  %v413 = vpop.permute.xlu0 %412
  %414 = vrot.lane.b32.xlu0 %v97, 91
  %v415 = vpop.permute.xlu0 %414
  %416 = vrot.lane.b32.xlu0 %v98, 91
  %v417 = vpop.permute.xlu0 %416
  %418 = vrot.lane.b32.xlu0 %v120, 91
  %v419 = vpop.permute.xlu0 %418
  %420 = vrot.lane.b32.xlu0 %v118, 91
  %v421 = vpop.permute.xlu0 %420
  %422 = vrot.lane.b32.xlu0 %v100, 91
  %v423 = vpop.permute.xlu0 %422
  %424 = vrot.lane.b32.xlu0 %v101, 91
  %v425 = vpop.permute.xlu0 %424
  %426 = vrot.lane.b32.xlu0 %v102, 91
  %v427 = vpop.permute.xlu0 %426
  %428 = vrot.lane.b32.xlu0 %v103, 91
  %v429 = vpop.permute.xlu0 %428
  %430 = vrot.lane.b32.xlu0 %v121, 91
  %v431 = vpop.permute.xlu0 %430
  %vm432 = vcmask 744448
  %v433 = vsel %vm432, %v409, %v411
  %v434 = vsel %vm432, %v411, %v413
  %v435 = vsel %vm432, %v413, %v415
  %v436 = vsel %vm432, %v415, %v417
  %v437 = vsel %vm432, %v417, %v419
  %v438 = vsel %vm432, %v421, %v423
  %v439 = vsel %vm432, %v423, %v425
  %v440 = vsel %vm432, %v425, %v427
  %v441 = vsel %vm432, %v427, %v429
  %v442 = vsel %vm432, %v429, %v431
  %455 = vrot.lane.b32.xlu0 %v117, 90
  %v456 = vpop.permute.xlu0 %455
  %457 = vrot.lane.b32.xlu0 %v95, 90
  %v458 = vpop.permute.xlu0 %457
  %459 = vrot.lane.b32.xlu0 %v96, 90
  %v460 = vpop.permute.xlu0 %459
  %461 = vrot.lane.b32.xlu0 %v97, 90
  %v462 = vpop.permute.xlu0 %461
  %463 = vrot.lane.b32.xlu0 %v98, 90
  %v464 = vpop.permute.xlu0 %463
  %465 = vrot.lane.b32.xlu0 %v120, 90
  %v466 = vpop.permute.xlu0 %465
  %467 = vrot.lane.b32.xlu0 %v118, 90
  %v468 = vpop.permute.xlu0 %467
  %469 = vrot.lane.b32.xlu0 %v100, 90
  %v470 = vpop.permute.xlu0 %469
  %471 = vrot.lane.b32.xlu0 %v101, 90
  %v472 = vpop.permute.xlu0 %471
  %473 = vrot.lane.b32.xlu0 %v102, 90
  %v474 = vpop.permute.xlu0 %473
  %475 = vrot.lane.b32.xlu0 %v103, 90
  %v476 = vpop.permute.xlu0 %475
  %477 = vrot.lane.b32.xlu0 %v121, 90
  %v478 = vpop.permute.xlu0 %477
  %vm479 = vcmask 736256
  %v480 = vsel %vm479, %v456, %v458
  %v481 = vsel %vm479, %v458, %v460
  %v482 = vsel %vm479, %v460, %v462
  %v483 = vsel %vm479, %v462, %v464
  %v484 = vsel %vm479, %v464, %v466
  %v485 = vsel %vm479, %v468, %v470
  %v486 = vsel %vm479, %v470, %v472
  %v487 = vsel %vm479, %v472, %v474
  %v488 = vsel %vm479, %v474, %v476
  %v489 = vsel %vm479, %v476, %v478
  %v502 = vld [vmem:[%s1] sm:$0xff]
  %v503 = vld [vmem:[%s1 + $0x8] sm:$0xff]
  %v504 = vld [vmem:[%s1 + $0x10] sm:$0xff]
  %v505 = vld [vmem:[%s1 + $0x18] sm:$0xff]
  %vm506 = vcmask 130048
  %v508 = vsel %vm506, %v503, 0
  %v511 = vsel %vm506, %v505, 0
  %v513 = vand.u32 %v438, 4294901760
  %514 = vmatpush.msra.mxu0 %v513
  %v515 = vand.u32 %v433, 4294901760
  %516 = vmatpush.msra.mxu0 %v515
  %v517 = vand.u32 %v391, 4294901760
  %518 = vmatpush.msra.mxu0 %v517
  %v519 = vand.u32 %v386, 4294901760
  %520 = vmatpush.msra.mxu0 %v519
  %v521 = vand.u32 %v344, 4294901760
  %522 = vmatpush.msra.mxu0 %v521
  %v523 = vand.u32 %v339, 4294901760
  %524 = vmatpush.msra.mxu0 %v523
  %v525 = vand.u32 %v297, 4294901760
  %526 = vmatpush.msra.mxu0 %v525
  %v527 = vand.u32 %v292, 4294901760
  %528 = vmatpush.msra.mxu0 %v527
  %v529 = vand.u32 %v250, 4294901760
  %530 = vmatpush.msra.mxu0 %v529
  %v531 = vand.u32 %v245, 4294901760
  %532 = vmatpush.msra.mxu0 %v531
  %v533 = vand.u32 %v203, 4294901760
  %534 = vmatpush.msra.mxu0 %v533
  %v535 = vand.u32 %v198, 4294901760
  %536 = vmatpush.msra.mxu0 %v535
  %v537 = vand.u32 %v156, 4294901760
  %538 = vmatpush.msra.mxu0 %v537
  %v539 = vand.u32 %v151, 4294901760
  %540 = vmatpush.msra.mxu0 %v539
  %v541 = vand.u32 %v118, 4294901760
  %542 = vmatpush.msra.mxu0 %v541
  %v543 = vand.u32 %v117, 4294901760
  %544 = vmatpush.msra.mxu0 %v543
  %v545 = vand.u32 %v502, 4294901760
  %v546 = vsub.f32 %v502, %v545
  %v547 = vand.u32 %v546, 4294901760
  %v548 = vsub.f32 %v546, %v547
  %v549 = vand.u32 %v548, 4294901760
  %550 = vmatmul.f32.gmra.mxu0 %v549
  %v551 = vpop.f32.mrf.mxu0
  %v552 = vadd.f32 0.0, %v551
  %v553 = vand.u32 %v504, 4294901760
  %v554 = vsub.f32 %v504, %v553
  %v555 = vand.u32 %v554, 4294901760
  %v556 = vsub.f32 %v554, %v555
  %v557 = vand.u32 %v556, 4294901760
  %558 = vmatmul.f32.gmra.mxu0 %v557
  %v559 = vpop.f32.mrf.mxu0
  %v560 = vadd.f32 0.0, %v559
  %561 = vdwg.mxu0
  %v562 = vand.u32 %v438, 4294901760
  %v563 = vsub.f32 %v438, %v562
  %v564 = vand.u32 %v563, 4294901760
  %v565 = vsub.f32 %v563, %v564
  %v566 = vand.u32 %v565, 4294901760
  %567 = vmatpush.msra.mxu0 %v566
  %v568 = vand.u32 %v433, 4294901760
  %v569 = vsub.f32 %v433, %v568
  %v570 = vand.u32 %v569, 4294901760
  %v571 = vsub.f32 %v569, %v570
  %v572 = vand.u32 %v571, 4294901760
  %573 = vmatpush.msra.mxu0 %v572
  %v574 = vand.u32 %v391, 4294901760
  %v575 = vsub.f32 %v391, %v574
  %v576 = vand.u32 %v575, 4294901760
  %v577 = vsub.f32 %v575, %v576
  %v578 = vand.u32 %v577, 4294901760
  %579 = vmatpush.msra.mxu0 %v578
  %v580 = vand.u32 %v386, 4294901760
  %v581 = vsub.f32 %v386, %v580
  %v582 = vand.u32 %v581, 4294901760
  %v583 = vsub.f32 %v581, %v582
  %v584 = vand.u32 %v583, 4294901760
  %585 = vmatpush.msra.mxu0 %v584
  %v586 = vand.u32 %v344, 4294901760
  %v587 = vsub.f32 %v344, %v586
  %v588 = vand.u32 %v587, 4294901760
  %v589 = vsub.f32 %v587, %v588
  %v590 = vand.u32 %v589, 4294901760
  %591 = vmatpush.msra.mxu0 %v590
  %v592 = vand.u32 %v339, 4294901760
  %v593 = vsub.f32 %v339, %v592
  %v594 = vand.u32 %v593, 4294901760
  %v595 = vsub.f32 %v593, %v594
  %v596 = vand.u32 %v595, 4294901760
  %597 = vmatpush.msra.mxu0 %v596
  %v598 = vand.u32 %v297, 4294901760
  %v599 = vsub.f32 %v297, %v598
  %v600 = vand.u32 %v599, 4294901760
  %v601 = vsub.f32 %v599, %v600
  %v602 = vand.u32 %v601, 4294901760
  %603 = vmatpush.msra.mxu0 %v602
  %v604 = vand.u32 %v292, 4294901760
  %v605 = vsub.f32 %v292, %v604
  %v606 = vand.u32 %v605, 4294901760
  %v607 = vsub.f32 %v605, %v606
  %v608 = vand.u32 %v607, 4294901760
  %609 = vmatpush.msra.mxu0 %v608
  %v610 = vand.u32 %v250, 4294901760
  %v611 = vsub.f32 %v250, %v610
  %v612 = vand.u32 %v611, 4294901760
  %v613 = vsub.f32 %v611, %v612
  %v614 = vand.u32 %v613, 4294901760
  %615 = vmatpush.msra.mxu0 %v614
  %v616 = vand.u32 %v245, 4294901760
  %v617 = vsub.f32 %v245, %v616
  %v618 = vand.u32 %v617, 4294901760
  %v619 = vsub.f32 %v617, %v618
  %v620 = vand.u32 %v619, 4294901760
  %621 = vmatpush.msra.mxu0 %v620
  %v622 = vand.u32 %v203, 4294901760
  %v623 = vsub.f32 %v203, %v622
  %v624 = vand.u32 %v623, 4294901760
  %v625 = vsub.f32 %v623, %v624
  %v626 = vand.u32 %v625, 4294901760
  %627 = vmatpush.msra.mxu0 %v626
  %v628 = vand.u32 %v198, 4294901760
  %v629 = vsub.f32 %v198, %v628
  %v630 = vand.u32 %v629, 4294901760
  %v631 = vsub.f32 %v629, %v630
  %v632 = vand.u32 %v631, 4294901760
  %633 = vmatpush.msra.mxu0 %v632
  %v634 = vand.u32 %v156, 4294901760
  %v635 = vsub.f32 %v156, %v634
  %v636 = vand.u32 %v635, 4294901760
  %v637 = vsub.f32 %v635, %v636
  %v638 = vand.u32 %v637, 4294901760
  %639 = vmatpush.msra.mxu0 %v638
  %v640 = vand.u32 %v151, 4294901760
  %v641 = vsub.f32 %v151, %v640
  %v642 = vand.u32 %v641, 4294901760
  %v643 = vsub.f32 %v641, %v642
  %v644 = vand.u32 %v643, 4294901760
  %645 = vmatpush.msra.mxu0 %v644
  %v646 = vand.u32 %v118, 4294901760
  %v647 = vsub.f32 %v118, %v646
  %v648 = vand.u32 %v647, 4294901760
  %v649 = vsub.f32 %v647, %v648
  %v650 = vand.u32 %v649, 4294901760
  %651 = vmatpush.msra.mxu0 %v650
  %v652 = vand.u32 %v117, 4294901760
  %v653 = vsub.f32 %v117, %v652
  %v654 = vand.u32 %v653, 4294901760
  %v655 = vsub.f32 %v653, %v654
  %v656 = vand.u32 %v655, 4294901760
  %657 = vmatpush.msra.mxu0 %v656
  %v658 = vand.u32 %v502, 4294901760
  %659 = vmatmul.f32.gmra.mxu0 %v658
  %v660 = vpop.f32.mrf.mxu0
  %v661 = vadd.f32 %v552, %v660
  %v662 = vand.u32 %v504, 4294901760
  %663 = vmatmul.f32.gmra.mxu0 %v662
  %v664 = vpop.f32.mrf.mxu0
  %v665 = vadd.f32 %v560, %v664
  %666 = vdwg.mxu0
  %v667 = vand.u32 %v438, 4294901760
  %v668 = vsub.f32 %v438, %v667
  %669 = vmatpush.msra.mxu0 %v668
  %v670 = vand.u32 %v433, 4294901760
  %v671 = vsub.f32 %v433, %v670
  %672 = vmatpush.msra.mxu0 %v671
  %v673 = vand.u32 %v391, 4294901760
  %v674 = vsub.f32 %v391, %v673
  %675 = vmatpush.msra.mxu0 %v674
  %v676 = vand.u32 %v386, 4294901760
  %v677 = vsub.f32 %v386, %v676
  %678 = vmatpush.msra.mxu0 %v677
  %v679 = vand.u32 %v344, 4294901760
  %v680 = vsub.f32 %v344, %v679
  %681 = vmatpush.msra.mxu0 %v680
  %v682 = vand.u32 %v339, 4294901760
  %v683 = vsub.f32 %v339, %v682
  %684 = vmatpush.msra.mxu0 %v683
  %v685 = vand.u32 %v297, 4294901760
  %v686 = vsub.f32 %v297, %v685
  %687 = vmatpush.msra.mxu0 %v686
  %v688 = vand.u32 %v292, 4294901760
  %v689 = vsub.f32 %v292, %v688
  %690 = vmatpush.msra.mxu0 %v689
  %v691 = vand.u32 %v250, 4294901760
  %v692 = vsub.f32 %v250, %v691
  %693 = vmatpush.msra.mxu0 %v692
  %v694 = vand.u32 %v245, 4294901760
  %v695 = vsub.f32 %v245, %v694
  %696 = vmatpush.msra.mxu0 %v695
  %v697 = vand.u32 %v203, 4294901760
  %v698 = vsub.f32 %v203, %v697
  %699 = vmatpush.msra.mxu0 %v698
  %v700 = vand.u32 %v198, 4294901760
  %v701 = vsub.f32 %v198, %v700
  %702 = vmatpush.msra.mxu0 %v701
  %v703 = vand.u32 %v156, 4294901760
  %v704 = vsub.f32 %v156, %v703
  %705 = vmatpush.msra.mxu0 %v704
  %v706 = vand.u32 %v151, 4294901760
  %v707 = vsub.f32 %v151, %v706
  %708 = vmatpush.msra.mxu0 %v707
  %v709 = vand.u32 %v118, 4294901760
  %v710 = vsub.f32 %v118, %v709
  %711 = vmatpush.msra.mxu0 %v710
  %v712 = vand.u32 %v117, 4294901760
  %v713 = vsub.f32 %v117, %v712
  %714 = vmatpush.msra.mxu0 %v713
  %v715 = vand.u32 %v502, 4294901760
  %v716 = vsub.f32 %v502, %v715
  %717 = vmatmul.f32.gmra.mxu0 %v716
  %v718 = vpop.f32.mrf.mxu0
  %v719 = vadd.f32 %v661, %v718
  %v720 = vand.u32 %v504, 4294901760
  %v721 = vsub.f32 %v504, %v720
  %722 = vmatmul.f32.gmra.mxu0 %v721
  %v723 = vpop.f32.mrf.mxu0
  %v724 = vadd.f32 %v665, %v723
  %725 = vdwg.mxu0
  %v726 = vand.u32 %v438, 4294901760
  %727 = vmatpush.msra.mxu0 %v726
  %v728 = vand.u32 %v433, 4294901760
  %729 = vmatpush.msra.mxu0 %v728
  %v730 = vand.u32 %v391, 4294901760
  %731 = vmatpush.msra.mxu0 %v730
  %v732 = vand.u32 %v386, 4294901760
  %733 = vmatpush.msra.mxu0 %v732
  %v734 = vand.u32 %v344, 4294901760
  %735 = vmatpush.msra.mxu0 %v734
  %v736 = vand.u32 %v339, 4294901760
  %737 = vmatpush.msra.mxu0 %v736
  %v738 = vand.u32 %v297, 4294901760
  %739 = vmatpush.msra.mxu0 %v738
  %v740 = vand.u32 %v292, 4294901760
  %741 = vmatpush.msra.mxu0 %v740
  %v742 = vand.u32 %v250, 4294901760
  %743 = vmatpush.msra.mxu0 %v742
  %v744 = vand.u32 %v245, 4294901760
  %745 = vmatpush.msra.mxu0 %v744
  %v746 = vand.u32 %v203, 4294901760
  %747 = vmatpush.msra.mxu0 %v746
  %v748 = vand.u32 %v198, 4294901760
  %749 = vmatpush.msra.mxu0 %v748
  %v750 = vand.u32 %v156, 4294901760
  %751 = vmatpush.msra.mxu0 %v750
  %v752 = vand.u32 %v151, 4294901760
  %753 = vmatpush.msra.mxu0 %v752
  %v754 = vand.u32 %v118, 4294901760
  %755 = vmatpush.msra.mxu0 %v754
  %v756 = vand.u32 %v117, 4294901760
  %757 = vmatpush.msra.mxu0 %v756
  %v758 = vand.u32 %v502, 4294901760
  %v759 = vsub.f32 %v502, %v758
  %v760 = vand.u32 %v759, 4294901760
  %761 = vmatmul.f32.gmra.mxu0 %v760
  %v762 = vpop.f32.mrf.mxu0
  %v763 = vadd.f32 %v719, %v762
  %v764 = vand.u32 %v504, 4294901760
  %v765 = vsub.f32 %v504, %v764
  %v766 = vand.u32 %v765, 4294901760
  %767 = vmatmul.f32.gmra.mxu0 %v766
  %v768 = vpop.f32.mrf.mxu0
  %v769 = vadd.f32 %v724, %v768
  %770 = vdwg.mxu0
  %v771 = vand.u32 %v438, 4294901760
  %v772 = vsub.f32 %v438, %v771
  %v773 = vand.u32 %v772, 4294901760
  %774 = vmatpush.msra.mxu0 %v773
  %v775 = vand.u32 %v433, 4294901760
  %v776 = vsub.f32 %v433, %v775
  %v777 = vand.u32 %v776, 4294901760
  %778 = vmatpush.msra.mxu0 %v777
  %v779 = vand.u32 %v391, 4294901760
  %v780 = vsub.f32 %v391, %v779
  %v781 = vand.u32 %v780, 4294901760
  %782 = vmatpush.msra.mxu0 %v781
  %v783 = vand.u32 %v386, 4294901760
  %v784 = vsub.f32 %v386, %v783
  %v785 = vand.u32 %v784, 4294901760
  %786 = vmatpush.msra.mxu0 %v785
  %v787 = vand.u32 %v344, 4294901760
  %v788 = vsub.f32 %v344, %v787
  %v789 = vand.u32 %v788, 4294901760
  %790 = vmatpush.msra.mxu0 %v789
  %v791 = vand.u32 %v339, 4294901760
  %v792 = vsub.f32 %v339, %v791
  %v793 = vand.u32 %v792, 4294901760
  %794 = vmatpush.msra.mxu0 %v793
  %v795 = vand.u32 %v297, 4294901760
  %v796 = vsub.f32 %v297, %v795
  %v797 = vand.u32 %v796, 4294901760
  %798 = vmatpush.msra.mxu0 %v797
  %v799 = vand.u32 %v292, 4294901760
  %v800 = vsub.f32 %v292, %v799
  %v801 = vand.u32 %v800, 4294901760
  %802 = vmatpush.msra.mxu0 %v801
  %v803 = vand.u32 %v250, 4294901760
  %v804 = vsub.f32 %v250, %v803
  %v805 = vand.u32 %v804, 4294901760
  %806 = vmatpush.msra.mxu0 %v805
  %v807 = vand.u32 %v245, 4294901760
  %v808 = vsub.f32 %v245, %v807
  %v809 = vand.u32 %v808, 4294901760
  %810 = vmatpush.msra.mxu0 %v809
  %v811 = vand.u32 %v203, 4294901760
  %v812 = vsub.f32 %v203, %v811
  %v813 = vand.u32 %v812, 4294901760
  %814 = vmatpush.msra.mxu0 %v813
  %v815 = vand.u32 %v198, 4294901760
  %v816 = vsub.f32 %v198, %v815
  %v817 = vand.u32 %v816, 4294901760
  %818 = vmatpush.msra.mxu0 %v817
  %v819 = vand.u32 %v156, 4294901760
  %v820 = vsub.f32 %v156, %v819
  %v821 = vand.u32 %v820, 4294901760
  %822 = vmatpush.msra.mxu0 %v821
  %v823 = vand.u32 %v151, 4294901760
  %v824 = vsub.f32 %v151, %v823
  %v825 = vand.u32 %v824, 4294901760
  %826 = vmatpush.msra.mxu0 %v825
  %v827 = vand.u32 %v118, 4294901760
  %v828 = vsub.f32 %v118, %v827
  %v829 = vand.u32 %v828, 4294901760
  %830 = vmatpush.msra.mxu0 %v829
  %v831 = vand.u32 %v117, 4294901760
  %v832 = vsub.f32 %v117, %v831
  %v833 = vand.u32 %v832, 4294901760
  %834 = vmatpush.msra.mxu0 %v833
  %v835 = vand.u32 %v502, 4294901760
  %836 = vmatmul.f32.gmra.mxu0 %v835
  %v837 = vpop.f32.mrf.mxu0
  %v838 = vadd.f32 %v763, %v837
  %v839 = vand.u32 %v504, 4294901760
  %840 = vmatmul.f32.gmra.mxu0 %v839
  %v841 = vpop.f32.mrf.mxu0
  %v842 = vadd.f32 %v769, %v841
  %843 = vdwg.mxu0
  %v844 = vand.u32 %v438, 4294901760
  %845 = vmatpush.msra.mxu0 %v844
  %v846 = vand.u32 %v433, 4294901760
  %847 = vmatpush.msra.mxu0 %v846
  %v848 = vand.u32 %v391, 4294901760
  %849 = vmatpush.msra.mxu0 %v848
  %v850 = vand.u32 %v386, 4294901760
  %851 = vmatpush.msra.mxu0 %v850
  %v852 = vand.u32 %v344, 4294901760
  %853 = vmatpush.msra.mxu0 %v852
  %v854 = vand.u32 %v339, 4294901760
  %855 = vmatpush.msra.mxu0 %v854
  %v856 = vand.u32 %v297, 4294901760
  %857 = vmatpush.msra.mxu0 %v856
  %v858 = vand.u32 %v292, 4294901760
  %859 = vmatpush.msra.mxu0 %v858
  %v860 = vand.u32 %v250, 4294901760
  %861 = vmatpush.msra.mxu0 %v860
  %v862 = vand.u32 %v245, 4294901760
  %863 = vmatpush.msra.mxu0 %v862
  %v864 = vand.u32 %v203, 4294901760
  %865 = vmatpush.msra.mxu0 %v864
  %v866 = vand.u32 %v198, 4294901760
  %867 = vmatpush.msra.mxu0 %v866
  %v868 = vand.u32 %v156, 4294901760
  %869 = vmatpush.msra.mxu0 %v868
  %v870 = vand.u32 %v151, 4294901760
  %871 = vmatpush.msra.mxu0 %v870
  %v872 = vand.u32 %v118, 4294901760
  %873 = vmatpush.msra.mxu0 %v872
  %v874 = vand.u32 %v117, 4294901760
  %875 = vmatpush.msra.mxu0 %v874
  %v876 = vand.u32 %v502, 4294901760
  %877 = vmatmul.f32.gmra.mxu0 %v876
  %v878 = vpop.f32.mrf.mxu0
  %v879 = vadd.f32 %v838, %v878
  %v880 = vand.u32 %v504, 4294901760
  %881 = vmatmul.f32.gmra.mxu0 %v880
  %v882 = vpop.f32.mrf.mxu0
  %v883 = vadd.f32 %v842, %v882
  %884 = vdwg.mxu0
  %885 = vmatpush.msra.mxu0 0.0
  %886 = vmatpush.msra.mxu0 0.0
  %887 = vmatpush.msra.mxu0 0.0
  %888 = vmatpush.msra.mxu0 0.0
  %889 = vmatpush.msra.mxu0 0.0
  %890 = vmatpush.msra.mxu0 0.0
  %891 = vmatpush.msra.mxu0 0.0
  %892 = vmatpush.msra.mxu0 0.0
  %893 = vmatpush.msra.mxu0 0.0
  %894 = vmatpush.msra.mxu0 0.0
  %895 = vmatpush.msra.mxu0 0.0
  %896 = vmatpush.msra.mxu0 0.0
  %897 = vmatpush.msra.mxu0 0.0
  %898 = vmatpush.msra.mxu0 0.0
  %v899 = vand.u32 %v485, 4294901760
  %900 = vmatpush.msra.mxu0 %v899
  %v901 = vand.u32 %v480, 4294901760
  %902 = vmatpush.msra.mxu0 %v901
  %v903 = vand.u32 %v508, 4294901760
  %v904 = vsub.f32 %v508, %v903
  %v905 = vand.u32 %v904, 4294901760
  %v906 = vsub.f32 %v904, %v905
  %v907 = vand.u32 %v906, 4294901760
  %908 = vmatmul.f32.gmra.mxu0 %v907
  %v909 = vpop.f32.mrf.mxu0
  %v910 = vadd.f32 %v879, %v909
  %v911 = vand.u32 %v511, 4294901760
  %v912 = vsub.f32 %v511, %v911
  %v913 = vand.u32 %v912, 4294901760
  %v914 = vsub.f32 %v912, %v913
  %v915 = vand.u32 %v914, 4294901760
  %916 = vmatmul.f32.gmra.mxu0 %v915
  %v917 = vpop.f32.mrf.mxu0
  %v918 = vadd.f32 %v883, %v917
  %919 = vdwg.mxu0
  %920 = vmatpush.msra.mxu0 0.0
  %921 = vmatpush.msra.mxu0 0.0
  %922 = vmatpush.msra.mxu0 0.0
  %923 = vmatpush.msra.mxu0 0.0
  %924 = vmatpush.msra.mxu0 0.0
  %925 = vmatpush.msra.mxu0 0.0
  %926 = vmatpush.msra.mxu0 0.0
  %927 = vmatpush.msra.mxu0 0.0
  %928 = vmatpush.msra.mxu0 0.0
  %929 = vmatpush.msra.mxu0 0.0
  %930 = vmatpush.msra.mxu0 0.0
  %931 = vmatpush.msra.mxu0 0.0
  %932 = vmatpush.msra.mxu0 0.0
  %933 = vmatpush.msra.mxu0 0.0
  %v934 = vand.u32 %v485, 4294901760
  %v935 = vsub.f32 %v485, %v934
  %v936 = vand.u32 %v935, 4294901760
  %v937 = vsub.f32 %v935, %v936
  %v938 = vand.u32 %v937, 4294901760
  %939 = vmatpush.msra.mxu0 %v938
  %v940 = vand.u32 %v480, 4294901760
  %v941 = vsub.f32 %v480, %v940
  %v942 = vand.u32 %v941, 4294901760
  %v943 = vsub.f32 %v941, %v942
  %v944 = vand.u32 %v943, 4294901760
  %945 = vmatpush.msra.mxu0 %v944
  %v946 = vand.u32 %v508, 4294901760
  %947 = vmatmul.f32.gmra.mxu0 %v946
  %v948 = vpop.f32.mrf.mxu0
  %v949 = vadd.f32 %v910, %v948
  %v950 = vand.u32 %v511, 4294901760
  %951 = vmatmul.f32.gmra.mxu0 %v950
  %v952 = vpop.f32.mrf.mxu0
  %v953 = vadd.f32 %v918, %v952
  %954 = vdwg.mxu0
  %955 = vmatpush.msra.mxu0 0.0
  %956 = vmatpush.msra.mxu0 0.0
  %957 = vmatpush.msra.mxu0 0.0
  %958 = vmatpush.msra.mxu0 0.0
  %959 = vmatpush.msra.mxu0 0.0
  %960 = vmatpush.msra.mxu0 0.0
  %961 = vmatpush.msra.mxu0 0.0
  %962 = vmatpush.msra.mxu0 0.0
  %963 = vmatpush.msra.mxu0 0.0
  %964 = vmatpush.msra.mxu0 0.0
  %965 = vmatpush.msra.mxu0 0.0
  %966 = vmatpush.msra.mxu0 0.0
  %967 = vmatpush.msra.mxu0 0.0
  %968 = vmatpush.msra.mxu0 0.0
  %v969 = vand.u32 %v485, 4294901760
  %v970 = vsub.f32 %v485, %v969
  %971 = vmatpush.msra.mxu0 %v970
  %v972 = vand.u32 %v480, 4294901760
  %v973 = vsub.f32 %v480, %v972
  %974 = vmatpush.msra.mxu0 %v973
  %v975 = vand.u32 %v508, 4294901760
  %v976 = vsub.f32 %v508, %v975
  %977 = vmatmul.f32.gmra.mxu0 %v976
  %v978 = vpop.f32.mrf.mxu0
  %v979 = vadd.f32 %v949, %v978
  %v980 = vand.u32 %v511, 4294901760
  %v981 = vsub.f32 %v511, %v980
  %982 = vmatmul.f32.gmra.mxu0 %v981
  %v983 = vpop.f32.mrf.mxu0
  %v984 = vadd.f32 %v953, %v983
  %985 = vdwg.mxu0
  %986 = vmatpush.msra.mxu0 0.0
  %987 = vmatpush.msra.mxu0 0.0
  %988 = vmatpush.msra.mxu0 0.0
  %989 = vmatpush.msra.mxu0 0.0
  %990 = vmatpush.msra.mxu0 0.0
  %991 = vmatpush.msra.mxu0 0.0
  %992 = vmatpush.msra.mxu0 0.0
  %993 = vmatpush.msra.mxu0 0.0
  %994 = vmatpush.msra.mxu0 0.0
  %995 = vmatpush.msra.mxu0 0.0
  %996 = vmatpush.msra.mxu0 0.0
  %997 = vmatpush.msra.mxu0 0.0
  %998 = vmatpush.msra.mxu0 0.0
  %999 = vmatpush.msra.mxu0 0.0
  %v1000 = vand.u32 %v485, 4294901760
  %1001 = vmatpush.msra.mxu0 %v1000
  %v1002 = vand.u32 %v480, 4294901760
  %1003 = vmatpush.msra.mxu0 %v1002
  %v1004 = vand.u32 %v508, 4294901760
  %v1005 = vsub.f32 %v508, %v1004
  %v1006 = vand.u32 %v1005, 4294901760
  %1007 = vmatmul.f32.gmra.mxu0 %v1006
  %v1008 = vpop.f32.mrf.mxu0
  %v1009 = vadd.f32 %v979, %v1008
  %v1010 = vand.u32 %v511, 4294901760
  %v1011 = vsub.f32 %v511, %v1010
  %v1012 = vand.u32 %v1011, 4294901760
  %1013 = vmatmul.f32.gmra.mxu0 %v1012
  %v1014 = vpop.f32.mrf.mxu0
  %v1015 = vadd.f32 %v984, %v1014
  %1016 = vdwg.mxu0
  %1017 = vmatpush.msra.mxu0 0.0
  %1018 = vmatpush.msra.mxu0 0.0
  %1019 = vmatpush.msra.mxu0 0.0
  %1020 = vmatpush.msra.mxu0 0.0
  %1021 = vmatpush.msra.mxu0 0.0
  %1022 = vmatpush.msra.mxu0 0.0
  %1023 = vmatpush.msra.mxu0 0.0
  %1024 = vmatpush.msra.mxu0 0.0
  %1025 = vmatpush.msra.mxu0 0.0
  %1026 = vmatpush.msra.mxu0 0.0
  %1027 = vmatpush.msra.mxu0 0.0
  %1028 = vmatpush.msra.mxu0 0.0
  %1029 = vmatpush.msra.mxu0 0.0
  %1030 = vmatpush.msra.mxu0 0.0
  %v1031 = vand.u32 %v485, 4294901760
  %v1032 = vsub.f32 %v485, %v1031
  %v1033 = vand.u32 %v1032, 4294901760
  %1034 = vmatpush.msra.mxu0 %v1033
  %v1035 = vand.u32 %v480, 4294901760
  %v1036 = vsub.f32 %v480, %v1035
  %v1037 = vand.u32 %v1036, 4294901760
  %1038 = vmatpush.msra.mxu0 %v1037
  %v1039 = vand.u32 %v508, 4294901760
  %1040 = vmatmul.f32.gmra.mxu0 %v1039
  %v1041 = vpop.f32.mrf.mxu0
  %v1042 = vadd.f32 %v1009, %v1041
  %v1043 = vand.u32 %v511, 4294901760
  %1044 = vmatmul.f32.gmra.mxu0 %v1043
  %v1045 = vpop.f32.mrf.mxu0
  %v1046 = vadd.f32 %v1015, %v1045
  %1047 = vdwg.mxu0
  %1048 = vmatpush.msra.mxu0 0.0
  %1049 = vmatpush.msra.mxu0 0.0
  %1050 = vmatpush.msra.mxu0 0.0
  %1051 = vmatpush.msra.mxu0 0.0
  %1052 = vmatpush.msra.mxu0 0.0
  %1053 = vmatpush.msra.mxu0 0.0
  %1054 = vmatpush.msra.mxu0 0.0
  %1055 = vmatpush.msra.mxu0 0.0
  %1056 = vmatpush.msra.mxu0 0.0
  %1057 = vmatpush.msra.mxu0 0.0
  %1058 = vmatpush.msra.mxu0 0.0
  %1059 = vmatpush.msra.mxu0 0.0
  %1060 = vmatpush.msra.mxu0 0.0
  %1061 = vmatpush.msra.mxu0 0.0
  %v1062 = vand.u32 %v485, 4294901760
  %1063 = vmatpush.msra.mxu0 %v1062
  %v1064 = vand.u32 %v480, 4294901760
  %1065 = vmatpush.msra.mxu0 %v1064
  %v1066 = vand.u32 %v508, 4294901760
  %1067 = vmatmul.f32.gmra.mxu0 %v1066
  %v1068 = vpop.f32.mrf.mxu0
  %v1069 = vadd.f32 %v1042, %v1068
  %v1070 = vand.u32 %v511, 4294901760
  %1071 = vmatmul.f32.gmra.mxu0 %v1070
  %v1072 = vpop.f32.mrf.mxu0
  %v1073 = vadd.f32 %v1046, %v1072
  %1074 = vdwg.mxu0
  %v1075 = vand.u32 %v439, 4294901760
  %1076 = vmatpush.msra.mxu0 %v1075
  %v1077 = vand.u32 %v434, 4294901760
  %1078 = vmatpush.msra.mxu0 %v1077
  %v1079 = vand.u32 %v392, 4294901760
  %1080 = vmatpush.msra.mxu0 %v1079
  %v1081 = vand.u32 %v387, 4294901760
  %1082 = vmatpush.msra.mxu0 %v1081
  %v1083 = vand.u32 %v345, 4294901760
  %1084 = vmatpush.msra.mxu0 %v1083
  %v1085 = vand.u32 %v340, 4294901760
  %1086 = vmatpush.msra.mxu0 %v1085
  %v1087 = vand.u32 %v298, 4294901760
  %1088 = vmatpush.msra.mxu0 %v1087
  %v1089 = vand.u32 %v293, 4294901760
  %1090 = vmatpush.msra.mxu0 %v1089
  %v1091 = vand.u32 %v251, 4294901760
  %1092 = vmatpush.msra.mxu0 %v1091
  %v1093 = vand.u32 %v246, 4294901760
  %1094 = vmatpush.msra.mxu0 %v1093
  %v1095 = vand.u32 %v204, 4294901760
  %1096 = vmatpush.msra.mxu0 %v1095
  %v1097 = vand.u32 %v199, 4294901760
  %1098 = vmatpush.msra.mxu0 %v1097
  %v1099 = vand.u32 %v157, 4294901760
  %1100 = vmatpush.msra.mxu0 %v1099
  %v1101 = vand.u32 %v152, 4294901760
  %1102 = vmatpush.msra.mxu0 %v1101
  %v1103 = vand.u32 %v100, 4294901760
  %1104 = vmatpush.msra.mxu0 %v1103
  %v1105 = vand.u32 %v95, 4294901760
  %1106 = vmatpush.msra.mxu0 %v1105
  %v1107 = vand.u32 %v502, 4294901760
  %v1108 = vsub.f32 %v502, %v1107
  %v1109 = vand.u32 %v1108, 4294901760
  %v1110 = vsub.f32 %v1108, %v1109
  %v1111 = vand.u32 %v1110, 4294901760
  %1112 = vmatmul.f32.gmra.mxu0 %v1111
  %v1113 = vpop.f32.mrf.mxu0
  %v1114 = vadd.f32 0.0, %v1113
  %v1115 = vand.u32 %v504, 4294901760
  %v1116 = vsub.f32 %v504, %v1115
  %v1117 = vand.u32 %v1116, 4294901760
  %v1118 = vsub.f32 %v1116, %v1117
  %v1119 = vand.u32 %v1118, 4294901760
  %1120 = vmatmul.f32.gmra.mxu0 %v1119
  %v1121 = vpop.f32.mrf.mxu0
  %v1122 = vadd.f32 0.0, %v1121
  %1123 = vdwg.mxu0
  %v1124 = vand.u32 %v439, 4294901760
  %v1125 = vsub.f32 %v439, %v1124
  %v1126 = vand.u32 %v1125, 4294901760
  %v1127 = vsub.f32 %v1125, %v1126
  %v1128 = vand.u32 %v1127, 4294901760
  %1129 = vmatpush.msra.mxu0 %v1128
  %v1130 = vand.u32 %v434, 4294901760
  %v1131 = vsub.f32 %v434, %v1130
  %v1132 = vand.u32 %v1131, 4294901760
  %v1133 = vsub.f32 %v1131, %v1132
  %v1134 = vand.u32 %v1133, 4294901760
  %1135 = vmatpush.msra.mxu0 %v1134
  %v1136 = vand.u32 %v392, 4294901760
  %v1137 = vsub.f32 %v392, %v1136
  %v1138 = vand.u32 %v1137, 4294901760
  %v1139 = vsub.f32 %v1137, %v1138
  %v1140 = vand.u32 %v1139, 4294901760
  %1141 = vmatpush.msra.mxu0 %v1140
  %v1142 = vand.u32 %v387, 4294901760
  %v1143 = vsub.f32 %v387, %v1142
  %v1144 = vand.u32 %v1143, 4294901760
  %v1145 = vsub.f32 %v1143, %v1144
  %v1146 = vand.u32 %v1145, 4294901760
  %1147 = vmatpush.msra.mxu0 %v1146
  %v1148 = vand.u32 %v345, 4294901760
  %v1149 = vsub.f32 %v345, %v1148
  %v1150 = vand.u32 %v1149, 4294901760
  %v1151 = vsub.f32 %v1149, %v1150
  %v1152 = vand.u32 %v1151, 4294901760
  %1153 = vmatpush.msra.mxu0 %v1152
  %v1154 = vand.u32 %v340, 4294901760
  %v1155 = vsub.f32 %v340, %v1154
  %v1156 = vand.u32 %v1155, 4294901760
  %v1157 = vsub.f32 %v1155, %v1156
  %v1158 = vand.u32 %v1157, 4294901760
  %1159 = vmatpush.msra.mxu0 %v1158
  %v1160 = vand.u32 %v298, 4294901760
  %v1161 = vsub.f32 %v298, %v1160
  %v1162 = vand.u32 %v1161, 4294901760
  %v1163 = vsub.f32 %v1161, %v1162
  %v1164 = vand.u32 %v1163, 4294901760
  %1165 = vmatpush.msra.mxu0 %v1164
  %v1166 = vand.u32 %v293, 4294901760
  %v1167 = vsub.f32 %v293, %v1166
  %v1168 = vand.u32 %v1167, 4294901760
  %v1169 = vsub.f32 %v1167, %v1168
  %v1170 = vand.u32 %v1169, 4294901760
  %1171 = vmatpush.msra.mxu0 %v1170
  %v1172 = vand.u32 %v251, 4294901760
  %v1173 = vsub.f32 %v251, %v1172
  %v1174 = vand.u32 %v1173, 4294901760
  %v1175 = vsub.f32 %v1173, %v1174
  %v1176 = vand.u32 %v1175, 4294901760
  %1177 = vmatpush.msra.mxu0 %v1176
  %v1178 = vand.u32 %v246, 4294901760
  %v1179 = vsub.f32 %v246, %v1178
  %v1180 = vand.u32 %v1179, 4294901760
  %v1181 = vsub.f32 %v1179, %v1180
  %v1182 = vand.u32 %v1181, 4294901760
  %1183 = vmatpush.msra.mxu0 %v1182
  %v1184 = vand.u32 %v204, 4294901760
  %v1185 = vsub.f32 %v204, %v1184
  %v1186 = vand.u32 %v1185, 4294901760
  %v1187 = vsub.f32 %v1185, %v1186
  %v1188 = vand.u32 %v1187, 4294901760
  %1189 = vmatpush.msra.mxu0 %v1188
  %v1190 = vand.u32 %v199, 4294901760
  %v1191 = vsub.f32 %v199, %v1190
  %v1192 = vand.u32 %v1191, 4294901760
  %v1193 = vsub.f32 %v1191, %v1192
  %v1194 = vand.u32 %v1193, 4294901760
  %1195 = vmatpush.msra.mxu0 %v1194
  %v1196 = vand.u32 %v157, 4294901760
  %v1197 = vsub.f32 %v157, %v1196
  %v1198 = vand.u32 %v1197, 4294901760
  %v1199 = vsub.f32 %v1197, %v1198
  %v1200 = vand.u32 %v1199, 4294901760
  %1201 = vmatpush.msra.mxu0 %v1200
  %v1202 = vand.u32 %v152, 4294901760
  %v1203 = vsub.f32 %v152, %v1202
  %v1204 = vand.u32 %v1203, 4294901760
  %v1205 = vsub.f32 %v1203, %v1204
  %v1206 = vand.u32 %v1205, 4294901760
  %1207 = vmatpush.msra.mxu0 %v1206
  %v1208 = vand.u32 %v100, 4294901760
  %v1209 = vsub.f32 %v100, %v1208
  %v1210 = vand.u32 %v1209, 4294901760
  %v1211 = vsub.f32 %v1209, %v1210
  %v1212 = vand.u32 %v1211, 4294901760
  %1213 = vmatpush.msra.mxu0 %v1212
  %v1214 = vand.u32 %v95, 4294901760
  %v1215 = vsub.f32 %v95, %v1214
  %v1216 = vand.u32 %v1215, 4294901760
  %v1217 = vsub.f32 %v1215, %v1216
  %v1218 = vand.u32 %v1217, 4294901760
  %1219 = vmatpush.msra.mxu0 %v1218
  %v1220 = vand.u32 %v502, 4294901760
  %1221 = vmatmul.f32.gmra.mxu0 %v1220
  %v1222 = vpop.f32.mrf.mxu0
  %v1223 = vadd.f32 %v1114, %v1222
  %v1224 = vand.u32 %v504, 4294901760
  %1225 = vmatmul.f32.gmra.mxu0 %v1224
  %v1226 = vpop.f32.mrf.mxu0
  %v1227 = vadd.f32 %v1122, %v1226
  %1228 = vdwg.mxu0
  %v1229 = vand.u32 %v439, 4294901760
  %v1230 = vsub.f32 %v439, %v1229
  %1231 = vmatpush.msra.mxu0 %v1230
  %v1232 = vand.u32 %v434, 4294901760
  %v1233 = vsub.f32 %v434, %v1232
  %1234 = vmatpush.msra.mxu0 %v1233
  %v1235 = vand.u32 %v392, 4294901760
  %v1236 = vsub.f32 %v392, %v1235
  %1237 = vmatpush.msra.mxu0 %v1236
  %v1238 = vand.u32 %v387, 4294901760
  %v1239 = vsub.f32 %v387, %v1238
  %1240 = vmatpush.msra.mxu0 %v1239
  %v1241 = vand.u32 %v345, 4294901760
  %v1242 = vsub.f32 %v345, %v1241
  %1243 = vmatpush.msra.mxu0 %v1242
  %v1244 = vand.u32 %v340, 4294901760
  %v1245 = vsub.f32 %v340, %v1244
  %1246 = vmatpush.msra.mxu0 %v1245
  %v1247 = vand.u32 %v298, 4294901760
  %v1248 = vsub.f32 %v298, %v1247
  %1249 = vmatpush.msra.mxu0 %v1248
  %v1250 = vand.u32 %v293, 4294901760
  %v1251 = vsub.f32 %v293, %v1250
  %1252 = vmatpush.msra.mxu0 %v1251
  %v1253 = vand.u32 %v251, 4294901760
  %v1254 = vsub.f32 %v251, %v1253
  %1255 = vmatpush.msra.mxu0 %v1254
  %v1256 = vand.u32 %v246, 4294901760
  %v1257 = vsub.f32 %v246, %v1256
  %1258 = vmatpush.msra.mxu0 %v1257
  %v1259 = vand.u32 %v204, 4294901760
  %v1260 = vsub.f32 %v204, %v1259
  %1261 = vmatpush.msra.mxu0 %v1260
  %v1262 = vand.u32 %v199, 4294901760
  %v1263 = vsub.f32 %v199, %v1262
  %1264 = vmatpush.msra.mxu0 %v1263
  %v1265 = vand.u32 %v157, 4294901760
  %v1266 = vsub.f32 %v157, %v1265
  %1267 = vmatpush.msra.mxu0 %v1266
  %v1268 = vand.u32 %v152, 4294901760
  %v1269 = vsub.f32 %v152, %v1268
  %1270 = vmatpush.msra.mxu0 %v1269
  %v1271 = vand.u32 %v100, 4294901760
  %v1272 = vsub.f32 %v100, %v1271
  %1273 = vmatpush.msra.mxu0 %v1272
  %v1274 = vand.u32 %v95, 4294901760
  %v1275 = vsub.f32 %v95, %v1274
  %1276 = vmatpush.msra.mxu0 %v1275
  %v1277 = vand.u32 %v502, 4294901760
  %v1278 = vsub.f32 %v502, %v1277
  %1279 = vmatmul.f32.gmra.mxu0 %v1278
  %v1280 = vpop.f32.mrf.mxu0
  %v1281 = vadd.f32 %v1223, %v1280
  %v1282 = vand.u32 %v504, 4294901760
  %v1283 = vsub.f32 %v504, %v1282
  %1284 = vmatmul.f32.gmra.mxu0 %v1283
  %v1285 = vpop.f32.mrf.mxu0
  %v1286 = vadd.f32 %v1227, %v1285
  %1287 = vdwg.mxu0
  %v1288 = vand.u32 %v439, 4294901760
  %1289 = vmatpush.msra.mxu0 %v1288
  %v1290 = vand.u32 %v434, 4294901760
  %1291 = vmatpush.msra.mxu0 %v1290
  %v1292 = vand.u32 %v392, 4294901760
  %1293 = vmatpush.msra.mxu0 %v1292
  %v1294 = vand.u32 %v387, 4294901760
  %1295 = vmatpush.msra.mxu0 %v1294
  %v1296 = vand.u32 %v345, 4294901760
  %1297 = vmatpush.msra.mxu0 %v1296
  %v1298 = vand.u32 %v340, 4294901760
  %1299 = vmatpush.msra.mxu0 %v1298
  %v1300 = vand.u32 %v298, 4294901760
  %1301 = vmatpush.msra.mxu0 %v1300
  %v1302 = vand.u32 %v293, 4294901760
  %1303 = vmatpush.msra.mxu0 %v1302
  %v1304 = vand.u32 %v251, 4294901760
  %1305 = vmatpush.msra.mxu0 %v1304
  %v1306 = vand.u32 %v246, 4294901760
  %1307 = vmatpush.msra.mxu0 %v1306
  %v1308 = vand.u32 %v204, 4294901760
  %1309 = vmatpush.msra.mxu0 %v1308
  %v1310 = vand.u32 %v199, 4294901760
  %1311 = vmatpush.msra.mxu0 %v1310
  %v1312 = vand.u32 %v157, 4294901760
  %1313 = vmatpush.msra.mxu0 %v1312
  %v1314 = vand.u32 %v152, 4294901760
  %1315 = vmatpush.msra.mxu0 %v1314
  %v1316 = vand.u32 %v100, 4294901760
  %1317 = vmatpush.msra.mxu0 %v1316
  %v1318 = vand.u32 %v95, 4294901760
  %1319 = vmatpush.msra.mxu0 %v1318
  %v1320 = vand.u32 %v502, 4294901760
  %v1321 = vsub.f32 %v502, %v1320
  %v1322 = vand.u32 %v1321, 4294901760
  %1323 = vmatmul.f32.gmra.mxu0 %v1322
  %v1324 = vpop.f32.mrf.mxu0
  %v1325 = vadd.f32 %v1281, %v1324
  %v1326 = vand.u32 %v504, 4294901760
  %v1327 = vsub.f32 %v504, %v1326
  %v1328 = vand.u32 %v1327, 4294901760
  %1329 = vmatmul.f32.gmra.mxu0 %v1328
  %v1330 = vpop.f32.mrf.mxu0
  %v1331 = vadd.f32 %v1286, %v1330
  %1332 = vdwg.mxu0
  %v1333 = vand.u32 %v439, 4294901760
  %v1334 = vsub.f32 %v439, %v1333
  %v1335 = vand.u32 %v1334, 4294901760
  %1336 = vmatpush.msra.mxu0 %v1335
  %v1337 = vand.u32 %v434, 4294901760
  %v1338 = vsub.f32 %v434, %v1337
  %v1339 = vand.u32 %v1338, 4294901760
  %1340 = vmatpush.msra.mxu0 %v1339
  %v1341 = vand.u32 %v392, 4294901760
  %v1342 = vsub.f32 %v392, %v1341
  %v1343 = vand.u32 %v1342, 4294901760
  %1344 = vmatpush.msra.mxu0 %v1343
  %v1345 = vand.u32 %v387, 4294901760
  %v1346 = vsub.f32 %v387, %v1345
  %v1347 = vand.u32 %v1346, 4294901760
  %1348 = vmatpush.msra.mxu0 %v1347
  %v1349 = vand.u32 %v345, 4294901760
  %v1350 = vsub.f32 %v345, %v1349
  %v1351 = vand.u32 %v1350, 4294901760
  %1352 = vmatpush.msra.mxu0 %v1351
  %v1353 = vand.u32 %v340, 4294901760
  %v1354 = vsub.f32 %v340, %v1353
  %v1355 = vand.u32 %v1354, 4294901760
  %1356 = vmatpush.msra.mxu0 %v1355
  %v1357 = vand.u32 %v298, 4294901760
  %v1358 = vsub.f32 %v298, %v1357
  %v1359 = vand.u32 %v1358, 4294901760
  %1360 = vmatpush.msra.mxu0 %v1359
  %v1361 = vand.u32 %v293, 4294901760
  %v1362 = vsub.f32 %v293, %v1361
  %v1363 = vand.u32 %v1362, 4294901760
  %1364 = vmatpush.msra.mxu0 %v1363
  %v1365 = vand.u32 %v251, 4294901760
  %v1366 = vsub.f32 %v251, %v1365
  %v1367 = vand.u32 %v1366, 4294901760
  %1368 = vmatpush.msra.mxu0 %v1367
  %v1369 = vand.u32 %v246, 4294901760
  %v1370 = vsub.f32 %v246, %v1369
  %v1371 = vand.u32 %v1370, 4294901760
  %1372 = vmatpush.msra.mxu0 %v1371
  %v1373 = vand.u32 %v204, 4294901760
  %v1374 = vsub.f32 %v204, %v1373
  %v1375 = vand.u32 %v1374, 4294901760
  %1376 = vmatpush.msra.mxu0 %v1375
  %v1377 = vand.u32 %v199, 4294901760
  %v1378 = vsub.f32 %v199, %v1377
  %v1379 = vand.u32 %v1378, 4294901760
  %1380 = vmatpush.msra.mxu0 %v1379
  %v1381 = vand.u32 %v157, 4294901760
  %v1382 = vsub.f32 %v157, %v1381
  %v1383 = vand.u32 %v1382, 4294901760
  %1384 = vmatpush.msra.mxu0 %v1383
  %v1385 = vand.u32 %v152, 4294901760
  %v1386 = vsub.f32 %v152, %v1385
  %v1387 = vand.u32 %v1386, 4294901760
  %1388 = vmatpush.msra.mxu0 %v1387
  %v1389 = vand.u32 %v100, 4294901760
  %v1390 = vsub.f32 %v100, %v1389
  %v1391 = vand.u32 %v1390, 4294901760
  %1392 = vmatpush.msra.mxu0 %v1391
  %v1393 = vand.u32 %v95, 4294901760
  %v1394 = vsub.f32 %v95, %v1393
  %v1395 = vand.u32 %v1394, 4294901760
  %1396 = vmatpush.msra.mxu0 %v1395
  %v1397 = vand.u32 %v502, 4294901760
  %1398 = vmatmul.f32.gmra.mxu0 %v1397
  %v1399 = vpop.f32.mrf.mxu0
  %v1400 = vadd.f32 %v1325, %v1399
  %v1401 = vand.u32 %v504, 4294901760
  %1402 = vmatmul.f32.gmra.mxu0 %v1401
  %v1403 = vpop.f32.mrf.mxu0
  %v1404 = vadd.f32 %v1331, %v1403
  %1405 = vdwg.mxu0
  %v1406 = vand.u32 %v439, 4294901760
  %1407 = vmatpush.msra.mxu0 %v1406
  %v1408 = vand.u32 %v434, 4294901760
  %1409 = vmatpush.msra.mxu0 %v1408
  %v1410 = vand.u32 %v392, 4294901760
  %1411 = vmatpush.msra.mxu0 %v1410
  %v1412 = vand.u32 %v387, 4294901760
  %1413 = vmatpush.msra.mxu0 %v1412
  %v1414 = vand.u32 %v345, 4294901760
  %1415 = vmatpush.msra.mxu0 %v1414
  %v1416 = vand.u32 %v340, 4294901760
  %1417 = vmatpush.msra.mxu0 %v1416
  %v1418 = vand.u32 %v298, 4294901760
  %1419 = vmatpush.msra.mxu0 %v1418
  %v1420 = vand.u32 %v293, 4294901760
  %1421 = vmatpush.msra.mxu0 %v1420
  %v1422 = vand.u32 %v251, 4294901760
  %1423 = vmatpush.msra.mxu0 %v1422
  %v1424 = vand.u32 %v246, 4294901760
  %1425 = vmatpush.msra.mxu0 %v1424
  %v1426 = vand.u32 %v204, 4294901760
  %1427 = vmatpush.msra.mxu0 %v1426
  %v1428 = vand.u32 %v199, 4294901760
  %1429 = vmatpush.msra.mxu0 %v1428
  %v1430 = vand.u32 %v157, 4294901760
  %1431 = vmatpush.msra.mxu0 %v1430
  %v1432 = vand.u32 %v152, 4294901760
  %1433 = vmatpush.msra.mxu0 %v1432
  %v1434 = vand.u32 %v100, 4294901760
  %1435 = vmatpush.msra.mxu0 %v1434
  %v1436 = vand.u32 %v95, 4294901760
  %1437 = vmatpush.msra.mxu0 %v1436
  %v1438 = vand.u32 %v502, 4294901760
  %1439 = vmatmul.f32.gmra.mxu0 %v1438
  %v1440 = vpop.f32.mrf.mxu0
  %v1441 = vadd.f32 %v1400, %v1440
  %v1442 = vand.u32 %v504, 4294901760
  %1443 = vmatmul.f32.gmra.mxu0 %v1442
  %v1444 = vpop.f32.mrf.mxu0
  %v1445 = vadd.f32 %v1404, %v1444
  %1446 = vdwg.mxu0
  %1447 = vmatpush.msra.mxu0 0.0
  %1448 = vmatpush.msra.mxu0 0.0
  %1449 = vmatpush.msra.mxu0 0.0
  %1450 = vmatpush.msra.mxu0 0.0
  %1451 = vmatpush.msra.mxu0 0.0
  %1452 = vmatpush.msra.mxu0 0.0
  %1453 = vmatpush.msra.mxu0 0.0
  %1454 = vmatpush.msra.mxu0 0.0
  %1455 = vmatpush.msra.mxu0 0.0
  %1456 = vmatpush.msra.mxu0 0.0
  %1457 = vmatpush.msra.mxu0 0.0
  %1458 = vmatpush.msra.mxu0 0.0
  %1459 = vmatpush.msra.mxu0 0.0
  %1460 = vmatpush.msra.mxu0 0.0
  %v1461 = vand.u32 %v486, 4294901760
  %1462 = vmatpush.msra.mxu0 %v1461
  %v1463 = vand.u32 %v481, 4294901760
  %1464 = vmatpush.msra.mxu0 %v1463
  %v1465 = vand.u32 %v508, 4294901760
  %v1466 = vsub.f32 %v508, %v1465
  %v1467 = vand.u32 %v1466, 4294901760
  %v1468 = vsub.f32 %v1466, %v1467
  %v1469 = vand.u32 %v1468, 4294901760
  %1470 = vmatmul.f32.gmra.mxu0 %v1469
  %v1471 = vpop.f32.mrf.mxu0
  %v1472 = vadd.f32 %v1441, %v1471
  %v1473 = vand.u32 %v511, 4294901760
  %v1474 = vsub.f32 %v511, %v1473
  %v1475 = vand.u32 %v1474, 4294901760
  %v1476 = vsub.f32 %v1474, %v1475
  %v1477 = vand.u32 %v1476, 4294901760
  %1478 = vmatmul.f32.gmra.mxu0 %v1477
  %v1479 = vpop.f32.mrf.mxu0
  %v1480 = vadd.f32 %v1445, %v1479
  %1481 = vdwg.mxu0
  %1482 = vmatpush.msra.mxu0 0.0
  %1483 = vmatpush.msra.mxu0 0.0
  %1484 = vmatpush.msra.mxu0 0.0
  %1485 = vmatpush.msra.mxu0 0.0
  %1486 = vmatpush.msra.mxu0 0.0
  %1487 = vmatpush.msra.mxu0 0.0
  %1488 = vmatpush.msra.mxu0 0.0
  %1489 = vmatpush.msra.mxu0 0.0
  %1490 = vmatpush.msra.mxu0 0.0
  %1491 = vmatpush.msra.mxu0 0.0
  %1492 = vmatpush.msra.mxu0 0.0
  %1493 = vmatpush.msra.mxu0 0.0
  %1494 = vmatpush.msra.mxu0 0.0
  %1495 = vmatpush.msra.mxu0 0.0
  %v1496 = vand.u32 %v486, 4294901760
  %v1497 = vsub.f32 %v486, %v1496
  %v1498 = vand.u32 %v1497, 4294901760
  %v1499 = vsub.f32 %v1497, %v1498
  %v1500 = vand.u32 %v1499, 4294901760
  %1501 = vmatpush.msra.mxu0 %v1500
  %v1502 = vand.u32 %v481, 4294901760
  %v1503 = vsub.f32 %v481, %v1502
  %v1504 = vand.u32 %v1503, 4294901760
  %v1505 = vsub.f32 %v1503, %v1504
  %v1506 = vand.u32 %v1505, 4294901760
  %1507 = vmatpush.msra.mxu0 %v1506
  %v1508 = vand.u32 %v508, 4294901760
  %1509 = vmatmul.f32.gmra.mxu0 %v1508
  %v1510 = vpop.f32.mrf.mxu0
  %v1511 = vadd.f32 %v1472, %v1510
  %v1512 = vand.u32 %v511, 4294901760
  %1513 = vmatmul.f32.gmra.mxu0 %v1512
  %v1514 = vpop.f32.mrf.mxu0
  %v1515 = vadd.f32 %v1480, %v1514
  %1516 = vdwg.mxu0
  %1517 = vmatpush.msra.mxu0 0.0
  %1518 = vmatpush.msra.mxu0 0.0
  %1519 = vmatpush.msra.mxu0 0.0
  %1520 = vmatpush.msra.mxu0 0.0
  %1521 = vmatpush.msra.mxu0 0.0
  %1522 = vmatpush.msra.mxu0 0.0
  %1523 = vmatpush.msra.mxu0 0.0
  %1524 = vmatpush.msra.mxu0 0.0
  %1525 = vmatpush.msra.mxu0 0.0
  %1526 = vmatpush.msra.mxu0 0.0
  %1527 = vmatpush.msra.mxu0 0.0
  %1528 = vmatpush.msra.mxu0 0.0
  %1529 = vmatpush.msra.mxu0 0.0
  %1530 = vmatpush.msra.mxu0 0.0
  %v1531 = vand.u32 %v486, 4294901760
  %v1532 = vsub.f32 %v486, %v1531
  %1533 = vmatpush.msra.mxu0 %v1532
  %v1534 = vand.u32 %v481, 4294901760
  %v1535 = vsub.f32 %v481, %v1534
  %1536 = vmatpush.msra.mxu0 %v1535
  %v1537 = vand.u32 %v508, 4294901760
  %v1538 = vsub.f32 %v508, %v1537
  %1539 = vmatmul.f32.gmra.mxu0 %v1538
  %v1540 = vpop.f32.mrf.mxu0
  %v1541 = vadd.f32 %v1511, %v1540
  %v1542 = vand.u32 %v511, 4294901760
  %v1543 = vsub.f32 %v511, %v1542
  %1544 = vmatmul.f32.gmra.mxu0 %v1543
  %v1545 = vpop.f32.mrf.mxu0
  %v1546 = vadd.f32 %v1515, %v1545
  %1547 = vdwg.mxu0
  %1548 = vmatpush.msra.mxu0 0.0
  %1549 = vmatpush.msra.mxu0 0.0
  %1550 = vmatpush.msra.mxu0 0.0
  %1551 = vmatpush.msra.mxu0 0.0
  %1552 = vmatpush.msra.mxu0 0.0
  %1553 = vmatpush.msra.mxu0 0.0
  %1554 = vmatpush.msra.mxu0 0.0
  %1555 = vmatpush.msra.mxu0 0.0
  %1556 = vmatpush.msra.mxu0 0.0
  %1557 = vmatpush.msra.mxu0 0.0
  %1558 = vmatpush.msra.mxu0 0.0
  %1559 = vmatpush.msra.mxu0 0.0
  %1560 = vmatpush.msra.mxu0 0.0
  %1561 = vmatpush.msra.mxu0 0.0
  %v1562 = vand.u32 %v486, 4294901760
  %1563 = vmatpush.msra.mxu0 %v1562
  %v1564 = vand.u32 %v481, 4294901760
  %1565 = vmatpush.msra.mxu0 %v1564
  %v1566 = vand.u32 %v508, 4294901760
  %v1567 = vsub.f32 %v508, %v1566
  %v1568 = vand.u32 %v1567, 4294901760
  %1569 = vmatmul.f32.gmra.mxu0 %v1568
  %v1570 = vpop.f32.mrf.mxu0
  %v1571 = vadd.f32 %v1541, %v1570
  %v1572 = vand.u32 %v511, 4294901760
  %v1573 = vsub.f32 %v511, %v1572
  %v1574 = vand.u32 %v1573, 4294901760
  %1575 = vmatmul.f32.gmra.mxu0 %v1574
  %v1576 = vpop.f32.mrf.mxu0
  %v1577 = vadd.f32 %v1546, %v1576
  %1578 = vdwg.mxu0
  %1579 = vmatpush.msra.mxu0 0.0
  %1580 = vmatpush.msra.mxu0 0.0
  %1581 = vmatpush.msra.mxu0 0.0
  %1582 = vmatpush.msra.mxu0 0.0
  %1583 = vmatpush.msra.mxu0 0.0
  %1584 = vmatpush.msra.mxu0 0.0
  %1585 = vmatpush.msra.mxu0 0.0
  %1586 = vmatpush.msra.mxu0 0.0
  %1587 = vmatpush.msra.mxu0 0.0
  %1588 = vmatpush.msra.mxu0 0.0
  %1589 = vmatpush.msra.mxu0 0.0
  %1590 = vmatpush.msra.mxu0 0.0
  %1591 = vmatpush.msra.mxu0 0.0
  %1592 = vmatpush.msra.mxu0 0.0
  %v1593 = vand.u32 %v486, 4294901760
  %v1594 = vsub.f32 %v486, %v1593
  %v1595 = vand.u32 %v1594, 4294901760
  %1596 = vmatpush.msra.mxu0 %v1595
  %v1597 = vand.u32 %v481, 4294901760
  %v1598 = vsub.f32 %v481, %v1597
  %v1599 = vand.u32 %v1598, 4294901760
  %1600 = vmatpush.msra.mxu0 %v1599
  %v1601 = vand.u32 %v508, 4294901760
  %1602 = vmatmul.f32.gmra.mxu0 %v1601
  %v1603 = vpop.f32.mrf.mxu0
  %v1604 = vadd.f32 %v1571, %v1603
  %v1605 = vand.u32 %v511, 4294901760
  %1606 = vmatmul.f32.gmra.mxu0 %v1605
  %v1607 = vpop.f32.mrf.mxu0
  %v1608 = vadd.f32 %v1577, %v1607
  %1609 = vdwg.mxu0
  %1610 = vmatpush.msra.mxu0 0.0
  %1611 = vmatpush.msra.mxu0 0.0
  %1612 = vmatpush.msra.mxu0 0.0
  %1613 = vmatpush.msra.mxu0 0.0
  %1614 = vmatpush.msra.mxu0 0.0
  %1615 = vmatpush.msra.mxu0 0.0
  %1616 = vmatpush.msra.mxu0 0.0
  %1617 = vmatpush.msra.mxu0 0.0
  %1618 = vmatpush.msra.mxu0 0.0
  %1619 = vmatpush.msra.mxu0 0.0
  %1620 = vmatpush.msra.mxu0 0.0
  %1621 = vmatpush.msra.mxu0 0.0
  %1622 = vmatpush.msra.mxu0 0.0
  %1623 = vmatpush.msra.mxu0 0.0
  %v1624 = vand.u32 %v486, 4294901760
  %1625 = vmatpush.msra.mxu0 %v1624
  %v1626 = vand.u32 %v481, 4294901760
  %1627 = vmatpush.msra.mxu0 %v1626
  %v1628 = vand.u32 %v508, 4294901760
  %1629 = vmatmul.f32.gmra.mxu0 %v1628
  %v1630 = vpop.f32.mrf.mxu0
  %v1631 = vadd.f32 %v1604, %v1630
  %v1632 = vand.u32 %v511, 4294901760
  %1633 = vmatmul.f32.gmra.mxu0 %v1632
  %v1634 = vpop.f32.mrf.mxu0
  %v1635 = vadd.f32 %v1608, %v1634
  %1636 = vdwg.mxu0
  %v1637 = vand.u32 %v440, 4294901760
  %1638 = vmatpush.msra.mxu0 %v1637
  %v1639 = vand.u32 %v435, 4294901760
  %1640 = vmatpush.msra.mxu0 %v1639
  %v1641 = vand.u32 %v393, 4294901760
  %1642 = vmatpush.msra.mxu0 %v1641
  %v1643 = vand.u32 %v388, 4294901760
  %1644 = vmatpush.msra.mxu0 %v1643
  %v1645 = vand.u32 %v346, 4294901760
  %1646 = vmatpush.msra.mxu0 %v1645
  %v1647 = vand.u32 %v341, 4294901760
  %1648 = vmatpush.msra.mxu0 %v1647
  %v1649 = vand.u32 %v299, 4294901760
  %1650 = vmatpush.msra.mxu0 %v1649
  %v1651 = vand.u32 %v294, 4294901760
  %1652 = vmatpush.msra.mxu0 %v1651
  %v1653 = vand.u32 %v252, 4294901760
  %1654 = vmatpush.msra.mxu0 %v1653
  %v1655 = vand.u32 %v247, 4294901760
  %1656 = vmatpush.msra.mxu0 %v1655
  %v1657 = vand.u32 %v205, 4294901760
  %1658 = vmatpush.msra.mxu0 %v1657
  %v1659 = vand.u32 %v200, 4294901760
  %1660 = vmatpush.msra.mxu0 %v1659
  %v1661 = vand.u32 %v158, 4294901760
  %1662 = vmatpush.msra.mxu0 %v1661
  %v1663 = vand.u32 %v153, 4294901760
  %1664 = vmatpush.msra.mxu0 %v1663
  %v1665 = vand.u32 %v101, 4294901760
  %1666 = vmatpush.msra.mxu0 %v1665
  %v1667 = vand.u32 %v96, 4294901760
  %1668 = vmatpush.msra.mxu0 %v1667
  %v1669 = vand.u32 %v502, 4294901760
  %v1670 = vsub.f32 %v502, %v1669
  %v1671 = vand.u32 %v1670, 4294901760
  %v1672 = vsub.f32 %v1670, %v1671
  %v1673 = vand.u32 %v1672, 4294901760
  %1674 = vmatmul.f32.gmra.mxu0 %v1673
  %v1675 = vpop.f32.mrf.mxu0
  %v1676 = vadd.f32 0.0, %v1675
  %v1677 = vand.u32 %v504, 4294901760
  %v1678 = vsub.f32 %v504, %v1677
  %v1679 = vand.u32 %v1678, 4294901760
  %v1680 = vsub.f32 %v1678, %v1679
  %v1681 = vand.u32 %v1680, 4294901760
  %1682 = vmatmul.f32.gmra.mxu0 %v1681
  %v1683 = vpop.f32.mrf.mxu0
  %v1684 = vadd.f32 0.0, %v1683
  %1685 = vdwg.mxu0
  %v1686 = vand.u32 %v440, 4294901760
  %v1687 = vsub.f32 %v440, %v1686
  %v1688 = vand.u32 %v1687, 4294901760
  %v1689 = vsub.f32 %v1687, %v1688
  %v1690 = vand.u32 %v1689, 4294901760
  %1691 = vmatpush.msra.mxu0 %v1690
  %v1692 = vand.u32 %v435, 4294901760
  %v1693 = vsub.f32 %v435, %v1692
  %v1694 = vand.u32 %v1693, 4294901760
  %v1695 = vsub.f32 %v1693, %v1694
  %v1696 = vand.u32 %v1695, 4294901760
  %1697 = vmatpush.msra.mxu0 %v1696
  %v1698 = vand.u32 %v393, 4294901760
  %v1699 = vsub.f32 %v393, %v1698
  %v1700 = vand.u32 %v1699, 4294901760
  %v1701 = vsub.f32 %v1699, %v1700
  %v1702 = vand.u32 %v1701, 4294901760
  %1703 = vmatpush.msra.mxu0 %v1702
  %v1704 = vand.u32 %v388, 4294901760
  %v1705 = vsub.f32 %v388, %v1704
  %v1706 = vand.u32 %v1705, 4294901760
  %v1707 = vsub.f32 %v1705, %v1706
  %v1708 = vand.u32 %v1707, 4294901760
  %1709 = vmatpush.msra.mxu0 %v1708
  %v1710 = vand.u32 %v346, 4294901760
  %v1711 = vsub.f32 %v346, %v1710
  %v1712 = vand.u32 %v1711, 4294901760
  %v1713 = vsub.f32 %v1711, %v1712
  %v1714 = vand.u32 %v1713, 4294901760
  %1715 = vmatpush.msra.mxu0 %v1714
  %v1716 = vand.u32 %v341, 4294901760
  %v1717 = vsub.f32 %v341, %v1716
  %v1718 = vand.u32 %v1717, 4294901760
  %v1719 = vsub.f32 %v1717, %v1718
  %v1720 = vand.u32 %v1719, 4294901760
  %1721 = vmatpush.msra.mxu0 %v1720
  %v1722 = vand.u32 %v299, 4294901760
  %v1723 = vsub.f32 %v299, %v1722
  %v1724 = vand.u32 %v1723, 4294901760
  %v1725 = vsub.f32 %v1723, %v1724
  %v1726 = vand.u32 %v1725, 4294901760
  %1727 = vmatpush.msra.mxu0 %v1726
  %v1728 = vand.u32 %v294, 4294901760
  %v1729 = vsub.f32 %v294, %v1728
  %v1730 = vand.u32 %v1729, 4294901760
  %v1731 = vsub.f32 %v1729, %v1730
  %v1732 = vand.u32 %v1731, 4294901760
  %1733 = vmatpush.msra.mxu0 %v1732
  %v1734 = vand.u32 %v252, 4294901760
  %v1735 = vsub.f32 %v252, %v1734
  %v1736 = vand.u32 %v1735, 4294901760
  %v1737 = vsub.f32 %v1735, %v1736
  %v1738 = vand.u32 %v1737, 4294901760
  %1739 = vmatpush.msra.mxu0 %v1738
  %v1740 = vand.u32 %v247, 4294901760
  %v1741 = vsub.f32 %v247, %v1740
  %v1742 = vand.u32 %v1741, 4294901760
  %v1743 = vsub.f32 %v1741, %v1742
  %v1744 = vand.u32 %v1743, 4294901760
  %1745 = vmatpush.msra.mxu0 %v1744
  %v1746 = vand.u32 %v205, 4294901760
  %v1747 = vsub.f32 %v205, %v1746
  %v1748 = vand.u32 %v1747, 4294901760
  %v1749 = vsub.f32 %v1747, %v1748
  %v1750 = vand.u32 %v1749, 4294901760
  %1751 = vmatpush.msra.mxu0 %v1750
  %v1752 = vand.u32 %v200, 4294901760
  %v1753 = vsub.f32 %v200, %v1752
  %v1754 = vand.u32 %v1753, 4294901760
  %v1755 = vsub.f32 %v1753, %v1754
  %v1756 = vand.u32 %v1755, 4294901760
  %1757 = vmatpush.msra.mxu0 %v1756
  %v1758 = vand.u32 %v158, 4294901760
  %v1759 = vsub.f32 %v158, %v1758
  %v1760 = vand.u32 %v1759, 4294901760
  %v1761 = vsub.f32 %v1759, %v1760
  %v1762 = vand.u32 %v1761, 4294901760
  %1763 = vmatpush.msra.mxu0 %v1762
  %v1764 = vand.u32 %v153, 4294901760
  %v1765 = vsub.f32 %v153, %v1764
  %v1766 = vand.u32 %v1765, 4294901760
  %v1767 = vsub.f32 %v1765, %v1766
  %v1768 = vand.u32 %v1767, 4294901760
  %1769 = vmatpush.msra.mxu0 %v1768
  %v1770 = vand.u32 %v101, 4294901760
  %v1771 = vsub.f32 %v101, %v1770
  %v1772 = vand.u32 %v1771, 4294901760
  %v1773 = vsub.f32 %v1771, %v1772
  %v1774 = vand.u32 %v1773, 4294901760
  %1775 = vmatpush.msra.mxu0 %v1774
  %v1776 = vand.u32 %v96, 4294901760
  %v1777 = vsub.f32 %v96, %v1776
  %v1778 = vand.u32 %v1777, 4294901760
  %v1779 = vsub.f32 %v1777, %v1778
  %v1780 = vand.u32 %v1779, 4294901760
  %1781 = vmatpush.msra.mxu0 %v1780
  %v1782 = vand.u32 %v502, 4294901760
  %1783 = vmatmul.f32.gmra.mxu0 %v1782
  %v1784 = vpop.f32.mrf.mxu0
  %v1785 = vadd.f32 %v1676, %v1784
  %v1786 = vand.u32 %v504, 4294901760
  %1787 = vmatmul.f32.gmra.mxu0 %v1786
  %v1788 = vpop.f32.mrf.mxu0
  %v1789 = vadd.f32 %v1684, %v1788
  %1790 = vdwg.mxu0
  %v1791 = vand.u32 %v440, 4294901760
  %v1792 = vsub.f32 %v440, %v1791
  %1793 = vmatpush.msra.mxu0 %v1792
  %v1794 = vand.u32 %v435, 4294901760
  %v1795 = vsub.f32 %v435, %v1794
  %1796 = vmatpush.msra.mxu0 %v1795
  %v1797 = vand.u32 %v393, 4294901760
  %v1798 = vsub.f32 %v393, %v1797
  %1799 = vmatpush.msra.mxu0 %v1798
  %v1800 = vand.u32 %v388, 4294901760
  %v1801 = vsub.f32 %v388, %v1800
  %1802 = vmatpush.msra.mxu0 %v1801
  %v1803 = vand.u32 %v346, 4294901760
  %v1804 = vsub.f32 %v346, %v1803
  %1805 = vmatpush.msra.mxu0 %v1804
  %v1806 = vand.u32 %v341, 4294901760
  %v1807 = vsub.f32 %v341, %v1806
  %1808 = vmatpush.msra.mxu0 %v1807
  %v1809 = vand.u32 %v299, 4294901760
  %v1810 = vsub.f32 %v299, %v1809
  %1811 = vmatpush.msra.mxu0 %v1810
  %v1812 = vand.u32 %v294, 4294901760
  %v1813 = vsub.f32 %v294, %v1812
  %1814 = vmatpush.msra.mxu0 %v1813
  %v1815 = vand.u32 %v252, 4294901760
  %v1816 = vsub.f32 %v252, %v1815
  %1817 = vmatpush.msra.mxu0 %v1816
  %v1818 = vand.u32 %v247, 4294901760
  %v1819 = vsub.f32 %v247, %v1818
  %1820 = vmatpush.msra.mxu0 %v1819
  %v1821 = vand.u32 %v205, 4294901760
  %v1822 = vsub.f32 %v205, %v1821
  %1823 = vmatpush.msra.mxu0 %v1822
  %v1824 = vand.u32 %v200, 4294901760
  %v1825 = vsub.f32 %v200, %v1824
  %1826 = vmatpush.msra.mxu0 %v1825
  %v1827 = vand.u32 %v158, 4294901760
  %v1828 = vsub.f32 %v158, %v1827
  %1829 = vmatpush.msra.mxu0 %v1828
  %v1830 = vand.u32 %v153, 4294901760
  %v1831 = vsub.f32 %v153, %v1830
  %1832 = vmatpush.msra.mxu0 %v1831
  %v1833 = vand.u32 %v101, 4294901760
  %v1834 = vsub.f32 %v101, %v1833
  %1835 = vmatpush.msra.mxu0 %v1834
  %v1836 = vand.u32 %v96, 4294901760
  %v1837 = vsub.f32 %v96, %v1836
  %1838 = vmatpush.msra.mxu0 %v1837
  %v1839 = vand.u32 %v502, 4294901760
  %v1840 = vsub.f32 %v502, %v1839
  %1841 = vmatmul.f32.gmra.mxu0 %v1840
  %v1842 = vpop.f32.mrf.mxu0
  %v1843 = vadd.f32 %v1785, %v1842
  %v1844 = vand.u32 %v504, 4294901760
  %v1845 = vsub.f32 %v504, %v1844
  %1846 = vmatmul.f32.gmra.mxu0 %v1845
  %v1847 = vpop.f32.mrf.mxu0
  %v1848 = vadd.f32 %v1789, %v1847
  %1849 = vdwg.mxu0
  %v1850 = vand.u32 %v440, 4294901760
  %1851 = vmatpush.msra.mxu0 %v1850
  %v1852 = vand.u32 %v435, 4294901760
  %1853 = vmatpush.msra.mxu0 %v1852
  %v1854 = vand.u32 %v393, 4294901760
  %1855 = vmatpush.msra.mxu0 %v1854
  %v1856 = vand.u32 %v388, 4294901760
  %1857 = vmatpush.msra.mxu0 %v1856
  %v1858 = vand.u32 %v346, 4294901760
  %1859 = vmatpush.msra.mxu0 %v1858
  %v1860 = vand.u32 %v341, 4294901760
  %1861 = vmatpush.msra.mxu0 %v1860
  %v1862 = vand.u32 %v299, 4294901760
  %1863 = vmatpush.msra.mxu0 %v1862
  %v1864 = vand.u32 %v294, 4294901760
  %1865 = vmatpush.msra.mxu0 %v1864
  %v1866 = vand.u32 %v252, 4294901760
  %1867 = vmatpush.msra.mxu0 %v1866
  %v1868 = vand.u32 %v247, 4294901760
  %1869 = vmatpush.msra.mxu0 %v1868
  %v1870 = vand.u32 %v205, 4294901760
  %1871 = vmatpush.msra.mxu0 %v1870
  %v1872 = vand.u32 %v200, 4294901760
  %1873 = vmatpush.msra.mxu0 %v1872
  %v1874 = vand.u32 %v158, 4294901760
  %1875 = vmatpush.msra.mxu0 %v1874
  %v1876 = vand.u32 %v153, 4294901760
  %1877 = vmatpush.msra.mxu0 %v1876
  %v1878 = vand.u32 %v101, 4294901760
  %1879 = vmatpush.msra.mxu0 %v1878
  %v1880 = vand.u32 %v96, 4294901760
  %1881 = vmatpush.msra.mxu0 %v1880
  %v1882 = vand.u32 %v502, 4294901760
  %v1883 = vsub.f32 %v502, %v1882
  %v1884 = vand.u32 %v1883, 4294901760
  %1885 = vmatmul.f32.gmra.mxu0 %v1884
  %v1886 = vpop.f32.mrf.mxu0
  %v1887 = vadd.f32 %v1843, %v1886
  %v1888 = vand.u32 %v504, 4294901760
  %v1889 = vsub.f32 %v504, %v1888
  %v1890 = vand.u32 %v1889, 4294901760
  %1891 = vmatmul.f32.gmra.mxu0 %v1890
  %v1892 = vpop.f32.mrf.mxu0
  %v1893 = vadd.f32 %v1848, %v1892
  %1894 = vdwg.mxu0
  %v1895 = vand.u32 %v440, 4294901760
  %v1896 = vsub.f32 %v440, %v1895
  %v1897 = vand.u32 %v1896, 4294901760
  %1898 = vmatpush.msra.mxu0 %v1897
  %v1899 = vand.u32 %v435, 4294901760
  %v1900 = vsub.f32 %v435, %v1899
  %v1901 = vand.u32 %v1900, 4294901760
  %1902 = vmatpush.msra.mxu0 %v1901
  %v1903 = vand.u32 %v393, 4294901760
  %v1904 = vsub.f32 %v393, %v1903
  %v1905 = vand.u32 %v1904, 4294901760
  %1906 = vmatpush.msra.mxu0 %v1905
  %v1907 = vand.u32 %v388, 4294901760
  %v1908 = vsub.f32 %v388, %v1907
  %v1909 = vand.u32 %v1908, 4294901760
  %1910 = vmatpush.msra.mxu0 %v1909
  %v1911 = vand.u32 %v346, 4294901760
  %v1912 = vsub.f32 %v346, %v1911
  %v1913 = vand.u32 %v1912, 4294901760
  %1914 = vmatpush.msra.mxu0 %v1913
  %v1915 = vand.u32 %v341, 4294901760
  %v1916 = vsub.f32 %v341, %v1915
  %v1917 = vand.u32 %v1916, 4294901760
  %1918 = vmatpush.msra.mxu0 %v1917
  %v1919 = vand.u32 %v299, 4294901760
  %v1920 = vsub.f32 %v299, %v1919
  %v1921 = vand.u32 %v1920, 4294901760
  %1922 = vmatpush.msra.mxu0 %v1921
  %v1923 = vand.u32 %v294, 4294901760
  %v1924 = vsub.f32 %v294, %v1923
  %v1925 = vand.u32 %v1924, 4294901760
  %1926 = vmatpush.msra.mxu0 %v1925
  %v1927 = vand.u32 %v252, 4294901760
  %v1928 = vsub.f32 %v252, %v1927
  %v1929 = vand.u32 %v1928, 4294901760
  %1930 = vmatpush.msra.mxu0 %v1929
  %v1931 = vand.u32 %v247, 4294901760
  %v1932 = vsub.f32 %v247, %v1931
  %v1933 = vand.u32 %v1932, 4294901760
  %1934 = vmatpush.msra.mxu0 %v1933
  %v1935 = vand.u32 %v205, 4294901760
  %v1936 = vsub.f32 %v205, %v1935
  %v1937 = vand.u32 %v1936, 4294901760
  %1938 = vmatpush.msra.mxu0 %v1937
  %v1939 = vand.u32 %v200, 4294901760
  %v1940 = vsub.f32 %v200, %v1939
  %v1941 = vand.u32 %v1940, 4294901760
  %1942 = vmatpush.msra.mxu0 %v1941
  %v1943 = vand.u32 %v158, 4294901760
  %v1944 = vsub.f32 %v158, %v1943
  %v1945 = vand.u32 %v1944, 4294901760
  %1946 = vmatpush.msra.mxu0 %v1945
  %v1947 = vand.u32 %v153, 4294901760
  %v1948 = vsub.f32 %v153, %v1947
  %v1949 = vand.u32 %v1948, 4294901760
  %1950 = vmatpush.msra.mxu0 %v1949
  %v1951 = vand.u32 %v101, 4294901760
  %v1952 = vsub.f32 %v101, %v1951
  %v1953 = vand.u32 %v1952, 4294901760
  %1954 = vmatpush.msra.mxu0 %v1953
  %v1955 = vand.u32 %v96, 4294901760
  %v1956 = vsub.f32 %v96, %v1955
  %v1957 = vand.u32 %v1956, 4294901760
  %1958 = vmatpush.msra.mxu0 %v1957
  %v1959 = vand.u32 %v502, 4294901760
  %1960 = vmatmul.f32.gmra.mxu0 %v1959
  %v1961 = vpop.f32.mrf.mxu0
  %v1962 = vadd.f32 %v1887, %v1961
  %v1963 = vand.u32 %v504, 4294901760
  %1964 = vmatmul.f32.gmra.mxu0 %v1963
  %v1965 = vpop.f32.mrf.mxu0
  %v1966 = vadd.f32 %v1893, %v1965
  %1967 = vdwg.mxu0
  %v1968 = vand.u32 %v440, 4294901760
  %1969 = vmatpush.msra.mxu0 %v1968
  %v1970 = vand.u32 %v435, 4294901760
  %1971 = vmatpush.msra.mxu0 %v1970
  %v1972 = vand.u32 %v393, 4294901760
  %1973 = vmatpush.msra.mxu0 %v1972
  %v1974 = vand.u32 %v388, 4294901760
  %1975 = vmatpush.msra.mxu0 %v1974
  %v1976 = vand.u32 %v346, 4294901760
  %1977 = vmatpush.msra.mxu0 %v1976
  %v1978 = vand.u32 %v341, 4294901760
  %1979 = vmatpush.msra.mxu0 %v1978
  %v1980 = vand.u32 %v299, 4294901760
  %1981 = vmatpush.msra.mxu0 %v1980
  %v1982 = vand.u32 %v294, 4294901760
  %1983 = vmatpush.msra.mxu0 %v1982
  %v1984 = vand.u32 %v252, 4294901760
  %1985 = vmatpush.msra.mxu0 %v1984
  %v1986 = vand.u32 %v247, 4294901760
  %1987 = vmatpush.msra.mxu0 %v1986
  %v1988 = vand.u32 %v205, 4294901760
  %1989 = vmatpush.msra.mxu0 %v1988
  %v1990 = vand.u32 %v200, 4294901760
  %1991 = vmatpush.msra.mxu0 %v1990
  %v1992 = vand.u32 %v158, 4294901760
  %1993 = vmatpush.msra.mxu0 %v1992
  %v1994 = vand.u32 %v153, 4294901760
  %1995 = vmatpush.msra.mxu0 %v1994
  %v1996 = vand.u32 %v101, 4294901760
  %1997 = vmatpush.msra.mxu0 %v1996
  %v1998 = vand.u32 %v96, 4294901760
  %1999 = vmatpush.msra.mxu0 %v1998
  %v2000 = vand.u32 %v502, 4294901760
  %2001 = vmatmul.f32.gmra.mxu0 %v2000
  %v2002 = vpop.f32.mrf.mxu0
  %v2003 = vadd.f32 %v1962, %v2002
  %v2004 = vand.u32 %v504, 4294901760
  %2005 = vmatmul.f32.gmra.mxu0 %v2004
  %v2006 = vpop.f32.mrf.mxu0
  %v2007 = vadd.f32 %v1966, %v2006
  %2008 = vdwg.mxu0
  %2009 = vmatpush.msra.mxu0 0.0
  %2010 = vmatpush.msra.mxu0 0.0
  %2011 = vmatpush.msra.mxu0 0.0
  %2012 = vmatpush.msra.mxu0 0.0
  %2013 = vmatpush.msra.mxu0 0.0
  %2014 = vmatpush.msra.mxu0 0.0
  %2015 = vmatpush.msra.mxu0 0.0
  %2016 = vmatpush.msra.mxu0 0.0
  %2017 = vmatpush.msra.mxu0 0.0
  %2018 = vmatpush.msra.mxu0 0.0
  %2019 = vmatpush.msra.mxu0 0.0
  %2020 = vmatpush.msra.mxu0 0.0
  %2021 = vmatpush.msra.mxu0 0.0
  %2022 = vmatpush.msra.mxu0 0.0
  %v2023 = vand.u32 %v487, 4294901760
  %2024 = vmatpush.msra.mxu0 %v2023
  %v2025 = vand.u32 %v482, 4294901760
  %2026 = vmatpush.msra.mxu0 %v2025
  %v2027 = vand.u32 %v508, 4294901760
  %v2028 = vsub.f32 %v508, %v2027
  %v2029 = vand.u32 %v2028, 4294901760
  %v2030 = vsub.f32 %v2028, %v2029
  %v2031 = vand.u32 %v2030, 4294901760
  %2032 = vmatmul.f32.gmra.mxu0 %v2031
  %v2033 = vpop.f32.mrf.mxu0
  %v2034 = vadd.f32 %v2003, %v2033
  %v2035 = vand.u32 %v511, 4294901760
  %v2036 = vsub.f32 %v511, %v2035
  %v2037 = vand.u32 %v2036, 4294901760
  %v2038 = vsub.f32 %v2036, %v2037
  %v2039 = vand.u32 %v2038, 4294901760
  %2040 = vmatmul.f32.gmra.mxu0 %v2039
  %v2041 = vpop.f32.mrf.mxu0
  %v2042 = vadd.f32 %v2007, %v2041
  %2043 = vdwg.mxu0
  %2044 = vmatpush.msra.mxu0 0.0
  %2045 = vmatpush.msra.mxu0 0.0
  %2046 = vmatpush.msra.mxu0 0.0
  %2047 = vmatpush.msra.mxu0 0.0
  %2048 = vmatpush.msra.mxu0 0.0
  %2049 = vmatpush.msra.mxu0 0.0
  %2050 = vmatpush.msra.mxu0 0.0
  %2051 = vmatpush.msra.mxu0 0.0
  %2052 = vmatpush.msra.mxu0 0.0
  %2053 = vmatpush.msra.mxu0 0.0
  %2054 = vmatpush.msra.mxu0 0.0
  %2055 = vmatpush.msra.mxu0 0.0
  %2056 = vmatpush.msra.mxu0 0.0
  %2057 = vmatpush.msra.mxu0 0.0
  %v2058 = vand.u32 %v487, 4294901760
  %v2059 = vsub.f32 %v487, %v2058
  %v2060 = vand.u32 %v2059, 4294901760
  %v2061 = vsub.f32 %v2059, %v2060
  %v2062 = vand.u32 %v2061, 4294901760
  %2063 = vmatpush.msra.mxu0 %v2062
  %v2064 = vand.u32 %v482, 4294901760
  %v2065 = vsub.f32 %v482, %v2064
  %v2066 = vand.u32 %v2065, 4294901760
  %v2067 = vsub.f32 %v2065, %v2066
  %v2068 = vand.u32 %v2067, 4294901760
  %2069 = vmatpush.msra.mxu0 %v2068
  %v2070 = vand.u32 %v508, 4294901760
  %2071 = vmatmul.f32.gmra.mxu0 %v2070
  %v2072 = vpop.f32.mrf.mxu0
  %v2073 = vadd.f32 %v2034, %v2072
  %v2074 = vand.u32 %v511, 4294901760
  %2075 = vmatmul.f32.gmra.mxu0 %v2074
  %v2076 = vpop.f32.mrf.mxu0
  %v2077 = vadd.f32 %v2042, %v2076
  %2078 = vdwg.mxu0
  %2079 = vmatpush.msra.mxu0 0.0
  %2080 = vmatpush.msra.mxu0 0.0
  %2081 = vmatpush.msra.mxu0 0.0
  %2082 = vmatpush.msra.mxu0 0.0
  %2083 = vmatpush.msra.mxu0 0.0
  %2084 = vmatpush.msra.mxu0 0.0
  %2085 = vmatpush.msra.mxu0 0.0
  %2086 = vmatpush.msra.mxu0 0.0
  %2087 = vmatpush.msra.mxu0 0.0
  %2088 = vmatpush.msra.mxu0 0.0
  %2089 = vmatpush.msra.mxu0 0.0
  %2090 = vmatpush.msra.mxu0 0.0
  %2091 = vmatpush.msra.mxu0 0.0
  %2092 = vmatpush.msra.mxu0 0.0
  %v2093 = vand.u32 %v487, 4294901760
  %v2094 = vsub.f32 %v487, %v2093
  %2095 = vmatpush.msra.mxu0 %v2094
  %v2096 = vand.u32 %v482, 4294901760
  %v2097 = vsub.f32 %v482, %v2096
  %2098 = vmatpush.msra.mxu0 %v2097
  %v2099 = vand.u32 %v508, 4294901760
  %v2100 = vsub.f32 %v508, %v2099
  %2101 = vmatmul.f32.gmra.mxu0 %v2100
  %v2102 = vpop.f32.mrf.mxu0
  %v2103 = vadd.f32 %v2073, %v2102
  %v2104 = vand.u32 %v511, 4294901760
  %v2105 = vsub.f32 %v511, %v2104
  %2106 = vmatmul.f32.gmra.mxu0 %v2105
  %v2107 = vpop.f32.mrf.mxu0
  %v2108 = vadd.f32 %v2077, %v2107
  %2109 = vdwg.mxu0
  %2110 = vmatpush.msra.mxu0 0.0
  %2111 = vmatpush.msra.mxu0 0.0
  %2112 = vmatpush.msra.mxu0 0.0
  %2113 = vmatpush.msra.mxu0 0.0
  %2114 = vmatpush.msra.mxu0 0.0
  %2115 = vmatpush.msra.mxu0 0.0
  %2116 = vmatpush.msra.mxu0 0.0
  %2117 = vmatpush.msra.mxu0 0.0
  %2118 = vmatpush.msra.mxu0 0.0
  %2119 = vmatpush.msra.mxu0 0.0
  %2120 = vmatpush.msra.mxu0 0.0
  %2121 = vmatpush.msra.mxu0 0.0
  %2122 = vmatpush.msra.mxu0 0.0
  %2123 = vmatpush.msra.mxu0 0.0
  %v2124 = vand.u32 %v487, 4294901760
  %2125 = vmatpush.msra.mxu0 %v2124
  %v2126 = vand.u32 %v482, 4294901760
  %2127 = vmatpush.msra.mxu0 %v2126
  %v2128 = vand.u32 %v508, 4294901760
  %v2129 = vsub.f32 %v508, %v2128
  %v2130 = vand.u32 %v2129, 4294901760
  %2131 = vmatmul.f32.gmra.mxu0 %v2130
  %v2132 = vpop.f32.mrf.mxu0
  %v2133 = vadd.f32 %v2103, %v2132
  %v2134 = vand.u32 %v511, 4294901760
  %v2135 = vsub.f32 %v511, %v2134
  %v2136 = vand.u32 %v2135, 4294901760
  %2137 = vmatmul.f32.gmra.mxu0 %v2136
  %v2138 = vpop.f32.mrf.mxu0
  %v2139 = vadd.f32 %v2108, %v2138
  %2140 = vdwg.mxu0
  %2141 = vmatpush.msra.mxu0 0.0
  %2142 = vmatpush.msra.mxu0 0.0
  %2143 = vmatpush.msra.mxu0 0.0
  %2144 = vmatpush.msra.mxu0 0.0
  %2145 = vmatpush.msra.mxu0 0.0
  %2146 = vmatpush.msra.mxu0 0.0
  %2147 = vmatpush.msra.mxu0 0.0
  %2148 = vmatpush.msra.mxu0 0.0
  %2149 = vmatpush.msra.mxu0 0.0
  %2150 = vmatpush.msra.mxu0 0.0
  %2151 = vmatpush.msra.mxu0 0.0
  %2152 = vmatpush.msra.mxu0 0.0
  %2153 = vmatpush.msra.mxu0 0.0
  %2154 = vmatpush.msra.mxu0 0.0
  %v2155 = vand.u32 %v487, 4294901760
  %v2156 = vsub.f32 %v487, %v2155
  %v2157 = vand.u32 %v2156, 4294901760
  %2158 = vmatpush.msra.mxu0 %v2157
  %v2159 = vand.u32 %v482, 4294901760
  %v2160 = vsub.f32 %v482, %v2159
  %v2161 = vand.u32 %v2160, 4294901760
  %2162 = vmatpush.msra.mxu0 %v2161
  %v2163 = vand.u32 %v508, 4294901760
  %2164 = vmatmul.f32.gmra.mxu0 %v2163
  %v2165 = vpop.f32.mrf.mxu0
  %v2166 = vadd.f32 %v2133, %v2165
  %v2167 = vand.u32 %v511, 4294901760
  %2168 = vmatmul.f32.gmra.mxu0 %v2167
  %v2169 = vpop.f32.mrf.mxu0
  %v2170 = vadd.f32 %v2139, %v2169
  %2171 = vdwg.mxu0
  %2172 = vmatpush.msra.mxu0 0.0
  %2173 = vmatpush.msra.mxu0 0.0
  %2174 = vmatpush.msra.mxu0 0.0
  %2175 = vmatpush.msra.mxu0 0.0
  %2176 = vmatpush.msra.mxu0 0.0
  %2177 = vmatpush.msra.mxu0 0.0
  %2178 = vmatpush.msra.mxu0 0.0
  %2179 = vmatpush.msra.mxu0 0.0
  %2180 = vmatpush.msra.mxu0 0.0
  %2181 = vmatpush.msra.mxu0 0.0
  %2182 = vmatpush.msra.mxu0 0.0
  %2183 = vmatpush.msra.mxu0 0.0
  %2184 = vmatpush.msra.mxu0 0.0
  %2185 = vmatpush.msra.mxu0 0.0
  %v2186 = vand.u32 %v487, 4294901760
  %2187 = vmatpush.msra.mxu0 %v2186
  %v2188 = vand.u32 %v482, 4294901760
  %2189 = vmatpush.msra.mxu0 %v2188
  %v2190 = vand.u32 %v508, 4294901760
  %2191 = vmatmul.f32.gmra.mxu0 %v2190
  %v2192 = vpop.f32.mrf.mxu0
  %v2193 = vadd.f32 %v2166, %v2192
  %v2194 = vand.u32 %v511, 4294901760
  %2195 = vmatmul.f32.gmra.mxu0 %v2194
  %v2196 = vpop.f32.mrf.mxu0
  %v2197 = vadd.f32 %v2170, %v2196
  %2198 = vdwg.mxu0
  %v2199 = vand.u32 %v441, 4294901760
  %2200 = vmatpush.msra.mxu0 %v2199
  %v2201 = vand.u32 %v436, 4294901760
  %2202 = vmatpush.msra.mxu0 %v2201
  %v2203 = vand.u32 %v394, 4294901760
  %2204 = vmatpush.msra.mxu0 %v2203
  %v2205 = vand.u32 %v389, 4294901760
  %2206 = vmatpush.msra.mxu0 %v2205
  %v2207 = vand.u32 %v347, 4294901760
  %2208 = vmatpush.msra.mxu0 %v2207
  %v2209 = vand.u32 %v342, 4294901760
  %2210 = vmatpush.msra.mxu0 %v2209
  %v2211 = vand.u32 %v300, 4294901760
  %2212 = vmatpush.msra.mxu0 %v2211
  %v2213 = vand.u32 %v295, 4294901760
  %2214 = vmatpush.msra.mxu0 %v2213
  %v2215 = vand.u32 %v253, 4294901760
  %2216 = vmatpush.msra.mxu0 %v2215
  %v2217 = vand.u32 %v248, 4294901760
  %2218 = vmatpush.msra.mxu0 %v2217
  %v2219 = vand.u32 %v206, 4294901760
  %2220 = vmatpush.msra.mxu0 %v2219
  %v2221 = vand.u32 %v201, 4294901760
  %2222 = vmatpush.msra.mxu0 %v2221
  %v2223 = vand.u32 %v159, 4294901760
  %2224 = vmatpush.msra.mxu0 %v2223
  %v2225 = vand.u32 %v154, 4294901760
  %2226 = vmatpush.msra.mxu0 %v2225
  %v2227 = vand.u32 %v102, 4294901760
  %2228 = vmatpush.msra.mxu0 %v2227
  %v2229 = vand.u32 %v97, 4294901760
  %2230 = vmatpush.msra.mxu0 %v2229
  %v2231 = vand.u32 %v502, 4294901760
  %v2232 = vsub.f32 %v502, %v2231
  %v2233 = vand.u32 %v2232, 4294901760
  %v2234 = vsub.f32 %v2232, %v2233
  %v2235 = vand.u32 %v2234, 4294901760
  %2236 = vmatmul.f32.gmra.mxu0 %v2235
  %v2237 = vpop.f32.mrf.mxu0
  %v2238 = vadd.f32 0.0, %v2237
  %v2239 = vand.u32 %v504, 4294901760
  %v2240 = vsub.f32 %v504, %v2239
  %v2241 = vand.u32 %v2240, 4294901760
  %v2242 = vsub.f32 %v2240, %v2241
  %v2243 = vand.u32 %v2242, 4294901760
  %2244 = vmatmul.f32.gmra.mxu0 %v2243
  %v2245 = vpop.f32.mrf.mxu0
  %v2246 = vadd.f32 0.0, %v2245
  %2247 = vdwg.mxu0
  %v2248 = vand.u32 %v441, 4294901760
  %v2249 = vsub.f32 %v441, %v2248
  %v2250 = vand.u32 %v2249, 4294901760
  %v2251 = vsub.f32 %v2249, %v2250
  %v2252 = vand.u32 %v2251, 4294901760
  %2253 = vmatpush.msra.mxu0 %v2252
  %v2254 = vand.u32 %v436, 4294901760
  %v2255 = vsub.f32 %v436, %v2254
  %v2256 = vand.u32 %v2255, 4294901760
  %v2257 = vsub.f32 %v2255, %v2256
  %v2258 = vand.u32 %v2257, 4294901760
  %2259 = vmatpush.msra.mxu0 %v2258
  %v2260 = vand.u32 %v394, 4294901760
  %v2261 = vsub.f32 %v394, %v2260
  %v2262 = vand.u32 %v2261, 4294901760
  %v2263 = vsub.f32 %v2261, %v2262
  %v2264 = vand.u32 %v2263, 4294901760
  %2265 = vmatpush.msra.mxu0 %v2264
  %v2266 = vand.u32 %v389, 4294901760
  %v2267 = vsub.f32 %v389, %v2266
  %v2268 = vand.u32 %v2267, 4294901760
  %v2269 = vsub.f32 %v2267, %v2268
  %v2270 = vand.u32 %v2269, 4294901760
  %2271 = vmatpush.msra.mxu0 %v2270
  %v2272 = vand.u32 %v347, 4294901760
  %v2273 = vsub.f32 %v347, %v2272
  %v2274 = vand.u32 %v2273, 4294901760
  %v2275 = vsub.f32 %v2273, %v2274
  %v2276 = vand.u32 %v2275, 4294901760
  %2277 = vmatpush.msra.mxu0 %v2276
  %v2278 = vand.u32 %v342, 4294901760
  %v2279 = vsub.f32 %v342, %v2278
  %v2280 = vand.u32 %v2279, 4294901760
  %v2281 = vsub.f32 %v2279, %v2280
  %v2282 = vand.u32 %v2281, 4294901760
  %2283 = vmatpush.msra.mxu0 %v2282
  %v2284 = vand.u32 %v300, 4294901760
  %v2285 = vsub.f32 %v300, %v2284
  %v2286 = vand.u32 %v2285, 4294901760
  %v2287 = vsub.f32 %v2285, %v2286
  %v2288 = vand.u32 %v2287, 4294901760
  %2289 = vmatpush.msra.mxu0 %v2288
  %v2290 = vand.u32 %v295, 4294901760
  %v2291 = vsub.f32 %v295, %v2290
  %v2292 = vand.u32 %v2291, 4294901760
  %v2293 = vsub.f32 %v2291, %v2292
  %v2294 = vand.u32 %v2293, 4294901760
  %2295 = vmatpush.msra.mxu0 %v2294
  %v2296 = vand.u32 %v253, 4294901760
  %v2297 = vsub.f32 %v253, %v2296
  %v2298 = vand.u32 %v2297, 4294901760
  %v2299 = vsub.f32 %v2297, %v2298
  %v2300 = vand.u32 %v2299, 4294901760
  %2301 = vmatpush.msra.mxu0 %v2300
  %v2302 = vand.u32 %v248, 4294901760
  %v2303 = vsub.f32 %v248, %v2302
  %v2304 = vand.u32 %v2303, 4294901760
  %v2305 = vsub.f32 %v2303, %v2304
  %v2306 = vand.u32 %v2305, 4294901760
  %2307 = vmatpush.msra.mxu0 %v2306
  %v2308 = vand.u32 %v206, 4294901760
  %v2309 = vsub.f32 %v206, %v2308
  %v2310 = vand.u32 %v2309, 4294901760
  %v2311 = vsub.f32 %v2309, %v2310
  %v2312 = vand.u32 %v2311, 4294901760
  %2313 = vmatpush.msra.mxu0 %v2312
  %v2314 = vand.u32 %v201, 4294901760
  %v2315 = vsub.f32 %v201, %v2314
  %v2316 = vand.u32 %v2315, 4294901760
  %v2317 = vsub.f32 %v2315, %v2316
  %v2318 = vand.u32 %v2317, 4294901760
  %2319 = vmatpush.msra.mxu0 %v2318
  %v2320 = vand.u32 %v159, 4294901760
  %v2321 = vsub.f32 %v159, %v2320
  %v2322 = vand.u32 %v2321, 4294901760
  %v2323 = vsub.f32 %v2321, %v2322
  %v2324 = vand.u32 %v2323, 4294901760
  %2325 = vmatpush.msra.mxu0 %v2324
  %v2326 = vand.u32 %v154, 4294901760
  %v2327 = vsub.f32 %v154, %v2326
  %v2328 = vand.u32 %v2327, 4294901760
  %v2329 = vsub.f32 %v2327, %v2328
  %v2330 = vand.u32 %v2329, 4294901760
  %2331 = vmatpush.msra.mxu0 %v2330
  %v2332 = vand.u32 %v102, 4294901760
  %v2333 = vsub.f32 %v102, %v2332
  %v2334 = vand.u32 %v2333, 4294901760
  %v2335 = vsub.f32 %v2333, %v2334
  %v2336 = vand.u32 %v2335, 4294901760
  %2337 = vmatpush.msra.mxu0 %v2336
  %v2338 = vand.u32 %v97, 4294901760
  %v2339 = vsub.f32 %v97, %v2338
  %v2340 = vand.u32 %v2339, 4294901760
  %v2341 = vsub.f32 %v2339, %v2340
  %v2342 = vand.u32 %v2341, 4294901760
  %2343 = vmatpush.msra.mxu0 %v2342
  %v2344 = vand.u32 %v502, 4294901760
  %2345 = vmatmul.f32.gmra.mxu0 %v2344
  %v2346 = vpop.f32.mrf.mxu0
  %v2347 = vadd.f32 %v2238, %v2346
  %v2348 = vand.u32 %v504, 4294901760
  %2349 = vmatmul.f32.gmra.mxu0 %v2348
  %v2350 = vpop.f32.mrf.mxu0
  %v2351 = vadd.f32 %v2246, %v2350
  %2352 = vdwg.mxu0
  %v2353 = vand.u32 %v441, 4294901760
  %v2354 = vsub.f32 %v441, %v2353
  %2355 = vmatpush.msra.mxu0 %v2354
  %v2356 = vand.u32 %v436, 4294901760
  %v2357 = vsub.f32 %v436, %v2356
  %2358 = vmatpush.msra.mxu0 %v2357
  %v2359 = vand.u32 %v394, 4294901760
  %v2360 = vsub.f32 %v394, %v2359
  %2361 = vmatpush.msra.mxu0 %v2360
  %v2362 = vand.u32 %v389, 4294901760
  %v2363 = vsub.f32 %v389, %v2362
  %2364 = vmatpush.msra.mxu0 %v2363
  %v2365 = vand.u32 %v347, 4294901760
  %v2366 = vsub.f32 %v347, %v2365
  %2367 = vmatpush.msra.mxu0 %v2366
  %v2368 = vand.u32 %v342, 4294901760
  %v2369 = vsub.f32 %v342, %v2368
  %2370 = vmatpush.msra.mxu0 %v2369
  %v2371 = vand.u32 %v300, 4294901760
  %v2372 = vsub.f32 %v300, %v2371
  %2373 = vmatpush.msra.mxu0 %v2372
  %v2374 = vand.u32 %v295, 4294901760
  %v2375 = vsub.f32 %v295, %v2374
  %2376 = vmatpush.msra.mxu0 %v2375
  %v2377 = vand.u32 %v253, 4294901760
  %v2378 = vsub.f32 %v253, %v2377
  %2379 = vmatpush.msra.mxu0 %v2378
  %v2380 = vand.u32 %v248, 4294901760
  %v2381 = vsub.f32 %v248, %v2380
  %2382 = vmatpush.msra.mxu0 %v2381
  %v2383 = vand.u32 %v206, 4294901760
  %v2384 = vsub.f32 %v206, %v2383
  %2385 = vmatpush.msra.mxu0 %v2384
  %v2386 = vand.u32 %v201, 4294901760
  %v2387 = vsub.f32 %v201, %v2386
  %2388 = vmatpush.msra.mxu0 %v2387
  %v2389 = vand.u32 %v159, 4294901760
  %v2390 = vsub.f32 %v159, %v2389
  %2391 = vmatpush.msra.mxu0 %v2390
  %v2392 = vand.u32 %v154, 4294901760
  %v2393 = vsub.f32 %v154, %v2392
  %2394 = vmatpush.msra.mxu0 %v2393
  %v2395 = vand.u32 %v102, 4294901760
  %v2396 = vsub.f32 %v102, %v2395
  %2397 = vmatpush.msra.mxu0 %v2396
  %v2398 = vand.u32 %v97, 4294901760
  %v2399 = vsub.f32 %v97, %v2398
  %2400 = vmatpush.msra.mxu0 %v2399
  %v2401 = vand.u32 %v502, 4294901760
  %v2402 = vsub.f32 %v502, %v2401
  %2403 = vmatmul.f32.gmra.mxu0 %v2402
  %v2404 = vpop.f32.mrf.mxu0
  %v2405 = vadd.f32 %v2347, %v2404
  %v2406 = vand.u32 %v504, 4294901760
  %v2407 = vsub.f32 %v504, %v2406
  %2408 = vmatmul.f32.gmra.mxu0 %v2407
  %v2409 = vpop.f32.mrf.mxu0
  %v2410 = vadd.f32 %v2351, %v2409
  %2411 = vdwg.mxu0
  %v2412 = vand.u32 %v441, 4294901760
  %2413 = vmatpush.msra.mxu0 %v2412
  %v2414 = vand.u32 %v436, 4294901760
  %2415 = vmatpush.msra.mxu0 %v2414
  %v2416 = vand.u32 %v394, 4294901760
  %2417 = vmatpush.msra.mxu0 %v2416
  %v2418 = vand.u32 %v389, 4294901760
  %2419 = vmatpush.msra.mxu0 %v2418
  %v2420 = vand.u32 %v347, 4294901760
  %2421 = vmatpush.msra.mxu0 %v2420
  %v2422 = vand.u32 %v342, 4294901760
  %2423 = vmatpush.msra.mxu0 %v2422
  %v2424 = vand.u32 %v300, 4294901760
  %2425 = vmatpush.msra.mxu0 %v2424
  %v2426 = vand.u32 %v295, 4294901760
  %2427 = vmatpush.msra.mxu0 %v2426
  %v2428 = vand.u32 %v253, 4294901760
  %2429 = vmatpush.msra.mxu0 %v2428
  %v2430 = vand.u32 %v248, 4294901760
  %2431 = vmatpush.msra.mxu0 %v2430
  %v2432 = vand.u32 %v206, 4294901760
  %2433 = vmatpush.msra.mxu0 %v2432
  %v2434 = vand.u32 %v201, 4294901760
  %2435 = vmatpush.msra.mxu0 %v2434
  %v2436 = vand.u32 %v159, 4294901760
  %2437 = vmatpush.msra.mxu0 %v2436
  %v2438 = vand.u32 %v154, 4294901760
  %2439 = vmatpush.msra.mxu0 %v2438
  %v2440 = vand.u32 %v102, 4294901760
  %2441 = vmatpush.msra.mxu0 %v2440
  %v2442 = vand.u32 %v97, 4294901760
  %2443 = vmatpush.msra.mxu0 %v2442
  %v2444 = vand.u32 %v502, 4294901760
  %v2445 = vsub.f32 %v502, %v2444
  %v2446 = vand.u32 %v2445, 4294901760
  %2447 = vmatmul.f32.gmra.mxu0 %v2446
  %v2448 = vpop.f32.mrf.mxu0
  %v2449 = vadd.f32 %v2405, %v2448
  %v2450 = vand.u32 %v504, 4294901760
  %v2451 = vsub.f32 %v504, %v2450
  %v2452 = vand.u32 %v2451, 4294901760
  %2453 = vmatmul.f32.gmra.mxu0 %v2452
  %v2454 = vpop.f32.mrf.mxu0
  %v2455 = vadd.f32 %v2410, %v2454
  %2456 = vdwg.mxu0
  %v2457 = vand.u32 %v441, 4294901760
  %v2458 = vsub.f32 %v441, %v2457
  %v2459 = vand.u32 %v2458, 4294901760
  %2460 = vmatpush.msra.mxu0 %v2459
  %v2461 = vand.u32 %v436, 4294901760
  %v2462 = vsub.f32 %v436, %v2461
  %v2463 = vand.u32 %v2462, 4294901760
  %2464 = vmatpush.msra.mxu0 %v2463
  %v2465 = vand.u32 %v394, 4294901760
  %v2466 = vsub.f32 %v394, %v2465
  %v2467 = vand.u32 %v2466, 4294901760
  %2468 = vmatpush.msra.mxu0 %v2467
  %v2469 = vand.u32 %v389, 4294901760
  %v2470 = vsub.f32 %v389, %v2469
  %v2471 = vand.u32 %v2470, 4294901760
  %2472 = vmatpush.msra.mxu0 %v2471
  %v2473 = vand.u32 %v347, 4294901760
  %v2474 = vsub.f32 %v347, %v2473
  %v2475 = vand.u32 %v2474, 4294901760
  %2476 = vmatpush.msra.mxu0 %v2475
  %v2477 = vand.u32 %v342, 4294901760
  %v2478 = vsub.f32 %v342, %v2477
  %v2479 = vand.u32 %v2478, 4294901760
  %2480 = vmatpush.msra.mxu0 %v2479
  %v2481 = vand.u32 %v300, 4294901760
  %v2482 = vsub.f32 %v300, %v2481
  %v2483 = vand.u32 %v2482, 4294901760
  %2484 = vmatpush.msra.mxu0 %v2483
  %v2485 = vand.u32 %v295, 4294901760
  %v2486 = vsub.f32 %v295, %v2485
  %v2487 = vand.u32 %v2486, 4294901760
  %2488 = vmatpush.msra.mxu0 %v2487
  %v2489 = vand.u32 %v253, 4294901760
  %v2490 = vsub.f32 %v253, %v2489
  %v2491 = vand.u32 %v2490, 4294901760
  %2492 = vmatpush.msra.mxu0 %v2491
  %v2493 = vand.u32 %v248, 4294901760
  %v2494 = vsub.f32 %v248, %v2493
  %v2495 = vand.u32 %v2494, 4294901760
  %2496 = vmatpush.msra.mxu0 %v2495
  %v2497 = vand.u32 %v206, 4294901760
  %v2498 = vsub.f32 %v206, %v2497
  %v2499 = vand.u32 %v2498, 4294901760
  %2500 = vmatpush.msra.mxu0 %v2499
  %v2501 = vand.u32 %v201, 4294901760
  %v2502 = vsub.f32 %v201, %v2501
  %v2503 = vand.u32 %v2502, 4294901760
  %2504 = vmatpush.msra.mxu0 %v2503
  %v2505 = vand.u32 %v159, 4294901760
  %v2506 = vsub.f32 %v159, %v2505
  %v2507 = vand.u32 %v2506, 4294901760
  %2508 = vmatpush.msra.mxu0 %v2507
  %v2509 = vand.u32 %v154, 4294901760
  %v2510 = vsub.f32 %v154, %v2509
  %v2511 = vand.u32 %v2510, 4294901760
  %2512 = vmatpush.msra.mxu0 %v2511
  %v2513 = vand.u32 %v102, 4294901760
  %v2514 = vsub.f32 %v102, %v2513
  %v2515 = vand.u32 %v2514, 4294901760
  %2516 = vmatpush.msra.mxu0 %v2515
  %v2517 = vand.u32 %v97, 4294901760
  %v2518 = vsub.f32 %v97, %v2517
  %v2519 = vand.u32 %v2518, 4294901760
  %2520 = vmatpush.msra.mxu0 %v2519
  %v2521 = vand.u32 %v502, 4294901760
  %2522 = vmatmul.f32.gmra.mxu0 %v2521
  %v2523 = vpop.f32.mrf.mxu0
  %v2524 = vadd.f32 %v2449, %v2523
  %v2525 = vand.u32 %v504, 4294901760
  %2526 = vmatmul.f32.gmra.mxu0 %v2525
  %v2527 = vpop.f32.mrf.mxu0
  %v2528 = vadd.f32 %v2455, %v2527
  %2529 = vdwg.mxu0
  %v2530 = vand.u32 %v441, 4294901760
  %2531 = vmatpush.msra.mxu0 %v2530
  %v2532 = vand.u32 %v436, 4294901760
  %2533 = vmatpush.msra.mxu0 %v2532
  %v2534 = vand.u32 %v394, 4294901760
  %2535 = vmatpush.msra.mxu0 %v2534
  %v2536 = vand.u32 %v389, 4294901760
  %2537 = vmatpush.msra.mxu0 %v2536
  %v2538 = vand.u32 %v347, 4294901760
  %2539 = vmatpush.msra.mxu0 %v2538
  %v2540 = vand.u32 %v342, 4294901760
  %2541 = vmatpush.msra.mxu0 %v2540
  %v2542 = vand.u32 %v300, 4294901760
  %2543 = vmatpush.msra.mxu0 %v2542
  %v2544 = vand.u32 %v295, 4294901760
  %2545 = vmatpush.msra.mxu0 %v2544
  %v2546 = vand.u32 %v253, 4294901760
  %2547 = vmatpush.msra.mxu0 %v2546
  %v2548 = vand.u32 %v248, 4294901760
  %2549 = vmatpush.msra.mxu0 %v2548
  %v2550 = vand.u32 %v206, 4294901760
  %2551 = vmatpush.msra.mxu0 %v2550
  %v2552 = vand.u32 %v201, 4294901760
  %2553 = vmatpush.msra.mxu0 %v2552
  %v2554 = vand.u32 %v159, 4294901760
  %2555 = vmatpush.msra.mxu0 %v2554
  %v2556 = vand.u32 %v154, 4294901760
  %2557 = vmatpush.msra.mxu0 %v2556
  %v2558 = vand.u32 %v102, 4294901760
  %2559 = vmatpush.msra.mxu0 %v2558
  %v2560 = vand.u32 %v97, 4294901760
  %2561 = vmatpush.msra.mxu0 %v2560
  %v2562 = vand.u32 %v502, 4294901760
  %2563 = vmatmul.f32.gmra.mxu0 %v2562
  %v2564 = vpop.f32.mrf.mxu0
  %v2565 = vadd.f32 %v2524, %v2564
  %v2566 = vand.u32 %v504, 4294901760
  %2567 = vmatmul.f32.gmra.mxu0 %v2566
  %v2568 = vpop.f32.mrf.mxu0
  %v2569 = vadd.f32 %v2528, %v2568
  %2570 = vdwg.mxu0
  %2571 = vmatpush.msra.mxu0 0.0
  %2572 = vmatpush.msra.mxu0 0.0
  %2573 = vmatpush.msra.mxu0 0.0
  %2574 = vmatpush.msra.mxu0 0.0
  %2575 = vmatpush.msra.mxu0 0.0
  %2576 = vmatpush.msra.mxu0 0.0
  %2577 = vmatpush.msra.mxu0 0.0
  %2578 = vmatpush.msra.mxu0 0.0
  %2579 = vmatpush.msra.mxu0 0.0
  %2580 = vmatpush.msra.mxu0 0.0
  %2581 = vmatpush.msra.mxu0 0.0
  %2582 = vmatpush.msra.mxu0 0.0
  %2583 = vmatpush.msra.mxu0 0.0
  %2584 = vmatpush.msra.mxu0 0.0
  %v2585 = vand.u32 %v488, 4294901760
  %2586 = vmatpush.msra.mxu0 %v2585
  %v2587 = vand.u32 %v483, 4294901760
  %2588 = vmatpush.msra.mxu0 %v2587
  %v2589 = vand.u32 %v508, 4294901760
  %v2590 = vsub.f32 %v508, %v2589
  %v2591 = vand.u32 %v2590, 4294901760
  %v2592 = vsub.f32 %v2590, %v2591
  %v2593 = vand.u32 %v2592, 4294901760
  %2594 = vmatmul.f32.gmra.mxu0 %v2593
  %v2595 = vpop.f32.mrf.mxu0
  %v2596 = vadd.f32 %v2565, %v2595
  %v2597 = vand.u32 %v511, 4294901760
  %v2598 = vsub.f32 %v511, %v2597
  %v2599 = vand.u32 %v2598, 4294901760
  %v2600 = vsub.f32 %v2598, %v2599
  %v2601 = vand.u32 %v2600, 4294901760
  %2602 = vmatmul.f32.gmra.mxu0 %v2601
  %v2603 = vpop.f32.mrf.mxu0
  %v2604 = vadd.f32 %v2569, %v2603
  %2605 = vdwg.mxu0
  %2606 = vmatpush.msra.mxu0 0.0
  %2607 = vmatpush.msra.mxu0 0.0
  %2608 = vmatpush.msra.mxu0 0.0
  %2609 = vmatpush.msra.mxu0 0.0
  %2610 = vmatpush.msra.mxu0 0.0
  %2611 = vmatpush.msra.mxu0 0.0
  %2612 = vmatpush.msra.mxu0 0.0
  %2613 = vmatpush.msra.mxu0 0.0
  %2614 = vmatpush.msra.mxu0 0.0
  %2615 = vmatpush.msra.mxu0 0.0
  %2616 = vmatpush.msra.mxu0 0.0
  %2617 = vmatpush.msra.mxu0 0.0
  %2618 = vmatpush.msra.mxu0 0.0
  %2619 = vmatpush.msra.mxu0 0.0
  %v2620 = vand.u32 %v488, 4294901760
  %v2621 = vsub.f32 %v488, %v2620
  %v2622 = vand.u32 %v2621, 4294901760
  %v2623 = vsub.f32 %v2621, %v2622
  %v2624 = vand.u32 %v2623, 4294901760
  %2625 = vmatpush.msra.mxu0 %v2624
  %v2626 = vand.u32 %v483, 4294901760
  %v2627 = vsub.f32 %v483, %v2626
  %v2628 = vand.u32 %v2627, 4294901760
  %v2629 = vsub.f32 %v2627, %v2628
  %v2630 = vand.u32 %v2629, 4294901760
  %2631 = vmatpush.msra.mxu0 %v2630
  %v2632 = vand.u32 %v508, 4294901760
  %2633 = vmatmul.f32.gmra.mxu0 %v2632
  %v2634 = vpop.f32.mrf.mxu0
  %v2635 = vadd.f32 %v2596, %v2634
  %v2636 = vand.u32 %v511, 4294901760
  %2637 = vmatmul.f32.gmra.mxu0 %v2636
  %v2638 = vpop.f32.mrf.mxu0
  %v2639 = vadd.f32 %v2604, %v2638
  %2640 = vdwg.mxu0
  %2641 = vmatpush.msra.mxu0 0.0
  %2642 = vmatpush.msra.mxu0 0.0
  %2643 = vmatpush.msra.mxu0 0.0
  %2644 = vmatpush.msra.mxu0 0.0
  %2645 = vmatpush.msra.mxu0 0.0
  %2646 = vmatpush.msra.mxu0 0.0
  %2647 = vmatpush.msra.mxu0 0.0
  %2648 = vmatpush.msra.mxu0 0.0
  %2649 = vmatpush.msra.mxu0 0.0
  %2650 = vmatpush.msra.mxu0 0.0
  %2651 = vmatpush.msra.mxu0 0.0
  %2652 = vmatpush.msra.mxu0 0.0
  %2653 = vmatpush.msra.mxu0 0.0
  %2654 = vmatpush.msra.mxu0 0.0
  %v2655 = vand.u32 %v488, 4294901760
  %v2656 = vsub.f32 %v488, %v2655
  %2657 = vmatpush.msra.mxu0 %v2656
  %v2658 = vand.u32 %v483, 4294901760
  %v2659 = vsub.f32 %v483, %v2658
  %2660 = vmatpush.msra.mxu0 %v2659
  %v2661 = vand.u32 %v508, 4294901760
  %v2662 = vsub.f32 %v508, %v2661
  %2663 = vmatmul.f32.gmra.mxu0 %v2662
  %v2664 = vpop.f32.mrf.mxu0
  %v2665 = vadd.f32 %v2635, %v2664
  %v2666 = vand.u32 %v511, 4294901760
  %v2667 = vsub.f32 %v511, %v2666
  %2668 = vmatmul.f32.gmra.mxu0 %v2667
  %v2669 = vpop.f32.mrf.mxu0
  %v2670 = vadd.f32 %v2639, %v2669
  %2671 = vdwg.mxu0
  %2672 = vmatpush.msra.mxu0 0.0
  %2673 = vmatpush.msra.mxu0 0.0
  %2674 = vmatpush.msra.mxu0 0.0
  %2675 = vmatpush.msra.mxu0 0.0
  %2676 = vmatpush.msra.mxu0 0.0
  %2677 = vmatpush.msra.mxu0 0.0
  %2678 = vmatpush.msra.mxu0 0.0
  %2679 = vmatpush.msra.mxu0 0.0
  %2680 = vmatpush.msra.mxu0 0.0
  %2681 = vmatpush.msra.mxu0 0.0
  %2682 = vmatpush.msra.mxu0 0.0
  %2683 = vmatpush.msra.mxu0 0.0
  %2684 = vmatpush.msra.mxu0 0.0
  %2685 = vmatpush.msra.mxu0 0.0
  %v2686 = vand.u32 %v488, 4294901760
  %2687 = vmatpush.msra.mxu0 %v2686
  %v2688 = vand.u32 %v483, 4294901760
  %2689 = vmatpush.msra.mxu0 %v2688
  %v2690 = vand.u32 %v508, 4294901760
  %v2691 = vsub.f32 %v508, %v2690
  %v2692 = vand.u32 %v2691, 4294901760
  %2693 = vmatmul.f32.gmra.mxu0 %v2692
  %v2694 = vpop.f32.mrf.mxu0
  %v2695 = vadd.f32 %v2665, %v2694
  %v2696 = vand.u32 %v511, 4294901760
  %v2697 = vsub.f32 %v511, %v2696
  %v2698 = vand.u32 %v2697, 4294901760
  %2699 = vmatmul.f32.gmra.mxu0 %v2698
  %v2700 = vpop.f32.mrf.mxu0
  %v2701 = vadd.f32 %v2670, %v2700
  %2702 = vdwg.mxu0
  %2703 = vmatpush.msra.mxu0 0.0
  %2704 = vmatpush.msra.mxu0 0.0
  %2705 = vmatpush.msra.mxu0 0.0
  %2706 = vmatpush.msra.mxu0 0.0
  %2707 = vmatpush.msra.mxu0 0.0
  %2708 = vmatpush.msra.mxu0 0.0
  %2709 = vmatpush.msra.mxu0 0.0
  %2710 = vmatpush.msra.mxu0 0.0
  %2711 = vmatpush.msra.mxu0 0.0
  %2712 = vmatpush.msra.mxu0 0.0
  %2713 = vmatpush.msra.mxu0 0.0
  %2714 = vmatpush.msra.mxu0 0.0
  %2715 = vmatpush.msra.mxu0 0.0
  %2716 = vmatpush.msra.mxu0 0.0
  %v2717 = vand.u32 %v488, 4294901760
  %v2718 = vsub.f32 %v488, %v2717
  %v2719 = vand.u32 %v2718, 4294901760
  %2720 = vmatpush.msra.mxu0 %v2719
  %v2721 = vand.u32 %v483, 4294901760
  %v2722 = vsub.f32 %v483, %v2721
  %v2723 = vand.u32 %v2722, 4294901760
  %2724 = vmatpush.msra.mxu0 %v2723
  %v2725 = vand.u32 %v508, 4294901760
  %2726 = vmatmul.f32.gmra.mxu0 %v2725
  %v2727 = vpop.f32.mrf.mxu0
  %v2728 = vadd.f32 %v2695, %v2727
  %v2729 = vand.u32 %v511, 4294901760
  %2730 = vmatmul.f32.gmra.mxu0 %v2729
  %v2731 = vpop.f32.mrf.mxu0
  %v2732 = vadd.f32 %v2701, %v2731
  %2733 = vdwg.mxu0
  %2734 = vmatpush.msra.mxu0 0.0
  %2735 = vmatpush.msra.mxu0 0.0
  %2736 = vmatpush.msra.mxu0 0.0
  %2737 = vmatpush.msra.mxu0 0.0
  %2738 = vmatpush.msra.mxu0 0.0
  %2739 = vmatpush.msra.mxu0 0.0
  %2740 = vmatpush.msra.mxu0 0.0
  %2741 = vmatpush.msra.mxu0 0.0
  %2742 = vmatpush.msra.mxu0 0.0
  %2743 = vmatpush.msra.mxu0 0.0
  %2744 = vmatpush.msra.mxu0 0.0
  %2745 = vmatpush.msra.mxu0 0.0
  %2746 = vmatpush.msra.mxu0 0.0
  %2747 = vmatpush.msra.mxu0 0.0
  %v2748 = vand.u32 %v488, 4294901760
  %2749 = vmatpush.msra.mxu0 %v2748
  %v2750 = vand.u32 %v483, 4294901760
  %2751 = vmatpush.msra.mxu0 %v2750
  %v2752 = vand.u32 %v508, 4294901760
  %2753 = vmatmul.f32.gmra.mxu0 %v2752
  %v2754 = vpop.f32.mrf.mxu0
  %v2755 = vadd.f32 %v2728, %v2754
  %v2756 = vand.u32 %v511, 4294901760
  %2757 = vmatmul.f32.gmra.mxu0 %v2756
  %v2758 = vpop.f32.mrf.mxu0
  %v2759 = vadd.f32 %v2732, %v2758
  %2760 = vdwg.mxu0
  %v2761 = vand.u32 %v442, 4294901760
  %2762 = vmatpush.msra.mxu0 %v2761
  %v2763 = vand.u32 %v437, 4294901760
  %2764 = vmatpush.msra.mxu0 %v2763
  %v2765 = vand.u32 %v395, 4294901760
  %2766 = vmatpush.msra.mxu0 %v2765
  %v2767 = vand.u32 %v390, 4294901760
  %2768 = vmatpush.msra.mxu0 %v2767
  %v2769 = vand.u32 %v348, 4294901760
  %2770 = vmatpush.msra.mxu0 %v2769
  %v2771 = vand.u32 %v343, 4294901760
  %2772 = vmatpush.msra.mxu0 %v2771
  %v2773 = vand.u32 %v301, 4294901760
  %2774 = vmatpush.msra.mxu0 %v2773
  %v2775 = vand.u32 %v296, 4294901760
  %2776 = vmatpush.msra.mxu0 %v2775
  %v2777 = vand.u32 %v254, 4294901760
  %2778 = vmatpush.msra.mxu0 %v2777
  %v2779 = vand.u32 %v249, 4294901760
  %2780 = vmatpush.msra.mxu0 %v2779
  %v2781 = vand.u32 %v207, 4294901760
  %2782 = vmatpush.msra.mxu0 %v2781
  %v2783 = vand.u32 %v202, 4294901760
  %2784 = vmatpush.msra.mxu0 %v2783
  %v2785 = vand.u32 %v160, 4294901760
  %2786 = vmatpush.msra.mxu0 %v2785
  %v2787 = vand.u32 %v155, 4294901760
  %2788 = vmatpush.msra.mxu0 %v2787
  %v2789 = vand.u32 %v103, 4294901760
  %2790 = vmatpush.msra.mxu0 %v2789
  %v2791 = vand.u32 %v98, 4294901760
  %2792 = vmatpush.msra.mxu0 %v2791
  %v2793 = vand.u32 %v502, 4294901760
  %v2794 = vsub.f32 %v502, %v2793
  %v2795 = vand.u32 %v2794, 4294901760
  %v2796 = vsub.f32 %v2794, %v2795
  %v2797 = vand.u32 %v2796, 4294901760
  %2798 = vmatmul.f32.gmra.mxu0 %v2797
  %v2799 = vpop.f32.mrf.mxu0
  %v2800 = vadd.f32 0.0, %v2799
  %v2801 = vand.u32 %v504, 4294901760
  %v2802 = vsub.f32 %v504, %v2801
  %v2803 = vand.u32 %v2802, 4294901760
  %v2804 = vsub.f32 %v2802, %v2803
  %v2805 = vand.u32 %v2804, 4294901760
  %2806 = vmatmul.f32.gmra.mxu0 %v2805
  %v2807 = vpop.f32.mrf.mxu0
  %v2808 = vadd.f32 0.0, %v2807
  %2809 = vdwg.mxu0
  %v2810 = vand.u32 %v442, 4294901760
  %v2811 = vsub.f32 %v442, %v2810
  %v2812 = vand.u32 %v2811, 4294901760
  %v2813 = vsub.f32 %v2811, %v2812
  %v2814 = vand.u32 %v2813, 4294901760
  %2815 = vmatpush.msra.mxu0 %v2814
  %v2816 = vand.u32 %v437, 4294901760
  %v2817 = vsub.f32 %v437, %v2816
  %v2818 = vand.u32 %v2817, 4294901760
  %v2819 = vsub.f32 %v2817, %v2818
  %v2820 = vand.u32 %v2819, 4294901760
  %2821 = vmatpush.msra.mxu0 %v2820
  %v2822 = vand.u32 %v395, 4294901760
  %v2823 = vsub.f32 %v395, %v2822
  %v2824 = vand.u32 %v2823, 4294901760
  %v2825 = vsub.f32 %v2823, %v2824
  %v2826 = vand.u32 %v2825, 4294901760
  %2827 = vmatpush.msra.mxu0 %v2826
  %v2828 = vand.u32 %v390, 4294901760
  %v2829 = vsub.f32 %v390, %v2828
  %v2830 = vand.u32 %v2829, 4294901760
  %v2831 = vsub.f32 %v2829, %v2830
  %v2832 = vand.u32 %v2831, 4294901760
  %2833 = vmatpush.msra.mxu0 %v2832
  %v2834 = vand.u32 %v348, 4294901760
  %v2835 = vsub.f32 %v348, %v2834
  %v2836 = vand.u32 %v2835, 4294901760
  %v2837 = vsub.f32 %v2835, %v2836
  %v2838 = vand.u32 %v2837, 4294901760
  %2839 = vmatpush.msra.mxu0 %v2838
  %v2840 = vand.u32 %v343, 4294901760
  %v2841 = vsub.f32 %v343, %v2840
  %v2842 = vand.u32 %v2841, 4294901760
  %v2843 = vsub.f32 %v2841, %v2842
  %v2844 = vand.u32 %v2843, 4294901760
  %2845 = vmatpush.msra.mxu0 %v2844
  %v2846 = vand.u32 %v301, 4294901760
  %v2847 = vsub.f32 %v301, %v2846
  %v2848 = vand.u32 %v2847, 4294901760
  %v2849 = vsub.f32 %v2847, %v2848
  %v2850 = vand.u32 %v2849, 4294901760
  %2851 = vmatpush.msra.mxu0 %v2850
  %v2852 = vand.u32 %v296, 4294901760
  %v2853 = vsub.f32 %v296, %v2852
  %v2854 = vand.u32 %v2853, 4294901760
  %v2855 = vsub.f32 %v2853, %v2854
  %v2856 = vand.u32 %v2855, 4294901760
  %2857 = vmatpush.msra.mxu0 %v2856
  %v2858 = vand.u32 %v254, 4294901760
  %v2859 = vsub.f32 %v254, %v2858
  %v2860 = vand.u32 %v2859, 4294901760
  %v2861 = vsub.f32 %v2859, %v2860
  %v2862 = vand.u32 %v2861, 4294901760
  %2863 = vmatpush.msra.mxu0 %v2862
  %v2864 = vand.u32 %v249, 4294901760
  %v2865 = vsub.f32 %v249, %v2864
  %v2866 = vand.u32 %v2865, 4294901760
  %v2867 = vsub.f32 %v2865, %v2866
  %v2868 = vand.u32 %v2867, 4294901760
  %2869 = vmatpush.msra.mxu0 %v2868
  %v2870 = vand.u32 %v207, 4294901760
  %v2871 = vsub.f32 %v207, %v2870
  %v2872 = vand.u32 %v2871, 4294901760
  %v2873 = vsub.f32 %v2871, %v2872
  %v2874 = vand.u32 %v2873, 4294901760
  %2875 = vmatpush.msra.mxu0 %v2874
  %v2876 = vand.u32 %v202, 4294901760
  %v2877 = vsub.f32 %v202, %v2876
  %v2878 = vand.u32 %v2877, 4294901760
  %v2879 = vsub.f32 %v2877, %v2878
  %v2880 = vand.u32 %v2879, 4294901760
  %2881 = vmatpush.msra.mxu0 %v2880
  %v2882 = vand.u32 %v160, 4294901760
  %v2883 = vsub.f32 %v160, %v2882
  %v2884 = vand.u32 %v2883, 4294901760
  %v2885 = vsub.f32 %v2883, %v2884
  %v2886 = vand.u32 %v2885, 4294901760
  %2887 = vmatpush.msra.mxu0 %v2886
  %v2888 = vand.u32 %v155, 4294901760
  %v2889 = vsub.f32 %v155, %v2888
  %v2890 = vand.u32 %v2889, 4294901760
  %v2891 = vsub.f32 %v2889, %v2890
  %v2892 = vand.u32 %v2891, 4294901760
  %2893 = vmatpush.msra.mxu0 %v2892
  %v2894 = vand.u32 %v103, 4294901760
  %v2895 = vsub.f32 %v103, %v2894
  %v2896 = vand.u32 %v2895, 4294901760
  %v2897 = vsub.f32 %v2895, %v2896
  %v2898 = vand.u32 %v2897, 4294901760
  %2899 = vmatpush.msra.mxu0 %v2898
  %v2900 = vand.u32 %v98, 4294901760
  %v2901 = vsub.f32 %v98, %v2900
  %v2902 = vand.u32 %v2901, 4294901760
  %v2903 = vsub.f32 %v2901, %v2902
  %v2904 = vand.u32 %v2903, 4294901760
  %2905 = vmatpush.msra.mxu0 %v2904
  %v2906 = vand.u32 %v502, 4294901760
  %2907 = vmatmul.f32.gmra.mxu0 %v2906
  %v2908 = vpop.f32.mrf.mxu0
  %v2909 = vadd.f32 %v2800, %v2908
  %v2910 = vand.u32 %v504, 4294901760
  %2911 = vmatmul.f32.gmra.mxu0 %v2910
  %v2912 = vpop.f32.mrf.mxu0
  %v2913 = vadd.f32 %v2808, %v2912
  %2914 = vdwg.mxu0
  %v2915 = vand.u32 %v442, 4294901760
  %v2916 = vsub.f32 %v442, %v2915
  %2917 = vmatpush.msra.mxu0 %v2916
  %v2918 = vand.u32 %v437, 4294901760
  %v2919 = vsub.f32 %v437, %v2918
  %2920 = vmatpush.msra.mxu0 %v2919
  %v2921 = vand.u32 %v395, 4294901760
  %v2922 = vsub.f32 %v395, %v2921
  %2923 = vmatpush.msra.mxu0 %v2922
  %v2924 = vand.u32 %v390, 4294901760
  %v2925 = vsub.f32 %v390, %v2924
  %2926 = vmatpush.msra.mxu0 %v2925
  %v2927 = vand.u32 %v348, 4294901760
  %v2928 = vsub.f32 %v348, %v2927
  %2929 = vmatpush.msra.mxu0 %v2928
  %v2930 = vand.u32 %v343, 4294901760
  %v2931 = vsub.f32 %v343, %v2930
  %2932 = vmatpush.msra.mxu0 %v2931
  %v2933 = vand.u32 %v301, 4294901760
  %v2934 = vsub.f32 %v301, %v2933
  %2935 = vmatpush.msra.mxu0 %v2934
  %v2936 = vand.u32 %v296, 4294901760
  %v2937 = vsub.f32 %v296, %v2936
  %2938 = vmatpush.msra.mxu0 %v2937
  %v2939 = vand.u32 %v254, 4294901760
  %v2940 = vsub.f32 %v254, %v2939
  %2941 = vmatpush.msra.mxu0 %v2940
  %v2942 = vand.u32 %v249, 4294901760
  %v2943 = vsub.f32 %v249, %v2942
  %2944 = vmatpush.msra.mxu0 %v2943
  %v2945 = vand.u32 %v207, 4294901760
  %v2946 = vsub.f32 %v207, %v2945
  %2947 = vmatpush.msra.mxu0 %v2946
  %v2948 = vand.u32 %v202, 4294901760
  %v2949 = vsub.f32 %v202, %v2948
  %2950 = vmatpush.msra.mxu0 %v2949
  %v2951 = vand.u32 %v160, 4294901760
  %v2952 = vsub.f32 %v160, %v2951
  %2953 = vmatpush.msra.mxu0 %v2952
  %v2954 = vand.u32 %v155, 4294901760
  %v2955 = vsub.f32 %v155, %v2954
  %2956 = vmatpush.msra.mxu0 %v2955
  %v2957 = vand.u32 %v103, 4294901760
  %v2958 = vsub.f32 %v103, %v2957
  %2959 = vmatpush.msra.mxu0 %v2958
  %v2960 = vand.u32 %v98, 4294901760
  %v2961 = vsub.f32 %v98, %v2960
  %2962 = vmatpush.msra.mxu0 %v2961
  %v2963 = vand.u32 %v502, 4294901760
  %v2964 = vsub.f32 %v502, %v2963
  %2965 = vmatmul.f32.gmra.mxu0 %v2964
  %v2966 = vpop.f32.mrf.mxu0
  %v2967 = vadd.f32 %v2909, %v2966
  %v2968 = vand.u32 %v504, 4294901760
  %v2969 = vsub.f32 %v504, %v2968
  %2970 = vmatmul.f32.gmra.mxu0 %v2969
  %v2971 = vpop.f32.mrf.mxu0
  %v2972 = vadd.f32 %v2913, %v2971
  %2973 = vdwg.mxu0
  %v2974 = vand.u32 %v442, 4294901760
  %2975 = vmatpush.msra.mxu0 %v2974
  %v2976 = vand.u32 %v437, 4294901760
  %2977 = vmatpush.msra.mxu0 %v2976
  %v2978 = vand.u32 %v395, 4294901760
  %2979 = vmatpush.msra.mxu0 %v2978
  %v2980 = vand.u32 %v390, 4294901760
  %2981 = vmatpush.msra.mxu0 %v2980
  %v2982 = vand.u32 %v348, 4294901760
  %2983 = vmatpush.msra.mxu0 %v2982
  %v2984 = vand.u32 %v343, 4294901760
  %2985 = vmatpush.msra.mxu0 %v2984
  %v2986 = vand.u32 %v301, 4294901760
  %2987 = vmatpush.msra.mxu0 %v2986
  %v2988 = vand.u32 %v296, 4294901760
  %2989 = vmatpush.msra.mxu0 %v2988
  %v2990 = vand.u32 %v254, 4294901760
  %2991 = vmatpush.msra.mxu0 %v2990
  %v2992 = vand.u32 %v249, 4294901760
  %2993 = vmatpush.msra.mxu0 %v2992
  %v2994 = vand.u32 %v207, 4294901760
  %2995 = vmatpush.msra.mxu0 %v2994
  %v2996 = vand.u32 %v202, 4294901760
  %2997 = vmatpush.msra.mxu0 %v2996
  %v2998 = vand.u32 %v160, 4294901760
  %2999 = vmatpush.msra.mxu0 %v2998
  %v3000 = vand.u32 %v155, 4294901760
  %3001 = vmatpush.msra.mxu0 %v3000
  %v3002 = vand.u32 %v103, 4294901760
  %3003 = vmatpush.msra.mxu0 %v3002
  %v3004 = vand.u32 %v98, 4294901760
  %3005 = vmatpush.msra.mxu0 %v3004
  %v3006 = vand.u32 %v502, 4294901760
  %v3007 = vsub.f32 %v502, %v3006
  %v3008 = vand.u32 %v3007, 4294901760
  %3009 = vmatmul.f32.gmra.mxu0 %v3008
  %v3010 = vpop.f32.mrf.mxu0
  %v3011 = vadd.f32 %v2967, %v3010
  %v3012 = vand.u32 %v504, 4294901760
  %v3013 = vsub.f32 %v504, %v3012
  %v3014 = vand.u32 %v3013, 4294901760
  %3015 = vmatmul.f32.gmra.mxu0 %v3014
  %v3016 = vpop.f32.mrf.mxu0
  %v3017 = vadd.f32 %v2972, %v3016
  %3018 = vdwg.mxu0
  %v3019 = vand.u32 %v442, 4294901760
  %v3020 = vsub.f32 %v442, %v3019
  %v3021 = vand.u32 %v3020, 4294901760
  %3022 = vmatpush.msra.mxu0 %v3021
  %v3023 = vand.u32 %v437, 4294901760
  %v3024 = vsub.f32 %v437, %v3023
  %v3025 = vand.u32 %v3024, 4294901760
  %3026 = vmatpush.msra.mxu0 %v3025
  %v3027 = vand.u32 %v395, 4294901760
  %v3028 = vsub.f32 %v395, %v3027
  %v3029 = vand.u32 %v3028, 4294901760
  %3030 = vmatpush.msra.mxu0 %v3029
  %v3031 = vand.u32 %v390, 4294901760
  %v3032 = vsub.f32 %v390, %v3031
  %v3033 = vand.u32 %v3032, 4294901760
  %3034 = vmatpush.msra.mxu0 %v3033
  %v3035 = vand.u32 %v348, 4294901760
  %v3036 = vsub.f32 %v348, %v3035
  %v3037 = vand.u32 %v3036, 4294901760
  %3038 = vmatpush.msra.mxu0 %v3037
  %v3039 = vand.u32 %v343, 4294901760
  %v3040 = vsub.f32 %v343, %v3039
  %v3041 = vand.u32 %v3040, 4294901760
  %3042 = vmatpush.msra.mxu0 %v3041
  %v3043 = vand.u32 %v301, 4294901760
  %v3044 = vsub.f32 %v301, %v3043
  %v3045 = vand.u32 %v3044, 4294901760
  %3046 = vmatpush.msra.mxu0 %v3045
  %v3047 = vand.u32 %v296, 4294901760
  %v3048 = vsub.f32 %v296, %v3047
  %v3049 = vand.u32 %v3048, 4294901760
  %3050 = vmatpush.msra.mxu0 %v3049
  %v3051 = vand.u32 %v254, 4294901760
  %v3052 = vsub.f32 %v254, %v3051
  %v3053 = vand.u32 %v3052, 4294901760
  %3054 = vmatpush.msra.mxu0 %v3053
  %v3055 = vand.u32 %v249, 4294901760
  %v3056 = vsub.f32 %v249, %v3055
  %v3057 = vand.u32 %v3056, 4294901760
  %3058 = vmatpush.msra.mxu0 %v3057
  %v3059 = vand.u32 %v207, 4294901760
  %v3060 = vsub.f32 %v207, %v3059
  %v3061 = vand.u32 %v3060, 4294901760
  %3062 = vmatpush.msra.mxu0 %v3061
  %v3063 = vand.u32 %v202, 4294901760
  %v3064 = vsub.f32 %v202, %v3063
  %v3065 = vand.u32 %v3064, 4294901760
  %3066 = vmatpush.msra.mxu0 %v3065
  %v3067 = vand.u32 %v160, 4294901760
  %v3068 = vsub.f32 %v160, %v3067
  %v3069 = vand.u32 %v3068, 4294901760
  %3070 = vmatpush.msra.mxu0 %v3069
  %v3071 = vand.u32 %v155, 4294901760
  %v3072 = vsub.f32 %v155, %v3071
  %v3073 = vand.u32 %v3072, 4294901760
  %3074 = vmatpush.msra.mxu0 %v3073
  %v3075 = vand.u32 %v103, 4294901760
  %v3076 = vsub.f32 %v103, %v3075
  %v3077 = vand.u32 %v3076, 4294901760
  %3078 = vmatpush.msra.mxu0 %v3077
  %v3079 = vand.u32 %v98, 4294901760
  %v3080 = vsub.f32 %v98, %v3079
  %v3081 = vand.u32 %v3080, 4294901760
  %3082 = vmatpush.msra.mxu0 %v3081
  %v3083 = vand.u32 %v502, 4294901760
  %3084 = vmatmul.f32.gmra.mxu0 %v3083
  %v3085 = vpop.f32.mrf.mxu0
  %v3086 = vadd.f32 %v3011, %v3085
  %v3087 = vand.u32 %v504, 4294901760
  %3088 = vmatmul.f32.gmra.mxu0 %v3087
  %v3089 = vpop.f32.mrf.mxu0
  %v3090 = vadd.f32 %v3017, %v3089
  %3091 = vdwg.mxu0
  %v3092 = vand.u32 %v442, 4294901760
  %3093 = vmatpush.msra.mxu0 %v3092
  %v3094 = vand.u32 %v437, 4294901760
  %3095 = vmatpush.msra.mxu0 %v3094
  %v3096 = vand.u32 %v395, 4294901760
  %3097 = vmatpush.msra.mxu0 %v3096
  %v3098 = vand.u32 %v390, 4294901760
  %3099 = vmatpush.msra.mxu0 %v3098
  %v3100 = vand.u32 %v348, 4294901760
  %3101 = vmatpush.msra.mxu0 %v3100
  %v3102 = vand.u32 %v343, 4294901760
  %3103 = vmatpush.msra.mxu0 %v3102
  %v3104 = vand.u32 %v301, 4294901760
  %3105 = vmatpush.msra.mxu0 %v3104
  %v3106 = vand.u32 %v296, 4294901760
  %3107 = vmatpush.msra.mxu0 %v3106
  %v3108 = vand.u32 %v254, 4294901760
  %3109 = vmatpush.msra.mxu0 %v3108
  %v3110 = vand.u32 %v249, 4294901760
  %3111 = vmatpush.msra.mxu0 %v3110
  %v3112 = vand.u32 %v207, 4294901760
  %3113 = vmatpush.msra.mxu0 %v3112
  %v3114 = vand.u32 %v202, 4294901760
  %3115 = vmatpush.msra.mxu0 %v3114
  %v3116 = vand.u32 %v160, 4294901760
  %3117 = vmatpush.msra.mxu0 %v3116
  %v3118 = vand.u32 %v155, 4294901760
  %3119 = vmatpush.msra.mxu0 %v3118
  %v3120 = vand.u32 %v103, 4294901760
  %3121 = vmatpush.msra.mxu0 %v3120
  %v3122 = vand.u32 %v98, 4294901760
  %3123 = vmatpush.msra.mxu0 %v3122
  %v3124 = vand.u32 %v502, 4294901760
  %3125 = vmatmul.f32.gmra.mxu0 %v3124
  %v3126 = vpop.f32.mrf.mxu0
  %v3127 = vadd.f32 %v3086, %v3126
  %v3128 = vand.u32 %v504, 4294901760
  %3129 = vmatmul.f32.gmra.mxu0 %v3128
  %v3130 = vpop.f32.mrf.mxu0
  %v3131 = vadd.f32 %v3090, %v3130
  %3132 = vdwg.mxu0
  %3133 = vmatpush.msra.mxu0 0.0
  %3134 = vmatpush.msra.mxu0 0.0
  %3135 = vmatpush.msra.mxu0 0.0
  %3136 = vmatpush.msra.mxu0 0.0
  %3137 = vmatpush.msra.mxu0 0.0
  %3138 = vmatpush.msra.mxu0 0.0
  %3139 = vmatpush.msra.mxu0 0.0
  %3140 = vmatpush.msra.mxu0 0.0
  %3141 = vmatpush.msra.mxu0 0.0
  %3142 = vmatpush.msra.mxu0 0.0
  %3143 = vmatpush.msra.mxu0 0.0
  %3144 = vmatpush.msra.mxu0 0.0
  %3145 = vmatpush.msra.mxu0 0.0
  %3146 = vmatpush.msra.mxu0 0.0
  %v3147 = vand.u32 %v489, 4294901760
  %3148 = vmatpush.msra.mxu0 %v3147
  %v3149 = vand.u32 %v484, 4294901760
  %3150 = vmatpush.msra.mxu0 %v3149
  %v3151 = vand.u32 %v508, 4294901760
  %v3152 = vsub.f32 %v508, %v3151
  %v3153 = vand.u32 %v3152, 4294901760
  %v3154 = vsub.f32 %v3152, %v3153
  %v3155 = vand.u32 %v3154, 4294901760
  %3156 = vmatmul.f32.gmra.mxu0 %v3155
  %v3157 = vpop.f32.mrf.mxu0
  %v3158 = vadd.f32 %v3127, %v3157
  %v3159 = vand.u32 %v511, 4294901760
  %v3160 = vsub.f32 %v511, %v3159
  %v3161 = vand.u32 %v3160, 4294901760
  %v3162 = vsub.f32 %v3160, %v3161
  %v3163 = vand.u32 %v3162, 4294901760
  %3164 = vmatmul.f32.gmra.mxu0 %v3163
  %v3165 = vpop.f32.mrf.mxu0
  %v3166 = vadd.f32 %v3131, %v3165
  %3167 = vdwg.mxu0
  %3168 = vmatpush.msra.mxu0 0.0
  %3169 = vmatpush.msra.mxu0 0.0
  %3170 = vmatpush.msra.mxu0 0.0
  %3171 = vmatpush.msra.mxu0 0.0
  %3172 = vmatpush.msra.mxu0 0.0
  %3173 = vmatpush.msra.mxu0 0.0
  %3174 = vmatpush.msra.mxu0 0.0
  %3175 = vmatpush.msra.mxu0 0.0
  %3176 = vmatpush.msra.mxu0 0.0
  %3177 = vmatpush.msra.mxu0 0.0
  %3178 = vmatpush.msra.mxu0 0.0
  %3179 = vmatpush.msra.mxu0 0.0
  %3180 = vmatpush.msra.mxu0 0.0
  %3181 = vmatpush.msra.mxu0 0.0
  %v3182 = vand.u32 %v489, 4294901760
  %v3183 = vsub.f32 %v489, %v3182
  %v3184 = vand.u32 %v3183, 4294901760
  %v3185 = vsub.f32 %v3183, %v3184
  %v3186 = vand.u32 %v3185, 4294901760
  %3187 = vmatpush.msra.mxu0 %v3186
  %v3188 = vand.u32 %v484, 4294901760
  %v3189 = vsub.f32 %v484, %v3188
  %v3190 = vand.u32 %v3189, 4294901760
  %v3191 = vsub.f32 %v3189, %v3190
  %v3192 = vand.u32 %v3191, 4294901760
  %3193 = vmatpush.msra.mxu0 %v3192
  %v3194 = vand.u32 %v508, 4294901760
  %3195 = vmatmul.f32.gmra.mxu0 %v3194
  %v3196 = vpop.f32.mrf.mxu0
  %v3197 = vadd.f32 %v3158, %v3196
  %v3198 = vand.u32 %v511, 4294901760
  %3199 = vmatmul.f32.gmra.mxu0 %v3198
  %v3200 = vpop.f32.mrf.mxu0
  %v3201 = vadd.f32 %v3166, %v3200
  %3202 = vdwg.mxu0
  %3203 = vmatpush.msra.mxu0 0.0
  %3204 = vmatpush.msra.mxu0 0.0
  %3205 = vmatpush.msra.mxu0 0.0
  %3206 = vmatpush.msra.mxu0 0.0
  %3207 = vmatpush.msra.mxu0 0.0
  %3208 = vmatpush.msra.mxu0 0.0
  %3209 = vmatpush.msra.mxu0 0.0
  %3210 = vmatpush.msra.mxu0 0.0
  %3211 = vmatpush.msra.mxu0 0.0
  %3212 = vmatpush.msra.mxu0 0.0
  %3213 = vmatpush.msra.mxu0 0.0
  %3214 = vmatpush.msra.mxu0 0.0
  %3215 = vmatpush.msra.mxu0 0.0
  %3216 = vmatpush.msra.mxu0 0.0
  %v3217 = vand.u32 %v489, 4294901760
  %v3218 = vsub.f32 %v489, %v3217
  %3219 = vmatpush.msra.mxu0 %v3218
  %v3220 = vand.u32 %v484, 4294901760
  %v3221 = vsub.f32 %v484, %v3220
  %3222 = vmatpush.msra.mxu0 %v3221
  %v3223 = vand.u32 %v508, 4294901760
  %v3224 = vsub.f32 %v508, %v3223
  %3225 = vmatmul.f32.gmra.mxu0 %v3224
  %v3226 = vpop.f32.mrf.mxu0
  %v3227 = vadd.f32 %v3197, %v3226
  %v3228 = vand.u32 %v511, 4294901760
  %v3229 = vsub.f32 %v511, %v3228
  %3230 = vmatmul.f32.gmra.mxu0 %v3229
  %v3231 = vpop.f32.mrf.mxu0
  %v3232 = vadd.f32 %v3201, %v3231
  %3233 = vdwg.mxu0
  %3234 = vmatpush.msra.mxu0 0.0
  %3235 = vmatpush.msra.mxu0 0.0
  %3236 = vmatpush.msra.mxu0 0.0
  %3237 = vmatpush.msra.mxu0 0.0
  %3238 = vmatpush.msra.mxu0 0.0
  %3239 = vmatpush.msra.mxu0 0.0
  %3240 = vmatpush.msra.mxu0 0.0
  %3241 = vmatpush.msra.mxu0 0.0
  %3242 = vmatpush.msra.mxu0 0.0
  %3243 = vmatpush.msra.mxu0 0.0
  %3244 = vmatpush.msra.mxu0 0.0
  %3245 = vmatpush.msra.mxu0 0.0
  %3246 = vmatpush.msra.mxu0 0.0
  %3247 = vmatpush.msra.mxu0 0.0
  %v3248 = vand.u32 %v489, 4294901760
  %3249 = vmatpush.msra.mxu0 %v3248
  %v3250 = vand.u32 %v484, 4294901760
  %3251 = vmatpush.msra.mxu0 %v3250
  %v3252 = vand.u32 %v508, 4294901760
  %v3253 = vsub.f32 %v508, %v3252
  %v3254 = vand.u32 %v3253, 4294901760
  %3255 = vmatmul.f32.gmra.mxu0 %v3254
  %v3256 = vpop.f32.mrf.mxu0
  %v3257 = vadd.f32 %v3227, %v3256
  %v3258 = vand.u32 %v511, 4294901760
  %v3259 = vsub.f32 %v511, %v3258
  %v3260 = vand.u32 %v3259, 4294901760
  %3261 = vmatmul.f32.gmra.mxu0 %v3260
  %v3262 = vpop.f32.mrf.mxu0
  %v3263 = vadd.f32 %v3232, %v3262
  %3264 = vdwg.mxu0
  %3265 = vmatpush.msra.mxu0 0.0
  %3266 = vmatpush.msra.mxu0 0.0
  %3267 = vmatpush.msra.mxu0 0.0
  %3268 = vmatpush.msra.mxu0 0.0
  %3269 = vmatpush.msra.mxu0 0.0
  %3270 = vmatpush.msra.mxu0 0.0
  %3271 = vmatpush.msra.mxu0 0.0
  %3272 = vmatpush.msra.mxu0 0.0
  %3273 = vmatpush.msra.mxu0 0.0
  %3274 = vmatpush.msra.mxu0 0.0
  %3275 = vmatpush.msra.mxu0 0.0
  %3276 = vmatpush.msra.mxu0 0.0
  %3277 = vmatpush.msra.mxu0 0.0
  %3278 = vmatpush.msra.mxu0 0.0
  %v3279 = vand.u32 %v489, 4294901760
  %v3280 = vsub.f32 %v489, %v3279
  %v3281 = vand.u32 %v3280, 4294901760
  %3282 = vmatpush.msra.mxu0 %v3281
  %v3283 = vand.u32 %v484, 4294901760
  %v3284 = vsub.f32 %v484, %v3283
  %v3285 = vand.u32 %v3284, 4294901760
  %3286 = vmatpush.msra.mxu0 %v3285
  %v3287 = vand.u32 %v508, 4294901760
  %3288 = vmatmul.f32.gmra.mxu0 %v3287
  %v3289 = vpop.f32.mrf.mxu0
  %v3290 = vadd.f32 %v3257, %v3289
  %v3291 = vand.u32 %v511, 4294901760
  %3292 = vmatmul.f32.gmra.mxu0 %v3291
  %v3293 = vpop.f32.mrf.mxu0
  %v3294 = vadd.f32 %v3263, %v3293
  %3295 = vdwg.mxu0
  %3296 = vmatpush.msra.mxu0 0.0
  %3297 = vmatpush.msra.mxu0 0.0
  %3298 = vmatpush.msra.mxu0 0.0
  %3299 = vmatpush.msra.mxu0 0.0
  %3300 = vmatpush.msra.mxu0 0.0
  %3301 = vmatpush.msra.mxu0 0.0
  %3302 = vmatpush.msra.mxu0 0.0
  %3303 = vmatpush.msra.mxu0 0.0
  %3304 = vmatpush.msra.mxu0 0.0
  %3305 = vmatpush.msra.mxu0 0.0
  %3306 = vmatpush.msra.mxu0 0.0
  %3307 = vmatpush.msra.mxu0 0.0
  %3308 = vmatpush.msra.mxu0 0.0
  %3309 = vmatpush.msra.mxu0 0.0
  %v3310 = vand.u32 %v489, 4294901760
  %3311 = vmatpush.msra.mxu0 %v3310
  %v3312 = vand.u32 %v484, 4294901760
  %3313 = vmatpush.msra.mxu0 %v3312
  %v3314 = vand.u32 %v508, 4294901760
  %3315 = vmatmul.f32.gmra.mxu0 %v3314
  %v3316 = vpop.f32.mrf.mxu0
  %v3317 = vadd.f32 %v3290, %v3316
  %v3318 = vand.u32 %v511, 4294901760
  %3319 = vmatmul.f32.gmra.mxu0 %v3318
  %v3320 = vpop.f32.mrf.mxu0
  %v3321 = vadd.f32 %v3294, %v3320
  %3322 = vdwg.mxu0
  %v3323 = vand.u32 %v431, 4294901760
  %3324 = vmatpush.msra.mxu0 %v3323
  %v3325 = vand.u32 %v419, 4294901760
  %3326 = vmatpush.msra.mxu0 %v3325
  %v3327 = vand.u32 %v384, 4294901760
  %3328 = vmatpush.msra.mxu0 %v3327
  %v3329 = vand.u32 %v372, 4294901760
  %3330 = vmatpush.msra.mxu0 %v3329
  %v3331 = vand.u32 %v337, 4294901760
  %3332 = vmatpush.msra.mxu0 %v3331
  %v3333 = vand.u32 %v325, 4294901760
  %3334 = vmatpush.msra.mxu0 %v3333
  %v3335 = vand.u32 %v290, 4294901760
  %3336 = vmatpush.msra.mxu0 %v3335
  %v3337 = vand.u32 %v278, 4294901760
  %3338 = vmatpush.msra.mxu0 %v3337
  %v3339 = vand.u32 %v243, 4294901760
  %3340 = vmatpush.msra.mxu0 %v3339
  %v3341 = vand.u32 %v231, 4294901760
  %3342 = vmatpush.msra.mxu0 %v3341
  %v3343 = vand.u32 %v196, 4294901760
  %3344 = vmatpush.msra.mxu0 %v3343
  %v3345 = vand.u32 %v184, 4294901760
  %3346 = vmatpush.msra.mxu0 %v3345
  %v3347 = vand.u32 %v149, 4294901760
  %3348 = vmatpush.msra.mxu0 %v3347
  %v3349 = vand.u32 %v137, 4294901760
  %3350 = vmatpush.msra.mxu0 %v3349
  %v3351 = vand.u32 %v121, 4294901760
  %3352 = vmatpush.msra.mxu0 %v3351
  %v3353 = vand.u32 %v120, 4294901760
  %3354 = vmatpush.msra.mxu0 %v3353
  %v3355 = vand.u32 %v502, 4294901760
  %v3356 = vsub.f32 %v502, %v3355
  %v3357 = vand.u32 %v3356, 4294901760
  %v3358 = vsub.f32 %v3356, %v3357
  %v3359 = vand.u32 %v3358, 4294901760
  %3360 = vmatmul.f32.gmra.mxu0 %v3359
  %v3361 = vpop.f32.mrf.mxu0
  %v3362 = vadd.f32 0.0, %v3361
  %v3363 = vand.u32 %v504, 4294901760
  %v3364 = vsub.f32 %v504, %v3363
  %v3365 = vand.u32 %v3364, 4294901760
  %v3366 = vsub.f32 %v3364, %v3365
  %v3367 = vand.u32 %v3366, 4294901760
  %3368 = vmatmul.f32.gmra.mxu0 %v3367
  %v3369 = vpop.f32.mrf.mxu0
  %v3370 = vadd.f32 0.0, %v3369
  %3371 = vdwg.mxu0
  %v3372 = vand.u32 %v431, 4294901760
  %v3373 = vsub.f32 %v431, %v3372
  %v3374 = vand.u32 %v3373, 4294901760
  %v3375 = vsub.f32 %v3373, %v3374
  %v3376 = vand.u32 %v3375, 4294901760
  %3377 = vmatpush.msra.mxu0 %v3376
  %v3378 = vand.u32 %v419, 4294901760
  %v3379 = vsub.f32 %v419, %v3378
  %v3380 = vand.u32 %v3379, 4294901760
  %v3381 = vsub.f32 %v3379, %v3380
  %v3382 = vand.u32 %v3381, 4294901760
  %3383 = vmatpush.msra.mxu0 %v3382
  %v3384 = vand.u32 %v384, 4294901760
  %v3385 = vsub.f32 %v384, %v3384
  %v3386 = vand.u32 %v3385, 4294901760
  %v3387 = vsub.f32 %v3385, %v3386
  %v3388 = vand.u32 %v3387, 4294901760
  %3389 = vmatpush.msra.mxu0 %v3388
  %v3390 = vand.u32 %v372, 4294901760
  %v3391 = vsub.f32 %v372, %v3390
  %v3392 = vand.u32 %v3391, 4294901760
  %v3393 = vsub.f32 %v3391, %v3392
  %v3394 = vand.u32 %v3393, 4294901760
  %3395 = vmatpush.msra.mxu0 %v3394
  %v3396 = vand.u32 %v337, 4294901760
  %v3397 = vsub.f32 %v337, %v3396
  %v3398 = vand.u32 %v3397, 4294901760
  %v3399 = vsub.f32 %v3397, %v3398
  %v3400 = vand.u32 %v3399, 4294901760
  %3401 = vmatpush.msra.mxu0 %v3400
  %v3402 = vand.u32 %v325, 4294901760
  %v3403 = vsub.f32 %v325, %v3402
  %v3404 = vand.u32 %v3403, 4294901760
  %v3405 = vsub.f32 %v3403, %v3404
  %v3406 = vand.u32 %v3405, 4294901760
  %3407 = vmatpush.msra.mxu0 %v3406
  %v3408 = vand.u32 %v290, 4294901760
  %v3409 = vsub.f32 %v290, %v3408
  %v3410 = vand.u32 %v3409, 4294901760
  %v3411 = vsub.f32 %v3409, %v3410
  %v3412 = vand.u32 %v3411, 4294901760
  %3413 = vmatpush.msra.mxu0 %v3412
  %v3414 = vand.u32 %v278, 4294901760
  %v3415 = vsub.f32 %v278, %v3414
  %v3416 = vand.u32 %v3415, 4294901760
  %v3417 = vsub.f32 %v3415, %v3416
  %v3418 = vand.u32 %v3417, 4294901760
  %3419 = vmatpush.msra.mxu0 %v3418
  %v3420 = vand.u32 %v243, 4294901760
  %v3421 = vsub.f32 %v243, %v3420
  %v3422 = vand.u32 %v3421, 4294901760
  %v3423 = vsub.f32 %v3421, %v3422
  %v3424 = vand.u32 %v3423, 4294901760
  %3425 = vmatpush.msra.mxu0 %v3424
  %v3426 = vand.u32 %v231, 4294901760
  %v3427 = vsub.f32 %v231, %v3426
  %v3428 = vand.u32 %v3427, 4294901760
  %v3429 = vsub.f32 %v3427, %v3428
  %v3430 = vand.u32 %v3429, 4294901760
  %3431 = vmatpush.msra.mxu0 %v3430
  %v3432 = vand.u32 %v196, 4294901760
  %v3433 = vsub.f32 %v196, %v3432
  %v3434 = vand.u32 %v3433, 4294901760
  %v3435 = vsub.f32 %v3433, %v3434
  %v3436 = vand.u32 %v3435, 4294901760
  %3437 = vmatpush.msra.mxu0 %v3436
  %v3438 = vand.u32 %v184, 4294901760
  %v3439 = vsub.f32 %v184, %v3438
  %v3440 = vand.u32 %v3439, 4294901760
  %v3441 = vsub.f32 %v3439, %v3440
  %v3442 = vand.u32 %v3441, 4294901760
  %3443 = vmatpush.msra.mxu0 %v3442
  %v3444 = vand.u32 %v149, 4294901760
  %v3445 = vsub.f32 %v149, %v3444
  %v3446 = vand.u32 %v3445, 4294901760
  %v3447 = vsub.f32 %v3445, %v3446
  %v3448 = vand.u32 %v3447, 4294901760
  %3449 = vmatpush.msra.mxu0 %v3448
  %v3450 = vand.u32 %v137, 4294901760
  %v3451 = vsub.f32 %v137, %v3450
  %v3452 = vand.u32 %v3451, 4294901760
  %v3453 = vsub.f32 %v3451, %v3452
  %v3454 = vand.u32 %v3453, 4294901760
  %3455 = vmatpush.msra.mxu0 %v3454
  %v3456 = vand.u32 %v121, 4294901760
  %v3457 = vsub.f32 %v121, %v3456
  %v3458 = vand.u32 %v3457, 4294901760
  %v3459 = vsub.f32 %v3457, %v3458
  %v3460 = vand.u32 %v3459, 4294901760
  %3461 = vmatpush.msra.mxu0 %v3460
  %v3462 = vand.u32 %v120, 4294901760
  %v3463 = vsub.f32 %v120, %v3462
  %v3464 = vand.u32 %v3463, 4294901760
  %v3465 = vsub.f32 %v3463, %v3464
  %v3466 = vand.u32 %v3465, 4294901760
  %3467 = vmatpush.msra.mxu0 %v3466
  %v3468 = vand.u32 %v502, 4294901760
  %3469 = vmatmul.f32.gmra.mxu0 %v3468
  %v3470 = vpop.f32.mrf.mxu0
  %v3471 = vadd.f32 %v3362, %v3470
  %v3472 = vand.u32 %v504, 4294901760
  %3473 = vmatmul.f32.gmra.mxu0 %v3472
  %v3474 = vpop.f32.mrf.mxu0
  %v3475 = vadd.f32 %v3370, %v3474
  %3476 = vdwg.mxu0
  %v3477 = vand.u32 %v431, 4294901760
  %v3478 = vsub.f32 %v431, %v3477
  %3479 = vmatpush.msra.mxu0 %v3478
  %v3480 = vand.u32 %v419, 4294901760
  %v3481 = vsub.f32 %v419, %v3480
  %3482 = vmatpush.msra.mxu0 %v3481
  %v3483 = vand.u32 %v384, 4294901760
  %v3484 = vsub.f32 %v384, %v3483
  %3485 = vmatpush.msra.mxu0 %v3484
  %v3486 = vand.u32 %v372, 4294901760
  %v3487 = vsub.f32 %v372, %v3486
  %3488 = vmatpush.msra.mxu0 %v3487
  %v3489 = vand.u32 %v337, 4294901760
  %v3490 = vsub.f32 %v337, %v3489
  %3491 = vmatpush.msra.mxu0 %v3490
  %v3492 = vand.u32 %v325, 4294901760
  %v3493 = vsub.f32 %v325, %v3492
  %3494 = vmatpush.msra.mxu0 %v3493
  %v3495 = vand.u32 %v290, 4294901760
  %v3496 = vsub.f32 %v290, %v3495
  %3497 = vmatpush.msra.mxu0 %v3496
  %v3498 = vand.u32 %v278, 4294901760
  %v3499 = vsub.f32 %v278, %v3498
  %3500 = vmatpush.msra.mxu0 %v3499
  %v3501 = vand.u32 %v243, 4294901760
  %v3502 = vsub.f32 %v243, %v3501
  %3503 = vmatpush.msra.mxu0 %v3502
  %v3504 = vand.u32 %v231, 4294901760
  %v3505 = vsub.f32 %v231, %v3504
  %3506 = vmatpush.msra.mxu0 %v3505
  %v3507 = vand.u32 %v196, 4294901760
  %v3508 = vsub.f32 %v196, %v3507
  %3509 = vmatpush.msra.mxu0 %v3508
  %v3510 = vand.u32 %v184, 4294901760
  %v3511 = vsub.f32 %v184, %v3510
  %3512 = vmatpush.msra.mxu0 %v3511
  %v3513 = vand.u32 %v149, 4294901760
  %v3514 = vsub.f32 %v149, %v3513
  %3515 = vmatpush.msra.mxu0 %v3514
  %v3516 = vand.u32 %v137, 4294901760
  %v3517 = vsub.f32 %v137, %v3516
  %3518 = vmatpush.msra.mxu0 %v3517
  %v3519 = vand.u32 %v121, 4294901760
  %v3520 = vsub.f32 %v121, %v3519
  %3521 = vmatpush.msra.mxu0 %v3520
  %v3522 = vand.u32 %v120, 4294901760
  %v3523 = vsub.f32 %v120, %v3522
  %3524 = vmatpush.msra.mxu0 %v3523
  %v3525 = vand.u32 %v502, 4294901760
  %v3526 = vsub.f32 %v502, %v3525
  %3527 = vmatmul.f32.gmra.mxu0 %v3526
  %v3528 = vpop.f32.mrf.mxu0
  %v3529 = vadd.f32 %v3471, %v3528
  %v3530 = vand.u32 %v504, 4294901760
  %v3531 = vsub.f32 %v504, %v3530
  %3532 = vmatmul.f32.gmra.mxu0 %v3531
  %v3533 = vpop.f32.mrf.mxu0
  %v3534 = vadd.f32 %v3475, %v3533
  %3535 = vdwg.mxu0
  %v3536 = vand.u32 %v431, 4294901760
  %3537 = vmatpush.msra.mxu0 %v3536
  %v3538 = vand.u32 %v419, 4294901760
  %3539 = vmatpush.msra.mxu0 %v3538
  %v3540 = vand.u32 %v384, 4294901760
  %3541 = vmatpush.msra.mxu0 %v3540
  %v3542 = vand.u32 %v372, 4294901760
  %3543 = vmatpush.msra.mxu0 %v3542
  %v3544 = vand.u32 %v337, 4294901760
  %3545 = vmatpush.msra.mxu0 %v3544
  %v3546 = vand.u32 %v325, 4294901760
  %3547 = vmatpush.msra.mxu0 %v3546
  %v3548 = vand.u32 %v290, 4294901760
  %3549 = vmatpush.msra.mxu0 %v3548
  %v3550 = vand.u32 %v278, 4294901760
  %3551 = vmatpush.msra.mxu0 %v3550
  %v3552 = vand.u32 %v243, 4294901760
  %3553 = vmatpush.msra.mxu0 %v3552
  %v3554 = vand.u32 %v231, 4294901760
  %3555 = vmatpush.msra.mxu0 %v3554
  %v3556 = vand.u32 %v196, 4294901760
  %3557 = vmatpush.msra.mxu0 %v3556
  %v3558 = vand.u32 %v184, 4294901760
  %3559 = vmatpush.msra.mxu0 %v3558
  %v3560 = vand.u32 %v149, 4294901760
  %3561 = vmatpush.msra.mxu0 %v3560
  %v3562 = vand.u32 %v137, 4294901760
  %3563 = vmatpush.msra.mxu0 %v3562
  %v3564 = vand.u32 %v121, 4294901760
  %3565 = vmatpush.msra.mxu0 %v3564
  %v3566 = vand.u32 %v120, 4294901760
  %3567 = vmatpush.msra.mxu0 %v3566
  %v3568 = vand.u32 %v502, 4294901760
  %v3569 = vsub.f32 %v502, %v3568
  %v3570 = vand.u32 %v3569, 4294901760
  %3571 = vmatmul.f32.gmra.mxu0 %v3570
  %v3572 = vpop.f32.mrf.mxu0
  %v3573 = vadd.f32 %v3529, %v3572
  %v3574 = vand.u32 %v504, 4294901760
  %v3575 = vsub.f32 %v504, %v3574
  %v3576 = vand.u32 %v3575, 4294901760
  %3577 = vmatmul.f32.gmra.mxu0 %v3576
  %v3578 = vpop.f32.mrf.mxu0
  %v3579 = vadd.f32 %v3534, %v3578
  %3580 = vdwg.mxu0
  %v3581 = vand.u32 %v431, 4294901760
  %v3582 = vsub.f32 %v431, %v3581
  %v3583 = vand.u32 %v3582, 4294901760
  %3584 = vmatpush.msra.mxu0 %v3583
  %v3585 = vand.u32 %v419, 4294901760
  %v3586 = vsub.f32 %v419, %v3585
  %v3587 = vand.u32 %v3586, 4294901760
  %3588 = vmatpush.msra.mxu0 %v3587
  %v3589 = vand.u32 %v384, 4294901760
  %v3590 = vsub.f32 %v384, %v3589
  %v3591 = vand.u32 %v3590, 4294901760
  %3592 = vmatpush.msra.mxu0 %v3591
  %v3593 = vand.u32 %v372, 4294901760
  %v3594 = vsub.f32 %v372, %v3593
  %v3595 = vand.u32 %v3594, 4294901760
  %3596 = vmatpush.msra.mxu0 %v3595
  %v3597 = vand.u32 %v337, 4294901760
  %v3598 = vsub.f32 %v337, %v3597
  %v3599 = vand.u32 %v3598, 4294901760
  %3600 = vmatpush.msra.mxu0 %v3599
  %v3601 = vand.u32 %v325, 4294901760
  %v3602 = vsub.f32 %v325, %v3601
  %v3603 = vand.u32 %v3602, 4294901760
  %3604 = vmatpush.msra.mxu0 %v3603
  %v3605 = vand.u32 %v290, 4294901760
  %v3606 = vsub.f32 %v290, %v3605
  %v3607 = vand.u32 %v3606, 4294901760
  %3608 = vmatpush.msra.mxu0 %v3607
  %v3609 = vand.u32 %v278, 4294901760
  %v3610 = vsub.f32 %v278, %v3609
  %v3611 = vand.u32 %v3610, 4294901760
  %3612 = vmatpush.msra.mxu0 %v3611
  %v3613 = vand.u32 %v243, 4294901760
  %v3614 = vsub.f32 %v243, %v3613
  %v3615 = vand.u32 %v3614, 4294901760
  %3616 = vmatpush.msra.mxu0 %v3615
  %v3617 = vand.u32 %v231, 4294901760
  %v3618 = vsub.f32 %v231, %v3617
  %v3619 = vand.u32 %v3618, 4294901760
  %3620 = vmatpush.msra.mxu0 %v3619
  %v3621 = vand.u32 %v196, 4294901760
  %v3622 = vsub.f32 %v196, %v3621
  %v3623 = vand.u32 %v3622, 4294901760
  %3624 = vmatpush.msra.mxu0 %v3623
  %v3625 = vand.u32 %v184, 4294901760
  %v3626 = vsub.f32 %v184, %v3625
  %v3627 = vand.u32 %v3626, 4294901760
  %3628 = vmatpush.msra.mxu0 %v3627
  %v3629 = vand.u32 %v149, 4294901760
  %v3630 = vsub.f32 %v149, %v3629
  %v3631 = vand.u32 %v3630, 4294901760
  %3632 = vmatpush.msra.mxu0 %v3631
  %v3633 = vand.u32 %v137, 4294901760
  %v3634 = vsub.f32 %v137, %v3633
  %v3635 = vand.u32 %v3634, 4294901760
  %3636 = vmatpush.msra.mxu0 %v3635
  %v3637 = vand.u32 %v121, 4294901760
  %v3638 = vsub.f32 %v121, %v3637
  %v3639 = vand.u32 %v3638, 4294901760
  %3640 = vmatpush.msra.mxu0 %v3639
  %v3641 = vand.u32 %v120, 4294901760
  %v3642 = vsub.f32 %v120, %v3641
  %v3643 = vand.u32 %v3642, 4294901760
  %3644 = vmatpush.msra.mxu0 %v3643
  %v3645 = vand.u32 %v502, 4294901760
  %3646 = vmatmul.f32.gmra.mxu0 %v3645
  %v3647 = vpop.f32.mrf.mxu0
  %v3648 = vadd.f32 %v3573, %v3647
  %v3649 = vand.u32 %v504, 4294901760
  %3650 = vmatmul.f32.gmra.mxu0 %v3649
  %v3651 = vpop.f32.mrf.mxu0
  %v3652 = vadd.f32 %v3579, %v3651
  %3653 = vdwg.mxu0
  %v3654 = vand.u32 %v431, 4294901760
  %3655 = vmatpush.msra.mxu0 %v3654
  %v3656 = vand.u32 %v419, 4294901760
  %3657 = vmatpush.msra.mxu0 %v3656
  %v3658 = vand.u32 %v384, 4294901760
  %3659 = vmatpush.msra.mxu0 %v3658
  %v3660 = vand.u32 %v372, 4294901760
  %3661 = vmatpush.msra.mxu0 %v3660
  %v3662 = vand.u32 %v337, 4294901760
  %3663 = vmatpush.msra.mxu0 %v3662
  %v3664 = vand.u32 %v325, 4294901760
  %3665 = vmatpush.msra.mxu0 %v3664
  %v3666 = vand.u32 %v290, 4294901760
  %3667 = vmatpush.msra.mxu0 %v3666
  %v3668 = vand.u32 %v278, 4294901760
  %3669 = vmatpush.msra.mxu0 %v3668
  %v3670 = vand.u32 %v243, 4294901760
  %3671 = vmatpush.msra.mxu0 %v3670
  %v3672 = vand.u32 %v231, 4294901760
  %3673 = vmatpush.msra.mxu0 %v3672
  %v3674 = vand.u32 %v196, 4294901760
  %3675 = vmatpush.msra.mxu0 %v3674
  %v3676 = vand.u32 %v184, 4294901760
  %3677 = vmatpush.msra.mxu0 %v3676
  %v3678 = vand.u32 %v149, 4294901760
  %3679 = vmatpush.msra.mxu0 %v3678
  %v3680 = vand.u32 %v137, 4294901760
  %3681 = vmatpush.msra.mxu0 %v3680
  %v3682 = vand.u32 %v121, 4294901760
  %3683 = vmatpush.msra.mxu0 %v3682
  %v3684 = vand.u32 %v120, 4294901760
  %3685 = vmatpush.msra.mxu0 %v3684
  %v3686 = vand.u32 %v502, 4294901760
  %3687 = vmatmul.f32.gmra.mxu0 %v3686
  %v3688 = vpop.f32.mrf.mxu0
  %v3689 = vadd.f32 %v3648, %v3688
  %v3690 = vand.u32 %v504, 4294901760
  %3691 = vmatmul.f32.gmra.mxu0 %v3690
  %v3692 = vpop.f32.mrf.mxu0
  %v3693 = vadd.f32 %v3652, %v3692
  %3694 = vdwg.mxu0
  %3695 = vmatpush.msra.mxu0 0.0
  %3696 = vmatpush.msra.mxu0 0.0
  %3697 = vmatpush.msra.mxu0 0.0
  %3698 = vmatpush.msra.mxu0 0.0
  %3699 = vmatpush.msra.mxu0 0.0
  %3700 = vmatpush.msra.mxu0 0.0
  %3701 = vmatpush.msra.mxu0 0.0
  %3702 = vmatpush.msra.mxu0 0.0
  %3703 = vmatpush.msra.mxu0 0.0
  %3704 = vmatpush.msra.mxu0 0.0
  %3705 = vmatpush.msra.mxu0 0.0
  %3706 = vmatpush.msra.mxu0 0.0
  %3707 = vmatpush.msra.mxu0 0.0
  %3708 = vmatpush.msra.mxu0 0.0
  %v3709 = vand.u32 %v478, 4294901760
  %3710 = vmatpush.msra.mxu0 %v3709
  %v3711 = vand.u32 %v466, 4294901760
  %3712 = vmatpush.msra.mxu0 %v3711
  %v3713 = vand.u32 %v508, 4294901760
  %v3714 = vsub.f32 %v508, %v3713
  %v3715 = vand.u32 %v3714, 4294901760
  %v3716 = vsub.f32 %v3714, %v3715
  %v3717 = vand.u32 %v3716, 4294901760
  %3718 = vmatmul.f32.gmra.mxu0 %v3717
  %v3719 = vpop.f32.mrf.mxu0
  %v3720 = vadd.f32 %v3689, %v3719
  %v3721 = vand.u32 %v511, 4294901760
  %v3722 = vsub.f32 %v511, %v3721
  %v3723 = vand.u32 %v3722, 4294901760
  %v3724 = vsub.f32 %v3722, %v3723
  %v3725 = vand.u32 %v3724, 4294901760
  %3726 = vmatmul.f32.gmra.mxu0 %v3725
  %v3727 = vpop.f32.mrf.mxu0
  %v3728 = vadd.f32 %v3693, %v3727
  %3729 = vdwg.mxu0
  %3730 = vmatpush.msra.mxu0 0.0
  %3731 = vmatpush.msra.mxu0 0.0
  %3732 = vmatpush.msra.mxu0 0.0
  %3733 = vmatpush.msra.mxu0 0.0
  %3734 = vmatpush.msra.mxu0 0.0
  %3735 = vmatpush.msra.mxu0 0.0
  %3736 = vmatpush.msra.mxu0 0.0
  %3737 = vmatpush.msra.mxu0 0.0
  %3738 = vmatpush.msra.mxu0 0.0
  %3739 = vmatpush.msra.mxu0 0.0
  %3740 = vmatpush.msra.mxu0 0.0
  %3741 = vmatpush.msra.mxu0 0.0
  %3742 = vmatpush.msra.mxu0 0.0
  %3743 = vmatpush.msra.mxu0 0.0
  %v3744 = vand.u32 %v478, 4294901760
  %v3745 = vsub.f32 %v478, %v3744
  %v3746 = vand.u32 %v3745, 4294901760
  %v3747 = vsub.f32 %v3745, %v3746
  %v3748 = vand.u32 %v3747, 4294901760
  %3749 = vmatpush.msra.mxu0 %v3748
  %v3750 = vand.u32 %v466, 4294901760
  %v3751 = vsub.f32 %v466, %v3750
  %v3752 = vand.u32 %v3751, 4294901760
  %v3753 = vsub.f32 %v3751, %v3752
  %v3754 = vand.u32 %v3753, 4294901760
  %3755 = vmatpush.msra.mxu0 %v3754
  %v3756 = vand.u32 %v508, 4294901760
  %3757 = vmatmul.f32.gmra.mxu0 %v3756
  %v3758 = vpop.f32.mrf.mxu0
  %v3759 = vadd.f32 %v3720, %v3758
  %v3760 = vand.u32 %v511, 4294901760
  %3761 = vmatmul.f32.gmra.mxu0 %v3760
  %v3762 = vpop.f32.mrf.mxu0
  %v3763 = vadd.f32 %v3728, %v3762
  %3764 = vdwg.mxu0
  %3765 = vmatpush.msra.mxu0 0.0
  %3766 = vmatpush.msra.mxu0 0.0
  %3767 = vmatpush.msra.mxu0 0.0
  %3768 = vmatpush.msra.mxu0 0.0
  %3769 = vmatpush.msra.mxu0 0.0
  %3770 = vmatpush.msra.mxu0 0.0
  %3771 = vmatpush.msra.mxu0 0.0
  %3772 = vmatpush.msra.mxu0 0.0
  %3773 = vmatpush.msra.mxu0 0.0
  %3774 = vmatpush.msra.mxu0 0.0
  %3775 = vmatpush.msra.mxu0 0.0
  %3776 = vmatpush.msra.mxu0 0.0
  %3777 = vmatpush.msra.mxu0 0.0
  %3778 = vmatpush.msra.mxu0 0.0
  %v3779 = vand.u32 %v478, 4294901760
  %v3780 = vsub.f32 %v478, %v3779
  %3781 = vmatpush.msra.mxu0 %v3780
  %v3782 = vand.u32 %v466, 4294901760
  %v3783 = vsub.f32 %v466, %v3782
  %3784 = vmatpush.msra.mxu0 %v3783
  %v3785 = vand.u32 %v508, 4294901760
  %v3786 = vsub.f32 %v508, %v3785
  %3787 = vmatmul.f32.gmra.mxu0 %v3786
  %v3788 = vpop.f32.mrf.mxu0
  %v3789 = vadd.f32 %v3759, %v3788
  %v3790 = vand.u32 %v511, 4294901760
  %v3791 = vsub.f32 %v511, %v3790
  %3792 = vmatmul.f32.gmra.mxu0 %v3791
  %v3793 = vpop.f32.mrf.mxu0
  %v3794 = vadd.f32 %v3763, %v3793
  %3795 = vdwg.mxu0
  %3796 = vmatpush.msra.mxu0 0.0
  %3797 = vmatpush.msra.mxu0 0.0
  %3798 = vmatpush.msra.mxu0 0.0
  %3799 = vmatpush.msra.mxu0 0.0
  %3800 = vmatpush.msra.mxu0 0.0
  %3801 = vmatpush.msra.mxu0 0.0
  %3802 = vmatpush.msra.mxu0 0.0
  %3803 = vmatpush.msra.mxu0 0.0
  %3804 = vmatpush.msra.mxu0 0.0
  %3805 = vmatpush.msra.mxu0 0.0
  %3806 = vmatpush.msra.mxu0 0.0
  %3807 = vmatpush.msra.mxu0 0.0
  %3808 = vmatpush.msra.mxu0 0.0
  %3809 = vmatpush.msra.mxu0 0.0
  %v3810 = vand.u32 %v478, 4294901760
  %3811 = vmatpush.msra.mxu0 %v3810
  %v3812 = vand.u32 %v466, 4294901760
  %3813 = vmatpush.msra.mxu0 %v3812
  %v3814 = vand.u32 %v508, 4294901760
  %v3815 = vsub.f32 %v508, %v3814
  %v3816 = vand.u32 %v3815, 4294901760
  %3817 = vmatmul.f32.gmra.mxu0 %v3816
  %v3818 = vpop.f32.mrf.mxu0
  %v3819 = vadd.f32 %v3789, %v3818
  %v3820 = vand.u32 %v511, 4294901760
  %v3821 = vsub.f32 %v511, %v3820
  %v3822 = vand.u32 %v3821, 4294901760
  %3823 = vmatmul.f32.gmra.mxu0 %v3822
  %v3824 = vpop.f32.mrf.mxu0
  %v3825 = vadd.f32 %v3794, %v3824
  %3826 = vdwg.mxu0
  %3827 = vmatpush.msra.mxu0 0.0
  %3828 = vmatpush.msra.mxu0 0.0
  %3829 = vmatpush.msra.mxu0 0.0
  %3830 = vmatpush.msra.mxu0 0.0
  %3831 = vmatpush.msra.mxu0 0.0
  %3832 = vmatpush.msra.mxu0 0.0
  %3833 = vmatpush.msra.mxu0 0.0
  %3834 = vmatpush.msra.mxu0 0.0
  %3835 = vmatpush.msra.mxu0 0.0
  %3836 = vmatpush.msra.mxu0 0.0
  %3837 = vmatpush.msra.mxu0 0.0
  %3838 = vmatpush.msra.mxu0 0.0
  %3839 = vmatpush.msra.mxu0 0.0
  %3840 = vmatpush.msra.mxu0 0.0
  %v3841 = vand.u32 %v478, 4294901760
  %v3842 = vsub.f32 %v478, %v3841
  %v3843 = vand.u32 %v3842, 4294901760
  %3844 = vmatpush.msra.mxu0 %v3843
  %v3845 = vand.u32 %v466, 4294901760
  %v3846 = vsub.f32 %v466, %v3845
  %v3847 = vand.u32 %v3846, 4294901760
  %3848 = vmatpush.msra.mxu0 %v3847
  %v3849 = vand.u32 %v508, 4294901760
  %3850 = vmatmul.f32.gmra.mxu0 %v3849
  %v3851 = vpop.f32.mrf.mxu0
  %v3852 = vadd.f32 %v3819, %v3851
  %v3853 = vand.u32 %v511, 4294901760
  %3854 = vmatmul.f32.gmra.mxu0 %v3853
  %v3855 = vpop.f32.mrf.mxu0
  %v3856 = vadd.f32 %v3825, %v3855
  %3857 = vdwg.mxu0
  %3858 = vmatpush.msra.mxu0 0.0
  %3859 = vmatpush.msra.mxu0 0.0
  %3860 = vmatpush.msra.mxu0 0.0
  %3861 = vmatpush.msra.mxu0 0.0
  %3862 = vmatpush.msra.mxu0 0.0
  %3863 = vmatpush.msra.mxu0 0.0
  %3864 = vmatpush.msra.mxu0 0.0
  %3865 = vmatpush.msra.mxu0 0.0
  %3866 = vmatpush.msra.mxu0 0.0
  %3867 = vmatpush.msra.mxu0 0.0
  %3868 = vmatpush.msra.mxu0 0.0
  %3869 = vmatpush.msra.mxu0 0.0
  %3870 = vmatpush.msra.mxu0 0.0
  %3871 = vmatpush.msra.mxu0 0.0
  %v3872 = vand.u32 %v478, 4294901760
  %3873 = vmatpush.msra.mxu0 %v3872
  %v3874 = vand.u32 %v466, 4294901760
  %3875 = vmatpush.msra.mxu0 %v3874
  %v3876 = vand.u32 %v508, 4294901760
  %3877 = vmatmul.f32.gmra.mxu0 %v3876
  %v3878 = vpop.f32.mrf.mxu0
  %v3879 = vadd.f32 %v3852, %v3878
  %v3880 = vand.u32 %v511, 4294901760
  %3881 = vmatmul.f32.gmra.mxu0 %v3880
  %v3882 = vpop.f32.mrf.mxu0
  %v3883 = vadd.f32 %v3856, %v3882
  %3884 = vdwg.mxu0
  %v3885 = vmul.f32 %v1069, %v34
  %v3886 = vmul.f32 %v1631, %v35
  %v3887 = vmul.f32 %v2193, %v36
  %v3888 = vmul.f32 %v2755, %v37
  %v3889 = vmul.f32 %v3317, %v38
  %v3890 = vmul.f32 %v3879, %v39
  %v3891 = vmul.f32 %v1073, %v34
  %v3892 = vmul.f32 %v1635, %v35
  %v3893 = vmul.f32 %v2197, %v36
  %v3894 = vmul.f32 %v2759, %v37
  %v3895 = vmul.f32 %v3321, %v38
  %v3896 = vmul.f32 %v3883, %v39
  %v3897 = vmul.f32 %v3885, %v3885
  %v3898 = vmul.f32 %v3886, %v3886
  %v3899 = vmul.f32 %v3887, %v3887
  %v3900 = vmul.f32 %v3888, %v3888
  %v3901 = vmul.f32 %v3889, %v3889
  %v3902 = vmul.f32 %v3890, %v3890
  %v3903 = vmul.f32 %v3891, %v3891
  %v3904 = vmul.f32 %v3892, %v3892
  %v3905 = vmul.f32 %v3893, %v3893
  %v3906 = vmul.f32 %v3894, %v3894
  %v3907 = vmul.f32 %v3895, %v3895
  %v3908 = vmul.f32 %v3896, %v3896
  %v3909 = vadd.f32 %v3885, %v3886
  %v3910 = vadd.f32 %v3909, %v3887
  %v3911 = vadd.f32 %v3910, %v3888
  %v3912 = vadd.f32 %v3911, %v3889
  %vm3913 = vcmask 64512
  %v3914 = vsel %vm3913, %v3890, 0.0
  %v3915 = vadd.f32 %v3912, %v3914
  %3916 = vadd.xlane.f32.xlu0 %v3915
  %v3917 = vpop.xlane.xlu0 %3916
  %v3918 = vadd.f32 %v3891, %v3892
  %v3919 = vadd.f32 %v3918, %v3893
  %v3920 = vadd.f32 %v3919, %v3894
  %v3921 = vadd.f32 %v3920, %v3895
  %v3922 = vsel %vm3913, %v3896, 0.0
  %v3923 = vadd.f32 %v3921, %v3922
  %3924 = vadd.xlane.f32.xlu0 %v3923
  %v3925 = vpop.xlane.xlu0 %3924
  %v3926 = vadd.f32 %v3897, %v3898
  %v3927 = vadd.f32 %v3926, %v3899
  %v3928 = vadd.f32 %v3927, %v3900
  %v3929 = vadd.f32 %v3928, %v3901
  %v3930 = vsel %vm3913, %v3902, 0.0
  %v3931 = vadd.f32 %v3929, %v3930
  %3932 = vadd.xlane.f32.xlu0 %v3931
  %v3933 = vpop.xlane.xlu0 %3932
  %v3934 = vadd.f32 %v3903, %v3904
  %v3935 = vadd.f32 %v3934, %v3905
  %v3936 = vadd.f32 %v3935, %v3906
  %v3937 = vadd.f32 %v3936, %v3907
  %v3938 = vsel %vm3913, %v3908, 0.0
  %v3939 = vadd.f32 %v3937, %v3938
  %3940 = vadd.xlane.f32.xlu0 %v3939
  %v3941 = vpop.xlane.xlu0 %3940
  %v3942 = vmul.f32 %v3917, 0.001953125
  %v3943 = vmul.f32 %v3925, 0.001953125
  %v3944 = vmul.f32 %v3933, 0.001953125
  %v3945 = vmul.f32 %v3941, 0.001953125
  %v3946 = vmul.f32 %v3942, %v3942
  %v3947 = vmul.f32 %v3943, %v3943
  %v3948 = vsub.f32 %v3944, %v3946
  %v3949 = vsub.f32 %v3945, %v3947
  %v3950 = vmax.f32 %v3948, 0.0
  %v3951 = vmax.f32 %v3949, 0.0
  %v3952 = vadd.f32 %v3950, 1e-05
  %v3953 = vadd.f32 %v3951, 1e-05
  %v3954 = vrsqrt.pop %v3952
  %v3955 = vmul.f32 %v3954, %v3952
  %v3956 = vmul.f32 %v3955, %v3954
  %v3957 = vmul.f32 0.5, %v3956
  %v3958 = vsub.f32 1.5, %v3957
  %v3959 = vmul.f32 %v3954, %v3958
  %vm3960 = vweird.f32 %v3952
  %vm3961 = vweird.f32 %v3954
  %vm3962 = vmor %vm3960, %vm3961
  %v3963 = vsel %vm3962, %v3954, %v3959
  %v3964 = vrsqrt.pop %v3953
  %v3965 = vmul.f32 %v3964, %v3953
  %v3966 = vmul.f32 %v3965, %v3964
  %v3967 = vmul.f32 0.5, %v3966
  %v3968 = vsub.f32 1.5, %v3967
  %v3969 = vmul.f32 %v3964, %v3968
  %vm3970 = vweird.f32 %v3953
  %vm3971 = vweird.f32 %v3964
  %vm3972 = vmor %vm3970, %vm3971
  %v3973 = vsel %vm3972, %v3964, %v3969
  %v3974 = vmul.f32 %v46, %v3963
  %v3975 = vmul.f32 %v47, %v3973
  %v3976 = vmul.f32 %v3942, %v3974
  %v3977 = vmul.f32 %v3943, %v3975
  %v3978 = vsub.f32 %v48, %v3976
  %v3979 = vsub.f32 %v49, %v3977
  %3981 = vset.pattern.permute.xlu0 0
  %3982 = vperm.xlu0 %3981, %v3974
  %v3983 = vpop.permute.xlu0 %3982
  %3986 = vset.pattern.permute.xlu0 0
  %3987 = vperm.xlu0 %3986, %v3975
  %v3988 = vpop.permute.xlu0 %3987
  %v3990 = vmul.f32 %v3885, %v3983
  %v3991 = vmul.f32 %v3886, %v3983
  %v3992 = vmul.f32 %v3887, %v3983
  %v3993 = vmul.f32 %v3888, %v3983
  %v3994 = vmul.f32 %v3889, %v3983
  %v3995 = vmul.f32 %v3890, %v3983
  %v3996 = vmul.f32 %v3891, %v3988
  %v3997 = vmul.f32 %v3892, %v3988
  %v3998 = vmul.f32 %v3893, %v3988
  %v3999 = vmul.f32 %v3894, %v3988
  %v4000 = vmul.f32 %v3895, %v3988
  %v4001 = vmul.f32 %v3896, %v3988
  %4003 = vset.pattern.permute.xlu0 0
  %4004 = vperm.xlu0 %4003, %v3978
  %v4005 = vpop.permute.xlu0 %4004
  %4008 = vset.pattern.permute.xlu0 0
  %4009 = vperm.xlu0 %4008, %v3979
  %v4010 = vpop.permute.xlu0 %4009
  %v4012 = vadd.f32 %v3990, %v4005
  %v4013 = vadd.f32 %v3991, %v4005
  %v4014 = vadd.f32 %v3992, %v4005
  %v4015 = vadd.f32 %v3993, %v4005
  %v4016 = vadd.f32 %v3994, %v4005
  %v4017 = vadd.f32 %v3995, %v4005
  %v4018 = vadd.f32 %v3996, %v4010
  %v4019 = vadd.f32 %v3997, %v4010
  %v4020 = vadd.f32 %v3998, %v4010
  %v4021 = vadd.f32 %v3999, %v4010
  %v4022 = vadd.f32 %v4000, %v4010
  %v4023 = vadd.f32 %v4001, %v4010
  %v4024 = vmax.f32 %v4012, 0.0
  %v4025 = vmax.f32 %v4013, 0.0
  %v4026 = vmax.f32 %v4014, 0.0
  %v4027 = vmax.f32 %v4015, 0.0
  %v4028 = vmax.f32 %v4016, 0.0
  %v4029 = vmax.f32 %v4017, 0.0
  %v4030 = vmax.f32 %v4018, 0.0
  %v4031 = vmax.f32 %v4019, 0.0
  %v4032 = vmax.f32 %v4020, 0.0
  %v4033 = vmax.f32 %v4021, 0.0
  %v4034 = vmax.f32 %v4022, 0.0
  %v4035 = vmax.f32 %v4023, 0.0
  %v4036 = vmul.f32 %v4024, %v34
  %v4037 = vmul.f32 %v4025, %v35
  %v4038 = vmul.f32 %v4026, %v36
  %v4039 = vmul.f32 %v4027, %v37
  %v4040 = vmul.f32 %v4028, %v38
  %v4041 = vmul.f32 %v4029, %v39
  %v4042 = vmul.f32 %v4030, %v34
  %v4043 = vmul.f32 %v4031, %v35
  %v4044 = vmul.f32 %v4032, %v36
  %v4045 = vmul.f32 %v4033, %v37
  %v4046 = vmul.f32 %v4034, %v38
  %v4047 = vmul.f32 %v4035, %v39
  %4060 = vrot.lane.b32.xlu0 %v4036, 19
  %v4061 = vpop.permute.xlu0 %4060
  %4062 = vrot.lane.b32.xlu0 %v4037, 19
  %v4063 = vpop.permute.xlu0 %4062
  %4064 = vrot.lane.b32.xlu0 %v4038, 19
  %v4065 = vpop.permute.xlu0 %4064
  %4066 = vrot.lane.b32.xlu0 %v4039, 19
  %v4067 = vpop.permute.xlu0 %4066
  %4068 = vrot.lane.b32.xlu0 %v4040, 19
  %v4069 = vpop.permute.xlu0 %4068
  %4070 = vrot.lane.b32.xlu0 %v4041, 19
  %v4071 = vpop.permute.xlu0 %4070
  %4072 = vrot.lane.b32.xlu0 %v4042, 19
  %v4073 = vpop.permute.xlu0 %4072
  %4074 = vrot.lane.b32.xlu0 %v4043, 19
  %v4075 = vpop.permute.xlu0 %4074
  %4076 = vrot.lane.b32.xlu0 %v4044, 19
  %v4077 = vpop.permute.xlu0 %4076
  %4078 = vrot.lane.b32.xlu0 %v4045, 19
  %v4079 = vpop.permute.xlu0 %4078
  %4080 = vrot.lane.b32.xlu0 %v4046, 19
  %v4081 = vpop.permute.xlu0 %4080
  %4082 = vrot.lane.b32.xlu0 %v4047, 19
  %v4083 = vpop.permute.xlu0 %4082
  %v4084 = vsel %vm94, %v4061, %v4063
  %v4085 = vsel %vm94, %v4063, %v4065
  %v4086 = vsel %vm94, %v4065, %v4067
  %v4087 = vsel %vm94, %v4067, %v4069
  %v4088 = vsel %vm94, %v4069, %v4071
  %v4089 = vsel %vm94, %v4073, %v4075
  %v4090 = vsel %vm94, %v4075, %v4077
  %v4091 = vsel %vm94, %v4077, %v4079
  %v4092 = vsel %vm94, %v4079, %v4081
  %v4093 = vsel %vm94, %v4081, %v4083
  %v4106 = vsel %vm94, 0.0, %v4061
  %v4107 = vsel %vm94, 0.0, %v4073
  %v4108 = vsel %vm119, %v4088, 0.0
  %v4109 = vsel %vm119, %v4093, 0.0
  %4114 = vrot.lane.b32.xlu0 %v4106, 127
  %v4115 = vpop.permute.xlu0 %4114
  %4116 = vrot.lane.b32.xlu0 %v4084, 127
  %v4117 = vpop.permute.xlu0 %4116
  %4118 = vrot.lane.b32.xlu0 %v4085, 127
  %v4119 = vpop.permute.xlu0 %4118
  %4120 = vrot.lane.b32.xlu0 %v4086, 127
  %v4121 = vpop.permute.xlu0 %4120
  %4122 = vrot.lane.b32.xlu0 %v4087, 127
  %v4123 = vpop.permute.xlu0 %4122
  %4124 = vrot.lane.b32.xlu0 %v4108, 127
  %v4125 = vpop.permute.xlu0 %4124
  %4126 = vrot.lane.b32.xlu0 %v4107, 127
  %v4127 = vpop.permute.xlu0 %4126
  %4128 = vrot.lane.b32.xlu0 %v4089, 127
  %v4129 = vpop.permute.xlu0 %4128
  %4130 = vrot.lane.b32.xlu0 %v4090, 127
  %v4131 = vpop.permute.xlu0 %4130
  %4132 = vrot.lane.b32.xlu0 %v4091, 127
  %v4133 = vpop.permute.xlu0 %4132
  %4134 = vrot.lane.b32.xlu0 %v4092, 127
  %v4135 = vpop.permute.xlu0 %4134
  %4136 = vrot.lane.b32.xlu0 %v4109, 127
  %v4137 = vpop.permute.xlu0 %4136
  %v4138 = vsel %vm150, %v4115, %v4117
  %v4139 = vsel %vm150, %v4117, %v4119
  %v4140 = vsel %vm150, %v4119, %v4121
  %v4141 = vsel %vm150, %v4121, %v4123
  %v4142 = vsel %vm150, %v4123, %v4125
  %v4143 = vsel %vm150, %v4127, %v4129
  %v4144 = vsel %vm150, %v4129, %v4131
  %v4145 = vsel %vm150, %v4131, %v4133
  %v4146 = vsel %vm150, %v4133, %v4135
  %v4147 = vsel %vm150, %v4135, %v4137
  %4160 = vrot.lane.b32.xlu0 %v4106, 126
  %v4161 = vpop.permute.xlu0 %4160
  %4162 = vrot.lane.b32.xlu0 %v4084, 126
  %v4163 = vpop.permute.xlu0 %4162
  %4164 = vrot.lane.b32.xlu0 %v4085, 126
  %v4165 = vpop.permute.xlu0 %4164
  %4166 = vrot.lane.b32.xlu0 %v4086, 126
  %v4167 = vpop.permute.xlu0 %4166
  %4168 = vrot.lane.b32.xlu0 %v4087, 126
  %v4169 = vpop.permute.xlu0 %4168
  %4170 = vrot.lane.b32.xlu0 %v4108, 126
  %v4171 = vpop.permute.xlu0 %4170
  %4172 = vrot.lane.b32.xlu0 %v4107, 126
  %v4173 = vpop.permute.xlu0 %4172
  %4174 = vrot.lane.b32.xlu0 %v4089, 126
  %v4175 = vpop.permute.xlu0 %4174
  %4176 = vrot.lane.b32.xlu0 %v4090, 126
  %v4177 = vpop.permute.xlu0 %4176
  %4178 = vrot.lane.b32.xlu0 %v4091, 126
  %v4179 = vpop.permute.xlu0 %4178
  %4180 = vrot.lane.b32.xlu0 %v4092, 126
  %v4181 = vpop.permute.xlu0 %4180
  %4182 = vrot.lane.b32.xlu0 %v4109, 126
  %v4183 = vpop.permute.xlu0 %4182
  %v4184 = vsel %vm197, %v4161, %v4163
  %v4185 = vsel %vm197, %v4163, %v4165
  %v4186 = vsel %vm197, %v4165, %v4167
  %v4187 = vsel %vm197, %v4167, %v4169
  %v4188 = vsel %vm197, %v4169, %v4171
  %v4189 = vsel %vm197, %v4173, %v4175
  %v4190 = vsel %vm197, %v4175, %v4177
  %v4191 = vsel %vm197, %v4177, %v4179
  %v4192 = vsel %vm197, %v4179, %v4181
  %v4193 = vsel %vm197, %v4181, %v4183
  %4206 = vrot.lane.b32.xlu0 %v4106, 110
  %v4207 = vpop.permute.xlu0 %4206
  %4208 = vrot.lane.b32.xlu0 %v4084, 110
  %v4209 = vpop.permute.xlu0 %4208
  %4210 = vrot.lane.b32.xlu0 %v4085, 110
  %v4211 = vpop.permute.xlu0 %4210
  %4212 = vrot.lane.b32.xlu0 %v4086, 110
  %v4213 = vpop.permute.xlu0 %4212
  %4214 = vrot.lane.b32.xlu0 %v4087, 110
  %v4215 = vpop.permute.xlu0 %4214
  %4216 = vrot.lane.b32.xlu0 %v4108, 110
  %v4217 = vpop.permute.xlu0 %4216
  %4218 = vrot.lane.b32.xlu0 %v4107, 110
  %v4219 = vpop.permute.xlu0 %4218
  %4220 = vrot.lane.b32.xlu0 %v4089, 110
  %v4221 = vpop.permute.xlu0 %4220
  %4222 = vrot.lane.b32.xlu0 %v4090, 110
  %v4223 = vpop.permute.xlu0 %4222
  %4224 = vrot.lane.b32.xlu0 %v4091, 110
  %v4225 = vpop.permute.xlu0 %4224
  %4226 = vrot.lane.b32.xlu0 %v4092, 110
  %v4227 = vpop.permute.xlu0 %4226
  %4228 = vrot.lane.b32.xlu0 %v4109, 110
  %v4229 = vpop.permute.xlu0 %4228
  %v4230 = vsel %vm244, %v4207, %v4209
  %v4231 = vsel %vm244, %v4209, %v4211
  %v4232 = vsel %vm244, %v4211, %v4213
  %v4233 = vsel %vm244, %v4213, %v4215
  %v4234 = vsel %vm244, %v4215, %v4217
  %v4235 = vsel %vm244, %v4219, %v4221
  %v4236 = vsel %vm244, %v4221, %v4223
  %v4237 = vsel %vm244, %v4223, %v4225
  %v4238 = vsel %vm244, %v4225, %v4227
  %v4239 = vsel %vm244, %v4227, %v4229
  %4252 = vrot.lane.b32.xlu0 %v4106, 109
  %v4253 = vpop.permute.xlu0 %4252
  %4254 = vrot.lane.b32.xlu0 %v4084, 109
  %v4255 = vpop.permute.xlu0 %4254
  %4256 = vrot.lane.b32.xlu0 %v4085, 109
  %v4257 = vpop.permute.xlu0 %4256
  %4258 = vrot.lane.b32.xlu0 %v4086, 109
  %v4259 = vpop.permute.xlu0 %4258
  %4260 = vrot.lane.b32.xlu0 %v4087, 109
  %v4261 = vpop.permute.xlu0 %4260
  %4262 = vrot.lane.b32.xlu0 %v4108, 109
  %v4263 = vpop.permute.xlu0 %4262
  %4264 = vrot.lane.b32.xlu0 %v4107, 109
  %v4265 = vpop.permute.xlu0 %4264
  %4266 = vrot.lane.b32.xlu0 %v4089, 109
  %v4267 = vpop.permute.xlu0 %4266
  %4268 = vrot.lane.b32.xlu0 %v4090, 109
  %v4269 = vpop.permute.xlu0 %4268
  %4270 = vrot.lane.b32.xlu0 %v4091, 109
  %v4271 = vpop.permute.xlu0 %4270
  %4272 = vrot.lane.b32.xlu0 %v4092, 109
  %v4273 = vpop.permute.xlu0 %4272
  %4274 = vrot.lane.b32.xlu0 %v4109, 109
  %v4275 = vpop.permute.xlu0 %4274
  %v4276 = vsel %vm291, %v4253, %v4255
  %v4277 = vsel %vm291, %v4255, %v4257
  %v4278 = vsel %vm291, %v4257, %v4259
  %v4279 = vsel %vm291, %v4259, %v4261
  %v4280 = vsel %vm291, %v4261, %v4263
  %v4281 = vsel %vm291, %v4265, %v4267
  %v4282 = vsel %vm291, %v4267, %v4269
  %v4283 = vsel %vm291, %v4269, %v4271
  %v4284 = vsel %vm291, %v4271, %v4273
  %v4285 = vsel %vm291, %v4273, %v4275
  %4298 = vrot.lane.b32.xlu0 %v4106, 108
  %v4299 = vpop.permute.xlu0 %4298
  %4300 = vrot.lane.b32.xlu0 %v4084, 108
  %v4301 = vpop.permute.xlu0 %4300
  %4302 = vrot.lane.b32.xlu0 %v4085, 108
  %v4303 = vpop.permute.xlu0 %4302
  %4304 = vrot.lane.b32.xlu0 %v4086, 108
  %v4305 = vpop.permute.xlu0 %4304
  %4306 = vrot.lane.b32.xlu0 %v4087, 108
  %v4307 = vpop.permute.xlu0 %4306
  %4308 = vrot.lane.b32.xlu0 %v4108, 108
  %v4309 = vpop.permute.xlu0 %4308
  %4310 = vrot.lane.b32.xlu0 %v4107, 108
  %v4311 = vpop.permute.xlu0 %4310
  %4312 = vrot.lane.b32.xlu0 %v4089, 108
  %v4313 = vpop.permute.xlu0 %4312
  %4314 = vrot.lane.b32.xlu0 %v4090, 108
  %v4315 = vpop.permute.xlu0 %4314
  %4316 = vrot.lane.b32.xlu0 %v4091, 108
  %v4317 = vpop.permute.xlu0 %4316
  %4318 = vrot.lane.b32.xlu0 %v4092, 108
  %v4319 = vpop.permute.xlu0 %4318
  %4320 = vrot.lane.b32.xlu0 %v4109, 108
  %v4321 = vpop.permute.xlu0 %4320
  %v4322 = vsel %vm338, %v4299, %v4301
  %v4323 = vsel %vm338, %v4301, %v4303
  %v4324 = vsel %vm338, %v4303, %v4305
  %v4325 = vsel %vm338, %v4305, %v4307
  %v4326 = vsel %vm338, %v4307, %v4309
  %v4327 = vsel %vm338, %v4311, %v4313
  %v4328 = vsel %vm338, %v4313, %v4315
  %v4329 = vsel %vm338, %v4315, %v4317
  %v4330 = vsel %vm338, %v4317, %v4319
  %v4331 = vsel %vm338, %v4319, %v4321
  %4344 = vrot.lane.b32.xlu0 %v4106, 92
  %v4345 = vpop.permute.xlu0 %4344
  %4346 = vrot.lane.b32.xlu0 %v4084, 92
  %v4347 = vpop.permute.xlu0 %4346
  %4348 = vrot.lane.b32.xlu0 %v4085, 92
  %v4349 = vpop.permute.xlu0 %4348
  %4350 = vrot.lane.b32.xlu0 %v4086, 92
  %v4351 = vpop.permute.xlu0 %4350
  %4352 = vrot.lane.b32.xlu0 %v4087, 92
  %v4353 = vpop.permute.xlu0 %4352
  %4354 = vrot.lane.b32.xlu0 %v4108, 92
  %v4355 = vpop.permute.xlu0 %4354
  %4356 = vrot.lane.b32.xlu0 %v4107, 92
  %v4357 = vpop.permute.xlu0 %4356
  %4358 = vrot.lane.b32.xlu0 %v4089, 92
  %v4359 = vpop.permute.xlu0 %4358
  %4360 = vrot.lane.b32.xlu0 %v4090, 92
  %v4361 = vpop.permute.xlu0 %4360
  %4362 = vrot.lane.b32.xlu0 %v4091, 92
  %v4363 = vpop.permute.xlu0 %4362
  %4364 = vrot.lane.b32.xlu0 %v4092, 92
  %v4365 = vpop.permute.xlu0 %4364
  %4366 = vrot.lane.b32.xlu0 %v4109, 92
  %v4367 = vpop.permute.xlu0 %4366
  %v4368 = vsel %vm385, %v4345, %v4347
  %v4369 = vsel %vm385, %v4347, %v4349
  %v4370 = vsel %vm385, %v4349, %v4351
  %v4371 = vsel %vm385, %v4351, %v4353
  %v4372 = vsel %vm385, %v4353, %v4355
  %v4373 = vsel %vm385, %v4357, %v4359
  %v4374 = vsel %vm385, %v4359, %v4361
  %v4375 = vsel %vm385, %v4361, %v4363
  %v4376 = vsel %vm385, %v4363, %v4365
  %v4377 = vsel %vm385, %v4365, %v4367
  %4390 = vrot.lane.b32.xlu0 %v4106, 91
  %v4391 = vpop.permute.xlu0 %4390
  %4392 = vrot.lane.b32.xlu0 %v4084, 91
  %v4393 = vpop.permute.xlu0 %4392
  %4394 = vrot.lane.b32.xlu0 %v4085, 91
  %v4395 = vpop.permute.xlu0 %4394
  %4396 = vrot.lane.b32.xlu0 %v4086, 91
  %v4397 = vpop.permute.xlu0 %4396
  %4398 = vrot.lane.b32.xlu0 %v4087, 91
  %v4399 = vpop.permute.xlu0 %4398
  %4400 = vrot.lane.b32.xlu0 %v4108, 91
  %v4401 = vpop.permute.xlu0 %4400
  %4402 = vrot.lane.b32.xlu0 %v4107, 91
  %v4403 = vpop.permute.xlu0 %4402
  %4404 = vrot.lane.b32.xlu0 %v4089, 91
  %v4405 = vpop.permute.xlu0 %4404
  %4406 = vrot.lane.b32.xlu0 %v4090, 91
  %v4407 = vpop.permute.xlu0 %4406
  %4408 = vrot.lane.b32.xlu0 %v4091, 91
  %v4409 = vpop.permute.xlu0 %4408
  %4410 = vrot.lane.b32.xlu0 %v4092, 91
  %v4411 = vpop.permute.xlu0 %4410
  %4412 = vrot.lane.b32.xlu0 %v4109, 91
  %v4413 = vpop.permute.xlu0 %4412
  %v4414 = vsel %vm432, %v4391, %v4393
  %v4415 = vsel %vm432, %v4393, %v4395
  %v4416 = vsel %vm432, %v4395, %v4397
  %v4417 = vsel %vm432, %v4397, %v4399
  %v4418 = vsel %vm432, %v4399, %v4401
  %v4419 = vsel %vm432, %v4403, %v4405
  %v4420 = vsel %vm432, %v4405, %v4407
  %v4421 = vsel %vm432, %v4407, %v4409
  %v4422 = vsel %vm432, %v4409, %v4411
  %v4423 = vsel %vm432, %v4411, %v4413
  %4436 = vrot.lane.b32.xlu0 %v4106, 90
  %v4437 = vpop.permute.xlu0 %4436
  %4438 = vrot.lane.b32.xlu0 %v4084, 90
  %v4439 = vpop.permute.xlu0 %4438
  %4440 = vrot.lane.b32.xlu0 %v4085, 90
  %v4441 = vpop.permute.xlu0 %4440
  %4442 = vrot.lane.b32.xlu0 %v4086, 90
  %v4443 = vpop.permute.xlu0 %4442
  %4444 = vrot.lane.b32.xlu0 %v4087, 90
  %v4445 = vpop.permute.xlu0 %4444
  %4446 = vrot.lane.b32.xlu0 %v4108, 90
  %v4447 = vpop.permute.xlu0 %4446
  %4448 = vrot.lane.b32.xlu0 %v4107, 90
  %v4449 = vpop.permute.xlu0 %4448
  %4450 = vrot.lane.b32.xlu0 %v4089, 90
  %v4451 = vpop.permute.xlu0 %4450
  %4452 = vrot.lane.b32.xlu0 %v4090, 90
  %v4453 = vpop.permute.xlu0 %4452
  %4454 = vrot.lane.b32.xlu0 %v4091, 90
  %v4455 = vpop.permute.xlu0 %4454
  %4456 = vrot.lane.b32.xlu0 %v4092, 90
  %v4457 = vpop.permute.xlu0 %4456
  %4458 = vrot.lane.b32.xlu0 %v4109, 90
  %v4459 = vpop.permute.xlu0 %4458
  %v4460 = vsel %vm479, %v4437, %v4439
  %v4461 = vsel %vm479, %v4439, %v4441
  %v4462 = vsel %vm479, %v4441, %v4443
  %v4463 = vsel %vm479, %v4443, %v4445
  %v4464 = vsel %vm479, %v4445, %v4447
  %v4465 = vsel %vm479, %v4449, %v4451
  %v4466 = vsel %vm479, %v4451, %v4453
  %v4467 = vsel %vm479, %v4453, %v4455
  %v4468 = vsel %vm479, %v4455, %v4457
  %v4469 = vsel %vm479, %v4457, %v4459
  %v4482 = vld [vmem:[%s1 + $0x20] sm:$0xff]
  %v4483 = vld [vmem:[%s1 + $0x28] sm:$0xff]
  %v4484 = vld [vmem:[%s1 + $0x30] sm:$0xff]
  %v4485 = vld [vmem:[%s1 + $0x38] sm:$0xff]
  %v4487 = vsel %vm506, %v4483, 0
  %v4490 = vsel %vm506, %v4485, 0
  %v4492 = vand.u32 %v4419, 4294901760
  %4493 = vmatpush.msra.mxu0 %v4492
  %v4494 = vand.u32 %v4414, 4294901760
  %4495 = vmatpush.msra.mxu0 %v4494
  %v4496 = vand.u32 %v4373, 4294901760
  %4497 = vmatpush.msra.mxu0 %v4496
  %v4498 = vand.u32 %v4368, 4294901760
  %4499 = vmatpush.msra.mxu0 %v4498
  %v4500 = vand.u32 %v4327, 4294901760
  %4501 = vmatpush.msra.mxu0 %v4500
  %v4502 = vand.u32 %v4322, 4294901760
  %4503 = vmatpush.msra.mxu0 %v4502
  %v4504 = vand.u32 %v4281, 4294901760
  %4505 = vmatpush.msra.mxu0 %v4504
  %v4506 = vand.u32 %v4276, 4294901760
  %4507 = vmatpush.msra.mxu0 %v4506
  %v4508 = vand.u32 %v4235, 4294901760
  %4509 = vmatpush.msra.mxu0 %v4508
  %v4510 = vand.u32 %v4230, 4294901760
  %4511 = vmatpush.msra.mxu0 %v4510
  %v4512 = vand.u32 %v4189, 4294901760
  %4513 = vmatpush.msra.mxu0 %v4512
  %v4514 = vand.u32 %v4184, 4294901760
  %4515 = vmatpush.msra.mxu0 %v4514
  %v4516 = vand.u32 %v4143, 4294901760
  %4517 = vmatpush.msra.mxu0 %v4516
  %v4518 = vand.u32 %v4138, 4294901760
  %4519 = vmatpush.msra.mxu0 %v4518
  %v4520 = vand.u32 %v4107, 4294901760
  %4521 = vmatpush.msra.mxu0 %v4520
  %v4522 = vand.u32 %v4106, 4294901760
  %4523 = vmatpush.msra.mxu0 %v4522
  %v4524 = vand.u32 %v4482, 4294901760
  %v4525 = vsub.f32 %v4482, %v4524
  %v4526 = vand.u32 %v4525, 4294901760
  %v4527 = vsub.f32 %v4525, %v4526
  %v4528 = vand.u32 %v4527, 4294901760
  %4529 = vmatmul.f32.gmra.mxu0 %v4528
  %v4530 = vpop.f32.mrf.mxu0
  %v4531 = vadd.f32 0.0, %v4530
  %v4532 = vand.u32 %v4484, 4294901760
  %v4533 = vsub.f32 %v4484, %v4532
  %v4534 = vand.u32 %v4533, 4294901760
  %v4535 = vsub.f32 %v4533, %v4534
  %v4536 = vand.u32 %v4535, 4294901760
  %4537 = vmatmul.f32.gmra.mxu0 %v4536
  %v4538 = vpop.f32.mrf.mxu0
  %v4539 = vadd.f32 0.0, %v4538
  %4540 = vdwg.mxu0
  %v4541 = vand.u32 %v4419, 4294901760
  %v4542 = vsub.f32 %v4419, %v4541
  %v4543 = vand.u32 %v4542, 4294901760
  %v4544 = vsub.f32 %v4542, %v4543
  %v4545 = vand.u32 %v4544, 4294901760
  %4546 = vmatpush.msra.mxu0 %v4545
  %v4547 = vand.u32 %v4414, 4294901760
  %v4548 = vsub.f32 %v4414, %v4547
  %v4549 = vand.u32 %v4548, 4294901760
  %v4550 = vsub.f32 %v4548, %v4549
  %v4551 = vand.u32 %v4550, 4294901760
  %4552 = vmatpush.msra.mxu0 %v4551
  %v4553 = vand.u32 %v4373, 4294901760
  %v4554 = vsub.f32 %v4373, %v4553
  %v4555 = vand.u32 %v4554, 4294901760
  %v4556 = vsub.f32 %v4554, %v4555
  %v4557 = vand.u32 %v4556, 4294901760
  %4558 = vmatpush.msra.mxu0 %v4557
  %v4559 = vand.u32 %v4368, 4294901760
  %v4560 = vsub.f32 %v4368, %v4559
  %v4561 = vand.u32 %v4560, 4294901760
  %v4562 = vsub.f32 %v4560, %v4561
  %v4563 = vand.u32 %v4562, 4294901760
  %4564 = vmatpush.msra.mxu0 %v4563
  %v4565 = vand.u32 %v4327, 4294901760
  %v4566 = vsub.f32 %v4327, %v4565
  %v4567 = vand.u32 %v4566, 4294901760
  %v4568 = vsub.f32 %v4566, %v4567
  %v4569 = vand.u32 %v4568, 4294901760
  %4570 = vmatpush.msra.mxu0 %v4569
  %v4571 = vand.u32 %v4322, 4294901760
  %v4572 = vsub.f32 %v4322, %v4571
  %v4573 = vand.u32 %v4572, 4294901760
  %v4574 = vsub.f32 %v4572, %v4573
  %v4575 = vand.u32 %v4574, 4294901760
  %4576 = vmatpush.msra.mxu0 %v4575
  %v4577 = vand.u32 %v4281, 4294901760
  %v4578 = vsub.f32 %v4281, %v4577
  %v4579 = vand.u32 %v4578, 4294901760
  %v4580 = vsub.f32 %v4578, %v4579
  %v4581 = vand.u32 %v4580, 4294901760
  %4582 = vmatpush.msra.mxu0 %v4581
  %v4583 = vand.u32 %v4276, 4294901760
  %v4584 = vsub.f32 %v4276, %v4583
  %v4585 = vand.u32 %v4584, 4294901760
  %v4586 = vsub.f32 %v4584, %v4585
  %v4587 = vand.u32 %v4586, 4294901760
  %4588 = vmatpush.msra.mxu0 %v4587
  %v4589 = vand.u32 %v4235, 4294901760
  %v4590 = vsub.f32 %v4235, %v4589
  %v4591 = vand.u32 %v4590, 4294901760
  %v4592 = vsub.f32 %v4590, %v4591
  %v4593 = vand.u32 %v4592, 4294901760
  %4594 = vmatpush.msra.mxu0 %v4593
  %v4595 = vand.u32 %v4230, 4294901760
  %v4596 = vsub.f32 %v4230, %v4595
  %v4597 = vand.u32 %v4596, 4294901760
  %v4598 = vsub.f32 %v4596, %v4597
  %v4599 = vand.u32 %v4598, 4294901760
  %4600 = vmatpush.msra.mxu0 %v4599
  %v4601 = vand.u32 %v4189, 4294901760
  %v4602 = vsub.f32 %v4189, %v4601
  %v4603 = vand.u32 %v4602, 4294901760
  %v4604 = vsub.f32 %v4602, %v4603
  %v4605 = vand.u32 %v4604, 4294901760
  %4606 = vmatpush.msra.mxu0 %v4605
  %v4607 = vand.u32 %v4184, 4294901760
  %v4608 = vsub.f32 %v4184, %v4607
  %v4609 = vand.u32 %v4608, 4294901760
  %v4610 = vsub.f32 %v4608, %v4609
  %v4611 = vand.u32 %v4610, 4294901760
  %4612 = vmatpush.msra.mxu0 %v4611
  %v4613 = vand.u32 %v4143, 4294901760
  %v4614 = vsub.f32 %v4143, %v4613
  %v4615 = vand.u32 %v4614, 4294901760
  %v4616 = vsub.f32 %v4614, %v4615
  %v4617 = vand.u32 %v4616, 4294901760
  %4618 = vmatpush.msra.mxu0 %v4617
  %v4619 = vand.u32 %v4138, 4294901760
  %v4620 = vsub.f32 %v4138, %v4619
  %v4621 = vand.u32 %v4620, 4294901760
  %v4622 = vsub.f32 %v4620, %v4621
  %v4623 = vand.u32 %v4622, 4294901760
  %4624 = vmatpush.msra.mxu0 %v4623
  %v4625 = vand.u32 %v4107, 4294901760
  %v4626 = vsub.f32 %v4107, %v4625
  %v4627 = vand.u32 %v4626, 4294901760
  %v4628 = vsub.f32 %v4626, %v4627
  %v4629 = vand.u32 %v4628, 4294901760
  %4630 = vmatpush.msra.mxu0 %v4629
  %v4631 = vand.u32 %v4106, 4294901760
  %v4632 = vsub.f32 %v4106, %v4631
  %v4633 = vand.u32 %v4632, 4294901760
  %v4634 = vsub.f32 %v4632, %v4633
  %v4635 = vand.u32 %v4634, 4294901760
  %4636 = vmatpush.msra.mxu0 %v4635
  %v4637 = vand.u32 %v4482, 4294901760
  %4638 = vmatmul.f32.gmra.mxu0 %v4637
  %v4639 = vpop.f32.mrf.mxu0
  %v4640 = vadd.f32 %v4531, %v4639
  %v4641 = vand.u32 %v4484, 4294901760
  %4642 = vmatmul.f32.gmra.mxu0 %v4641
  %v4643 = vpop.f32.mrf.mxu0
  %v4644 = vadd.f32 %v4539, %v4643
  %4645 = vdwg.mxu0
  %v4646 = vand.u32 %v4419, 4294901760
  %v4647 = vsub.f32 %v4419, %v4646
  %4648 = vmatpush.msra.mxu0 %v4647
  %v4649 = vand.u32 %v4414, 4294901760
  %v4650 = vsub.f32 %v4414, %v4649
  %4651 = vmatpush.msra.mxu0 %v4650
  %v4652 = vand.u32 %v4373, 4294901760
  %v4653 = vsub.f32 %v4373, %v4652
  %4654 = vmatpush.msra.mxu0 %v4653
  %v4655 = vand.u32 %v4368, 4294901760
  %v4656 = vsub.f32 %v4368, %v4655
  %4657 = vmatpush.msra.mxu0 %v4656
  %v4658 = vand.u32 %v4327, 4294901760
  %v4659 = vsub.f32 %v4327, %v4658
  %4660 = vmatpush.msra.mxu0 %v4659
  %v4661 = vand.u32 %v4322, 4294901760
  %v4662 = vsub.f32 %v4322, %v4661
  %4663 = vmatpush.msra.mxu0 %v4662
  %v4664 = vand.u32 %v4281, 4294901760
  %v4665 = vsub.f32 %v4281, %v4664
  %4666 = vmatpush.msra.mxu0 %v4665
  %v4667 = vand.u32 %v4276, 4294901760
  %v4668 = vsub.f32 %v4276, %v4667
  %4669 = vmatpush.msra.mxu0 %v4668
  %v4670 = vand.u32 %v4235, 4294901760
  %v4671 = vsub.f32 %v4235, %v4670
  %4672 = vmatpush.msra.mxu0 %v4671
  %v4673 = vand.u32 %v4230, 4294901760
  %v4674 = vsub.f32 %v4230, %v4673
  %4675 = vmatpush.msra.mxu0 %v4674
  %v4676 = vand.u32 %v4189, 4294901760
  %v4677 = vsub.f32 %v4189, %v4676
  %4678 = vmatpush.msra.mxu0 %v4677
  %v4679 = vand.u32 %v4184, 4294901760
  %v4680 = vsub.f32 %v4184, %v4679
  %4681 = vmatpush.msra.mxu0 %v4680
  %v4682 = vand.u32 %v4143, 4294901760
  %v4683 = vsub.f32 %v4143, %v4682
  %4684 = vmatpush.msra.mxu0 %v4683
  %v4685 = vand.u32 %v4138, 4294901760
  %v4686 = vsub.f32 %v4138, %v4685
  %4687 = vmatpush.msra.mxu0 %v4686
  %v4688 = vand.u32 %v4107, 4294901760
  %v4689 = vsub.f32 %v4107, %v4688
  %4690 = vmatpush.msra.mxu0 %v4689
  %v4691 = vand.u32 %v4106, 4294901760
  %v4692 = vsub.f32 %v4106, %v4691
  %4693 = vmatpush.msra.mxu0 %v4692
  %v4694 = vand.u32 %v4482, 4294901760
  %v4695 = vsub.f32 %v4482, %v4694
  %4696 = vmatmul.f32.gmra.mxu0 %v4695
  %v4697 = vpop.f32.mrf.mxu0
  %v4698 = vadd.f32 %v4640, %v4697
  %v4699 = vand.u32 %v4484, 4294901760
  %v4700 = vsub.f32 %v4484, %v4699
  %4701 = vmatmul.f32.gmra.mxu0 %v4700
  %v4702 = vpop.f32.mrf.mxu0
  %v4703 = vadd.f32 %v4644, %v4702
  %4704 = vdwg.mxu0
  %v4705 = vand.u32 %v4419, 4294901760
  %4706 = vmatpush.msra.mxu0 %v4705
  %v4707 = vand.u32 %v4414, 4294901760
  %4708 = vmatpush.msra.mxu0 %v4707
  %v4709 = vand.u32 %v4373, 4294901760
  %4710 = vmatpush.msra.mxu0 %v4709
  %v4711 = vand.u32 %v4368, 4294901760
  %4712 = vmatpush.msra.mxu0 %v4711
  %v4713 = vand.u32 %v4327, 4294901760
  %4714 = vmatpush.msra.mxu0 %v4713
  %v4715 = vand.u32 %v4322, 4294901760
  %4716 = vmatpush.msra.mxu0 %v4715
  %v4717 = vand.u32 %v4281, 4294901760
  %4718 = vmatpush.msra.mxu0 %v4717
  %v4719 = vand.u32 %v4276, 4294901760
  %4720 = vmatpush.msra.mxu0 %v4719
  %v4721 = vand.u32 %v4235, 4294901760
  %4722 = vmatpush.msra.mxu0 %v4721
  %v4723 = vand.u32 %v4230, 4294901760
  %4724 = vmatpush.msra.mxu0 %v4723
  %v4725 = vand.u32 %v4189, 4294901760
  %4726 = vmatpush.msra.mxu0 %v4725
  %v4727 = vand.u32 %v4184, 4294901760
  %4728 = vmatpush.msra.mxu0 %v4727
  %v4729 = vand.u32 %v4143, 4294901760
  %4730 = vmatpush.msra.mxu0 %v4729
  %v4731 = vand.u32 %v4138, 4294901760
  %4732 = vmatpush.msra.mxu0 %v4731
  %v4733 = vand.u32 %v4107, 4294901760
  %4734 = vmatpush.msra.mxu0 %v4733
  %v4735 = vand.u32 %v4106, 4294901760
  %4736 = vmatpush.msra.mxu0 %v4735
  %v4737 = vand.u32 %v4482, 4294901760
  %v4738 = vsub.f32 %v4482, %v4737
  %v4739 = vand.u32 %v4738, 4294901760
  %4740 = vmatmul.f32.gmra.mxu0 %v4739
  %v4741 = vpop.f32.mrf.mxu0
  %v4742 = vadd.f32 %v4698, %v4741
  %v4743 = vand.u32 %v4484, 4294901760
  %v4744 = vsub.f32 %v4484, %v4743
  %v4745 = vand.u32 %v4744, 4294901760
  %4746 = vmatmul.f32.gmra.mxu0 %v4745
  %v4747 = vpop.f32.mrf.mxu0
  %v4748 = vadd.f32 %v4703, %v4747
  %4749 = vdwg.mxu0
  %v4750 = vand.u32 %v4419, 4294901760
  %v4751 = vsub.f32 %v4419, %v4750
  %v4752 = vand.u32 %v4751, 4294901760
  %4753 = vmatpush.msra.mxu0 %v4752
  %v4754 = vand.u32 %v4414, 4294901760
  %v4755 = vsub.f32 %v4414, %v4754
  %v4756 = vand.u32 %v4755, 4294901760
  %4757 = vmatpush.msra.mxu0 %v4756
  %v4758 = vand.u32 %v4373, 4294901760
  %v4759 = vsub.f32 %v4373, %v4758
  %v4760 = vand.u32 %v4759, 4294901760
  %4761 = vmatpush.msra.mxu0 %v4760
  %v4762 = vand.u32 %v4368, 4294901760
  %v4763 = vsub.f32 %v4368, %v4762
  %v4764 = vand.u32 %v4763, 4294901760
  %4765 = vmatpush.msra.mxu0 %v4764
  %v4766 = vand.u32 %v4327, 4294901760
  %v4767 = vsub.f32 %v4327, %v4766
  %v4768 = vand.u32 %v4767, 4294901760
  %4769 = vmatpush.msra.mxu0 %v4768
  %v4770 = vand.u32 %v4322, 4294901760
  %v4771 = vsub.f32 %v4322, %v4770
  %v4772 = vand.u32 %v4771, 4294901760
  %4773 = vmatpush.msra.mxu0 %v4772
  %v4774 = vand.u32 %v4281, 4294901760
  %v4775 = vsub.f32 %v4281, %v4774
  %v4776 = vand.u32 %v4775, 4294901760
  %4777 = vmatpush.msra.mxu0 %v4776
  %v4778 = vand.u32 %v4276, 4294901760
  %v4779 = vsub.f32 %v4276, %v4778
  %v4780 = vand.u32 %v4779, 4294901760
  %4781 = vmatpush.msra.mxu0 %v4780
  %v4782 = vand.u32 %v4235, 4294901760
  %v4783 = vsub.f32 %v4235, %v4782
  %v4784 = vand.u32 %v4783, 4294901760
  %4785 = vmatpush.msra.mxu0 %v4784
  %v4786 = vand.u32 %v4230, 4294901760
  %v4787 = vsub.f32 %v4230, %v4786
  %v4788 = vand.u32 %v4787, 4294901760
  %4789 = vmatpush.msra.mxu0 %v4788
  %v4790 = vand.u32 %v4189, 4294901760
  %v4791 = vsub.f32 %v4189, %v4790
  %v4792 = vand.u32 %v4791, 4294901760
  %4793 = vmatpush.msra.mxu0 %v4792
  %v4794 = vand.u32 %v4184, 4294901760
  %v4795 = vsub.f32 %v4184, %v4794
  %v4796 = vand.u32 %v4795, 4294901760
  %4797 = vmatpush.msra.mxu0 %v4796
  %v4798 = vand.u32 %v4143, 4294901760
  %v4799 = vsub.f32 %v4143, %v4798
  %v4800 = vand.u32 %v4799, 4294901760
  %4801 = vmatpush.msra.mxu0 %v4800
  %v4802 = vand.u32 %v4138, 4294901760
  %v4803 = vsub.f32 %v4138, %v4802
  %v4804 = vand.u32 %v4803, 4294901760
  %4805 = vmatpush.msra.mxu0 %v4804
  %v4806 = vand.u32 %v4107, 4294901760
  %v4807 = vsub.f32 %v4107, %v4806
  %v4808 = vand.u32 %v4807, 4294901760
  %4809 = vmatpush.msra.mxu0 %v4808
  %v4810 = vand.u32 %v4106, 4294901760
  %v4811 = vsub.f32 %v4106, %v4810
  %v4812 = vand.u32 %v4811, 4294901760
  %4813 = vmatpush.msra.mxu0 %v4812
  %v4814 = vand.u32 %v4482, 4294901760
  %4815 = vmatmul.f32.gmra.mxu0 %v4814
  %v4816 = vpop.f32.mrf.mxu0
  %v4817 = vadd.f32 %v4742, %v4816
  %v4818 = vand.u32 %v4484, 4294901760
  %4819 = vmatmul.f32.gmra.mxu0 %v4818
  %v4820 = vpop.f32.mrf.mxu0
  %v4821 = vadd.f32 %v4748, %v4820
  %4822 = vdwg.mxu0
  %v4823 = vand.u32 %v4419, 4294901760
  %4824 = vmatpush.msra.mxu0 %v4823
  %v4825 = vand.u32 %v4414, 4294901760
  %4826 = vmatpush.msra.mxu0 %v4825
  %v4827 = vand.u32 %v4373, 4294901760
  %4828 = vmatpush.msra.mxu0 %v4827
  %v4829 = vand.u32 %v4368, 4294901760
  %4830 = vmatpush.msra.mxu0 %v4829
  %v4831 = vand.u32 %v4327, 4294901760
  %4832 = vmatpush.msra.mxu0 %v4831
  %v4833 = vand.u32 %v4322, 4294901760
  %4834 = vmatpush.msra.mxu0 %v4833
  %v4835 = vand.u32 %v4281, 4294901760
  %4836 = vmatpush.msra.mxu0 %v4835
  %v4837 = vand.u32 %v4276, 4294901760
  %4838 = vmatpush.msra.mxu0 %v4837
  %v4839 = vand.u32 %v4235, 4294901760
  %4840 = vmatpush.msra.mxu0 %v4839
  %v4841 = vand.u32 %v4230, 4294901760
  %4842 = vmatpush.msra.mxu0 %v4841
  %v4843 = vand.u32 %v4189, 4294901760
  %4844 = vmatpush.msra.mxu0 %v4843
  %v4845 = vand.u32 %v4184, 4294901760
  %4846 = vmatpush.msra.mxu0 %v4845
  %v4847 = vand.u32 %v4143, 4294901760
  %4848 = vmatpush.msra.mxu0 %v4847
  %v4849 = vand.u32 %v4138, 4294901760
  %4850 = vmatpush.msra.mxu0 %v4849
  %v4851 = vand.u32 %v4107, 4294901760
  %4852 = vmatpush.msra.mxu0 %v4851
  %v4853 = vand.u32 %v4106, 4294901760
  %4854 = vmatpush.msra.mxu0 %v4853
  %v4855 = vand.u32 %v4482, 4294901760
  %4856 = vmatmul.f32.gmra.mxu0 %v4855
  %v4857 = vpop.f32.mrf.mxu0
  %v4858 = vadd.f32 %v4817, %v4857
  %v4859 = vand.u32 %v4484, 4294901760
  %4860 = vmatmul.f32.gmra.mxu0 %v4859
  %v4861 = vpop.f32.mrf.mxu0
  %v4862 = vadd.f32 %v4821, %v4861
  %4863 = vdwg.mxu0
  %4864 = vmatpush.msra.mxu0 0.0
  %4865 = vmatpush.msra.mxu0 0.0
  %4866 = vmatpush.msra.mxu0 0.0
  %4867 = vmatpush.msra.mxu0 0.0
  %4868 = vmatpush.msra.mxu0 0.0
  %4869 = vmatpush.msra.mxu0 0.0
  %4870 = vmatpush.msra.mxu0 0.0
  %4871 = vmatpush.msra.mxu0 0.0
  %4872 = vmatpush.msra.mxu0 0.0
  %4873 = vmatpush.msra.mxu0 0.0
  %4874 = vmatpush.msra.mxu0 0.0
  %4875 = vmatpush.msra.mxu0 0.0
  %4876 = vmatpush.msra.mxu0 0.0
  %4877 = vmatpush.msra.mxu0 0.0
  %v4878 = vand.u32 %v4465, 4294901760
  %4879 = vmatpush.msra.mxu0 %v4878
  %v4880 = vand.u32 %v4460, 4294901760
  %4881 = vmatpush.msra.mxu0 %v4880
  %v4882 = vand.u32 %v4487, 4294901760
  %v4883 = vsub.f32 %v4487, %v4882
  %v4884 = vand.u32 %v4883, 4294901760
  %v4885 = vsub.f32 %v4883, %v4884
  %v4886 = vand.u32 %v4885, 4294901760
  %4887 = vmatmul.f32.gmra.mxu0 %v4886
  %v4888 = vpop.f32.mrf.mxu0
  %v4889 = vadd.f32 %v4858, %v4888
  %v4890 = vand.u32 %v4490, 4294901760
  %v4891 = vsub.f32 %v4490, %v4890
  %v4892 = vand.u32 %v4891, 4294901760
  %v4893 = vsub.f32 %v4891, %v4892
  %v4894 = vand.u32 %v4893, 4294901760
  %4895 = vmatmul.f32.gmra.mxu0 %v4894
  %v4896 = vpop.f32.mrf.mxu0
  %v4897 = vadd.f32 %v4862, %v4896
  %4898 = vdwg.mxu0
  %4899 = vmatpush.msra.mxu0 0.0
  %4900 = vmatpush.msra.mxu0 0.0
  %4901 = vmatpush.msra.mxu0 0.0
  %4902 = vmatpush.msra.mxu0 0.0
  %4903 = vmatpush.msra.mxu0 0.0
  %4904 = vmatpush.msra.mxu0 0.0
  %4905 = vmatpush.msra.mxu0 0.0
  %4906 = vmatpush.msra.mxu0 0.0
  %4907 = vmatpush.msra.mxu0 0.0
  %4908 = vmatpush.msra.mxu0 0.0
  %4909 = vmatpush.msra.mxu0 0.0
  %4910 = vmatpush.msra.mxu0 0.0
  %4911 = vmatpush.msra.mxu0 0.0
  %4912 = vmatpush.msra.mxu0 0.0
  %v4913 = vand.u32 %v4465, 4294901760
  %v4914 = vsub.f32 %v4465, %v4913
  %v4915 = vand.u32 %v4914, 4294901760
  %v4916 = vsub.f32 %v4914, %v4915
  %v4917 = vand.u32 %v4916, 4294901760
  %4918 = vmatpush.msra.mxu0 %v4917
  %v4919 = vand.u32 %v4460, 4294901760
  %v4920 = vsub.f32 %v4460, %v4919
  %v4921 = vand.u32 %v4920, 4294901760
  %v4922 = vsub.f32 %v4920, %v4921
  %v4923 = vand.u32 %v4922, 4294901760
  %4924 = vmatpush.msra.mxu0 %v4923
  %v4925 = vand.u32 %v4487, 4294901760
  %4926 = vmatmul.f32.gmra.mxu0 %v4925
  %v4927 = vpop.f32.mrf.mxu0
  %v4928 = vadd.f32 %v4889, %v4927
  %v4929 = vand.u32 %v4490, 4294901760
  %4930 = vmatmul.f32.gmra.mxu0 %v4929
  %v4931 = vpop.f32.mrf.mxu0
  %v4932 = vadd.f32 %v4897, %v4931
  %4933 = vdwg.mxu0
  %4934 = vmatpush.msra.mxu0 0.0
  %4935 = vmatpush.msra.mxu0 0.0
  %4936 = vmatpush.msra.mxu0 0.0
  %4937 = vmatpush.msra.mxu0 0.0
  %4938 = vmatpush.msra.mxu0 0.0
  %4939 = vmatpush.msra.mxu0 0.0
  %4940 = vmatpush.msra.mxu0 0.0
  %4941 = vmatpush.msra.mxu0 0.0
  %4942 = vmatpush.msra.mxu0 0.0
  %4943 = vmatpush.msra.mxu0 0.0
  %4944 = vmatpush.msra.mxu0 0.0
  %4945 = vmatpush.msra.mxu0 0.0
  %4946 = vmatpush.msra.mxu0 0.0
  %4947 = vmatpush.msra.mxu0 0.0
  %v4948 = vand.u32 %v4465, 4294901760
  %v4949 = vsub.f32 %v4465, %v4948
  %4950 = vmatpush.msra.mxu0 %v4949
  %v4951 = vand.u32 %v4460, 4294901760
  %v4952 = vsub.f32 %v4460, %v4951
  %4953 = vmatpush.msra.mxu0 %v4952
  %v4954 = vand.u32 %v4487, 4294901760
  %v4955 = vsub.f32 %v4487, %v4954
  %4956 = vmatmul.f32.gmra.mxu0 %v4955
  %v4957 = vpop.f32.mrf.mxu0
  %v4958 = vadd.f32 %v4928, %v4957
  %v4959 = vand.u32 %v4490, 4294901760
  %v4960 = vsub.f32 %v4490, %v4959
  %4961 = vmatmul.f32.gmra.mxu0 %v4960
  %v4962 = vpop.f32.mrf.mxu0
  %v4963 = vadd.f32 %v4932, %v4962
  %4964 = vdwg.mxu0
  %4965 = vmatpush.msra.mxu0 0.0
  %4966 = vmatpush.msra.mxu0 0.0
  %4967 = vmatpush.msra.mxu0 0.0
  %4968 = vmatpush.msra.mxu0 0.0
  %4969 = vmatpush.msra.mxu0 0.0
  %4970 = vmatpush.msra.mxu0 0.0
  %4971 = vmatpush.msra.mxu0 0.0
  %4972 = vmatpush.msra.mxu0 0.0
  %4973 = vmatpush.msra.mxu0 0.0
  %4974 = vmatpush.msra.mxu0 0.0
  %4975 = vmatpush.msra.mxu0 0.0
  %4976 = vmatpush.msra.mxu0 0.0
  %4977 = vmatpush.msra.mxu0 0.0
  %4978 = vmatpush.msra.mxu0 0.0
  %v4979 = vand.u32 %v4465, 4294901760
  %4980 = vmatpush.msra.mxu0 %v4979
  %v4981 = vand.u32 %v4460, 4294901760
  %4982 = vmatpush.msra.mxu0 %v4981
  %v4983 = vand.u32 %v4487, 4294901760
  %v4984 = vsub.f32 %v4487, %v4983
  %v4985 = vand.u32 %v4984, 4294901760
  %4986 = vmatmul.f32.gmra.mxu0 %v4985
  %v4987 = vpop.f32.mrf.mxu0
  %v4988 = vadd.f32 %v4958, %v4987
  %v4989 = vand.u32 %v4490, 4294901760
  %v4990 = vsub.f32 %v4490, %v4989
  %v4991 = vand.u32 %v4990, 4294901760
  %4992 = vmatmul.f32.gmra.mxu0 %v4991
  %v4993 = vpop.f32.mrf.mxu0
  %v4994 = vadd.f32 %v4963, %v4993
  %4995 = vdwg.mxu0
  %4996 = vmatpush.msra.mxu0 0.0
  %4997 = vmatpush.msra.mxu0 0.0
  %4998 = vmatpush.msra.mxu0 0.0
  %4999 = vmatpush.msra.mxu0 0.0
  %5000 = vmatpush.msra.mxu0 0.0
  %5001 = vmatpush.msra.mxu0 0.0
  %5002 = vmatpush.msra.mxu0 0.0
  %5003 = vmatpush.msra.mxu0 0.0
  %5004 = vmatpush.msra.mxu0 0.0
  %5005 = vmatpush.msra.mxu0 0.0
  %5006 = vmatpush.msra.mxu0 0.0
  %5007 = vmatpush.msra.mxu0 0.0
  %5008 = vmatpush.msra.mxu0 0.0
  %5009 = vmatpush.msra.mxu0 0.0
  %v5010 = vand.u32 %v4465, 4294901760
  %v5011 = vsub.f32 %v4465, %v5010
  %v5012 = vand.u32 %v5011, 4294901760
  %5013 = vmatpush.msra.mxu0 %v5012
  %v5014 = vand.u32 %v4460, 4294901760
  %v5015 = vsub.f32 %v4460, %v5014
  %v5016 = vand.u32 %v5015, 4294901760
  %5017 = vmatpush.msra.mxu0 %v5016
  %v5018 = vand.u32 %v4487, 4294901760
  %5019 = vmatmul.f32.gmra.mxu0 %v5018
  %v5020 = vpop.f32.mrf.mxu0
  %v5021 = vadd.f32 %v4988, %v5020
  %v5022 = vand.u32 %v4490, 4294901760
  %5023 = vmatmul.f32.gmra.mxu0 %v5022
  %v5024 = vpop.f32.mrf.mxu0
  %v5025 = vadd.f32 %v4994, %v5024
  %5026 = vdwg.mxu0
  %5027 = vmatpush.msra.mxu0 0.0
  %5028 = vmatpush.msra.mxu0 0.0
  %5029 = vmatpush.msra.mxu0 0.0
  %5030 = vmatpush.msra.mxu0 0.0
  %5031 = vmatpush.msra.mxu0 0.0
  %5032 = vmatpush.msra.mxu0 0.0
  %5033 = vmatpush.msra.mxu0 0.0
  %5034 = vmatpush.msra.mxu0 0.0
  %5035 = vmatpush.msra.mxu0 0.0
  %5036 = vmatpush.msra.mxu0 0.0
  %5037 = vmatpush.msra.mxu0 0.0
  %5038 = vmatpush.msra.mxu0 0.0
  %5039 = vmatpush.msra.mxu0 0.0
  %5040 = vmatpush.msra.mxu0 0.0
  %v5041 = vand.u32 %v4465, 4294901760
  %5042 = vmatpush.msra.mxu0 %v5041
  %v5043 = vand.u32 %v4460, 4294901760
  %5044 = vmatpush.msra.mxu0 %v5043
  %v5045 = vand.u32 %v4487, 4294901760
  %5046 = vmatmul.f32.gmra.mxu0 %v5045
  %v5047 = vpop.f32.mrf.mxu0
  %v5048 = vadd.f32 %v5021, %v5047
  %v5049 = vand.u32 %v4490, 4294901760
  %5050 = vmatmul.f32.gmra.mxu0 %v5049
  %v5051 = vpop.f32.mrf.mxu0
  %v5052 = vadd.f32 %v5025, %v5051
  %5053 = vdwg.mxu0
  %v5054 = vand.u32 %v4420, 4294901760
  %5055 = vmatpush.msra.mxu0 %v5054
  %v5056 = vand.u32 %v4415, 4294901760
  %5057 = vmatpush.msra.mxu0 %v5056
  %v5058 = vand.u32 %v4374, 4294901760
  %5059 = vmatpush.msra.mxu0 %v5058
  %v5060 = vand.u32 %v4369, 4294901760
  %5061 = vmatpush.msra.mxu0 %v5060
  %v5062 = vand.u32 %v4328, 4294901760
  %5063 = vmatpush.msra.mxu0 %v5062
  %v5064 = vand.u32 %v4323, 4294901760
  %5065 = vmatpush.msra.mxu0 %v5064
  %v5066 = vand.u32 %v4282, 4294901760
  %5067 = vmatpush.msra.mxu0 %v5066
  %v5068 = vand.u32 %v4277, 4294901760
  %5069 = vmatpush.msra.mxu0 %v5068
  %v5070 = vand.u32 %v4236, 4294901760
  %5071 = vmatpush.msra.mxu0 %v5070
  %v5072 = vand.u32 %v4231, 4294901760
  %5073 = vmatpush.msra.mxu0 %v5072
  %v5074 = vand.u32 %v4190, 4294901760
  %5075 = vmatpush.msra.mxu0 %v5074
  %v5076 = vand.u32 %v4185, 4294901760
  %5077 = vmatpush.msra.mxu0 %v5076
  %v5078 = vand.u32 %v4144, 4294901760
  %5079 = vmatpush.msra.mxu0 %v5078
  %v5080 = vand.u32 %v4139, 4294901760
  %5081 = vmatpush.msra.mxu0 %v5080
  %v5082 = vand.u32 %v4089, 4294901760
  %5083 = vmatpush.msra.mxu0 %v5082
  %v5084 = vand.u32 %v4084, 4294901760
  %5085 = vmatpush.msra.mxu0 %v5084
  %v5086 = vand.u32 %v4482, 4294901760
  %v5087 = vsub.f32 %v4482, %v5086
  %v5088 = vand.u32 %v5087, 4294901760
  %v5089 = vsub.f32 %v5087, %v5088
  %v5090 = vand.u32 %v5089, 4294901760
  %5091 = vmatmul.f32.gmra.mxu0 %v5090
  %v5092 = vpop.f32.mrf.mxu0
  %v5093 = vadd.f32 0.0, %v5092
  %v5094 = vand.u32 %v4484, 4294901760
  %v5095 = vsub.f32 %v4484, %v5094
  %v5096 = vand.u32 %v5095, 4294901760
  %v5097 = vsub.f32 %v5095, %v5096
  %v5098 = vand.u32 %v5097, 4294901760
  %5099 = vmatmul.f32.gmra.mxu0 %v5098
  %v5100 = vpop.f32.mrf.mxu0
  %v5101 = vadd.f32 0.0, %v5100
  %5102 = vdwg.mxu0
  %v5103 = vand.u32 %v4420, 4294901760
  %v5104 = vsub.f32 %v4420, %v5103
  %v5105 = vand.u32 %v5104, 4294901760
  %v5106 = vsub.f32 %v5104, %v5105
  %v5107 = vand.u32 %v5106, 4294901760
  %5108 = vmatpush.msra.mxu0 %v5107
  %v5109 = vand.u32 %v4415, 4294901760
  %v5110 = vsub.f32 %v4415, %v5109
  %v5111 = vand.u32 %v5110, 4294901760
  %v5112 = vsub.f32 %v5110, %v5111
  %v5113 = vand.u32 %v5112, 4294901760
  %5114 = vmatpush.msra.mxu0 %v5113
  %v5115 = vand.u32 %v4374, 4294901760
  %v5116 = vsub.f32 %v4374, %v5115
  %v5117 = vand.u32 %v5116, 4294901760
  %v5118 = vsub.f32 %v5116, %v5117
  %v5119 = vand.u32 %v5118, 4294901760
  %5120 = vmatpush.msra.mxu0 %v5119
  %v5121 = vand.u32 %v4369, 4294901760
  %v5122 = vsub.f32 %v4369, %v5121
  %v5123 = vand.u32 %v5122, 4294901760
  %v5124 = vsub.f32 %v5122, %v5123
  %v5125 = vand.u32 %v5124, 4294901760
  %5126 = vmatpush.msra.mxu0 %v5125
  %v5127 = vand.u32 %v4328, 4294901760
  %v5128 = vsub.f32 %v4328, %v5127
  %v5129 = vand.u32 %v5128, 4294901760
  %v5130 = vsub.f32 %v5128, %v5129
  %v5131 = vand.u32 %v5130, 4294901760
  %5132 = vmatpush.msra.mxu0 %v5131
  %v5133 = vand.u32 %v4323, 4294901760
  %v5134 = vsub.f32 %v4323, %v5133
  %v5135 = vand.u32 %v5134, 4294901760
  %v5136 = vsub.f32 %v5134, %v5135
  %v5137 = vand.u32 %v5136, 4294901760
  %5138 = vmatpush.msra.mxu0 %v5137
  %v5139 = vand.u32 %v4282, 4294901760
  %v5140 = vsub.f32 %v4282, %v5139
  %v5141 = vand.u32 %v5140, 4294901760
  %v5142 = vsub.f32 %v5140, %v5141
  %v5143 = vand.u32 %v5142, 4294901760
  %5144 = vmatpush.msra.mxu0 %v5143
  %v5145 = vand.u32 %v4277, 4294901760
  %v5146 = vsub.f32 %v4277, %v5145
  %v5147 = vand.u32 %v5146, 4294901760
  %v5148 = vsub.f32 %v5146, %v5147
  %v5149 = vand.u32 %v5148, 4294901760
  %5150 = vmatpush.msra.mxu0 %v5149
  %v5151 = vand.u32 %v4236, 4294901760
  %v5152 = vsub.f32 %v4236, %v5151
  %v5153 = vand.u32 %v5152, 4294901760
  %v5154 = vsub.f32 %v5152, %v5153
  %v5155 = vand.u32 %v5154, 4294901760
  %5156 = vmatpush.msra.mxu0 %v5155
  %v5157 = vand.u32 %v4231, 4294901760
  %v5158 = vsub.f32 %v4231, %v5157
  %v5159 = vand.u32 %v5158, 4294901760
  %v5160 = vsub.f32 %v5158, %v5159
  %v5161 = vand.u32 %v5160, 4294901760
  %5162 = vmatpush.msra.mxu0 %v5161
  %v5163 = vand.u32 %v4190, 4294901760
  %v5164 = vsub.f32 %v4190, %v5163
  %v5165 = vand.u32 %v5164, 4294901760
  %v5166 = vsub.f32 %v5164, %v5165
  %v5167 = vand.u32 %v5166, 4294901760
  %5168 = vmatpush.msra.mxu0 %v5167
  %v5169 = vand.u32 %v4185, 4294901760
  %v5170 = vsub.f32 %v4185, %v5169
  %v5171 = vand.u32 %v5170, 4294901760
  %v5172 = vsub.f32 %v5170, %v5171
  %v5173 = vand.u32 %v5172, 4294901760
  %5174 = vmatpush.msra.mxu0 %v5173
  %v5175 = vand.u32 %v4144, 4294901760
  %v5176 = vsub.f32 %v4144, %v5175
  %v5177 = vand.u32 %v5176, 4294901760
  %v5178 = vsub.f32 %v5176, %v5177
  %v5179 = vand.u32 %v5178, 4294901760
  %5180 = vmatpush.msra.mxu0 %v5179
  %v5181 = vand.u32 %v4139, 4294901760
  %v5182 = vsub.f32 %v4139, %v5181
  %v5183 = vand.u32 %v5182, 4294901760
  %v5184 = vsub.f32 %v5182, %v5183
  %v5185 = vand.u32 %v5184, 4294901760
  %5186 = vmatpush.msra.mxu0 %v5185
  %v5187 = vand.u32 %v4089, 4294901760
  %v5188 = vsub.f32 %v4089, %v5187
  %v5189 = vand.u32 %v5188, 4294901760
  %v5190 = vsub.f32 %v5188, %v5189
  %v5191 = vand.u32 %v5190, 4294901760
  %5192 = vmatpush.msra.mxu0 %v5191
  %v5193 = vand.u32 %v4084, 4294901760
  %v5194 = vsub.f32 %v4084, %v5193
  %v5195 = vand.u32 %v5194, 4294901760
  %v5196 = vsub.f32 %v5194, %v5195
  %v5197 = vand.u32 %v5196, 4294901760
  %5198 = vmatpush.msra.mxu0 %v5197
  %v5199 = vand.u32 %v4482, 4294901760
  %5200 = vmatmul.f32.gmra.mxu0 %v5199
  %v5201 = vpop.f32.mrf.mxu0
  %v5202 = vadd.f32 %v5093, %v5201
  %v5203 = vand.u32 %v4484, 4294901760
  %5204 = vmatmul.f32.gmra.mxu0 %v5203
  %v5205 = vpop.f32.mrf.mxu0
  %v5206 = vadd.f32 %v5101, %v5205
  %5207 = vdwg.mxu0
  %v5208 = vand.u32 %v4420, 4294901760
  %v5209 = vsub.f32 %v4420, %v5208
  %5210 = vmatpush.msra.mxu0 %v5209
  %v5211 = vand.u32 %v4415, 4294901760
  %v5212 = vsub.f32 %v4415, %v5211
  %5213 = vmatpush.msra.mxu0 %v5212
  %v5214 = vand.u32 %v4374, 4294901760
  %v5215 = vsub.f32 %v4374, %v5214
  %5216 = vmatpush.msra.mxu0 %v5215
  %v5217 = vand.u32 %v4369, 4294901760
  %v5218 = vsub.f32 %v4369, %v5217
  %5219 = vmatpush.msra.mxu0 %v5218
  %v5220 = vand.u32 %v4328, 4294901760
  %v5221 = vsub.f32 %v4328, %v5220
  %5222 = vmatpush.msra.mxu0 %v5221
  %v5223 = vand.u32 %v4323, 4294901760
  %v5224 = vsub.f32 %v4323, %v5223
  %5225 = vmatpush.msra.mxu0 %v5224
  %v5226 = vand.u32 %v4282, 4294901760
  %v5227 = vsub.f32 %v4282, %v5226
  %5228 = vmatpush.msra.mxu0 %v5227
  %v5229 = vand.u32 %v4277, 4294901760
  %v5230 = vsub.f32 %v4277, %v5229
  %5231 = vmatpush.msra.mxu0 %v5230
  %v5232 = vand.u32 %v4236, 4294901760
  %v5233 = vsub.f32 %v4236, %v5232
  %5234 = vmatpush.msra.mxu0 %v5233
  %v5235 = vand.u32 %v4231, 4294901760
  %v5236 = vsub.f32 %v4231, %v5235
  %5237 = vmatpush.msra.mxu0 %v5236
  %v5238 = vand.u32 %v4190, 4294901760
  %v5239 = vsub.f32 %v4190, %v5238
  %5240 = vmatpush.msra.mxu0 %v5239
  %v5241 = vand.u32 %v4185, 4294901760
  %v5242 = vsub.f32 %v4185, %v5241
  %5243 = vmatpush.msra.mxu0 %v5242
  %v5244 = vand.u32 %v4144, 4294901760
  %v5245 = vsub.f32 %v4144, %v5244
  %5246 = vmatpush.msra.mxu0 %v5245
  %v5247 = vand.u32 %v4139, 4294901760
  %v5248 = vsub.f32 %v4139, %v5247
  %5249 = vmatpush.msra.mxu0 %v5248
  %v5250 = vand.u32 %v4089, 4294901760
  %v5251 = vsub.f32 %v4089, %v5250
  %5252 = vmatpush.msra.mxu0 %v5251
  %v5253 = vand.u32 %v4084, 4294901760
  %v5254 = vsub.f32 %v4084, %v5253
  %5255 = vmatpush.msra.mxu0 %v5254
  %v5256 = vand.u32 %v4482, 4294901760
  %v5257 = vsub.f32 %v4482, %v5256
  %5258 = vmatmul.f32.gmra.mxu0 %v5257
  %v5259 = vpop.f32.mrf.mxu0
  %v5260 = vadd.f32 %v5202, %v5259
  %v5261 = vand.u32 %v4484, 4294901760
  %v5262 = vsub.f32 %v4484, %v5261
  %5263 = vmatmul.f32.gmra.mxu0 %v5262
  %v5264 = vpop.f32.mrf.mxu0
  %v5265 = vadd.f32 %v5206, %v5264
  %5266 = vdwg.mxu0
  %v5267 = vand.u32 %v4420, 4294901760
  %5268 = vmatpush.msra.mxu0 %v5267
  %v5269 = vand.u32 %v4415, 4294901760
  %5270 = vmatpush.msra.mxu0 %v5269
  %v5271 = vand.u32 %v4374, 4294901760
  %5272 = vmatpush.msra.mxu0 %v5271
  %v5273 = vand.u32 %v4369, 4294901760
  %5274 = vmatpush.msra.mxu0 %v5273
  %v5275 = vand.u32 %v4328, 4294901760
  %5276 = vmatpush.msra.mxu0 %v5275
  %v5277 = vand.u32 %v4323, 4294901760
  %5278 = vmatpush.msra.mxu0 %v5277
  %v5279 = vand.u32 %v4282, 4294901760
  %5280 = vmatpush.msra.mxu0 %v5279
  %v5281 = vand.u32 %v4277, 4294901760
  %5282 = vmatpush.msra.mxu0 %v5281
  %v5283 = vand.u32 %v4236, 4294901760
  %5284 = vmatpush.msra.mxu0 %v5283
  %v5285 = vand.u32 %v4231, 4294901760
  %5286 = vmatpush.msra.mxu0 %v5285
  %v5287 = vand.u32 %v4190, 4294901760
  %5288 = vmatpush.msra.mxu0 %v5287
  %v5289 = vand.u32 %v4185, 4294901760
  %5290 = vmatpush.msra.mxu0 %v5289
  %v5291 = vand.u32 %v4144, 4294901760
  %5292 = vmatpush.msra.mxu0 %v5291
  %v5293 = vand.u32 %v4139, 4294901760
  %5294 = vmatpush.msra.mxu0 %v5293
  %v5295 = vand.u32 %v4089, 4294901760
  %5296 = vmatpush.msra.mxu0 %v5295
  %v5297 = vand.u32 %v4084, 4294901760
  %5298 = vmatpush.msra.mxu0 %v5297
  %v5299 = vand.u32 %v4482, 4294901760
  %v5300 = vsub.f32 %v4482, %v5299
  %v5301 = vand.u32 %v5300, 4294901760
  %5302 = vmatmul.f32.gmra.mxu0 %v5301
  %v5303 = vpop.f32.mrf.mxu0
  %v5304 = vadd.f32 %v5260, %v5303
  %v5305 = vand.u32 %v4484, 4294901760
  %v5306 = vsub.f32 %v4484, %v5305
  %v5307 = vand.u32 %v5306, 4294901760
  %5308 = vmatmul.f32.gmra.mxu0 %v5307
  %v5309 = vpop.f32.mrf.mxu0
  %v5310 = vadd.f32 %v5265, %v5309
  %5311 = vdwg.mxu0
  %v5312 = vand.u32 %v4420, 4294901760
  %v5313 = vsub.f32 %v4420, %v5312
  %v5314 = vand.u32 %v5313, 4294901760
  %5315 = vmatpush.msra.mxu0 %v5314
  %v5316 = vand.u32 %v4415, 4294901760
  %v5317 = vsub.f32 %v4415, %v5316
  %v5318 = vand.u32 %v5317, 4294901760
  %5319 = vmatpush.msra.mxu0 %v5318
  %v5320 = vand.u32 %v4374, 4294901760
  %v5321 = vsub.f32 %v4374, %v5320
  %v5322 = vand.u32 %v5321, 4294901760
  %5323 = vmatpush.msra.mxu0 %v5322
  %v5324 = vand.u32 %v4369, 4294901760
  %v5325 = vsub.f32 %v4369, %v5324
  %v5326 = vand.u32 %v5325, 4294901760
  %5327 = vmatpush.msra.mxu0 %v5326
  %v5328 = vand.u32 %v4328, 4294901760
  %v5329 = vsub.f32 %v4328, %v5328
  %v5330 = vand.u32 %v5329, 4294901760
  %5331 = vmatpush.msra.mxu0 %v5330
  %v5332 = vand.u32 %v4323, 4294901760
  %v5333 = vsub.f32 %v4323, %v5332
  %v5334 = vand.u32 %v5333, 4294901760
  %5335 = vmatpush.msra.mxu0 %v5334
  %v5336 = vand.u32 %v4282, 4294901760
  %v5337 = vsub.f32 %v4282, %v5336
  %v5338 = vand.u32 %v5337, 4294901760
  %5339 = vmatpush.msra.mxu0 %v5338
  %v5340 = vand.u32 %v4277, 4294901760
  %v5341 = vsub.f32 %v4277, %v5340
  %v5342 = vand.u32 %v5341, 4294901760
  %5343 = vmatpush.msra.mxu0 %v5342
  %v5344 = vand.u32 %v4236, 4294901760
  %v5345 = vsub.f32 %v4236, %v5344
  %v5346 = vand.u32 %v5345, 4294901760
  %5347 = vmatpush.msra.mxu0 %v5346
  %v5348 = vand.u32 %v4231, 4294901760
  %v5349 = vsub.f32 %v4231, %v5348
  %v5350 = vand.u32 %v5349, 4294901760
  %5351 = vmatpush.msra.mxu0 %v5350
  %v5352 = vand.u32 %v4190, 4294901760
  %v5353 = vsub.f32 %v4190, %v5352
  %v5354 = vand.u32 %v5353, 4294901760
  %5355 = vmatpush.msra.mxu0 %v5354
  %v5356 = vand.u32 %v4185, 4294901760
  %v5357 = vsub.f32 %v4185, %v5356
  %v5358 = vand.u32 %v5357, 4294901760
  %5359 = vmatpush.msra.mxu0 %v5358
  %v5360 = vand.u32 %v4144, 4294901760
  %v5361 = vsub.f32 %v4144, %v5360
  %v5362 = vand.u32 %v5361, 4294901760
  %5363 = vmatpush.msra.mxu0 %v5362
  %v5364 = vand.u32 %v4139, 4294901760
  %v5365 = vsub.f32 %v4139, %v5364
  %v5366 = vand.u32 %v5365, 4294901760
  %5367 = vmatpush.msra.mxu0 %v5366
  %v5368 = vand.u32 %v4089, 4294901760
  %v5369 = vsub.f32 %v4089, %v5368
  %v5370 = vand.u32 %v5369, 4294901760
  %5371 = vmatpush.msra.mxu0 %v5370
  %v5372 = vand.u32 %v4084, 4294901760
  %v5373 = vsub.f32 %v4084, %v5372
  %v5374 = vand.u32 %v5373, 4294901760
  %5375 = vmatpush.msra.mxu0 %v5374
  %v5376 = vand.u32 %v4482, 4294901760
  %5377 = vmatmul.f32.gmra.mxu0 %v5376
  %v5378 = vpop.f32.mrf.mxu0
  %v5379 = vadd.f32 %v5304, %v5378
  %v5380 = vand.u32 %v4484, 4294901760
  %5381 = vmatmul.f32.gmra.mxu0 %v5380
  %v5382 = vpop.f32.mrf.mxu0
  %v5383 = vadd.f32 %v5310, %v5382
  %5384 = vdwg.mxu0
  %v5385 = vand.u32 %v4420, 4294901760
  %5386 = vmatpush.msra.mxu0 %v5385
  %v5387 = vand.u32 %v4415, 4294901760
  %5388 = vmatpush.msra.mxu0 %v5387
  %v5389 = vand.u32 %v4374, 4294901760
  %5390 = vmatpush.msra.mxu0 %v5389
  %v5391 = vand.u32 %v4369, 4294901760
  %5392 = vmatpush.msra.mxu0 %v5391
  %v5393 = vand.u32 %v4328, 4294901760
  %5394 = vmatpush.msra.mxu0 %v5393
  %v5395 = vand.u32 %v4323, 4294901760
  %5396 = vmatpush.msra.mxu0 %v5395
  %v5397 = vand.u32 %v4282, 4294901760
  %5398 = vmatpush.msra.mxu0 %v5397
  %v5399 = vand.u32 %v4277, 4294901760
  %5400 = vmatpush.msra.mxu0 %v5399
  %v5401 = vand.u32 %v4236, 4294901760
  %5402 = vmatpush.msra.mxu0 %v5401
  %v5403 = vand.u32 %v4231, 4294901760
  %5404 = vmatpush.msra.mxu0 %v5403
  %v5405 = vand.u32 %v4190, 4294901760
  %5406 = vmatpush.msra.mxu0 %v5405
  %v5407 = vand.u32 %v4185, 4294901760
  %5408 = vmatpush.msra.mxu0 %v5407
  %v5409 = vand.u32 %v4144, 4294901760
  %5410 = vmatpush.msra.mxu0 %v5409
  %v5411 = vand.u32 %v4139, 4294901760
  %5412 = vmatpush.msra.mxu0 %v5411
  %v5413 = vand.u32 %v4089, 4294901760
  %5414 = vmatpush.msra.mxu0 %v5413
  %v5415 = vand.u32 %v4084, 4294901760
  %5416 = vmatpush.msra.mxu0 %v5415
  %v5417 = vand.u32 %v4482, 4294901760
  %5418 = vmatmul.f32.gmra.mxu0 %v5417
  %v5419 = vpop.f32.mrf.mxu0
  %v5420 = vadd.f32 %v5379, %v5419
  %v5421 = vand.u32 %v4484, 4294901760
  %5422 = vmatmul.f32.gmra.mxu0 %v5421
  %v5423 = vpop.f32.mrf.mxu0
  %v5424 = vadd.f32 %v5383, %v5423
  %5425 = vdwg.mxu0
  %5426 = vmatpush.msra.mxu0 0.0
  %5427 = vmatpush.msra.mxu0 0.0
  %5428 = vmatpush.msra.mxu0 0.0
  %5429 = vmatpush.msra.mxu0 0.0
  %5430 = vmatpush.msra.mxu0 0.0
  %5431 = vmatpush.msra.mxu0 0.0
  %5432 = vmatpush.msra.mxu0 0.0
  %5433 = vmatpush.msra.mxu0 0.0
  %5434 = vmatpush.msra.mxu0 0.0
  %5435 = vmatpush.msra.mxu0 0.0
  %5436 = vmatpush.msra.mxu0 0.0
  %5437 = vmatpush.msra.mxu0 0.0
  %5438 = vmatpush.msra.mxu0 0.0
  %5439 = vmatpush.msra.mxu0 0.0
  %v5440 = vand.u32 %v4466, 4294901760
  %5441 = vmatpush.msra.mxu0 %v5440
  %v5442 = vand.u32 %v4461, 4294901760
  %5443 = vmatpush.msra.mxu0 %v5442
  %v5444 = vand.u32 %v4487, 4294901760
  %v5445 = vsub.f32 %v4487, %v5444
  %v5446 = vand.u32 %v5445, 4294901760
  %v5447 = vsub.f32 %v5445, %v5446
  %v5448 = vand.u32 %v5447, 4294901760
  %5449 = vmatmul.f32.gmra.mxu0 %v5448
  %v5450 = vpop.f32.mrf.mxu0
  %v5451 = vadd.f32 %v5420, %v5450
  %v5452 = vand.u32 %v4490, 4294901760
  %v5453 = vsub.f32 %v4490, %v5452
  %v5454 = vand.u32 %v5453, 4294901760
  %v5455 = vsub.f32 %v5453, %v5454
  %v5456 = vand.u32 %v5455, 4294901760
  %5457 = vmatmul.f32.gmra.mxu0 %v5456
  %v5458 = vpop.f32.mrf.mxu0
  %v5459 = vadd.f32 %v5424, %v5458
  %5460 = vdwg.mxu0
  %5461 = vmatpush.msra.mxu0 0.0
  %5462 = vmatpush.msra.mxu0 0.0
  %5463 = vmatpush.msra.mxu0 0.0
  %5464 = vmatpush.msra.mxu0 0.0
  %5465 = vmatpush.msra.mxu0 0.0
  %5466 = vmatpush.msra.mxu0 0.0
  %5467 = vmatpush.msra.mxu0 0.0
  %5468 = vmatpush.msra.mxu0 0.0
  %5469 = vmatpush.msra.mxu0 0.0
  %5470 = vmatpush.msra.mxu0 0.0
  %5471 = vmatpush.msra.mxu0 0.0
  %5472 = vmatpush.msra.mxu0 0.0
  %5473 = vmatpush.msra.mxu0 0.0
  %5474 = vmatpush.msra.mxu0 0.0
  %v5475 = vand.u32 %v4466, 4294901760
  %v5476 = vsub.f32 %v4466, %v5475
  %v5477 = vand.u32 %v5476, 4294901760
  %v5478 = vsub.f32 %v5476, %v5477
  %v5479 = vand.u32 %v5478, 4294901760
  %5480 = vmatpush.msra.mxu0 %v5479
  %v5481 = vand.u32 %v4461, 4294901760
  %v5482 = vsub.f32 %v4461, %v5481
  %v5483 = vand.u32 %v5482, 4294901760
  %v5484 = vsub.f32 %v5482, %v5483
  %v5485 = vand.u32 %v5484, 4294901760
  %5486 = vmatpush.msra.mxu0 %v5485
  %v5487 = vand.u32 %v4487, 4294901760
  %5488 = vmatmul.f32.gmra.mxu0 %v5487
  %v5489 = vpop.f32.mrf.mxu0
  %v5490 = vadd.f32 %v5451, %v5489
  %v5491 = vand.u32 %v4490, 4294901760
  %5492 = vmatmul.f32.gmra.mxu0 %v5491
  %v5493 = vpop.f32.mrf.mxu0
  %v5494 = vadd.f32 %v5459, %v5493
  %5495 = vdwg.mxu0
  %5496 = vmatpush.msra.mxu0 0.0
  %5497 = vmatpush.msra.mxu0 0.0
  %5498 = vmatpush.msra.mxu0 0.0
  %5499 = vmatpush.msra.mxu0 0.0
  %5500 = vmatpush.msra.mxu0 0.0
  %5501 = vmatpush.msra.mxu0 0.0
  %5502 = vmatpush.msra.mxu0 0.0
  %5503 = vmatpush.msra.mxu0 0.0
  %5504 = vmatpush.msra.mxu0 0.0
  %5505 = vmatpush.msra.mxu0 0.0
  %5506 = vmatpush.msra.mxu0 0.0
  %5507 = vmatpush.msra.mxu0 0.0
  %5508 = vmatpush.msra.mxu0 0.0
  %5509 = vmatpush.msra.mxu0 0.0
  %v5510 = vand.u32 %v4466, 4294901760
  %v5511 = vsub.f32 %v4466, %v5510
  %5512 = vmatpush.msra.mxu0 %v5511
  %v5513 = vand.u32 %v4461, 4294901760
  %v5514 = vsub.f32 %v4461, %v5513
  %5515 = vmatpush.msra.mxu0 %v5514
  %v5516 = vand.u32 %v4487, 4294901760
  %v5517 = vsub.f32 %v4487, %v5516
  %5518 = vmatmul.f32.gmra.mxu0 %v5517
  %v5519 = vpop.f32.mrf.mxu0
  %v5520 = vadd.f32 %v5490, %v5519
  %v5521 = vand.u32 %v4490, 4294901760
  %v5522 = vsub.f32 %v4490, %v5521
  %5523 = vmatmul.f32.gmra.mxu0 %v5522
  %v5524 = vpop.f32.mrf.mxu0
  %v5525 = vadd.f32 %v5494, %v5524
  %5526 = vdwg.mxu0
  %5527 = vmatpush.msra.mxu0 0.0
  %5528 = vmatpush.msra.mxu0 0.0
  %5529 = vmatpush.msra.mxu0 0.0
  %5530 = vmatpush.msra.mxu0 0.0
  %5531 = vmatpush.msra.mxu0 0.0
  %5532 = vmatpush.msra.mxu0 0.0
  %5533 = vmatpush.msra.mxu0 0.0
  %5534 = vmatpush.msra.mxu0 0.0
  %5535 = vmatpush.msra.mxu0 0.0
  %5536 = vmatpush.msra.mxu0 0.0
  %5537 = vmatpush.msra.mxu0 0.0
  %5538 = vmatpush.msra.mxu0 0.0
  %5539 = vmatpush.msra.mxu0 0.0
  %5540 = vmatpush.msra.mxu0 0.0
  %v5541 = vand.u32 %v4466, 4294901760
  %5542 = vmatpush.msra.mxu0 %v5541
  %v5543 = vand.u32 %v4461, 4294901760
  %5544 = vmatpush.msra.mxu0 %v5543
  %v5545 = vand.u32 %v4487, 4294901760
  %v5546 = vsub.f32 %v4487, %v5545
  %v5547 = vand.u32 %v5546, 4294901760
  %5548 = vmatmul.f32.gmra.mxu0 %v5547
  %v5549 = vpop.f32.mrf.mxu0
  %v5550 = vadd.f32 %v5520, %v5549
  %v5551 = vand.u32 %v4490, 4294901760
  %v5552 = vsub.f32 %v4490, %v5551
  %v5553 = vand.u32 %v5552, 4294901760
  %5554 = vmatmul.f32.gmra.mxu0 %v5553
  %v5555 = vpop.f32.mrf.mxu0
  %v5556 = vadd.f32 %v5525, %v5555
  %5557 = vdwg.mxu0
  %5558 = vmatpush.msra.mxu0 0.0
  %5559 = vmatpush.msra.mxu0 0.0
  %5560 = vmatpush.msra.mxu0 0.0
  %5561 = vmatpush.msra.mxu0 0.0
  %5562 = vmatpush.msra.mxu0 0.0
  %5563 = vmatpush.msra.mxu0 0.0
  %5564 = vmatpush.msra.mxu0 0.0
  %5565 = vmatpush.msra.mxu0 0.0
  %5566 = vmatpush.msra.mxu0 0.0
  %5567 = vmatpush.msra.mxu0 0.0
  %5568 = vmatpush.msra.mxu0 0.0
  %5569 = vmatpush.msra.mxu0 0.0
  %5570 = vmatpush.msra.mxu0 0.0
  %5571 = vmatpush.msra.mxu0 0.0
  %v5572 = vand.u32 %v4466, 4294901760
  %v5573 = vsub.f32 %v4466, %v5572
  %v5574 = vand.u32 %v5573, 4294901760
  %5575 = vmatpush.msra.mxu0 %v5574
  %v5576 = vand.u32 %v4461, 4294901760
  %v5577 = vsub.f32 %v4461, %v5576
  %v5578 = vand.u32 %v5577, 4294901760
  %5579 = vmatpush.msra.mxu0 %v5578
  %v5580 = vand.u32 %v4487, 4294901760
  %5581 = vmatmul.f32.gmra.mxu0 %v5580
  %v5582 = vpop.f32.mrf.mxu0
  %v5583 = vadd.f32 %v5550, %v5582
  %v5584 = vand.u32 %v4490, 4294901760
  %5585 = vmatmul.f32.gmra.mxu0 %v5584
  %v5586 = vpop.f32.mrf.mxu0
  %v5587 = vadd.f32 %v5556, %v5586
  %5588 = vdwg.mxu0
  %5589 = vmatpush.msra.mxu0 0.0
  %5590 = vmatpush.msra.mxu0 0.0
  %5591 = vmatpush.msra.mxu0 0.0
  %5592 = vmatpush.msra.mxu0 0.0
  %5593 = vmatpush.msra.mxu0 0.0
  %5594 = vmatpush.msra.mxu0 0.0
  %5595 = vmatpush.msra.mxu0 0.0
  %5596 = vmatpush.msra.mxu0 0.0
  %5597 = vmatpush.msra.mxu0 0.0
  %5598 = vmatpush.msra.mxu0 0.0
  %5599 = vmatpush.msra.mxu0 0.0
  %5600 = vmatpush.msra.mxu0 0.0
  %5601 = vmatpush.msra.mxu0 0.0
  %5602 = vmatpush.msra.mxu0 0.0
  %v5603 = vand.u32 %v4466, 4294901760
  %5604 = vmatpush.msra.mxu0 %v5603
  %v5605 = vand.u32 %v4461, 4294901760
  %5606 = vmatpush.msra.mxu0 %v5605
  %v5607 = vand.u32 %v4487, 4294901760
  %5608 = vmatmul.f32.gmra.mxu0 %v5607
  %v5609 = vpop.f32.mrf.mxu0
  %v5610 = vadd.f32 %v5583, %v5609
  %v5611 = vand.u32 %v4490, 4294901760
  %5612 = vmatmul.f32.gmra.mxu0 %v5611
  %v5613 = vpop.f32.mrf.mxu0
  %v5614 = vadd.f32 %v5587, %v5613
  %5615 = vdwg.mxu0
  %v5616 = vand.u32 %v4421, 4294901760
  %5617 = vmatpush.msra.mxu0 %v5616
  %v5618 = vand.u32 %v4416, 4294901760
  %5619 = vmatpush.msra.mxu0 %v5618
  %v5620 = vand.u32 %v4375, 4294901760
  %5621 = vmatpush.msra.mxu0 %v5620
  %v5622 = vand.u32 %v4370, 4294901760
  %5623 = vmatpush.msra.mxu0 %v5622
  %v5624 = vand.u32 %v4329, 4294901760
  %5625 = vmatpush.msra.mxu0 %v5624
  %v5626 = vand.u32 %v4324, 4294901760
  %5627 = vmatpush.msra.mxu0 %v5626
  %v5628 = vand.u32 %v4283, 4294901760
  %5629 = vmatpush.msra.mxu0 %v5628
  %v5630 = vand.u32 %v4278, 4294901760
  %5631 = vmatpush.msra.mxu0 %v5630
  %v5632 = vand.u32 %v4237, 4294901760
  %5633 = vmatpush.msra.mxu0 %v5632
  %v5634 = vand.u32 %v4232, 4294901760
  %5635 = vmatpush.msra.mxu0 %v5634
  %v5636 = vand.u32 %v4191, 4294901760
  %5637 = vmatpush.msra.mxu0 %v5636
  %v5638 = vand.u32 %v4186, 4294901760
  %5639 = vmatpush.msra.mxu0 %v5638
  %v5640 = vand.u32 %v4145, 4294901760
  %5641 = vmatpush.msra.mxu0 %v5640
  %v5642 = vand.u32 %v4140, 4294901760
  %5643 = vmatpush.msra.mxu0 %v5642
  %v5644 = vand.u32 %v4090, 4294901760
  %5645 = vmatpush.msra.mxu0 %v5644
  %v5646 = vand.u32 %v4085, 4294901760
  %5647 = vmatpush.msra.mxu0 %v5646
  %v5648 = vand.u32 %v4482, 4294901760
  %v5649 = vsub.f32 %v4482, %v5648
  %v5650 = vand.u32 %v5649, 4294901760
  %v5651 = vsub.f32 %v5649, %v5650
  %v5652 = vand.u32 %v5651, 4294901760
  %5653 = vmatmul.f32.gmra.mxu0 %v5652
  %v5654 = vpop.f32.mrf.mxu0
  %v5655 = vadd.f32 0.0, %v5654
  %v5656 = vand.u32 %v4484, 4294901760
  %v5657 = vsub.f32 %v4484, %v5656
  %v5658 = vand.u32 %v5657, 4294901760
  %v5659 = vsub.f32 %v5657, %v5658
  %v5660 = vand.u32 %v5659, 4294901760
  %5661 = vmatmul.f32.gmra.mxu0 %v5660
  %v5662 = vpop.f32.mrf.mxu0
  %v5663 = vadd.f32 0.0, %v5662
  %5664 = vdwg.mxu0
  %v5665 = vand.u32 %v4421, 4294901760
  %v5666 = vsub.f32 %v4421, %v5665
  %v5667 = vand.u32 %v5666, 4294901760
  %v5668 = vsub.f32 %v5666, %v5667
  %v5669 = vand.u32 %v5668, 4294901760
  %5670 = vmatpush.msra.mxu0 %v5669
  %v5671 = vand.u32 %v4416, 4294901760
  %v5672 = vsub.f32 %v4416, %v5671
  %v5673 = vand.u32 %v5672, 4294901760
  %v5674 = vsub.f32 %v5672, %v5673
  %v5675 = vand.u32 %v5674, 4294901760
  %5676 = vmatpush.msra.mxu0 %v5675
  %v5677 = vand.u32 %v4375, 4294901760
  %v5678 = vsub.f32 %v4375, %v5677
  %v5679 = vand.u32 %v5678, 4294901760
  %v5680 = vsub.f32 %v5678, %v5679
  %v5681 = vand.u32 %v5680, 4294901760
  %5682 = vmatpush.msra.mxu0 %v5681
  %v5683 = vand.u32 %v4370, 4294901760
  %v5684 = vsub.f32 %v4370, %v5683
  %v5685 = vand.u32 %v5684, 4294901760
  %v5686 = vsub.f32 %v5684, %v5685
  %v5687 = vand.u32 %v5686, 4294901760
  %5688 = vmatpush.msra.mxu0 %v5687
  %v5689 = vand.u32 %v4329, 4294901760
  %v5690 = vsub.f32 %v4329, %v5689
  %v5691 = vand.u32 %v5690, 4294901760
  %v5692 = vsub.f32 %v5690, %v5691
  %v5693 = vand.u32 %v5692, 4294901760
  %5694 = vmatpush.msra.mxu0 %v5693
  %v5695 = vand.u32 %v4324, 4294901760
  %v5696 = vsub.f32 %v4324, %v5695
  %v5697 = vand.u32 %v5696, 4294901760
  %v5698 = vsub.f32 %v5696, %v5697
  %v5699 = vand.u32 %v5698, 4294901760
  %5700 = vmatpush.msra.mxu0 %v5699
  %v5701 = vand.u32 %v4283, 4294901760
  %v5702 = vsub.f32 %v4283, %v5701
  %v5703 = vand.u32 %v5702, 4294901760
  %v5704 = vsub.f32 %v5702, %v5703
  %v5705 = vand.u32 %v5704, 4294901760
  %5706 = vmatpush.msra.mxu0 %v5705
  %v5707 = vand.u32 %v4278, 4294901760
  %v5708 = vsub.f32 %v4278, %v5707
  %v5709 = vand.u32 %v5708, 4294901760
  %v5710 = vsub.f32 %v5708, %v5709
  %v5711 = vand.u32 %v5710, 4294901760
  %5712 = vmatpush.msra.mxu0 %v5711
  %v5713 = vand.u32 %v4237, 4294901760
  %v5714 = vsub.f32 %v4237, %v5713
  %v5715 = vand.u32 %v5714, 4294901760
  %v5716 = vsub.f32 %v5714, %v5715
  %v5717 = vand.u32 %v5716, 4294901760
  %5718 = vmatpush.msra.mxu0 %v5717
  %v5719 = vand.u32 %v4232, 4294901760
  %v5720 = vsub.f32 %v4232, %v5719
  %v5721 = vand.u32 %v5720, 4294901760
  %v5722 = vsub.f32 %v5720, %v5721
  %v5723 = vand.u32 %v5722, 4294901760
  %5724 = vmatpush.msra.mxu0 %v5723
  %v5725 = vand.u32 %v4191, 4294901760
  %v5726 = vsub.f32 %v4191, %v5725
  %v5727 = vand.u32 %v5726, 4294901760
  %v5728 = vsub.f32 %v5726, %v5727
  %v5729 = vand.u32 %v5728, 4294901760
  %5730 = vmatpush.msra.mxu0 %v5729
  %v5731 = vand.u32 %v4186, 4294901760
  %v5732 = vsub.f32 %v4186, %v5731
  %v5733 = vand.u32 %v5732, 4294901760
  %v5734 = vsub.f32 %v5732, %v5733
  %v5735 = vand.u32 %v5734, 4294901760
  %5736 = vmatpush.msra.mxu0 %v5735
  %v5737 = vand.u32 %v4145, 4294901760
  %v5738 = vsub.f32 %v4145, %v5737
  %v5739 = vand.u32 %v5738, 4294901760
  %v5740 = vsub.f32 %v5738, %v5739
  %v5741 = vand.u32 %v5740, 4294901760
  %5742 = vmatpush.msra.mxu0 %v5741
  %v5743 = vand.u32 %v4140, 4294901760
  %v5744 = vsub.f32 %v4140, %v5743
  %v5745 = vand.u32 %v5744, 4294901760
  %v5746 = vsub.f32 %v5744, %v5745
  %v5747 = vand.u32 %v5746, 4294901760
  %5748 = vmatpush.msra.mxu0 %v5747
  %v5749 = vand.u32 %v4090, 4294901760
  %v5750 = vsub.f32 %v4090, %v5749
  %v5751 = vand.u32 %v5750, 4294901760
  %v5752 = vsub.f32 %v5750, %v5751
  %v5753 = vand.u32 %v5752, 4294901760
  %5754 = vmatpush.msra.mxu0 %v5753
  %v5755 = vand.u32 %v4085, 4294901760
  %v5756 = vsub.f32 %v4085, %v5755
  %v5757 = vand.u32 %v5756, 4294901760
  %v5758 = vsub.f32 %v5756, %v5757
  %v5759 = vand.u32 %v5758, 4294901760
  %5760 = vmatpush.msra.mxu0 %v5759
  %v5761 = vand.u32 %v4482, 4294901760
  %5762 = vmatmul.f32.gmra.mxu0 %v5761
  %v5763 = vpop.f32.mrf.mxu0
  %v5764 = vadd.f32 %v5655, %v5763
  %v5765 = vand.u32 %v4484, 4294901760
  %5766 = vmatmul.f32.gmra.mxu0 %v5765
  %v5767 = vpop.f32.mrf.mxu0
  %v5768 = vadd.f32 %v5663, %v5767
  %5769 = vdwg.mxu0
  %v5770 = vand.u32 %v4421, 4294901760
  %v5771 = vsub.f32 %v4421, %v5770
  %5772 = vmatpush.msra.mxu0 %v5771
  %v5773 = vand.u32 %v4416, 4294901760
  %v5774 = vsub.f32 %v4416, %v5773
  %5775 = vmatpush.msra.mxu0 %v5774
  %v5776 = vand.u32 %v4375, 4294901760
  %v5777 = vsub.f32 %v4375, %v5776
  %5778 = vmatpush.msra.mxu0 %v5777
  %v5779 = vand.u32 %v4370, 4294901760
  %v5780 = vsub.f32 %v4370, %v5779
  %5781 = vmatpush.msra.mxu0 %v5780
  %v5782 = vand.u32 %v4329, 4294901760
  %v5783 = vsub.f32 %v4329, %v5782
  %5784 = vmatpush.msra.mxu0 %v5783
  %v5785 = vand.u32 %v4324, 4294901760
  %v5786 = vsub.f32 %v4324, %v5785
  %5787 = vmatpush.msra.mxu0 %v5786
  %v5788 = vand.u32 %v4283, 4294901760
  %v5789 = vsub.f32 %v4283, %v5788
  %5790 = vmatpush.msra.mxu0 %v5789
  %v5791 = vand.u32 %v4278, 4294901760
  %v5792 = vsub.f32 %v4278, %v5791
  %5793 = vmatpush.msra.mxu0 %v5792
  %v5794 = vand.u32 %v4237, 4294901760
  %v5795 = vsub.f32 %v4237, %v5794
  %5796 = vmatpush.msra.mxu0 %v5795
  %v5797 = vand.u32 %v4232, 4294901760
  %v5798 = vsub.f32 %v4232, %v5797
  %5799 = vmatpush.msra.mxu0 %v5798
  %v5800 = vand.u32 %v4191, 4294901760
  %v5801 = vsub.f32 %v4191, %v5800
  %5802 = vmatpush.msra.mxu0 %v5801
  %v5803 = vand.u32 %v4186, 4294901760
  %v5804 = vsub.f32 %v4186, %v5803
  %5805 = vmatpush.msra.mxu0 %v5804
  %v5806 = vand.u32 %v4145, 4294901760
  %v5807 = vsub.f32 %v4145, %v5806
  %5808 = vmatpush.msra.mxu0 %v5807
  %v5809 = vand.u32 %v4140, 4294901760
  %v5810 = vsub.f32 %v4140, %v5809
  %5811 = vmatpush.msra.mxu0 %v5810
  %v5812 = vand.u32 %v4090, 4294901760
  %v5813 = vsub.f32 %v4090, %v5812
  %5814 = vmatpush.msra.mxu0 %v5813
  %v5815 = vand.u32 %v4085, 4294901760
  %v5816 = vsub.f32 %v4085, %v5815
  %5817 = vmatpush.msra.mxu0 %v5816
  %v5818 = vand.u32 %v4482, 4294901760
  %v5819 = vsub.f32 %v4482, %v5818
  %5820 = vmatmul.f32.gmra.mxu0 %v5819
  %v5821 = vpop.f32.mrf.mxu0
  %v5822 = vadd.f32 %v5764, %v5821
  %v5823 = vand.u32 %v4484, 4294901760
  %v5824 = vsub.f32 %v4484, %v5823
  %5825 = vmatmul.f32.gmra.mxu0 %v5824
  %v5826 = vpop.f32.mrf.mxu0
  %v5827 = vadd.f32 %v5768, %v5826
  %5828 = vdwg.mxu0
  %v5829 = vand.u32 %v4421, 4294901760
  %5830 = vmatpush.msra.mxu0 %v5829
  %v5831 = vand.u32 %v4416, 4294901760
  %5832 = vmatpush.msra.mxu0 %v5831
  %v5833 = vand.u32 %v4375, 4294901760
  %5834 = vmatpush.msra.mxu0 %v5833
  %v5835 = vand.u32 %v4370, 4294901760
  %5836 = vmatpush.msra.mxu0 %v5835
  %v5837 = vand.u32 %v4329, 4294901760
  %5838 = vmatpush.msra.mxu0 %v5837
  %v5839 = vand.u32 %v4324, 4294901760
  %5840 = vmatpush.msra.mxu0 %v5839
  %v5841 = vand.u32 %v4283, 4294901760
  %5842 = vmatpush.msra.mxu0 %v5841
  %v5843 = vand.u32 %v4278, 4294901760
  %5844 = vmatpush.msra.mxu0 %v5843
  %v5845 = vand.u32 %v4237, 4294901760
  %5846 = vmatpush.msra.mxu0 %v5845
  %v5847 = vand.u32 %v4232, 4294901760
  %5848 = vmatpush.msra.mxu0 %v5847
  %v5849 = vand.u32 %v4191, 4294901760
  %5850 = vmatpush.msra.mxu0 %v5849
  %v5851 = vand.u32 %v4186, 4294901760
  %5852 = vmatpush.msra.mxu0 %v5851
  %v5853 = vand.u32 %v4145, 4294901760
  %5854 = vmatpush.msra.mxu0 %v5853
  %v5855 = vand.u32 %v4140, 4294901760
  %5856 = vmatpush.msra.mxu0 %v5855
  %v5857 = vand.u32 %v4090, 4294901760
  %5858 = vmatpush.msra.mxu0 %v5857
  %v5859 = vand.u32 %v4085, 4294901760
  %5860 = vmatpush.msra.mxu0 %v5859
  %v5861 = vand.u32 %v4482, 4294901760
  %v5862 = vsub.f32 %v4482, %v5861
  %v5863 = vand.u32 %v5862, 4294901760
  %5864 = vmatmul.f32.gmra.mxu0 %v5863
  %v5865 = vpop.f32.mrf.mxu0
  %v5866 = vadd.f32 %v5822, %v5865
  %v5867 = vand.u32 %v4484, 4294901760
  %v5868 = vsub.f32 %v4484, %v5867
  %v5869 = vand.u32 %v5868, 4294901760
  %5870 = vmatmul.f32.gmra.mxu0 %v5869
  %v5871 = vpop.f32.mrf.mxu0
  %v5872 = vadd.f32 %v5827, %v5871
  %5873 = vdwg.mxu0
  %v5874 = vand.u32 %v4421, 4294901760
  %v5875 = vsub.f32 %v4421, %v5874
  %v5876 = vand.u32 %v5875, 4294901760
  %5877 = vmatpush.msra.mxu0 %v5876
  %v5878 = vand.u32 %v4416, 4294901760
  %v5879 = vsub.f32 %v4416, %v5878
  %v5880 = vand.u32 %v5879, 4294901760
  %5881 = vmatpush.msra.mxu0 %v5880
  %v5882 = vand.u32 %v4375, 4294901760
  %v5883 = vsub.f32 %v4375, %v5882
  %v5884 = vand.u32 %v5883, 4294901760
  %5885 = vmatpush.msra.mxu0 %v5884
  %v5886 = vand.u32 %v4370, 4294901760
  %v5887 = vsub.f32 %v4370, %v5886
  %v5888 = vand.u32 %v5887, 4294901760
  %5889 = vmatpush.msra.mxu0 %v5888
  %v5890 = vand.u32 %v4329, 4294901760
  %v5891 = vsub.f32 %v4329, %v5890
  %v5892 = vand.u32 %v5891, 4294901760
  %5893 = vmatpush.msra.mxu0 %v5892
  %v5894 = vand.u32 %v4324, 4294901760
  %v5895 = vsub.f32 %v4324, %v5894
  %v5896 = vand.u32 %v5895, 4294901760
  %5897 = vmatpush.msra.mxu0 %v5896
  %v5898 = vand.u32 %v4283, 4294901760
  %v5899 = vsub.f32 %v4283, %v5898
  %v5900 = vand.u32 %v5899, 4294901760
  %5901 = vmatpush.msra.mxu0 %v5900
  %v5902 = vand.u32 %v4278, 4294901760
  %v5903 = vsub.f32 %v4278, %v5902
  %v5904 = vand.u32 %v5903, 4294901760
  %5905 = vmatpush.msra.mxu0 %v5904
  %v5906 = vand.u32 %v4237, 4294901760
  %v5907 = vsub.f32 %v4237, %v5906
  %v5908 = vand.u32 %v5907, 4294901760
  %5909 = vmatpush.msra.mxu0 %v5908
  %v5910 = vand.u32 %v4232, 4294901760
  %v5911 = vsub.f32 %v4232, %v5910
  %v5912 = vand.u32 %v5911, 4294901760
  %5913 = vmatpush.msra.mxu0 %v5912
  %v5914 = vand.u32 %v4191, 4294901760
  %v5915 = vsub.f32 %v4191, %v5914
  %v5916 = vand.u32 %v5915, 4294901760
  %5917 = vmatpush.msra.mxu0 %v5916
  %v5918 = vand.u32 %v4186, 4294901760
  %v5919 = vsub.f32 %v4186, %v5918
  %v5920 = vand.u32 %v5919, 4294901760
  %5921 = vmatpush.msra.mxu0 %v5920
  %v5922 = vand.u32 %v4145, 4294901760
  %v5923 = vsub.f32 %v4145, %v5922
  %v5924 = vand.u32 %v5923, 4294901760
  %5925 = vmatpush.msra.mxu0 %v5924
  %v5926 = vand.u32 %v4140, 4294901760
  %v5927 = vsub.f32 %v4140, %v5926
  %v5928 = vand.u32 %v5927, 4294901760
  %5929 = vmatpush.msra.mxu0 %v5928
  %v5930 = vand.u32 %v4090, 4294901760
  %v5931 = vsub.f32 %v4090, %v5930
  %v5932 = vand.u32 %v5931, 4294901760
  %5933 = vmatpush.msra.mxu0 %v5932
  %v5934 = vand.u32 %v4085, 4294901760
  %v5935 = vsub.f32 %v4085, %v5934
  %v5936 = vand.u32 %v5935, 4294901760
  %5937 = vmatpush.msra.mxu0 %v5936
  %v5938 = vand.u32 %v4482, 4294901760
  %5939 = vmatmul.f32.gmra.mxu0 %v5938
  %v5940 = vpop.f32.mrf.mxu0
  %v5941 = vadd.f32 %v5866, %v5940
  %v5942 = vand.u32 %v4484, 4294901760
  %5943 = vmatmul.f32.gmra.mxu0 %v5942
  %v5944 = vpop.f32.mrf.mxu0
  %v5945 = vadd.f32 %v5872, %v5944
  %5946 = vdwg.mxu0
  %v5947 = vand.u32 %v4421, 4294901760
  %5948 = vmatpush.msra.mxu0 %v5947
  %v5949 = vand.u32 %v4416, 4294901760
  %5950 = vmatpush.msra.mxu0 %v5949
  %v5951 = vand.u32 %v4375, 4294901760
  %5952 = vmatpush.msra.mxu0 %v5951
  %v5953 = vand.u32 %v4370, 4294901760
  %5954 = vmatpush.msra.mxu0 %v5953
  %v5955 = vand.u32 %v4329, 4294901760
  %5956 = vmatpush.msra.mxu0 %v5955
  %v5957 = vand.u32 %v4324, 4294901760
  %5958 = vmatpush.msra.mxu0 %v5957
  %v5959 = vand.u32 %v4283, 4294901760
  %5960 = vmatpush.msra.mxu0 %v5959
  %v5961 = vand.u32 %v4278, 4294901760
  %5962 = vmatpush.msra.mxu0 %v5961
  %v5963 = vand.u32 %v4237, 4294901760
  %5964 = vmatpush.msra.mxu0 %v5963
  %v5965 = vand.u32 %v4232, 4294901760
  %5966 = vmatpush.msra.mxu0 %v5965
  %v5967 = vand.u32 %v4191, 4294901760
  %5968 = vmatpush.msra.mxu0 %v5967
  %v5969 = vand.u32 %v4186, 4294901760
  %5970 = vmatpush.msra.mxu0 %v5969
  %v5971 = vand.u32 %v4145, 4294901760
  %5972 = vmatpush.msra.mxu0 %v5971
  %v5973 = vand.u32 %v4140, 4294901760
  %5974 = vmatpush.msra.mxu0 %v5973
  %v5975 = vand.u32 %v4090, 4294901760
  %5976 = vmatpush.msra.mxu0 %v5975
  %v5977 = vand.u32 %v4085, 4294901760
  %5978 = vmatpush.msra.mxu0 %v5977
  %v5979 = vand.u32 %v4482, 4294901760
  %5980 = vmatmul.f32.gmra.mxu0 %v5979
  %v5981 = vpop.f32.mrf.mxu0
  %v5982 = vadd.f32 %v5941, %v5981
  %v5983 = vand.u32 %v4484, 4294901760
  %5984 = vmatmul.f32.gmra.mxu0 %v5983
  %v5985 = vpop.f32.mrf.mxu0
  %v5986 = vadd.f32 %v5945, %v5985
  %5987 = vdwg.mxu0
  %5988 = vmatpush.msra.mxu0 0.0
  %5989 = vmatpush.msra.mxu0 0.0
  %5990 = vmatpush.msra.mxu0 0.0
  %5991 = vmatpush.msra.mxu0 0.0
  %5992 = vmatpush.msra.mxu0 0.0
  %5993 = vmatpush.msra.mxu0 0.0
  %5994 = vmatpush.msra.mxu0 0.0
  %5995 = vmatpush.msra.mxu0 0.0
  %5996 = vmatpush.msra.mxu0 0.0
  %5997 = vmatpush.msra.mxu0 0.0
  %5998 = vmatpush.msra.mxu0 0.0
  %5999 = vmatpush.msra.mxu0 0.0
  %6000 = vmatpush.msra.mxu0 0.0
  %6001 = vmatpush.msra.mxu0 0.0
  %v6002 = vand.u32 %v4467, 4294901760
  %6003 = vmatpush.msra.mxu0 %v6002
  %v6004 = vand.u32 %v4462, 4294901760
  %6005 = vmatpush.msra.mxu0 %v6004
  %v6006 = vand.u32 %v4487, 4294901760
  %v6007 = vsub.f32 %v4487, %v6006
  %v6008 = vand.u32 %v6007, 4294901760
  %v6009 = vsub.f32 %v6007, %v6008
  %v6010 = vand.u32 %v6009, 4294901760
  %6011 = vmatmul.f32.gmra.mxu0 %v6010
  %v6012 = vpop.f32.mrf.mxu0
  %v6013 = vadd.f32 %v5982, %v6012
  %v6014 = vand.u32 %v4490, 4294901760
  %v6015 = vsub.f32 %v4490, %v6014
  %v6016 = vand.u32 %v6015, 4294901760
  %v6017 = vsub.f32 %v6015, %v6016
  %v6018 = vand.u32 %v6017, 4294901760
  %6019 = vmatmul.f32.gmra.mxu0 %v6018
  %v6020 = vpop.f32.mrf.mxu0
  %v6021 = vadd.f32 %v5986, %v6020
  %6022 = vdwg.mxu0
  %6023 = vmatpush.msra.mxu0 0.0
  %6024 = vmatpush.msra.mxu0 0.0
  %6025 = vmatpush.msra.mxu0 0.0
  %6026 = vmatpush.msra.mxu0 0.0
  %6027 = vmatpush.msra.mxu0 0.0
  %6028 = vmatpush.msra.mxu0 0.0
  %6029 = vmatpush.msra.mxu0 0.0
  %6030 = vmatpush.msra.mxu0 0.0
  %6031 = vmatpush.msra.mxu0 0.0
  %6032 = vmatpush.msra.mxu0 0.0
  %6033 = vmatpush.msra.mxu0 0.0
  %6034 = vmatpush.msra.mxu0 0.0
  %6035 = vmatpush.msra.mxu0 0.0
  %6036 = vmatpush.msra.mxu0 0.0
  %v6037 = vand.u32 %v4467, 4294901760
  %v6038 = vsub.f32 %v4467, %v6037
  %v6039 = vand.u32 %v6038, 4294901760
  %v6040 = vsub.f32 %v6038, %v6039
  %v6041 = vand.u32 %v6040, 4294901760
  %6042 = vmatpush.msra.mxu0 %v6041
  %v6043 = vand.u32 %v4462, 4294901760
  %v6044 = vsub.f32 %v4462, %v6043
  %v6045 = vand.u32 %v6044, 4294901760
  %v6046 = vsub.f32 %v6044, %v6045
  %v6047 = vand.u32 %v6046, 4294901760
  %6048 = vmatpush.msra.mxu0 %v6047
  %v6049 = vand.u32 %v4487, 4294901760
  %6050 = vmatmul.f32.gmra.mxu0 %v6049
  %v6051 = vpop.f32.mrf.mxu0
  %v6052 = vadd.f32 %v6013, %v6051
  %v6053 = vand.u32 %v4490, 4294901760
  %6054 = vmatmul.f32.gmra.mxu0 %v6053
  %v6055 = vpop.f32.mrf.mxu0
  %v6056 = vadd.f32 %v6021, %v6055
  %6057 = vdwg.mxu0
  %6058 = vmatpush.msra.mxu0 0.0
  %6059 = vmatpush.msra.mxu0 0.0
  %6060 = vmatpush.msra.mxu0 0.0
  %6061 = vmatpush.msra.mxu0 0.0
  %6062 = vmatpush.msra.mxu0 0.0
  %6063 = vmatpush.msra.mxu0 0.0
  %6064 = vmatpush.msra.mxu0 0.0
  %6065 = vmatpush.msra.mxu0 0.0
  %6066 = vmatpush.msra.mxu0 0.0
  %6067 = vmatpush.msra.mxu0 0.0
  %6068 = vmatpush.msra.mxu0 0.0
  %6069 = vmatpush.msra.mxu0 0.0
  %6070 = vmatpush.msra.mxu0 0.0
  %6071 = vmatpush.msra.mxu0 0.0
  %v6072 = vand.u32 %v4467, 4294901760
  %v6073 = vsub.f32 %v4467, %v6072
  %6074 = vmatpush.msra.mxu0 %v6073
  %v6075 = vand.u32 %v4462, 4294901760
  %v6076 = vsub.f32 %v4462, %v6075
  %6077 = vmatpush.msra.mxu0 %v6076
  %v6078 = vand.u32 %v4487, 4294901760
  %v6079 = vsub.f32 %v4487, %v6078
  %6080 = vmatmul.f32.gmra.mxu0 %v6079
  %v6081 = vpop.f32.mrf.mxu0
  %v6082 = vadd.f32 %v6052, %v6081
  %v6083 = vand.u32 %v4490, 4294901760
  %v6084 = vsub.f32 %v4490, %v6083
  %6085 = vmatmul.f32.gmra.mxu0 %v6084
  %v6086 = vpop.f32.mrf.mxu0
  %v6087 = vadd.f32 %v6056, %v6086
  %6088 = vdwg.mxu0
  %6089 = vmatpush.msra.mxu0 0.0
  %6090 = vmatpush.msra.mxu0 0.0
  %6091 = vmatpush.msra.mxu0 0.0
  %6092 = vmatpush.msra.mxu0 0.0
  %6093 = vmatpush.msra.mxu0 0.0
  %6094 = vmatpush.msra.mxu0 0.0
  %6095 = vmatpush.msra.mxu0 0.0
  %6096 = vmatpush.msra.mxu0 0.0
  %6097 = vmatpush.msra.mxu0 0.0
  %6098 = vmatpush.msra.mxu0 0.0
  %6099 = vmatpush.msra.mxu0 0.0
  %6100 = vmatpush.msra.mxu0 0.0
  %6101 = vmatpush.msra.mxu0 0.0
  %6102 = vmatpush.msra.mxu0 0.0
  %v6103 = vand.u32 %v4467, 4294901760
  %6104 = vmatpush.msra.mxu0 %v6103
  %v6105 = vand.u32 %v4462, 4294901760
  %6106 = vmatpush.msra.mxu0 %v6105
  %v6107 = vand.u32 %v4487, 4294901760
  %v6108 = vsub.f32 %v4487, %v6107
  %v6109 = vand.u32 %v6108, 4294901760
  %6110 = vmatmul.f32.gmra.mxu0 %v6109
  %v6111 = vpop.f32.mrf.mxu0
  %v6112 = vadd.f32 %v6082, %v6111
  %v6113 = vand.u32 %v4490, 4294901760
  %v6114 = vsub.f32 %v4490, %v6113
  %v6115 = vand.u32 %v6114, 4294901760
  %6116 = vmatmul.f32.gmra.mxu0 %v6115
  %v6117 = vpop.f32.mrf.mxu0
  %v6118 = vadd.f32 %v6087, %v6117
  %6119 = vdwg.mxu0
  %6120 = vmatpush.msra.mxu0 0.0
  %6121 = vmatpush.msra.mxu0 0.0
  %6122 = vmatpush.msra.mxu0 0.0
  %6123 = vmatpush.msra.mxu0 0.0
  %6124 = vmatpush.msra.mxu0 0.0
  %6125 = vmatpush.msra.mxu0 0.0
  %6126 = vmatpush.msra.mxu0 0.0
  %6127 = vmatpush.msra.mxu0 0.0
  %6128 = vmatpush.msra.mxu0 0.0
  %6129 = vmatpush.msra.mxu0 0.0
  %6130 = vmatpush.msra.mxu0 0.0
  %6131 = vmatpush.msra.mxu0 0.0
  %6132 = vmatpush.msra.mxu0 0.0
  %6133 = vmatpush.msra.mxu0 0.0
  %v6134 = vand.u32 %v4467, 4294901760
  %v6135 = vsub.f32 %v4467, %v6134
  %v6136 = vand.u32 %v6135, 4294901760
  %6137 = vmatpush.msra.mxu0 %v6136
  %v6138 = vand.u32 %v4462, 4294901760
  %v6139 = vsub.f32 %v4462, %v6138
  %v6140 = vand.u32 %v6139, 4294901760
  %6141 = vmatpush.msra.mxu0 %v6140
  %v6142 = vand.u32 %v4487, 4294901760
  %6143 = vmatmul.f32.gmra.mxu0 %v6142
  %v6144 = vpop.f32.mrf.mxu0
  %v6145 = vadd.f32 %v6112, %v6144
  %v6146 = vand.u32 %v4490, 4294901760
  %6147 = vmatmul.f32.gmra.mxu0 %v6146
  %v6148 = vpop.f32.mrf.mxu0
  %v6149 = vadd.f32 %v6118, %v6148
  %6150 = vdwg.mxu0
  %6151 = vmatpush.msra.mxu0 0.0
  %6152 = vmatpush.msra.mxu0 0.0
  %6153 = vmatpush.msra.mxu0 0.0
  %6154 = vmatpush.msra.mxu0 0.0
  %6155 = vmatpush.msra.mxu0 0.0
  %6156 = vmatpush.msra.mxu0 0.0
  %6157 = vmatpush.msra.mxu0 0.0
  %6158 = vmatpush.msra.mxu0 0.0
  %6159 = vmatpush.msra.mxu0 0.0
  %6160 = vmatpush.msra.mxu0 0.0
  %6161 = vmatpush.msra.mxu0 0.0
  %6162 = vmatpush.msra.mxu0 0.0
  %6163 = vmatpush.msra.mxu0 0.0
  %6164 = vmatpush.msra.mxu0 0.0
  %v6165 = vand.u32 %v4467, 4294901760
  %6166 = vmatpush.msra.mxu0 %v6165
  %v6167 = vand.u32 %v4462, 4294901760
  %6168 = vmatpush.msra.mxu0 %v6167
  %v6169 = vand.u32 %v4487, 4294901760
  %6170 = vmatmul.f32.gmra.mxu0 %v6169
  %v6171 = vpop.f32.mrf.mxu0
  %v6172 = vadd.f32 %v6145, %v6171
  %v6173 = vand.u32 %v4490, 4294901760
  %6174 = vmatmul.f32.gmra.mxu0 %v6173
  %v6175 = vpop.f32.mrf.mxu0
  %v6176 = vadd.f32 %v6149, %v6175
  %6177 = vdwg.mxu0
  %v6178 = vand.u32 %v4422, 4294901760
  %6179 = vmatpush.msra.mxu0 %v6178
  %v6180 = vand.u32 %v4417, 4294901760
  %6181 = vmatpush.msra.mxu0 %v6180
  %v6182 = vand.u32 %v4376, 4294901760
  %6183 = vmatpush.msra.mxu0 %v6182
  %v6184 = vand.u32 %v4371, 4294901760
  %6185 = vmatpush.msra.mxu0 %v6184
  %v6186 = vand.u32 %v4330, 4294901760
  %6187 = vmatpush.msra.mxu0 %v6186
  %v6188 = vand.u32 %v4325, 4294901760
  %6189 = vmatpush.msra.mxu0 %v6188
  %v6190 = vand.u32 %v4284, 4294901760
  %6191 = vmatpush.msra.mxu0 %v6190
  %v6192 = vand.u32 %v4279, 4294901760
  %6193 = vmatpush.msra.mxu0 %v6192
  %v6194 = vand.u32 %v4238, 4294901760
  %6195 = vmatpush.msra.mxu0 %v6194
  %v6196 = vand.u32 %v4233, 4294901760
  %6197 = vmatpush.msra.mxu0 %v6196
  %v6198 = vand.u32 %v4192, 4294901760
  %6199 = vmatpush.msra.mxu0 %v6198
  %v6200 = vand.u32 %v4187, 4294901760
  %6201 = vmatpush.msra.mxu0 %v6200
  %v6202 = vand.u32 %v4146, 4294901760
  %6203 = vmatpush.msra.mxu0 %v6202
  %v6204 = vand.u32 %v4141, 4294901760
  %6205 = vmatpush.msra.mxu0 %v6204
  %v6206 = vand.u32 %v4091, 4294901760
  %6207 = vmatpush.msra.mxu0 %v6206
  %v6208 = vand.u32 %v4086, 4294901760
  %6209 = vmatpush.msra.mxu0 %v6208
  %v6210 = vand.u32 %v4482, 4294901760
  %v6211 = vsub.f32 %v4482, %v6210
  %v6212 = vand.u32 %v6211, 4294901760
  %v6213 = vsub.f32 %v6211, %v6212
  %v6214 = vand.u32 %v6213, 4294901760
  %6215 = vmatmul.f32.gmra.mxu0 %v6214
  %v6216 = vpop.f32.mrf.mxu0
  %v6217 = vadd.f32 0.0, %v6216
  %v6218 = vand.u32 %v4484, 4294901760
  %v6219 = vsub.f32 %v4484, %v6218
  %v6220 = vand.u32 %v6219, 4294901760
  %v6221 = vsub.f32 %v6219, %v6220
  %v6222 = vand.u32 %v6221, 4294901760
  %6223 = vmatmul.f32.gmra.mxu0 %v6222
  %v6224 = vpop.f32.mrf.mxu0
  %v6225 = vadd.f32 0.0, %v6224
  %6226 = vdwg.mxu0
  %v6227 = vand.u32 %v4422, 4294901760
  %v6228 = vsub.f32 %v4422, %v6227
  %v6229 = vand.u32 %v6228, 4294901760
  %v6230 = vsub.f32 %v6228, %v6229
  %v6231 = vand.u32 %v6230, 4294901760
  %6232 = vmatpush.msra.mxu0 %v6231
  %v6233 = vand.u32 %v4417, 4294901760
  %v6234 = vsub.f32 %v4417, %v6233
  %v6235 = vand.u32 %v6234, 4294901760
  %v6236 = vsub.f32 %v6234, %v6235
  %v6237 = vand.u32 %v6236, 4294901760
  %6238 = vmatpush.msra.mxu0 %v6237
  %v6239 = vand.u32 %v4376, 4294901760
  %v6240 = vsub.f32 %v4376, %v6239
  %v6241 = vand.u32 %v6240, 4294901760
  %v6242 = vsub.f32 %v6240, %v6241
  %v6243 = vand.u32 %v6242, 4294901760
  %6244 = vmatpush.msra.mxu0 %v6243
  %v6245 = vand.u32 %v4371, 4294901760
  %v6246 = vsub.f32 %v4371, %v6245
  %v6247 = vand.u32 %v6246, 4294901760
  %v6248 = vsub.f32 %v6246, %v6247
  %v6249 = vand.u32 %v6248, 4294901760
  %6250 = vmatpush.msra.mxu0 %v6249
  %v6251 = vand.u32 %v4330, 4294901760
  %v6252 = vsub.f32 %v4330, %v6251
  %v6253 = vand.u32 %v6252, 4294901760
  %v6254 = vsub.f32 %v6252, %v6253
  %v6255 = vand.u32 %v6254, 4294901760
  %6256 = vmatpush.msra.mxu0 %v6255
  %v6257 = vand.u32 %v4325, 4294901760
  %v6258 = vsub.f32 %v4325, %v6257
  %v6259 = vand.u32 %v6258, 4294901760
  %v6260 = vsub.f32 %v6258, %v6259
  %v6261 = vand.u32 %v6260, 4294901760
  %6262 = vmatpush.msra.mxu0 %v6261
  %v6263 = vand.u32 %v4284, 4294901760
  %v6264 = vsub.f32 %v4284, %v6263
  %v6265 = vand.u32 %v6264, 4294901760
  %v6266 = vsub.f32 %v6264, %v6265
  %v6267 = vand.u32 %v6266, 4294901760
  %6268 = vmatpush.msra.mxu0 %v6267
  %v6269 = vand.u32 %v4279, 4294901760
  %v6270 = vsub.f32 %v4279, %v6269
  %v6271 = vand.u32 %v6270, 4294901760
  %v6272 = vsub.f32 %v6270, %v6271
  %v6273 = vand.u32 %v6272, 4294901760
  %6274 = vmatpush.msra.mxu0 %v6273
  %v6275 = vand.u32 %v4238, 4294901760
  %v6276 = vsub.f32 %v4238, %v6275
  %v6277 = vand.u32 %v6276, 4294901760
  %v6278 = vsub.f32 %v6276, %v6277
  %v6279 = vand.u32 %v6278, 4294901760
  %6280 = vmatpush.msra.mxu0 %v6279
  %v6281 = vand.u32 %v4233, 4294901760
  %v6282 = vsub.f32 %v4233, %v6281
  %v6283 = vand.u32 %v6282, 4294901760
  %v6284 = vsub.f32 %v6282, %v6283
  %v6285 = vand.u32 %v6284, 4294901760
  %6286 = vmatpush.msra.mxu0 %v6285
  %v6287 = vand.u32 %v4192, 4294901760
  %v6288 = vsub.f32 %v4192, %v6287
  %v6289 = vand.u32 %v6288, 4294901760
  %v6290 = vsub.f32 %v6288, %v6289
  %v6291 = vand.u32 %v6290, 4294901760
  %6292 = vmatpush.msra.mxu0 %v6291
  %v6293 = vand.u32 %v4187, 4294901760
  %v6294 = vsub.f32 %v4187, %v6293
  %v6295 = vand.u32 %v6294, 4294901760
  %v6296 = vsub.f32 %v6294, %v6295
  %v6297 = vand.u32 %v6296, 4294901760
  %6298 = vmatpush.msra.mxu0 %v6297
  %v6299 = vand.u32 %v4146, 4294901760
  %v6300 = vsub.f32 %v4146, %v6299
  %v6301 = vand.u32 %v6300, 4294901760
  %v6302 = vsub.f32 %v6300, %v6301
  %v6303 = vand.u32 %v6302, 4294901760
  %6304 = vmatpush.msra.mxu0 %v6303
  %v6305 = vand.u32 %v4141, 4294901760
  %v6306 = vsub.f32 %v4141, %v6305
  %v6307 = vand.u32 %v6306, 4294901760
  %v6308 = vsub.f32 %v6306, %v6307
  %v6309 = vand.u32 %v6308, 4294901760
  %6310 = vmatpush.msra.mxu0 %v6309
  %v6311 = vand.u32 %v4091, 4294901760
  %v6312 = vsub.f32 %v4091, %v6311
  %v6313 = vand.u32 %v6312, 4294901760
  %v6314 = vsub.f32 %v6312, %v6313
  %v6315 = vand.u32 %v6314, 4294901760
  %6316 = vmatpush.msra.mxu0 %v6315
  %v6317 = vand.u32 %v4086, 4294901760
  %v6318 = vsub.f32 %v4086, %v6317
  %v6319 = vand.u32 %v6318, 4294901760
  %v6320 = vsub.f32 %v6318, %v6319
  %v6321 = vand.u32 %v6320, 4294901760
  %6322 = vmatpush.msra.mxu0 %v6321
  %v6323 = vand.u32 %v4482, 4294901760
  %6324 = vmatmul.f32.gmra.mxu0 %v6323
  %v6325 = vpop.f32.mrf.mxu0
  %v6326 = vadd.f32 %v6217, %v6325
  %v6327 = vand.u32 %v4484, 4294901760
  %6328 = vmatmul.f32.gmra.mxu0 %v6327
  %v6329 = vpop.f32.mrf.mxu0
  %v6330 = vadd.f32 %v6225, %v6329
  %6331 = vdwg.mxu0
  %v6332 = vand.u32 %v4422, 4294901760
  %v6333 = vsub.f32 %v4422, %v6332
  %6334 = vmatpush.msra.mxu0 %v6333
  %v6335 = vand.u32 %v4417, 4294901760
  %v6336 = vsub.f32 %v4417, %v6335
  %6337 = vmatpush.msra.mxu0 %v6336
  %v6338 = vand.u32 %v4376, 4294901760
  %v6339 = vsub.f32 %v4376, %v6338
  %6340 = vmatpush.msra.mxu0 %v6339
  %v6341 = vand.u32 %v4371, 4294901760
  %v6342 = vsub.f32 %v4371, %v6341
  %6343 = vmatpush.msra.mxu0 %v6342
  %v6344 = vand.u32 %v4330, 4294901760
  %v6345 = vsub.f32 %v4330, %v6344
  %6346 = vmatpush.msra.mxu0 %v6345
  %v6347 = vand.u32 %v4325, 4294901760
  %v6348 = vsub.f32 %v4325, %v6347
  %6349 = vmatpush.msra.mxu0 %v6348
  %v6350 = vand.u32 %v4284, 4294901760
  %v6351 = vsub.f32 %v4284, %v6350
  %6352 = vmatpush.msra.mxu0 %v6351
  %v6353 = vand.u32 %v4279, 4294901760
  %v6354 = vsub.f32 %v4279, %v6353
  %6355 = vmatpush.msra.mxu0 %v6354
  %v6356 = vand.u32 %v4238, 4294901760
  %v6357 = vsub.f32 %v4238, %v6356
  %6358 = vmatpush.msra.mxu0 %v6357
  %v6359 = vand.u32 %v4233, 4294901760
  %v6360 = vsub.f32 %v4233, %v6359
  %6361 = vmatpush.msra.mxu0 %v6360
  %v6362 = vand.u32 %v4192, 4294901760
  %v6363 = vsub.f32 %v4192, %v6362
  %6364 = vmatpush.msra.mxu0 %v6363
  %v6365 = vand.u32 %v4187, 4294901760
  %v6366 = vsub.f32 %v4187, %v6365
  %6367 = vmatpush.msra.mxu0 %v6366
  %v6368 = vand.u32 %v4146, 4294901760
  %v6369 = vsub.f32 %v4146, %v6368
  %6370 = vmatpush.msra.mxu0 %v6369
  %v6371 = vand.u32 %v4141, 4294901760
  %v6372 = vsub.f32 %v4141, %v6371
  %6373 = vmatpush.msra.mxu0 %v6372
  %v6374 = vand.u32 %v4091, 4294901760
  %v6375 = vsub.f32 %v4091, %v6374
  %6376 = vmatpush.msra.mxu0 %v6375
  %v6377 = vand.u32 %v4086, 4294901760
  %v6378 = vsub.f32 %v4086, %v6377
  %6379 = vmatpush.msra.mxu0 %v6378
  %v6380 = vand.u32 %v4482, 4294901760
  %v6381 = vsub.f32 %v4482, %v6380
  %6382 = vmatmul.f32.gmra.mxu0 %v6381
  %v6383 = vpop.f32.mrf.mxu0
  %v6384 = vadd.f32 %v6326, %v6383
  %v6385 = vand.u32 %v4484, 4294901760
  %v6386 = vsub.f32 %v4484, %v6385
  %6387 = vmatmul.f32.gmra.mxu0 %v6386
  %v6388 = vpop.f32.mrf.mxu0
  %v6389 = vadd.f32 %v6330, %v6388
  %6390 = vdwg.mxu0
  %v6391 = vand.u32 %v4422, 4294901760
  %6392 = vmatpush.msra.mxu0 %v6391
  %v6393 = vand.u32 %v4417, 4294901760
  %6394 = vmatpush.msra.mxu0 %v6393
  %v6395 = vand.u32 %v4376, 4294901760
  %6396 = vmatpush.msra.mxu0 %v6395
  %v6397 = vand.u32 %v4371, 4294901760
  %6398 = vmatpush.msra.mxu0 %v6397
  %v6399 = vand.u32 %v4330, 4294901760
  %6400 = vmatpush.msra.mxu0 %v6399
  %v6401 = vand.u32 %v4325, 4294901760
  %6402 = vmatpush.msra.mxu0 %v6401
  %v6403 = vand.u32 %v4284, 4294901760
  %6404 = vmatpush.msra.mxu0 %v6403
  %v6405 = vand.u32 %v4279, 4294901760
  %6406 = vmatpush.msra.mxu0 %v6405
  %v6407 = vand.u32 %v4238, 4294901760
  %6408 = vmatpush.msra.mxu0 %v6407
  %v6409 = vand.u32 %v4233, 4294901760
  %6410 = vmatpush.msra.mxu0 %v6409
  %v6411 = vand.u32 %v4192, 4294901760
  %6412 = vmatpush.msra.mxu0 %v6411
  %v6413 = vand.u32 %v4187, 4294901760
  %6414 = vmatpush.msra.mxu0 %v6413
  %v6415 = vand.u32 %v4146, 4294901760
  %6416 = vmatpush.msra.mxu0 %v6415
  %v6417 = vand.u32 %v4141, 4294901760
  %6418 = vmatpush.msra.mxu0 %v6417
  %v6419 = vand.u32 %v4091, 4294901760
  %6420 = vmatpush.msra.mxu0 %v6419
  %v6421 = vand.u32 %v4086, 4294901760
  %6422 = vmatpush.msra.mxu0 %v6421
  %v6423 = vand.u32 %v4482, 4294901760
  %v6424 = vsub.f32 %v4482, %v6423
  %v6425 = vand.u32 %v6424, 4294901760
  %6426 = vmatmul.f32.gmra.mxu0 %v6425
  %v6427 = vpop.f32.mrf.mxu0
  %v6428 = vadd.f32 %v6384, %v6427
  %v6429 = vand.u32 %v4484, 4294901760
  %v6430 = vsub.f32 %v4484, %v6429
  %v6431 = vand.u32 %v6430, 4294901760
  %6432 = vmatmul.f32.gmra.mxu0 %v6431
  %v6433 = vpop.f32.mrf.mxu0
  %v6434 = vadd.f32 %v6389, %v6433
  %6435 = vdwg.mxu0
  %v6436 = vand.u32 %v4422, 4294901760
  %v6437 = vsub.f32 %v4422, %v6436
  %v6438 = vand.u32 %v6437, 4294901760
  %6439 = vmatpush.msra.mxu0 %v6438
  %v6440 = vand.u32 %v4417, 4294901760
  %v6441 = vsub.f32 %v4417, %v6440
  %v6442 = vand.u32 %v6441, 4294901760
  %6443 = vmatpush.msra.mxu0 %v6442
  %v6444 = vand.u32 %v4376, 4294901760
  %v6445 = vsub.f32 %v4376, %v6444
  %v6446 = vand.u32 %v6445, 4294901760
  %6447 = vmatpush.msra.mxu0 %v6446
  %v6448 = vand.u32 %v4371, 4294901760
  %v6449 = vsub.f32 %v4371, %v6448
  %v6450 = vand.u32 %v6449, 4294901760
  %6451 = vmatpush.msra.mxu0 %v6450
  %v6452 = vand.u32 %v4330, 4294901760
  %v6453 = vsub.f32 %v4330, %v6452
  %v6454 = vand.u32 %v6453, 4294901760
  %6455 = vmatpush.msra.mxu0 %v6454
  %v6456 = vand.u32 %v4325, 4294901760
  %v6457 = vsub.f32 %v4325, %v6456
  %v6458 = vand.u32 %v6457, 4294901760
  %6459 = vmatpush.msra.mxu0 %v6458
  %v6460 = vand.u32 %v4284, 4294901760
  %v6461 = vsub.f32 %v4284, %v6460
  %v6462 = vand.u32 %v6461, 4294901760
  %6463 = vmatpush.msra.mxu0 %v6462
  %v6464 = vand.u32 %v4279, 4294901760
  %v6465 = vsub.f32 %v4279, %v6464
  %v6466 = vand.u32 %v6465, 4294901760
  %6467 = vmatpush.msra.mxu0 %v6466
  %v6468 = vand.u32 %v4238, 4294901760
  %v6469 = vsub.f32 %v4238, %v6468
  %v6470 = vand.u32 %v6469, 4294901760
  %6471 = vmatpush.msra.mxu0 %v6470
  %v6472 = vand.u32 %v4233, 4294901760
  %v6473 = vsub.f32 %v4233, %v6472
  %v6474 = vand.u32 %v6473, 4294901760
  %6475 = vmatpush.msra.mxu0 %v6474
  %v6476 = vand.u32 %v4192, 4294901760
  %v6477 = vsub.f32 %v4192, %v6476
  %v6478 = vand.u32 %v6477, 4294901760
  %6479 = vmatpush.msra.mxu0 %v6478
  %v6480 = vand.u32 %v4187, 4294901760
  %v6481 = vsub.f32 %v4187, %v6480
  %v6482 = vand.u32 %v6481, 4294901760
  %6483 = vmatpush.msra.mxu0 %v6482
  %v6484 = vand.u32 %v4146, 4294901760
  %v6485 = vsub.f32 %v4146, %v6484
  %v6486 = vand.u32 %v6485, 4294901760
  %6487 = vmatpush.msra.mxu0 %v6486
  %v6488 = vand.u32 %v4141, 4294901760
  %v6489 = vsub.f32 %v4141, %v6488
  %v6490 = vand.u32 %v6489, 4294901760
  %6491 = vmatpush.msra.mxu0 %v6490
  %v6492 = vand.u32 %v4091, 4294901760
  %v6493 = vsub.f32 %v4091, %v6492
  %v6494 = vand.u32 %v6493, 4294901760
  %6495 = vmatpush.msra.mxu0 %v6494
  %v6496 = vand.u32 %v4086, 4294901760
  %v6497 = vsub.f32 %v4086, %v6496
  %v6498 = vand.u32 %v6497, 4294901760
  %6499 = vmatpush.msra.mxu0 %v6498
  %v6500 = vand.u32 %v4482, 4294901760
  %6501 = vmatmul.f32.gmra.mxu0 %v6500
  %v6502 = vpop.f32.mrf.mxu0
  %v6503 = vadd.f32 %v6428, %v6502
  %v6504 = vand.u32 %v4484, 4294901760
  %6505 = vmatmul.f32.gmra.mxu0 %v6504
  %v6506 = vpop.f32.mrf.mxu0
  %v6507 = vadd.f32 %v6434, %v6506
  %6508 = vdwg.mxu0
  %v6509 = vand.u32 %v4422, 4294901760
  %6510 = vmatpush.msra.mxu0 %v6509
  %v6511 = vand.u32 %v4417, 4294901760
  %6512 = vmatpush.msra.mxu0 %v6511
  %v6513 = vand.u32 %v4376, 4294901760
  %6514 = vmatpush.msra.mxu0 %v6513
  %v6515 = vand.u32 %v4371, 4294901760
  %6516 = vmatpush.msra.mxu0 %v6515
  %v6517 = vand.u32 %v4330, 4294901760
  %6518 = vmatpush.msra.mxu0 %v6517
  %v6519 = vand.u32 %v4325, 4294901760
  %6520 = vmatpush.msra.mxu0 %v6519
  %v6521 = vand.u32 %v4284, 4294901760
  %6522 = vmatpush.msra.mxu0 %v6521
  %v6523 = vand.u32 %v4279, 4294901760
  %6524 = vmatpush.msra.mxu0 %v6523
  %v6525 = vand.u32 %v4238, 4294901760
  %6526 = vmatpush.msra.mxu0 %v6525
  %v6527 = vand.u32 %v4233, 4294901760
  %6528 = vmatpush.msra.mxu0 %v6527
  %v6529 = vand.u32 %v4192, 4294901760
  %6530 = vmatpush.msra.mxu0 %v6529
  %v6531 = vand.u32 %v4187, 4294901760
  %6532 = vmatpush.msra.mxu0 %v6531
  %v6533 = vand.u32 %v4146, 4294901760
  %6534 = vmatpush.msra.mxu0 %v6533
  %v6535 = vand.u32 %v4141, 4294901760
  %6536 = vmatpush.msra.mxu0 %v6535
  %v6537 = vand.u32 %v4091, 4294901760
  %6538 = vmatpush.msra.mxu0 %v6537
  %v6539 = vand.u32 %v4086, 4294901760
  %6540 = vmatpush.msra.mxu0 %v6539
  %v6541 = vand.u32 %v4482, 4294901760
  %6542 = vmatmul.f32.gmra.mxu0 %v6541
  %v6543 = vpop.f32.mrf.mxu0
  %v6544 = vadd.f32 %v6503, %v6543
  %v6545 = vand.u32 %v4484, 4294901760
  %6546 = vmatmul.f32.gmra.mxu0 %v6545
  %v6547 = vpop.f32.mrf.mxu0
  %v6548 = vadd.f32 %v6507, %v6547
  %6549 = vdwg.mxu0
  %6550 = vmatpush.msra.mxu0 0.0
  %6551 = vmatpush.msra.mxu0 0.0
  %6552 = vmatpush.msra.mxu0 0.0
  %6553 = vmatpush.msra.mxu0 0.0
  %6554 = vmatpush.msra.mxu0 0.0
  %6555 = vmatpush.msra.mxu0 0.0
  %6556 = vmatpush.msra.mxu0 0.0
  %6557 = vmatpush.msra.mxu0 0.0
  %6558 = vmatpush.msra.mxu0 0.0
  %6559 = vmatpush.msra.mxu0 0.0
  %6560 = vmatpush.msra.mxu0 0.0
  %6561 = vmatpush.msra.mxu0 0.0
  %6562 = vmatpush.msra.mxu0 0.0
  %6563 = vmatpush.msra.mxu0 0.0
  %v6564 = vand.u32 %v4468, 4294901760
  %6565 = vmatpush.msra.mxu0 %v6564
  %v6566 = vand.u32 %v4463, 4294901760
  %6567 = vmatpush.msra.mxu0 %v6566
  %v6568 = vand.u32 %v4487, 4294901760
  %v6569 = vsub.f32 %v4487, %v6568
  %v6570 = vand.u32 %v6569, 4294901760
  %v6571 = vsub.f32 %v6569, %v6570
  %v6572 = vand.u32 %v6571, 4294901760
  %6573 = vmatmul.f32.gmra.mxu0 %v6572
  %v6574 = vpop.f32.mrf.mxu0
  %v6575 = vadd.f32 %v6544, %v6574
  %v6576 = vand.u32 %v4490, 4294901760
  %v6577 = vsub.f32 %v4490, %v6576
  %v6578 = vand.u32 %v6577, 4294901760
  %v6579 = vsub.f32 %v6577, %v6578
  %v6580 = vand.u32 %v6579, 4294901760
  %6581 = vmatmul.f32.gmra.mxu0 %v6580
  %v6582 = vpop.f32.mrf.mxu0
  %v6583 = vadd.f32 %v6548, %v6582
  %6584 = vdwg.mxu0
  %6585 = vmatpush.msra.mxu0 0.0
  %6586 = vmatpush.msra.mxu0 0.0
  %6587 = vmatpush.msra.mxu0 0.0
  %6588 = vmatpush.msra.mxu0 0.0
  %6589 = vmatpush.msra.mxu0 0.0
  %6590 = vmatpush.msra.mxu0 0.0
  %6591 = vmatpush.msra.mxu0 0.0
  %6592 = vmatpush.msra.mxu0 0.0
  %6593 = vmatpush.msra.mxu0 0.0
  %6594 = vmatpush.msra.mxu0 0.0
  %6595 = vmatpush.msra.mxu0 0.0
  %6596 = vmatpush.msra.mxu0 0.0
  %6597 = vmatpush.msra.mxu0 0.0
  %6598 = vmatpush.msra.mxu0 0.0
  %v6599 = vand.u32 %v4468, 4294901760
  %v6600 = vsub.f32 %v4468, %v6599
  %v6601 = vand.u32 %v6600, 4294901760
  %v6602 = vsub.f32 %v6600, %v6601
  %v6603 = vand.u32 %v6602, 4294901760
  %6604 = vmatpush.msra.mxu0 %v6603
  %v6605 = vand.u32 %v4463, 4294901760
  %v6606 = vsub.f32 %v4463, %v6605
  %v6607 = vand.u32 %v6606, 4294901760
  %v6608 = vsub.f32 %v6606, %v6607
  %v6609 = vand.u32 %v6608, 4294901760
  %6610 = vmatpush.msra.mxu0 %v6609
  %v6611 = vand.u32 %v4487, 4294901760
  %6612 = vmatmul.f32.gmra.mxu0 %v6611
  %v6613 = vpop.f32.mrf.mxu0
  %v6614 = vadd.f32 %v6575, %v6613
  %v6615 = vand.u32 %v4490, 4294901760
  %6616 = vmatmul.f32.gmra.mxu0 %v6615
  %v6617 = vpop.f32.mrf.mxu0
  %v6618 = vadd.f32 %v6583, %v6617
  %6619 = vdwg.mxu0
  %6620 = vmatpush.msra.mxu0 0.0
  %6621 = vmatpush.msra.mxu0 0.0
  %6622 = vmatpush.msra.mxu0 0.0
  %6623 = vmatpush.msra.mxu0 0.0
  %6624 = vmatpush.msra.mxu0 0.0
  %6625 = vmatpush.msra.mxu0 0.0
  %6626 = vmatpush.msra.mxu0 0.0
  %6627 = vmatpush.msra.mxu0 0.0
  %6628 = vmatpush.msra.mxu0 0.0
  %6629 = vmatpush.msra.mxu0 0.0
  %6630 = vmatpush.msra.mxu0 0.0
  %6631 = vmatpush.msra.mxu0 0.0
  %6632 = vmatpush.msra.mxu0 0.0
  %6633 = vmatpush.msra.mxu0 0.0
  %v6634 = vand.u32 %v4468, 4294901760
  %v6635 = vsub.f32 %v4468, %v6634
  %6636 = vmatpush.msra.mxu0 %v6635
  %v6637 = vand.u32 %v4463, 4294901760
  %v6638 = vsub.f32 %v4463, %v6637
  %6639 = vmatpush.msra.mxu0 %v6638
  %v6640 = vand.u32 %v4487, 4294901760
  %v6641 = vsub.f32 %v4487, %v6640
  %6642 = vmatmul.f32.gmra.mxu0 %v6641
  %v6643 = vpop.f32.mrf.mxu0
  %v6644 = vadd.f32 %v6614, %v6643
  %v6645 = vand.u32 %v4490, 4294901760
  %v6646 = vsub.f32 %v4490, %v6645
  %6647 = vmatmul.f32.gmra.mxu0 %v6646
  %v6648 = vpop.f32.mrf.mxu0
  %v6649 = vadd.f32 %v6618, %v6648
  %6650 = vdwg.mxu0
  %6651 = vmatpush.msra.mxu0 0.0
  %6652 = vmatpush.msra.mxu0 0.0
  %6653 = vmatpush.msra.mxu0 0.0
  %6654 = vmatpush.msra.mxu0 0.0
  %6655 = vmatpush.msra.mxu0 0.0
  %6656 = vmatpush.msra.mxu0 0.0
  %6657 = vmatpush.msra.mxu0 0.0
  %6658 = vmatpush.msra.mxu0 0.0
  %6659 = vmatpush.msra.mxu0 0.0
  %6660 = vmatpush.msra.mxu0 0.0
  %6661 = vmatpush.msra.mxu0 0.0
  %6662 = vmatpush.msra.mxu0 0.0
  %6663 = vmatpush.msra.mxu0 0.0
  %6664 = vmatpush.msra.mxu0 0.0
  %v6665 = vand.u32 %v4468, 4294901760
  %6666 = vmatpush.msra.mxu0 %v6665
  %v6667 = vand.u32 %v4463, 4294901760
  %6668 = vmatpush.msra.mxu0 %v6667
  %v6669 = vand.u32 %v4487, 4294901760
  %v6670 = vsub.f32 %v4487, %v6669
  %v6671 = vand.u32 %v6670, 4294901760
  %6672 = vmatmul.f32.gmra.mxu0 %v6671
  %v6673 = vpop.f32.mrf.mxu0
  %v6674 = vadd.f32 %v6644, %v6673
  %v6675 = vand.u32 %v4490, 4294901760
  %v6676 = vsub.f32 %v4490, %v6675
  %v6677 = vand.u32 %v6676, 4294901760
  %6678 = vmatmul.f32.gmra.mxu0 %v6677
  %v6679 = vpop.f32.mrf.mxu0
  %v6680 = vadd.f32 %v6649, %v6679
  %6681 = vdwg.mxu0
  %6682 = vmatpush.msra.mxu0 0.0
  %6683 = vmatpush.msra.mxu0 0.0
  %6684 = vmatpush.msra.mxu0 0.0
  %6685 = vmatpush.msra.mxu0 0.0
  %6686 = vmatpush.msra.mxu0 0.0
  %6687 = vmatpush.msra.mxu0 0.0
  %6688 = vmatpush.msra.mxu0 0.0
  %6689 = vmatpush.msra.mxu0 0.0
  %6690 = vmatpush.msra.mxu0 0.0
  %6691 = vmatpush.msra.mxu0 0.0
  %6692 = vmatpush.msra.mxu0 0.0
  %6693 = vmatpush.msra.mxu0 0.0
  %6694 = vmatpush.msra.mxu0 0.0
  %6695 = vmatpush.msra.mxu0 0.0
  %v6696 = vand.u32 %v4468, 4294901760
  %v6697 = vsub.f32 %v4468, %v6696
  %v6698 = vand.u32 %v6697, 4294901760
  %6699 = vmatpush.msra.mxu0 %v6698
  %v6700 = vand.u32 %v4463, 4294901760
  %v6701 = vsub.f32 %v4463, %v6700
  %v6702 = vand.u32 %v6701, 4294901760
  %6703 = vmatpush.msra.mxu0 %v6702
  %v6704 = vand.u32 %v4487, 4294901760
  %6705 = vmatmul.f32.gmra.mxu0 %v6704
  %v6706 = vpop.f32.mrf.mxu0
  %v6707 = vadd.f32 %v6674, %v6706
  %v6708 = vand.u32 %v4490, 4294901760
  %6709 = vmatmul.f32.gmra.mxu0 %v6708
  %v6710 = vpop.f32.mrf.mxu0
  %v6711 = vadd.f32 %v6680, %v6710
  %6712 = vdwg.mxu0
  %6713 = vmatpush.msra.mxu0 0.0
  %6714 = vmatpush.msra.mxu0 0.0
  %6715 = vmatpush.msra.mxu0 0.0
  %6716 = vmatpush.msra.mxu0 0.0
  %6717 = vmatpush.msra.mxu0 0.0
  %6718 = vmatpush.msra.mxu0 0.0
  %6719 = vmatpush.msra.mxu0 0.0
  %6720 = vmatpush.msra.mxu0 0.0
  %6721 = vmatpush.msra.mxu0 0.0
  %6722 = vmatpush.msra.mxu0 0.0
  %6723 = vmatpush.msra.mxu0 0.0
  %6724 = vmatpush.msra.mxu0 0.0
  %6725 = vmatpush.msra.mxu0 0.0
  %6726 = vmatpush.msra.mxu0 0.0
  %v6727 = vand.u32 %v4468, 4294901760
  %6728 = vmatpush.msra.mxu0 %v6727
  %v6729 = vand.u32 %v4463, 4294901760
  %6730 = vmatpush.msra.mxu0 %v6729
  %v6731 = vand.u32 %v4487, 4294901760
  %6732 = vmatmul.f32.gmra.mxu0 %v6731
  %v6733 = vpop.f32.mrf.mxu0
  %v6734 = vadd.f32 %v6707, %v6733
  %v6735 = vand.u32 %v4490, 4294901760
  %6736 = vmatmul.f32.gmra.mxu0 %v6735
  %v6737 = vpop.f32.mrf.mxu0
  %v6738 = vadd.f32 %v6711, %v6737
  %6739 = vdwg.mxu0
  %v6740 = vand.u32 %v4423, 4294901760
  %6741 = vmatpush.msra.mxu0 %v6740
  %v6742 = vand.u32 %v4418, 4294901760
  %6743 = vmatpush.msra.mxu0 %v6742
  %v6744 = vand.u32 %v4377, 4294901760
  %6745 = vmatpush.msra.mxu0 %v6744
  %v6746 = vand.u32 %v4372, 4294901760
  %6747 = vmatpush.msra.mxu0 %v6746
  %v6748 = vand.u32 %v4331, 4294901760
  %6749 = vmatpush.msra.mxu0 %v6748
  %v6750 = vand.u32 %v4326, 4294901760
  %6751 = vmatpush.msra.mxu0 %v6750
  %v6752 = vand.u32 %v4285, 4294901760
  %6753 = vmatpush.msra.mxu0 %v6752
  %v6754 = vand.u32 %v4280, 4294901760
  %6755 = vmatpush.msra.mxu0 %v6754
  %v6756 = vand.u32 %v4239, 4294901760
  %6757 = vmatpush.msra.mxu0 %v6756
  %v6758 = vand.u32 %v4234, 4294901760
  %6759 = vmatpush.msra.mxu0 %v6758
  %v6760 = vand.u32 %v4193, 4294901760
  %6761 = vmatpush.msra.mxu0 %v6760
  %v6762 = vand.u32 %v4188, 4294901760
  %6763 = vmatpush.msra.mxu0 %v6762
  %v6764 = vand.u32 %v4147, 4294901760
  %6765 = vmatpush.msra.mxu0 %v6764
  %v6766 = vand.u32 %v4142, 4294901760
  %6767 = vmatpush.msra.mxu0 %v6766
  %v6768 = vand.u32 %v4092, 4294901760
  %6769 = vmatpush.msra.mxu0 %v6768
  %v6770 = vand.u32 %v4087, 4294901760
  %6771 = vmatpush.msra.mxu0 %v6770
  %v6772 = vand.u32 %v4482, 4294901760
  %v6773 = vsub.f32 %v4482, %v6772
  %v6774 = vand.u32 %v6773, 4294901760
  %v6775 = vsub.f32 %v6773, %v6774
  %v6776 = vand.u32 %v6775, 4294901760
  %6777 = vmatmul.f32.gmra.mxu0 %v6776
  %v6778 = vpop.f32.mrf.mxu0
  %v6779 = vadd.f32 0.0, %v6778
  %v6780 = vand.u32 %v4484, 4294901760
  %v6781 = vsub.f32 %v4484, %v6780
  %v6782 = vand.u32 %v6781, 4294901760
  %v6783 = vsub.f32 %v6781, %v6782
  %v6784 = vand.u32 %v6783, 4294901760
  %6785 = vmatmul.f32.gmra.mxu0 %v6784
  %v6786 = vpop.f32.mrf.mxu0
  %v6787 = vadd.f32 0.0, %v6786
  %6788 = vdwg.mxu0
  %v6789 = vand.u32 %v4423, 4294901760
  %v6790 = vsub.f32 %v4423, %v6789
  %v6791 = vand.u32 %v6790, 4294901760
  %v6792 = vsub.f32 %v6790, %v6791
  %v6793 = vand.u32 %v6792, 4294901760
  %6794 = vmatpush.msra.mxu0 %v6793
  %v6795 = vand.u32 %v4418, 4294901760
  %v6796 = vsub.f32 %v4418, %v6795
  %v6797 = vand.u32 %v6796, 4294901760
  %v6798 = vsub.f32 %v6796, %v6797
  %v6799 = vand.u32 %v6798, 4294901760
  %6800 = vmatpush.msra.mxu0 %v6799
  %v6801 = vand.u32 %v4377, 4294901760
  %v6802 = vsub.f32 %v4377, %v6801
  %v6803 = vand.u32 %v6802, 4294901760
  %v6804 = vsub.f32 %v6802, %v6803
  %v6805 = vand.u32 %v6804, 4294901760
  %6806 = vmatpush.msra.mxu0 %v6805
  %v6807 = vand.u32 %v4372, 4294901760
  %v6808 = vsub.f32 %v4372, %v6807
  %v6809 = vand.u32 %v6808, 4294901760
  %v6810 = vsub.f32 %v6808, %v6809
  %v6811 = vand.u32 %v6810, 4294901760
  %6812 = vmatpush.msra.mxu0 %v6811
  %v6813 = vand.u32 %v4331, 4294901760
  %v6814 = vsub.f32 %v4331, %v6813
  %v6815 = vand.u32 %v6814, 4294901760
  %v6816 = vsub.f32 %v6814, %v6815
  %v6817 = vand.u32 %v6816, 4294901760
  %6818 = vmatpush.msra.mxu0 %v6817
  %v6819 = vand.u32 %v4326, 4294901760
  %v6820 = vsub.f32 %v4326, %v6819
  %v6821 = vand.u32 %v6820, 4294901760
  %v6822 = vsub.f32 %v6820, %v6821
  %v6823 = vand.u32 %v6822, 4294901760
  %6824 = vmatpush.msra.mxu0 %v6823
  %v6825 = vand.u32 %v4285, 4294901760
  %v6826 = vsub.f32 %v4285, %v6825
  %v6827 = vand.u32 %v6826, 4294901760
  %v6828 = vsub.f32 %v6826, %v6827
  %v6829 = vand.u32 %v6828, 4294901760
  %6830 = vmatpush.msra.mxu0 %v6829
  %v6831 = vand.u32 %v4280, 4294901760
  %v6832 = vsub.f32 %v4280, %v6831
  %v6833 = vand.u32 %v6832, 4294901760
  %v6834 = vsub.f32 %v6832, %v6833
  %v6835 = vand.u32 %v6834, 4294901760
  %6836 = vmatpush.msra.mxu0 %v6835
  %v6837 = vand.u32 %v4239, 4294901760
  %v6838 = vsub.f32 %v4239, %v6837
  %v6839 = vand.u32 %v6838, 4294901760
  %v6840 = vsub.f32 %v6838, %v6839
  %v6841 = vand.u32 %v6840, 4294901760
  %6842 = vmatpush.msra.mxu0 %v6841
  %v6843 = vand.u32 %v4234, 4294901760
  %v6844 = vsub.f32 %v4234, %v6843
  %v6845 = vand.u32 %v6844, 4294901760
  %v6846 = vsub.f32 %v6844, %v6845
  %v6847 = vand.u32 %v6846, 4294901760
  %6848 = vmatpush.msra.mxu0 %v6847
  %v6849 = vand.u32 %v4193, 4294901760
  %v6850 = vsub.f32 %v4193, %v6849
  %v6851 = vand.u32 %v6850, 4294901760
  %v6852 = vsub.f32 %v6850, %v6851
  %v6853 = vand.u32 %v6852, 4294901760
  %6854 = vmatpush.msra.mxu0 %v6853
  %v6855 = vand.u32 %v4188, 4294901760
  %v6856 = vsub.f32 %v4188, %v6855
  %v6857 = vand.u32 %v6856, 4294901760
  %v6858 = vsub.f32 %v6856, %v6857
  %v6859 = vand.u32 %v6858, 4294901760
  %6860 = vmatpush.msra.mxu0 %v6859
  %v6861 = vand.u32 %v4147, 4294901760
  %v6862 = vsub.f32 %v4147, %v6861
  %v6863 = vand.u32 %v6862, 4294901760
  %v6864 = vsub.f32 %v6862, %v6863
  %v6865 = vand.u32 %v6864, 4294901760
  %6866 = vmatpush.msra.mxu0 %v6865
  %v6867 = vand.u32 %v4142, 4294901760
  %v6868 = vsub.f32 %v4142, %v6867
  %v6869 = vand.u32 %v6868, 4294901760
  %v6870 = vsub.f32 %v6868, %v6869
  %v6871 = vand.u32 %v6870, 4294901760
  %6872 = vmatpush.msra.mxu0 %v6871
  %v6873 = vand.u32 %v4092, 4294901760
  %v6874 = vsub.f32 %v4092, %v6873
  %v6875 = vand.u32 %v6874, 4294901760
  %v6876 = vsub.f32 %v6874, %v6875
  %v6877 = vand.u32 %v6876, 4294901760
  %6878 = vmatpush.msra.mxu0 %v6877
  %v6879 = vand.u32 %v4087, 4294901760
  %v6880 = vsub.f32 %v4087, %v6879
  %v6881 = vand.u32 %v6880, 4294901760
  %v6882 = vsub.f32 %v6880, %v6881
  %v6883 = vand.u32 %v6882, 4294901760
  %6884 = vmatpush.msra.mxu0 %v6883
  %v6885 = vand.u32 %v4482, 4294901760
  %6886 = vmatmul.f32.gmra.mxu0 %v6885
  %v6887 = vpop.f32.mrf.mxu0
  %v6888 = vadd.f32 %v6779, %v6887
  %v6889 = vand.u32 %v4484, 4294901760
  %6890 = vmatmul.f32.gmra.mxu0 %v6889
  %v6891 = vpop.f32.mrf.mxu0
  %v6892 = vadd.f32 %v6787, %v6891
  %6893 = vdwg.mxu0
  %v6894 = vand.u32 %v4423, 4294901760
  %v6895 = vsub.f32 %v4423, %v6894
  %6896 = vmatpush.msra.mxu0 %v6895
  %v6897 = vand.u32 %v4418, 4294901760
  %v6898 = vsub.f32 %v4418, %v6897
  %6899 = vmatpush.msra.mxu0 %v6898
  %v6900 = vand.u32 %v4377, 4294901760
  %v6901 = vsub.f32 %v4377, %v6900
  %6902 = vmatpush.msra.mxu0 %v6901
  %v6903 = vand.u32 %v4372, 4294901760
  %v6904 = vsub.f32 %v4372, %v6903
  %6905 = vmatpush.msra.mxu0 %v6904
  %v6906 = vand.u32 %v4331, 4294901760
  %v6907 = vsub.f32 %v4331, %v6906
  %6908 = vmatpush.msra.mxu0 %v6907
  %v6909 = vand.u32 %v4326, 4294901760
  %v6910 = vsub.f32 %v4326, %v6909
  %6911 = vmatpush.msra.mxu0 %v6910
  %v6912 = vand.u32 %v4285, 4294901760
  %v6913 = vsub.f32 %v4285, %v6912
  %6914 = vmatpush.msra.mxu0 %v6913
  %v6915 = vand.u32 %v4280, 4294901760
  %v6916 = vsub.f32 %v4280, %v6915
  %6917 = vmatpush.msra.mxu0 %v6916
  %v6918 = vand.u32 %v4239, 4294901760
  %v6919 = vsub.f32 %v4239, %v6918
  %6920 = vmatpush.msra.mxu0 %v6919
  %v6921 = vand.u32 %v4234, 4294901760
  %v6922 = vsub.f32 %v4234, %v6921
  %6923 = vmatpush.msra.mxu0 %v6922
  %v6924 = vand.u32 %v4193, 4294901760
  %v6925 = vsub.f32 %v4193, %v6924
  %6926 = vmatpush.msra.mxu0 %v6925
  %v6927 = vand.u32 %v4188, 4294901760
  %v6928 = vsub.f32 %v4188, %v6927
  %6929 = vmatpush.msra.mxu0 %v6928
  %v6930 = vand.u32 %v4147, 4294901760
  %v6931 = vsub.f32 %v4147, %v6930
  %6932 = vmatpush.msra.mxu0 %v6931
  %v6933 = vand.u32 %v4142, 4294901760
  %v6934 = vsub.f32 %v4142, %v6933
  %6935 = vmatpush.msra.mxu0 %v6934
  %v6936 = vand.u32 %v4092, 4294901760
  %v6937 = vsub.f32 %v4092, %v6936
  %6938 = vmatpush.msra.mxu0 %v6937
  %v6939 = vand.u32 %v4087, 4294901760
  %v6940 = vsub.f32 %v4087, %v6939
  %6941 = vmatpush.msra.mxu0 %v6940
  %v6942 = vand.u32 %v4482, 4294901760
  %v6943 = vsub.f32 %v4482, %v6942
  %6944 = vmatmul.f32.gmra.mxu0 %v6943
  %v6945 = vpop.f32.mrf.mxu0
  %v6946 = vadd.f32 %v6888, %v6945
  %v6947 = vand.u32 %v4484, 4294901760
  %v6948 = vsub.f32 %v4484, %v6947
  %6949 = vmatmul.f32.gmra.mxu0 %v6948
  %v6950 = vpop.f32.mrf.mxu0
  %v6951 = vadd.f32 %v6892, %v6950
  %6952 = vdwg.mxu0
  %v6953 = vand.u32 %v4423, 4294901760
  %6954 = vmatpush.msra.mxu0 %v6953
  %v6955 = vand.u32 %v4418, 4294901760
  %6956 = vmatpush.msra.mxu0 %v6955
  %v6957 = vand.u32 %v4377, 4294901760
  %6958 = vmatpush.msra.mxu0 %v6957
  %v6959 = vand.u32 %v4372, 4294901760
  %6960 = vmatpush.msra.mxu0 %v6959
  %v6961 = vand.u32 %v4331, 4294901760
  %6962 = vmatpush.msra.mxu0 %v6961
  %v6963 = vand.u32 %v4326, 4294901760
  %6964 = vmatpush.msra.mxu0 %v6963
  %v6965 = vand.u32 %v4285, 4294901760
  %6966 = vmatpush.msra.mxu0 %v6965
  %v6967 = vand.u32 %v4280, 4294901760
  %6968 = vmatpush.msra.mxu0 %v6967
  %v6969 = vand.u32 %v4239, 4294901760
  %6970 = vmatpush.msra.mxu0 %v6969
  %v6971 = vand.u32 %v4234, 4294901760
  %6972 = vmatpush.msra.mxu0 %v6971
  %v6973 = vand.u32 %v4193, 4294901760
  %6974 = vmatpush.msra.mxu0 %v6973
  %v6975 = vand.u32 %v4188, 4294901760
  %6976 = vmatpush.msra.mxu0 %v6975
  %v6977 = vand.u32 %v4147, 4294901760
  %6978 = vmatpush.msra.mxu0 %v6977
  %v6979 = vand.u32 %v4142, 4294901760
  %6980 = vmatpush.msra.mxu0 %v6979
  %v6981 = vand.u32 %v4092, 4294901760
  %6982 = vmatpush.msra.mxu0 %v6981
  %v6983 = vand.u32 %v4087, 4294901760
  %6984 = vmatpush.msra.mxu0 %v6983
  %v6985 = vand.u32 %v4482, 4294901760
  %v6986 = vsub.f32 %v4482, %v6985
  %v6987 = vand.u32 %v6986, 4294901760
  %6988 = vmatmul.f32.gmra.mxu0 %v6987
  %v6989 = vpop.f32.mrf.mxu0
  %v6990 = vadd.f32 %v6946, %v6989
  %v6991 = vand.u32 %v4484, 4294901760
  %v6992 = vsub.f32 %v4484, %v6991
  %v6993 = vand.u32 %v6992, 4294901760
  %6994 = vmatmul.f32.gmra.mxu0 %v6993
  %v6995 = vpop.f32.mrf.mxu0
  %v6996 = vadd.f32 %v6951, %v6995
  %6997 = vdwg.mxu0
  %v6998 = vand.u32 %v4423, 4294901760
  %v6999 = vsub.f32 %v4423, %v6998
  %v7000 = vand.u32 %v6999, 4294901760
  %7001 = vmatpush.msra.mxu0 %v7000
  %v7002 = vand.u32 %v4418, 4294901760
  %v7003 = vsub.f32 %v4418, %v7002
  %v7004 = vand.u32 %v7003, 4294901760
  %7005 = vmatpush.msra.mxu0 %v7004
  %v7006 = vand.u32 %v4377, 4294901760
  %v7007 = vsub.f32 %v4377, %v7006
  %v7008 = vand.u32 %v7007, 4294901760
  %7009 = vmatpush.msra.mxu0 %v7008
  %v7010 = vand.u32 %v4372, 4294901760
  %v7011 = vsub.f32 %v4372, %v7010
  %v7012 = vand.u32 %v7011, 4294901760
  %7013 = vmatpush.msra.mxu0 %v7012
  %v7014 = vand.u32 %v4331, 4294901760
  %v7015 = vsub.f32 %v4331, %v7014
  %v7016 = vand.u32 %v7015, 4294901760
  %7017 = vmatpush.msra.mxu0 %v7016
  %v7018 = vand.u32 %v4326, 4294901760
  %v7019 = vsub.f32 %v4326, %v7018
  %v7020 = vand.u32 %v7019, 4294901760
  %7021 = vmatpush.msra.mxu0 %v7020
  %v7022 = vand.u32 %v4285, 4294901760
  %v7023 = vsub.f32 %v4285, %v7022
  %v7024 = vand.u32 %v7023, 4294901760
  %7025 = vmatpush.msra.mxu0 %v7024
  %v7026 = vand.u32 %v4280, 4294901760
  %v7027 = vsub.f32 %v4280, %v7026
  %v7028 = vand.u32 %v7027, 4294901760
  %7029 = vmatpush.msra.mxu0 %v7028
  %v7030 = vand.u32 %v4239, 4294901760
  %v7031 = vsub.f32 %v4239, %v7030
  %v7032 = vand.u32 %v7031, 4294901760
  %7033 = vmatpush.msra.mxu0 %v7032
  %v7034 = vand.u32 %v4234, 4294901760
  %v7035 = vsub.f32 %v4234, %v7034
  %v7036 = vand.u32 %v7035, 4294901760
  %7037 = vmatpush.msra.mxu0 %v7036
  %v7038 = vand.u32 %v4193, 4294901760
  %v7039 = vsub.f32 %v4193, %v7038
  %v7040 = vand.u32 %v7039, 4294901760
  %7041 = vmatpush.msra.mxu0 %v7040
  %v7042 = vand.u32 %v4188, 4294901760
  %v7043 = vsub.f32 %v4188, %v7042
  %v7044 = vand.u32 %v7043, 4294901760
  %7045 = vmatpush.msra.mxu0 %v7044
  %v7046 = vand.u32 %v4147, 4294901760
  %v7047 = vsub.f32 %v4147, %v7046
  %v7048 = vand.u32 %v7047, 4294901760
  %7049 = vmatpush.msra.mxu0 %v7048
  %v7050 = vand.u32 %v4142, 4294901760
  %v7051 = vsub.f32 %v4142, %v7050
  %v7052 = vand.u32 %v7051, 4294901760
  %7053 = vmatpush.msra.mxu0 %v7052
  %v7054 = vand.u32 %v4092, 4294901760
  %v7055 = vsub.f32 %v4092, %v7054
  %v7056 = vand.u32 %v7055, 4294901760
  %7057 = vmatpush.msra.mxu0 %v7056
  %v7058 = vand.u32 %v4087, 4294901760
  %v7059 = vsub.f32 %v4087, %v7058
  %v7060 = vand.u32 %v7059, 4294901760
  %7061 = vmatpush.msra.mxu0 %v7060
  %v7062 = vand.u32 %v4482, 4294901760
  %7063 = vmatmul.f32.gmra.mxu0 %v7062
  %v7064 = vpop.f32.mrf.mxu0
  %v7065 = vadd.f32 %v6990, %v7064
  %v7066 = vand.u32 %v4484, 4294901760
  %7067 = vmatmul.f32.gmra.mxu0 %v7066
  %v7068 = vpop.f32.mrf.mxu0
  %v7069 = vadd.f32 %v6996, %v7068
  %7070 = vdwg.mxu0
  %v7071 = vand.u32 %v4423, 4294901760
  %7072 = vmatpush.msra.mxu0 %v7071
  %v7073 = vand.u32 %v4418, 4294901760
  %7074 = vmatpush.msra.mxu0 %v7073
  %v7075 = vand.u32 %v4377, 4294901760
  %7076 = vmatpush.msra.mxu0 %v7075
  %v7077 = vand.u32 %v4372, 4294901760
  %7078 = vmatpush.msra.mxu0 %v7077
  %v7079 = vand.u32 %v4331, 4294901760
  %7080 = vmatpush.msra.mxu0 %v7079
  %v7081 = vand.u32 %v4326, 4294901760
  %7082 = vmatpush.msra.mxu0 %v7081
  %v7083 = vand.u32 %v4285, 4294901760
  %7084 = vmatpush.msra.mxu0 %v7083
  %v7085 = vand.u32 %v4280, 4294901760
  %7086 = vmatpush.msra.mxu0 %v7085
  %v7087 = vand.u32 %v4239, 4294901760
  %7088 = vmatpush.msra.mxu0 %v7087
  %v7089 = vand.u32 %v4234, 4294901760
  %7090 = vmatpush.msra.mxu0 %v7089
  %v7091 = vand.u32 %v4193, 4294901760
  %7092 = vmatpush.msra.mxu0 %v7091
  %v7093 = vand.u32 %v4188, 4294901760
  %7094 = vmatpush.msra.mxu0 %v7093
  %v7095 = vand.u32 %v4147, 4294901760
  %7096 = vmatpush.msra.mxu0 %v7095
  %v7097 = vand.u32 %v4142, 4294901760
  %7098 = vmatpush.msra.mxu0 %v7097
  %v7099 = vand.u32 %v4092, 4294901760
  %7100 = vmatpush.msra.mxu0 %v7099
  %v7101 = vand.u32 %v4087, 4294901760
  %7102 = vmatpush.msra.mxu0 %v7101
  %v7103 = vand.u32 %v4482, 4294901760
  %7104 = vmatmul.f32.gmra.mxu0 %v7103
  %v7105 = vpop.f32.mrf.mxu0
  %v7106 = vadd.f32 %v7065, %v7105
  %v7107 = vand.u32 %v4484, 4294901760
  %7108 = vmatmul.f32.gmra.mxu0 %v7107
  %v7109 = vpop.f32.mrf.mxu0
  %v7110 = vadd.f32 %v7069, %v7109
  %7111 = vdwg.mxu0
  %7112 = vmatpush.msra.mxu0 0.0
  %7113 = vmatpush.msra.mxu0 0.0
  %7114 = vmatpush.msra.mxu0 0.0
  %7115 = vmatpush.msra.mxu0 0.0
  %7116 = vmatpush.msra.mxu0 0.0
  %7117 = vmatpush.msra.mxu0 0.0
  %7118 = vmatpush.msra.mxu0 0.0
  %7119 = vmatpush.msra.mxu0 0.0
  %7120 = vmatpush.msra.mxu0 0.0
  %7121 = vmatpush.msra.mxu0 0.0
  %7122 = vmatpush.msra.mxu0 0.0
  %7123 = vmatpush.msra.mxu0 0.0
  %7124 = vmatpush.msra.mxu0 0.0
  %7125 = vmatpush.msra.mxu0 0.0
  %v7126 = vand.u32 %v4469, 4294901760
  %7127 = vmatpush.msra.mxu0 %v7126
  %v7128 = vand.u32 %v4464, 4294901760
  %7129 = vmatpush.msra.mxu0 %v7128
  %v7130 = vand.u32 %v4487, 4294901760
  %v7131 = vsub.f32 %v4487, %v7130
  %v7132 = vand.u32 %v7131, 4294901760
  %v7133 = vsub.f32 %v7131, %v7132
  %v7134 = vand.u32 %v7133, 4294901760
  %7135 = vmatmul.f32.gmra.mxu0 %v7134
  %v7136 = vpop.f32.mrf.mxu0
  %v7137 = vadd.f32 %v7106, %v7136
  %v7138 = vand.u32 %v4490, 4294901760
  %v7139 = vsub.f32 %v4490, %v7138
  %v7140 = vand.u32 %v7139, 4294901760
  %v7141 = vsub.f32 %v7139, %v7140
  %v7142 = vand.u32 %v7141, 4294901760
  %7143 = vmatmul.f32.gmra.mxu0 %v7142
  %v7144 = vpop.f32.mrf.mxu0
  %v7145 = vadd.f32 %v7110, %v7144
  %7146 = vdwg.mxu0
  %7147 = vmatpush.msra.mxu0 0.0
  %7148 = vmatpush.msra.mxu0 0.0
  %7149 = vmatpush.msra.mxu0 0.0
  %7150 = vmatpush.msra.mxu0 0.0
  %7151 = vmatpush.msra.mxu0 0.0
  %7152 = vmatpush.msra.mxu0 0.0
  %7153 = vmatpush.msra.mxu0 0.0
  %7154 = vmatpush.msra.mxu0 0.0
  %7155 = vmatpush.msra.mxu0 0.0
  %7156 = vmatpush.msra.mxu0 0.0
  %7157 = vmatpush.msra.mxu0 0.0
  %7158 = vmatpush.msra.mxu0 0.0
  %7159 = vmatpush.msra.mxu0 0.0
  %7160 = vmatpush.msra.mxu0 0.0
  %v7161 = vand.u32 %v4469, 4294901760
  %v7162 = vsub.f32 %v4469, %v7161
  %v7163 = vand.u32 %v7162, 4294901760
  %v7164 = vsub.f32 %v7162, %v7163
  %v7165 = vand.u32 %v7164, 4294901760
  %7166 = vmatpush.msra.mxu0 %v7165
  %v7167 = vand.u32 %v4464, 4294901760
  %v7168 = vsub.f32 %v4464, %v7167
  %v7169 = vand.u32 %v7168, 4294901760
  %v7170 = vsub.f32 %v7168, %v7169
  %v7171 = vand.u32 %v7170, 4294901760
  %7172 = vmatpush.msra.mxu0 %v7171
  %v7173 = vand.u32 %v4487, 4294901760
  %7174 = vmatmul.f32.gmra.mxu0 %v7173
  %v7175 = vpop.f32.mrf.mxu0
  %v7176 = vadd.f32 %v7137, %v7175
  %v7177 = vand.u32 %v4490, 4294901760
  %7178 = vmatmul.f32.gmra.mxu0 %v7177
  %v7179 = vpop.f32.mrf.mxu0
  %v7180 = vadd.f32 %v7145, %v7179
  %7181 = vdwg.mxu0
  %7182 = vmatpush.msra.mxu0 0.0
  %7183 = vmatpush.msra.mxu0 0.0
  %7184 = vmatpush.msra.mxu0 0.0
  %7185 = vmatpush.msra.mxu0 0.0
  %7186 = vmatpush.msra.mxu0 0.0
  %7187 = vmatpush.msra.mxu0 0.0
  %7188 = vmatpush.msra.mxu0 0.0
  %7189 = vmatpush.msra.mxu0 0.0
  %7190 = vmatpush.msra.mxu0 0.0
  %7191 = vmatpush.msra.mxu0 0.0
  %7192 = vmatpush.msra.mxu0 0.0
  %7193 = vmatpush.msra.mxu0 0.0
  %7194 = vmatpush.msra.mxu0 0.0
  %7195 = vmatpush.msra.mxu0 0.0
  %v7196 = vand.u32 %v4469, 4294901760
  %v7197 = vsub.f32 %v4469, %v7196
  %7198 = vmatpush.msra.mxu0 %v7197
  %v7199 = vand.u32 %v4464, 4294901760
  %v7200 = vsub.f32 %v4464, %v7199
  %7201 = vmatpush.msra.mxu0 %v7200
  %v7202 = vand.u32 %v4487, 4294901760
  %v7203 = vsub.f32 %v4487, %v7202
  %7204 = vmatmul.f32.gmra.mxu0 %v7203
  %v7205 = vpop.f32.mrf.mxu0
  %v7206 = vadd.f32 %v7176, %v7205
  %v7207 = vand.u32 %v4490, 4294901760
  %v7208 = vsub.f32 %v4490, %v7207
  %7209 = vmatmul.f32.gmra.mxu0 %v7208
  %v7210 = vpop.f32.mrf.mxu0
  %v7211 = vadd.f32 %v7180, %v7210
  %7212 = vdwg.mxu0
  %7213 = vmatpush.msra.mxu0 0.0
  %7214 = vmatpush.msra.mxu0 0.0
  %7215 = vmatpush.msra.mxu0 0.0
  %7216 = vmatpush.msra.mxu0 0.0
  %7217 = vmatpush.msra.mxu0 0.0
  %7218 = vmatpush.msra.mxu0 0.0
  %7219 = vmatpush.msra.mxu0 0.0
  %7220 = vmatpush.msra.mxu0 0.0
  %7221 = vmatpush.msra.mxu0 0.0
  %7222 = vmatpush.msra.mxu0 0.0
  %7223 = vmatpush.msra.mxu0 0.0
  %7224 = vmatpush.msra.mxu0 0.0
  %7225 = vmatpush.msra.mxu0 0.0
  %7226 = vmatpush.msra.mxu0 0.0
  %v7227 = vand.u32 %v4469, 4294901760
  %7228 = vmatpush.msra.mxu0 %v7227
  %v7229 = vand.u32 %v4464, 4294901760
  %7230 = vmatpush.msra.mxu0 %v7229
  %v7231 = vand.u32 %v4487, 4294901760
  %v7232 = vsub.f32 %v4487, %v7231
  %v7233 = vand.u32 %v7232, 4294901760
  %7234 = vmatmul.f32.gmra.mxu0 %v7233
  %v7235 = vpop.f32.mrf.mxu0
  %v7236 = vadd.f32 %v7206, %v7235
  %v7237 = vand.u32 %v4490, 4294901760
  %v7238 = vsub.f32 %v4490, %v7237
  %v7239 = vand.u32 %v7238, 4294901760
  %7240 = vmatmul.f32.gmra.mxu0 %v7239
  %v7241 = vpop.f32.mrf.mxu0
  %v7242 = vadd.f32 %v7211, %v7241
  %7243 = vdwg.mxu0
  %7244 = vmatpush.msra.mxu0 0.0
  %7245 = vmatpush.msra.mxu0 0.0
  %7246 = vmatpush.msra.mxu0 0.0
  %7247 = vmatpush.msra.mxu0 0.0
  %7248 = vmatpush.msra.mxu0 0.0
  %7249 = vmatpush.msra.mxu0 0.0
  %7250 = vmatpush.msra.mxu0 0.0
  %7251 = vmatpush.msra.mxu0 0.0
  %7252 = vmatpush.msra.mxu0 0.0
  %7253 = vmatpush.msra.mxu0 0.0
  %7254 = vmatpush.msra.mxu0 0.0
  %7255 = vmatpush.msra.mxu0 0.0
  %7256 = vmatpush.msra.mxu0 0.0
  %7257 = vmatpush.msra.mxu0 0.0
  %v7258 = vand.u32 %v4469, 4294901760
  %v7259 = vsub.f32 %v4469, %v7258
  %v7260 = vand.u32 %v7259, 4294901760
  %7261 = vmatpush.msra.mxu0 %v7260
  %v7262 = vand.u32 %v4464, 4294901760
  %v7263 = vsub.f32 %v4464, %v7262
  %v7264 = vand.u32 %v7263, 4294901760
  %7265 = vmatpush.msra.mxu0 %v7264
  %v7266 = vand.u32 %v4487, 4294901760
  %7267 = vmatmul.f32.gmra.mxu0 %v7266
  %v7268 = vpop.f32.mrf.mxu0
  %v7269 = vadd.f32 %v7236, %v7268
  %v7270 = vand.u32 %v4490, 4294901760
  %7271 = vmatmul.f32.gmra.mxu0 %v7270
  %v7272 = vpop.f32.mrf.mxu0
  %v7273 = vadd.f32 %v7242, %v7272
  %7274 = vdwg.mxu0
  %7275 = vmatpush.msra.mxu0 0.0
  %7276 = vmatpush.msra.mxu0 0.0
  %7277 = vmatpush.msra.mxu0 0.0
  %7278 = vmatpush.msra.mxu0 0.0
  %7279 = vmatpush.msra.mxu0 0.0
  %7280 = vmatpush.msra.mxu0 0.0
  %7281 = vmatpush.msra.mxu0 0.0
  %7282 = vmatpush.msra.mxu0 0.0
  %7283 = vmatpush.msra.mxu0 0.0
  %7284 = vmatpush.msra.mxu0 0.0
  %7285 = vmatpush.msra.mxu0 0.0
  %7286 = vmatpush.msra.mxu0 0.0
  %7287 = vmatpush.msra.mxu0 0.0
  %7288 = vmatpush.msra.mxu0 0.0
  %v7289 = vand.u32 %v4469, 4294901760
  %7290 = vmatpush.msra.mxu0 %v7289
  %v7291 = vand.u32 %v4464, 4294901760
  %7292 = vmatpush.msra.mxu0 %v7291
  %v7293 = vand.u32 %v4487, 4294901760
  %7294 = vmatmul.f32.gmra.mxu0 %v7293
  %v7295 = vpop.f32.mrf.mxu0
  %v7296 = vadd.f32 %v7269, %v7295
  %v7297 = vand.u32 %v4490, 4294901760
  %7298 = vmatmul.f32.gmra.mxu0 %v7297
  %v7299 = vpop.f32.mrf.mxu0
  %v7300 = vadd.f32 %v7273, %v7299
  %7301 = vdwg.mxu0
  %v7302 = vand.u32 %v4413, 4294901760
  %7303 = vmatpush.msra.mxu0 %v7302
  %v7304 = vand.u32 %v4401, 4294901760
  %7305 = vmatpush.msra.mxu0 %v7304
  %v7306 = vand.u32 %v4367, 4294901760
  %7307 = vmatpush.msra.mxu0 %v7306
  %v7308 = vand.u32 %v4355, 4294901760
  %7309 = vmatpush.msra.mxu0 %v7308
  %v7310 = vand.u32 %v4321, 4294901760
  %7311 = vmatpush.msra.mxu0 %v7310
  %v7312 = vand.u32 %v4309, 4294901760
  %7313 = vmatpush.msra.mxu0 %v7312
  %v7314 = vand.u32 %v4275, 4294901760
  %7315 = vmatpush.msra.mxu0 %v7314
  %v7316 = vand.u32 %v4263, 4294901760
  %7317 = vmatpush.msra.mxu0 %v7316
  %v7318 = vand.u32 %v4229, 4294901760
  %7319 = vmatpush.msra.mxu0 %v7318
  %v7320 = vand.u32 %v4217, 4294901760
  %7321 = vmatpush.msra.mxu0 %v7320
  %v7322 = vand.u32 %v4183, 4294901760
  %7323 = vmatpush.msra.mxu0 %v7322
  %v7324 = vand.u32 %v4171, 4294901760
  %7325 = vmatpush.msra.mxu0 %v7324
  %v7326 = vand.u32 %v4137, 4294901760
  %7327 = vmatpush.msra.mxu0 %v7326
  %v7328 = vand.u32 %v4125, 4294901760
  %7329 = vmatpush.msra.mxu0 %v7328
  %v7330 = vand.u32 %v4109, 4294901760
  %7331 = vmatpush.msra.mxu0 %v7330
  %v7332 = vand.u32 %v4108, 4294901760
  %7333 = vmatpush.msra.mxu0 %v7332
  %v7334 = vand.u32 %v4482, 4294901760
  %v7335 = vsub.f32 %v4482, %v7334
  %v7336 = vand.u32 %v7335, 4294901760
  %v7337 = vsub.f32 %v7335, %v7336
  %v7338 = vand.u32 %v7337, 4294901760
  %7339 = vmatmul.f32.gmra.mxu0 %v7338
  %v7340 = vpop.f32.mrf.mxu0
  %v7341 = vadd.f32 0.0, %v7340
  %v7342 = vand.u32 %v4484, 4294901760
  %v7343 = vsub.f32 %v4484, %v7342
  %v7344 = vand.u32 %v7343, 4294901760
  %v7345 = vsub.f32 %v7343, %v7344
  %v7346 = vand.u32 %v7345, 4294901760
  %7347 = vmatmul.f32.gmra.mxu0 %v7346
  %v7348 = vpop.f32.mrf.mxu0
  %v7349 = vadd.f32 0.0, %v7348
  %7350 = vdwg.mxu0
  %v7351 = vand.u32 %v4413, 4294901760
  %v7352 = vsub.f32 %v4413, %v7351
  %v7353 = vand.u32 %v7352, 4294901760
  %v7354 = vsub.f32 %v7352, %v7353
  %v7355 = vand.u32 %v7354, 4294901760
  %7356 = vmatpush.msra.mxu0 %v7355
  %v7357 = vand.u32 %v4401, 4294901760
  %v7358 = vsub.f32 %v4401, %v7357
  %v7359 = vand.u32 %v7358, 4294901760
  %v7360 = vsub.f32 %v7358, %v7359
  %v7361 = vand.u32 %v7360, 4294901760
  %7362 = vmatpush.msra.mxu0 %v7361
  %v7363 = vand.u32 %v4367, 4294901760
  %v7364 = vsub.f32 %v4367, %v7363
  %v7365 = vand.u32 %v7364, 4294901760
  %v7366 = vsub.f32 %v7364, %v7365
  %v7367 = vand.u32 %v7366, 4294901760
  %7368 = vmatpush.msra.mxu0 %v7367
  %v7369 = vand.u32 %v4355, 4294901760
  %v7370 = vsub.f32 %v4355, %v7369
  %v7371 = vand.u32 %v7370, 4294901760
  %v7372 = vsub.f32 %v7370, %v7371
  %v7373 = vand.u32 %v7372, 4294901760
  %7374 = vmatpush.msra.mxu0 %v7373
  %v7375 = vand.u32 %v4321, 4294901760
  %v7376 = vsub.f32 %v4321, %v7375
  %v7377 = vand.u32 %v7376, 4294901760
  %v7378 = vsub.f32 %v7376, %v7377
  %v7379 = vand.u32 %v7378, 4294901760
  %7380 = vmatpush.msra.mxu0 %v7379
  %v7381 = vand.u32 %v4309, 4294901760
  %v7382 = vsub.f32 %v4309, %v7381
  %v7383 = vand.u32 %v7382, 4294901760
  %v7384 = vsub.f32 %v7382, %v7383
  %v7385 = vand.u32 %v7384, 4294901760
  %7386 = vmatpush.msra.mxu0 %v7385
  %v7387 = vand.u32 %v4275, 4294901760
  %v7388 = vsub.f32 %v4275, %v7387
  %v7389 = vand.u32 %v7388, 4294901760
  %v7390 = vsub.f32 %v7388, %v7389
  %v7391 = vand.u32 %v7390, 4294901760
  %7392 = vmatpush.msra.mxu0 %v7391
  %v7393 = vand.u32 %v4263, 4294901760
  %v7394 = vsub.f32 %v4263, %v7393
  %v7395 = vand.u32 %v7394, 4294901760
  %v7396 = vsub.f32 %v7394, %v7395
  %v7397 = vand.u32 %v7396, 4294901760
  %7398 = vmatpush.msra.mxu0 %v7397
  %v7399 = vand.u32 %v4229, 4294901760
  %v7400 = vsub.f32 %v4229, %v7399
  %v7401 = vand.u32 %v7400, 4294901760
  %v7402 = vsub.f32 %v7400, %v7401
  %v7403 = vand.u32 %v7402, 4294901760
  %7404 = vmatpush.msra.mxu0 %v7403
  %v7405 = vand.u32 %v4217, 4294901760
  %v7406 = vsub.f32 %v4217, %v7405
  %v7407 = vand.u32 %v7406, 4294901760
  %v7408 = vsub.f32 %v7406, %v7407
  %v7409 = vand.u32 %v7408, 4294901760
  %7410 = vmatpush.msra.mxu0 %v7409
  %v7411 = vand.u32 %v4183, 4294901760
  %v7412 = vsub.f32 %v4183, %v7411
  %v7413 = vand.u32 %v7412, 4294901760
  %v7414 = vsub.f32 %v7412, %v7413
  %v7415 = vand.u32 %v7414, 4294901760
  %7416 = vmatpush.msra.mxu0 %v7415
  %v7417 = vand.u32 %v4171, 4294901760
  %v7418 = vsub.f32 %v4171, %v7417
  %v7419 = vand.u32 %v7418, 4294901760
  %v7420 = vsub.f32 %v7418, %v7419
  %v7421 = vand.u32 %v7420, 4294901760
  %7422 = vmatpush.msra.mxu0 %v7421
  %v7423 = vand.u32 %v4137, 4294901760
  %v7424 = vsub.f32 %v4137, %v7423
  %v7425 = vand.u32 %v7424, 4294901760
  %v7426 = vsub.f32 %v7424, %v7425
  %v7427 = vand.u32 %v7426, 4294901760
  %7428 = vmatpush.msra.mxu0 %v7427
  %v7429 = vand.u32 %v4125, 4294901760
  %v7430 = vsub.f32 %v4125, %v7429
  %v7431 = vand.u32 %v7430, 4294901760
  %v7432 = vsub.f32 %v7430, %v7431
  %v7433 = vand.u32 %v7432, 4294901760
  %7434 = vmatpush.msra.mxu0 %v7433
  %v7435 = vand.u32 %v4109, 4294901760
  %v7436 = vsub.f32 %v4109, %v7435
  %v7437 = vand.u32 %v7436, 4294901760
  %v7438 = vsub.f32 %v7436, %v7437
  %v7439 = vand.u32 %v7438, 4294901760
  %7440 = vmatpush.msra.mxu0 %v7439
  %v7441 = vand.u32 %v4108, 4294901760
  %v7442 = vsub.f32 %v4108, %v7441
  %v7443 = vand.u32 %v7442, 4294901760
  %v7444 = vsub.f32 %v7442, %v7443
  %v7445 = vand.u32 %v7444, 4294901760
  %7446 = vmatpush.msra.mxu0 %v7445
  %v7447 = vand.u32 %v4482, 4294901760
  %7448 = vmatmul.f32.gmra.mxu0 %v7447
  %v7449 = vpop.f32.mrf.mxu0
  %v7450 = vadd.f32 %v7341, %v7449
  %v7451 = vand.u32 %v4484, 4294901760
  %7452 = vmatmul.f32.gmra.mxu0 %v7451
  %v7453 = vpop.f32.mrf.mxu0
  %v7454 = vadd.f32 %v7349, %v7453
  %7455 = vdwg.mxu0
  %v7456 = vand.u32 %v4413, 4294901760
  %v7457 = vsub.f32 %v4413, %v7456
  %7458 = vmatpush.msra.mxu0 %v7457
  %v7459 = vand.u32 %v4401, 4294901760
  %v7460 = vsub.f32 %v4401, %v7459
  %7461 = vmatpush.msra.mxu0 %v7460
  %v7462 = vand.u32 %v4367, 4294901760
  %v7463 = vsub.f32 %v4367, %v7462
  %7464 = vmatpush.msra.mxu0 %v7463
  %v7465 = vand.u32 %v4355, 4294901760
  %v7466 = vsub.f32 %v4355, %v7465
  %7467 = vmatpush.msra.mxu0 %v7466
  %v7468 = vand.u32 %v4321, 4294901760
  %v7469 = vsub.f32 %v4321, %v7468
  %7470 = vmatpush.msra.mxu0 %v7469
  %v7471 = vand.u32 %v4309, 4294901760
  %v7472 = vsub.f32 %v4309, %v7471
  %7473 = vmatpush.msra.mxu0 %v7472
  %v7474 = vand.u32 %v4275, 4294901760
  %v7475 = vsub.f32 %v4275, %v7474
  %7476 = vmatpush.msra.mxu0 %v7475
  %v7477 = vand.u32 %v4263, 4294901760
  %v7478 = vsub.f32 %v4263, %v7477
  %7479 = vmatpush.msra.mxu0 %v7478
  %v7480 = vand.u32 %v4229, 4294901760
  %v7481 = vsub.f32 %v4229, %v7480
  %7482 = vmatpush.msra.mxu0 %v7481
  %v7483 = vand.u32 %v4217, 4294901760
  %v7484 = vsub.f32 %v4217, %v7483
  %7485 = vmatpush.msra.mxu0 %v7484
  %v7486 = vand.u32 %v4183, 4294901760
  %v7487 = vsub.f32 %v4183, %v7486
  %7488 = vmatpush.msra.mxu0 %v7487
  %v7489 = vand.u32 %v4171, 4294901760
  %v7490 = vsub.f32 %v4171, %v7489
  %7491 = vmatpush.msra.mxu0 %v7490
  %v7492 = vand.u32 %v4137, 4294901760
  %v7493 = vsub.f32 %v4137, %v7492
  %7494 = vmatpush.msra.mxu0 %v7493
  %v7495 = vand.u32 %v4125, 4294901760
  %v7496 = vsub.f32 %v4125, %v7495
  %7497 = vmatpush.msra.mxu0 %v7496
  %v7498 = vand.u32 %v4109, 4294901760
  %v7499 = vsub.f32 %v4109, %v7498
  %7500 = vmatpush.msra.mxu0 %v7499
  %v7501 = vand.u32 %v4108, 4294901760
  %v7502 = vsub.f32 %v4108, %v7501
  %7503 = vmatpush.msra.mxu0 %v7502
  %v7504 = vand.u32 %v4482, 4294901760
  %v7505 = vsub.f32 %v4482, %v7504
  %7506 = vmatmul.f32.gmra.mxu0 %v7505
  %v7507 = vpop.f32.mrf.mxu0
  %v7508 = vadd.f32 %v7450, %v7507
  %v7509 = vand.u32 %v4484, 4294901760
  %v7510 = vsub.f32 %v4484, %v7509
  %7511 = vmatmul.f32.gmra.mxu0 %v7510
  %v7512 = vpop.f32.mrf.mxu0
  %v7513 = vadd.f32 %v7454, %v7512
  %7514 = vdwg.mxu0
  %v7515 = vand.u32 %v4413, 4294901760
  %7516 = vmatpush.msra.mxu0 %v7515
  %v7517 = vand.u32 %v4401, 4294901760
  %7518 = vmatpush.msra.mxu0 %v7517
  %v7519 = vand.u32 %v4367, 4294901760
  %7520 = vmatpush.msra.mxu0 %v7519
  %v7521 = vand.u32 %v4355, 4294901760
  %7522 = vmatpush.msra.mxu0 %v7521
  %v7523 = vand.u32 %v4321, 4294901760
  %7524 = vmatpush.msra.mxu0 %v7523
  %v7525 = vand.u32 %v4309, 4294901760
  %7526 = vmatpush.msra.mxu0 %v7525
  %v7527 = vand.u32 %v4275, 4294901760
  %7528 = vmatpush.msra.mxu0 %v7527
  %v7529 = vand.u32 %v4263, 4294901760
  %7530 = vmatpush.msra.mxu0 %v7529
  %v7531 = vand.u32 %v4229, 4294901760
  %7532 = vmatpush.msra.mxu0 %v7531
  %v7533 = vand.u32 %v4217, 4294901760
  %7534 = vmatpush.msra.mxu0 %v7533
  %v7535 = vand.u32 %v4183, 4294901760
  %7536 = vmatpush.msra.mxu0 %v7535
  %v7537 = vand.u32 %v4171, 4294901760
  %7538 = vmatpush.msra.mxu0 %v7537
  %v7539 = vand.u32 %v4137, 4294901760
  %7540 = vmatpush.msra.mxu0 %v7539
  %v7541 = vand.u32 %v4125, 4294901760
  %7542 = vmatpush.msra.mxu0 %v7541
  %v7543 = vand.u32 %v4109, 4294901760
  %7544 = vmatpush.msra.mxu0 %v7543
  %v7545 = vand.u32 %v4108, 4294901760
  %7546 = vmatpush.msra.mxu0 %v7545
  %v7547 = vand.u32 %v4482, 4294901760
  %v7548 = vsub.f32 %v4482, %v7547
  %v7549 = vand.u32 %v7548, 4294901760
  %7550 = vmatmul.f32.gmra.mxu0 %v7549
  %v7551 = vpop.f32.mrf.mxu0
  %v7552 = vadd.f32 %v7508, %v7551
  %v7553 = vand.u32 %v4484, 4294901760
  %v7554 = vsub.f32 %v4484, %v7553
  %v7555 = vand.u32 %v7554, 4294901760
  %7556 = vmatmul.f32.gmra.mxu0 %v7555
  %v7557 = vpop.f32.mrf.mxu0
  %v7558 = vadd.f32 %v7513, %v7557
  %7559 = vdwg.mxu0
  %v7560 = vand.u32 %v4413, 4294901760
  %v7561 = vsub.f32 %v4413, %v7560
  %v7562 = vand.u32 %v7561, 4294901760
  %7563 = vmatpush.msra.mxu0 %v7562
  %v7564 = vand.u32 %v4401, 4294901760
  %v7565 = vsub.f32 %v4401, %v7564
  %v7566 = vand.u32 %v7565, 4294901760
  %7567 = vmatpush.msra.mxu0 %v7566
  %v7568 = vand.u32 %v4367, 4294901760
  %v7569 = vsub.f32 %v4367, %v7568
  %v7570 = vand.u32 %v7569, 4294901760
  %7571 = vmatpush.msra.mxu0 %v7570
  %v7572 = vand.u32 %v4355, 4294901760
  %v7573 = vsub.f32 %v4355, %v7572
  %v7574 = vand.u32 %v7573, 4294901760
  %7575 = vmatpush.msra.mxu0 %v7574
  %v7576 = vand.u32 %v4321, 4294901760
  %v7577 = vsub.f32 %v4321, %v7576
  %v7578 = vand.u32 %v7577, 4294901760
  %7579 = vmatpush.msra.mxu0 %v7578
  %v7580 = vand.u32 %v4309, 4294901760
  %v7581 = vsub.f32 %v4309, %v7580
  %v7582 = vand.u32 %v7581, 4294901760
  %7583 = vmatpush.msra.mxu0 %v7582
  %v7584 = vand.u32 %v4275, 4294901760
  %v7585 = vsub.f32 %v4275, %v7584
  %v7586 = vand.u32 %v7585, 4294901760
  %7587 = vmatpush.msra.mxu0 %v7586
  %v7588 = vand.u32 %v4263, 4294901760
  %v7589 = vsub.f32 %v4263, %v7588
  %v7590 = vand.u32 %v7589, 4294901760
  %7591 = vmatpush.msra.mxu0 %v7590
  %v7592 = vand.u32 %v4229, 4294901760
  %v7593 = vsub.f32 %v4229, %v7592
  %v7594 = vand.u32 %v7593, 4294901760
  %7595 = vmatpush.msra.mxu0 %v7594
  %v7596 = vand.u32 %v4217, 4294901760
  %v7597 = vsub.f32 %v4217, %v7596
  %v7598 = vand.u32 %v7597, 4294901760
  %7599 = vmatpush.msra.mxu0 %v7598
  %v7600 = vand.u32 %v4183, 4294901760
  %v7601 = vsub.f32 %v4183, %v7600
  %v7602 = vand.u32 %v7601, 4294901760
  %7603 = vmatpush.msra.mxu0 %v7602
  %v7604 = vand.u32 %v4171, 4294901760
  %v7605 = vsub.f32 %v4171, %v7604
  %v7606 = vand.u32 %v7605, 4294901760
  %7607 = vmatpush.msra.mxu0 %v7606
  %v7608 = vand.u32 %v4137, 4294901760
  %v7609 = vsub.f32 %v4137, %v7608
  %v7610 = vand.u32 %v7609, 4294901760
  %7611 = vmatpush.msra.mxu0 %v7610
  %v7612 = vand.u32 %v4125, 4294901760
  %v7613 = vsub.f32 %v4125, %v7612
  %v7614 = vand.u32 %v7613, 4294901760
  %7615 = vmatpush.msra.mxu0 %v7614
  %v7616 = vand.u32 %v4109, 4294901760
  %v7617 = vsub.f32 %v4109, %v7616
  %v7618 = vand.u32 %v7617, 4294901760
  %7619 = vmatpush.msra.mxu0 %v7618
  %v7620 = vand.u32 %v4108, 4294901760
  %v7621 = vsub.f32 %v4108, %v7620
  %v7622 = vand.u32 %v7621, 4294901760
  %7623 = vmatpush.msra.mxu0 %v7622
  %v7624 = vand.u32 %v4482, 4294901760
  %7625 = vmatmul.f32.gmra.mxu0 %v7624
  %v7626 = vpop.f32.mrf.mxu0
  %v7627 = vadd.f32 %v7552, %v7626
  %v7628 = vand.u32 %v4484, 4294901760
  %7629 = vmatmul.f32.gmra.mxu0 %v7628
  %v7630 = vpop.f32.mrf.mxu0
  %v7631 = vadd.f32 %v7558, %v7630
  %7632 = vdwg.mxu0
  %v7633 = vand.u32 %v4413, 4294901760
  %7634 = vmatpush.msra.mxu0 %v7633
  %v7635 = vand.u32 %v4401, 4294901760
  %7636 = vmatpush.msra.mxu0 %v7635
  %v7637 = vand.u32 %v4367, 4294901760
  %7638 = vmatpush.msra.mxu0 %v7637
  %v7639 = vand.u32 %v4355, 4294901760
  %7640 = vmatpush.msra.mxu0 %v7639
  %v7641 = vand.u32 %v4321, 4294901760
  %7642 = vmatpush.msra.mxu0 %v7641
  %v7643 = vand.u32 %v4309, 4294901760
  %7644 = vmatpush.msra.mxu0 %v7643
  %v7645 = vand.u32 %v4275, 4294901760
  %7646 = vmatpush.msra.mxu0 %v7645
  %v7647 = vand.u32 %v4263, 4294901760
  %7648 = vmatpush.msra.mxu0 %v7647
  %v7649 = vand.u32 %v4229, 4294901760
  %7650 = vmatpush.msra.mxu0 %v7649
  %v7651 = vand.u32 %v4217, 4294901760
  %7652 = vmatpush.msra.mxu0 %v7651
  %v7653 = vand.u32 %v4183, 4294901760
  %7654 = vmatpush.msra.mxu0 %v7653
  %v7655 = vand.u32 %v4171, 4294901760
  %7656 = vmatpush.msra.mxu0 %v7655
  %v7657 = vand.u32 %v4137, 4294901760
  %7658 = vmatpush.msra.mxu0 %v7657
  %v7659 = vand.u32 %v4125, 4294901760
  %7660 = vmatpush.msra.mxu0 %v7659
  %v7661 = vand.u32 %v4109, 4294901760
  %7662 = vmatpush.msra.mxu0 %v7661
  %v7663 = vand.u32 %v4108, 4294901760
  %7664 = vmatpush.msra.mxu0 %v7663
  %v7665 = vand.u32 %v4482, 4294901760
  %7666 = vmatmul.f32.gmra.mxu0 %v7665
  %v7667 = vpop.f32.mrf.mxu0
  %v7668 = vadd.f32 %v7627, %v7667
  %v7669 = vand.u32 %v4484, 4294901760
  %7670 = vmatmul.f32.gmra.mxu0 %v7669
  %v7671 = vpop.f32.mrf.mxu0
  %v7672 = vadd.f32 %v7631, %v7671
  %7673 = vdwg.mxu0
  %7674 = vmatpush.msra.mxu0 0.0
  %7675 = vmatpush.msra.mxu0 0.0
  %7676 = vmatpush.msra.mxu0 0.0
  %7677 = vmatpush.msra.mxu0 0.0
  %7678 = vmatpush.msra.mxu0 0.0
  %7679 = vmatpush.msra.mxu0 0.0
  %7680 = vmatpush.msra.mxu0 0.0
  %7681 = vmatpush.msra.mxu0 0.0
  %7682 = vmatpush.msra.mxu0 0.0
  %7683 = vmatpush.msra.mxu0 0.0
  %7684 = vmatpush.msra.mxu0 0.0
  %7685 = vmatpush.msra.mxu0 0.0
  %7686 = vmatpush.msra.mxu0 0.0
  %7687 = vmatpush.msra.mxu0 0.0
  %v7688 = vand.u32 %v4459, 4294901760
  %7689 = vmatpush.msra.mxu0 %v7688
  %v7690 = vand.u32 %v4447, 4294901760
  %7691 = vmatpush.msra.mxu0 %v7690
  %v7692 = vand.u32 %v4487, 4294901760
  %v7693 = vsub.f32 %v4487, %v7692
  %v7694 = vand.u32 %v7693, 4294901760
  %v7695 = vsub.f32 %v7693, %v7694
  %v7696 = vand.u32 %v7695, 4294901760
  %7697 = vmatmul.f32.gmra.mxu0 %v7696
  %v7698 = vpop.f32.mrf.mxu0
  %v7699 = vadd.f32 %v7668, %v7698
  %v7700 = vand.u32 %v4490, 4294901760
  %v7701 = vsub.f32 %v4490, %v7700
  %v7702 = vand.u32 %v7701, 4294901760
  %v7703 = vsub.f32 %v7701, %v7702
  %v7704 = vand.u32 %v7703, 4294901760
  %7705 = vmatmul.f32.gmra.mxu0 %v7704
  %v7706 = vpop.f32.mrf.mxu0
  %v7707 = vadd.f32 %v7672, %v7706
  %7708 = vdwg.mxu0
  %7709 = vmatpush.msra.mxu0 0.0
  %7710 = vmatpush.msra.mxu0 0.0
  %7711 = vmatpush.msra.mxu0 0.0
  %7712 = vmatpush.msra.mxu0 0.0
  %7713 = vmatpush.msra.mxu0 0.0
  %7714 = vmatpush.msra.mxu0 0.0
  %7715 = vmatpush.msra.mxu0 0.0
  %7716 = vmatpush.msra.mxu0 0.0
  %7717 = vmatpush.msra.mxu0 0.0
  %7718 = vmatpush.msra.mxu0 0.0
  %7719 = vmatpush.msra.mxu0 0.0
  %7720 = vmatpush.msra.mxu0 0.0
  %7721 = vmatpush.msra.mxu0 0.0
  %7722 = vmatpush.msra.mxu0 0.0
  %v7723 = vand.u32 %v4459, 4294901760
  %v7724 = vsub.f32 %v4459, %v7723
  %v7725 = vand.u32 %v7724, 4294901760
  %v7726 = vsub.f32 %v7724, %v7725
  %v7727 = vand.u32 %v7726, 4294901760
  %7728 = vmatpush.msra.mxu0 %v7727
  %v7729 = vand.u32 %v4447, 4294901760
  %v7730 = vsub.f32 %v4447, %v7729
  %v7731 = vand.u32 %v7730, 4294901760
  %v7732 = vsub.f32 %v7730, %v7731
  %v7733 = vand.u32 %v7732, 4294901760
  %7734 = vmatpush.msra.mxu0 %v7733
  %v7735 = vand.u32 %v4487, 4294901760
  %7736 = vmatmul.f32.gmra.mxu0 %v7735
  %v7737 = vpop.f32.mrf.mxu0
  %v7738 = vadd.f32 %v7699, %v7737
  %v7739 = vand.u32 %v4490, 4294901760
  %7740 = vmatmul.f32.gmra.mxu0 %v7739
  %v7741 = vpop.f32.mrf.mxu0
  %v7742 = vadd.f32 %v7707, %v7741
  %7743 = vdwg.mxu0
  %7744 = vmatpush.msra.mxu0 0.0
  %7745 = vmatpush.msra.mxu0 0.0
  %7746 = vmatpush.msra.mxu0 0.0
  %7747 = vmatpush.msra.mxu0 0.0
  %7748 = vmatpush.msra.mxu0 0.0
  %7749 = vmatpush.msra.mxu0 0.0
  %7750 = vmatpush.msra.mxu0 0.0
  %7751 = vmatpush.msra.mxu0 0.0
  %7752 = vmatpush.msra.mxu0 0.0
  %7753 = vmatpush.msra.mxu0 0.0
  %7754 = vmatpush.msra.mxu0 0.0
  %7755 = vmatpush.msra.mxu0 0.0
  %7756 = vmatpush.msra.mxu0 0.0
  %7757 = vmatpush.msra.mxu0 0.0
  %v7758 = vand.u32 %v4459, 4294901760
  %v7759 = vsub.f32 %v4459, %v7758
  %7760 = vmatpush.msra.mxu0 %v7759
  %v7761 = vand.u32 %v4447, 4294901760
  %v7762 = vsub.f32 %v4447, %v7761
  %7763 = vmatpush.msra.mxu0 %v7762
  %v7764 = vand.u32 %v4487, 4294901760
  %v7765 = vsub.f32 %v4487, %v7764
  %7766 = vmatmul.f32.gmra.mxu0 %v7765
  %v7767 = vpop.f32.mrf.mxu0
  %v7768 = vadd.f32 %v7738, %v7767
  %v7769 = vand.u32 %v4490, 4294901760
  %v7770 = vsub.f32 %v4490, %v7769
  %7771 = vmatmul.f32.gmra.mxu0 %v7770
  %v7772 = vpop.f32.mrf.mxu0
  %v7773 = vadd.f32 %v7742, %v7772
  %7774 = vdwg.mxu0
  %7775 = vmatpush.msra.mxu0 0.0
  %7776 = vmatpush.msra.mxu0 0.0
  %7777 = vmatpush.msra.mxu0 0.0
  %7778 = vmatpush.msra.mxu0 0.0
  %7779 = vmatpush.msra.mxu0 0.0
  %7780 = vmatpush.msra.mxu0 0.0
  %7781 = vmatpush.msra.mxu0 0.0
  %7782 = vmatpush.msra.mxu0 0.0
  %7783 = vmatpush.msra.mxu0 0.0
  %7784 = vmatpush.msra.mxu0 0.0
  %7785 = vmatpush.msra.mxu0 0.0
  %7786 = vmatpush.msra.mxu0 0.0
  %7787 = vmatpush.msra.mxu0 0.0
  %7788 = vmatpush.msra.mxu0 0.0
  %v7789 = vand.u32 %v4459, 4294901760
  %7790 = vmatpush.msra.mxu0 %v7789
  %v7791 = vand.u32 %v4447, 4294901760
  %7792 = vmatpush.msra.mxu0 %v7791
  %v7793 = vand.u32 %v4487, 4294901760
  %v7794 = vsub.f32 %v4487, %v7793
  %v7795 = vand.u32 %v7794, 4294901760
  %7796 = vmatmul.f32.gmra.mxu0 %v7795
  %v7797 = vpop.f32.mrf.mxu0
  %v7798 = vadd.f32 %v7768, %v7797
  %v7799 = vand.u32 %v4490, 4294901760
  %v7800 = vsub.f32 %v4490, %v7799
  %v7801 = vand.u32 %v7800, 4294901760
  %7802 = vmatmul.f32.gmra.mxu0 %v7801
  %v7803 = vpop.f32.mrf.mxu0
  %v7804 = vadd.f32 %v7773, %v7803
  %7805 = vdwg.mxu0
  %7806 = vmatpush.msra.mxu0 0.0
  %7807 = vmatpush.msra.mxu0 0.0
  %7808 = vmatpush.msra.mxu0 0.0
  %7809 = vmatpush.msra.mxu0 0.0
  %7810 = vmatpush.msra.mxu0 0.0
  %7811 = vmatpush.msra.mxu0 0.0
  %7812 = vmatpush.msra.mxu0 0.0
  %7813 = vmatpush.msra.mxu0 0.0
  %7814 = vmatpush.msra.mxu0 0.0
  %7815 = vmatpush.msra.mxu0 0.0
  %7816 = vmatpush.msra.mxu0 0.0
  %7817 = vmatpush.msra.mxu0 0.0
  %7818 = vmatpush.msra.mxu0 0.0
  %7819 = vmatpush.msra.mxu0 0.0
  %v7820 = vand.u32 %v4459, 4294901760
  %v7821 = vsub.f32 %v4459, %v7820
  %v7822 = vand.u32 %v7821, 4294901760
  %7823 = vmatpush.msra.mxu0 %v7822
  %v7824 = vand.u32 %v4447, 4294901760
  %v7825 = vsub.f32 %v4447, %v7824
  %v7826 = vand.u32 %v7825, 4294901760
  %7827 = vmatpush.msra.mxu0 %v7826
  %v7828 = vand.u32 %v4487, 4294901760
  %7829 = vmatmul.f32.gmra.mxu0 %v7828
  %v7830 = vpop.f32.mrf.mxu0
  %v7831 = vadd.f32 %v7798, %v7830
  %v7832 = vand.u32 %v4490, 4294901760
  %7833 = vmatmul.f32.gmra.mxu0 %v7832
  %v7834 = vpop.f32.mrf.mxu0
  %v7835 = vadd.f32 %v7804, %v7834
  %7836 = vdwg.mxu0
  %7837 = vmatpush.msra.mxu0 0.0
  %7838 = vmatpush.msra.mxu0 0.0
  %7839 = vmatpush.msra.mxu0 0.0
  %7840 = vmatpush.msra.mxu0 0.0
  %7841 = vmatpush.msra.mxu0 0.0
  %7842 = vmatpush.msra.mxu0 0.0
  %7843 = vmatpush.msra.mxu0 0.0
  %7844 = vmatpush.msra.mxu0 0.0
  %7845 = vmatpush.msra.mxu0 0.0
  %7846 = vmatpush.msra.mxu0 0.0
  %7847 = vmatpush.msra.mxu0 0.0
  %7848 = vmatpush.msra.mxu0 0.0
  %7849 = vmatpush.msra.mxu0 0.0
  %7850 = vmatpush.msra.mxu0 0.0
  %v7851 = vand.u32 %v4459, 4294901760
  %7852 = vmatpush.msra.mxu0 %v7851
  %v7853 = vand.u32 %v4447, 4294901760
  %7854 = vmatpush.msra.mxu0 %v7853
  %v7855 = vand.u32 %v4487, 4294901760
  %7856 = vmatmul.f32.gmra.mxu0 %v7855
  %v7857 = vpop.f32.mrf.mxu0
  %v7858 = vadd.f32 %v7831, %v7857
  %v7859 = vand.u32 %v4490, 4294901760
  %7860 = vmatmul.f32.gmra.mxu0 %v7859
  %v7861 = vpop.f32.mrf.mxu0
  %v7862 = vadd.f32 %v7835, %v7861
  %7863 = vdwg.mxu0
  %v7864 = vmul.f32 %v5048, %v34
  %v7865 = vmul.f32 %v5610, %v35
  %v7866 = vmul.f32 %v6172, %v36
  %v7867 = vmul.f32 %v6734, %v37
  %v7868 = vmul.f32 %v7296, %v38
  %v7869 = vmul.f32 %v7858, %v39
  %v7870 = vmul.f32 %v5052, %v34
  %v7871 = vmul.f32 %v5614, %v35
  %v7872 = vmul.f32 %v6176, %v36
  %v7873 = vmul.f32 %v6738, %v37
  %v7874 = vmul.f32 %v7300, %v38
  %v7875 = vmul.f32 %v7862, %v39
  %v7876 = vmul.f32 %v7864, %v7864
  %v7877 = vmul.f32 %v7865, %v7865
  %v7878 = vmul.f32 %v7866, %v7866
  %v7879 = vmul.f32 %v7867, %v7867
  %v7880 = vmul.f32 %v7868, %v7868
  %v7881 = vmul.f32 %v7869, %v7869
  %v7882 = vmul.f32 %v7870, %v7870
  %v7883 = vmul.f32 %v7871, %v7871
  %v7884 = vmul.f32 %v7872, %v7872
  %v7885 = vmul.f32 %v7873, %v7873
  %v7886 = vmul.f32 %v7874, %v7874
  %v7887 = vmul.f32 %v7875, %v7875
  %v7888 = vadd.f32 %v7864, %v7865
  %v7889 = vadd.f32 %v7888, %v7866
  %v7890 = vadd.f32 %v7889, %v7867
  %v7891 = vadd.f32 %v7890, %v7868
  %v7892 = vsel %vm3913, %v7869, 0.0
  %v7893 = vadd.f32 %v7891, %v7892
  %7894 = vadd.xlane.f32.xlu0 %v7893
  %v7895 = vpop.xlane.xlu0 %7894
  %v7896 = vadd.f32 %v7870, %v7871
  %v7897 = vadd.f32 %v7896, %v7872
  %v7898 = vadd.f32 %v7897, %v7873
  %v7899 = vadd.f32 %v7898, %v7874
  %v7900 = vsel %vm3913, %v7875, 0.0
  %v7901 = vadd.f32 %v7899, %v7900
  %7902 = vadd.xlane.f32.xlu0 %v7901
  %v7903 = vpop.xlane.xlu0 %7902
  %v7904 = vadd.f32 %v7876, %v7877
  %v7905 = vadd.f32 %v7904, %v7878
  %v7906 = vadd.f32 %v7905, %v7879
  %v7907 = vadd.f32 %v7906, %v7880
  %v7908 = vsel %vm3913, %v7881, 0.0
  %v7909 = vadd.f32 %v7907, %v7908
  %7910 = vadd.xlane.f32.xlu0 %v7909
  %v7911 = vpop.xlane.xlu0 %7910
  %v7912 = vadd.f32 %v7882, %v7883
  %v7913 = vadd.f32 %v7912, %v7884
  %v7914 = vadd.f32 %v7913, %v7885
  %v7915 = vadd.f32 %v7914, %v7886
  %v7916 = vsel %vm3913, %v7887, 0.0
  %v7917 = vadd.f32 %v7915, %v7916
  %7918 = vadd.xlane.f32.xlu0 %v7917
  %v7919 = vpop.xlane.xlu0 %7918
  %v7920 = vmul.f32 %v7895, 0.001953125
  %v7921 = vmul.f32 %v7903, 0.001953125
  %v7922 = vmul.f32 %v7911, 0.001953125
  %v7923 = vmul.f32 %v7919, 0.001953125
  %v7924 = vmul.f32 %v7920, %v7920
  %v7925 = vmul.f32 %v7921, %v7921
  %v7926 = vsub.f32 %v7922, %v7924
  %v7927 = vsub.f32 %v7923, %v7925
  %v7928 = vmax.f32 %v7926, 0.0
  %v7929 = vmax.f32 %v7927, 0.0
  %v7930 = vadd.f32 %v7928, 1e-05
  %v7931 = vadd.f32 %v7929, 1e-05
  %v7932 = vrsqrt.pop %v7930
  %v7933 = vmul.f32 %v7932, %v7930
  %v7934 = vmul.f32 %v7933, %v7932
  %v7935 = vmul.f32 0.5, %v7934
  %v7936 = vsub.f32 1.5, %v7935
  %v7937 = vmul.f32 %v7932, %v7936
  %vm7938 = vweird.f32 %v7930
  %vm7939 = vweird.f32 %v7932
  %vm7940 = vmor %vm7938, %vm7939
  %v7941 = vsel %vm7940, %v7932, %v7937
  %v7942 = vrsqrt.pop %v7931
  %v7943 = vmul.f32 %v7942, %v7931
  %v7944 = vmul.f32 %v7943, %v7942
  %v7945 = vmul.f32 0.5, %v7944
  %v7946 = vsub.f32 1.5, %v7945
  %v7947 = vmul.f32 %v7942, %v7946
  %vm7948 = vweird.f32 %v7931
  %vm7949 = vweird.f32 %v7942
  %vm7950 = vmor %vm7948, %vm7949
  %v7951 = vsel %vm7950, %v7942, %v7947
  %v7952 = vmul.f32 %v50, %v7941
  %v7953 = vmul.f32 %v51, %v7951
  %v7954 = vmul.f32 %v7920, %v7952
  %v7955 = vmul.f32 %v7921, %v7953
  %v7956 = vsub.f32 %v52, %v7954
  %v7957 = vsub.f32 %v53, %v7955
  %7959 = vset.pattern.permute.xlu0 0
  %7960 = vperm.xlu0 %7959, %v7952
  %v7961 = vpop.permute.xlu0 %7960
  %7964 = vset.pattern.permute.xlu0 0
  %7965 = vperm.xlu0 %7964, %v7953
  %v7966 = vpop.permute.xlu0 %7965
  %v7968 = vmul.f32 %v7864, %v7961
  %v7969 = vmul.f32 %v7865, %v7961
  %v7970 = vmul.f32 %v7866, %v7961
  %v7971 = vmul.f32 %v7867, %v7961
  %v7972 = vmul.f32 %v7868, %v7961
  %v7973 = vmul.f32 %v7869, %v7961
  %v7974 = vmul.f32 %v7870, %v7966
  %v7975 = vmul.f32 %v7871, %v7966
  %v7976 = vmul.f32 %v7872, %v7966
  %v7977 = vmul.f32 %v7873, %v7966
  %v7978 = vmul.f32 %v7874, %v7966
  %v7979 = vmul.f32 %v7875, %v7966
  %7981 = vset.pattern.permute.xlu0 0
  %7982 = vperm.xlu0 %7981, %v7956
  %v7983 = vpop.permute.xlu0 %7982
  %7986 = vset.pattern.permute.xlu0 0
  %7987 = vperm.xlu0 %7986, %v7957
  %v7988 = vpop.permute.xlu0 %7987
  %v7990 = vadd.f32 %v7968, %v7983
  %v7991 = vadd.f32 %v7969, %v7983
  %v7992 = vadd.f32 %v7970, %v7983
  %v7993 = vadd.f32 %v7971, %v7983
  %v7994 = vadd.f32 %v7972, %v7983
  %v7995 = vadd.f32 %v7973, %v7983
  %v7996 = vadd.f32 %v7974, %v7988
  %v7997 = vadd.f32 %v7975, %v7988
  %v7998 = vadd.f32 %v7976, %v7988
  %v7999 = vadd.f32 %v7977, %v7988
  %v8000 = vadd.f32 %v7978, %v7988
  %v8001 = vadd.f32 %v7979, %v7988
  %v8002 = vmax.f32 %v7990, 0.0
  %v8003 = vmax.f32 %v7991, 0.0
  %v8004 = vmax.f32 %v7992, 0.0
  %v8005 = vmax.f32 %v7993, 0.0
  %v8006 = vmax.f32 %v7994, 0.0
  %v8007 = vmax.f32 %v7995, 0.0
  %v8008 = vmax.f32 %v7996, 0.0
  %v8009 = vmax.f32 %v7997, 0.0
  %v8010 = vmax.f32 %v7998, 0.0
  %v8011 = vmax.f32 %v7999, 0.0
  %v8012 = vmax.f32 %v8000, 0.0
  %v8013 = vmax.f32 %v8001, 0.0
  %v8014 = vmul.f32 %v8002, %v34
  %v8015 = vmul.f32 %v8003, %v35
  %v8016 = vmul.f32 %v8004, %v36
  %v8017 = vmul.f32 %v8005, %v37
  %v8018 = vmul.f32 %v8006, %v38
  %v8019 = vmul.f32 %v8007, %v39
  %v8020 = vmul.f32 %v8008, %v34
  %v8021 = vmul.f32 %v8009, %v35
  %v8022 = vmul.f32 %v8010, %v36
  %v8023 = vmul.f32 %v8011, %v37
  %v8024 = vmul.f32 %v8012, %v38
  %v8025 = vmul.f32 %v8013, %v39
  %8038 = vrot.lane.b32.xlu0 %v8014, 19
  %v8039 = vpop.permute.xlu0 %8038
  %8040 = vrot.lane.b32.xlu0 %v8015, 19
  %v8041 = vpop.permute.xlu0 %8040
  %8042 = vrot.lane.b32.xlu0 %v8016, 19
  %v8043 = vpop.permute.xlu0 %8042
  %8044 = vrot.lane.b32.xlu0 %v8017, 19
  %v8045 = vpop.permute.xlu0 %8044
  %8046 = vrot.lane.b32.xlu0 %v8018, 19
  %v8047 = vpop.permute.xlu0 %8046
  %8048 = vrot.lane.b32.xlu0 %v8019, 19
  %v8049 = vpop.permute.xlu0 %8048
  %8050 = vrot.lane.b32.xlu0 %v8020, 19
  %v8051 = vpop.permute.xlu0 %8050
  %8052 = vrot.lane.b32.xlu0 %v8021, 19
  %v8053 = vpop.permute.xlu0 %8052
  %8054 = vrot.lane.b32.xlu0 %v8022, 19
  %v8055 = vpop.permute.xlu0 %8054
  %8056 = vrot.lane.b32.xlu0 %v8023, 19
  %v8057 = vpop.permute.xlu0 %8056
  %8058 = vrot.lane.b32.xlu0 %v8024, 19
  %v8059 = vpop.permute.xlu0 %8058
  %8060 = vrot.lane.b32.xlu0 %v8025, 19
  %v8061 = vpop.permute.xlu0 %8060
  %v8062 = vsel %vm94, %v8039, %v8041
  %v8063 = vsel %vm94, %v8041, %v8043
  %v8064 = vsel %vm94, %v8043, %v8045
  %v8065 = vsel %vm94, %v8045, %v8047
  %v8066 = vsel %vm94, %v8047, %v8049
  %v8067 = vsel %vm94, %v8051, %v8053
  %v8068 = vsel %vm94, %v8053, %v8055
  %v8069 = vsel %vm94, %v8055, %v8057
  %v8070 = vsel %vm94, %v8057, %v8059
  %v8071 = vsel %vm94, %v8059, %v8061
  %v8084 = vsel %vm94, 0.0, %v8039
  %v8085 = vsel %vm94, 0.0, %v8051
  %v8086 = vsel %vm119, %v8066, 0.0
  %v8087 = vsel %vm119, %v8071, 0.0
  %8092 = vrot.lane.b32.xlu0 %v8084, 127
  %v8093 = vpop.permute.xlu0 %8092
  %8094 = vrot.lane.b32.xlu0 %v8062, 127
  %v8095 = vpop.permute.xlu0 %8094
  %8096 = vrot.lane.b32.xlu0 %v8063, 127
  %v8097 = vpop.permute.xlu0 %8096
  %8098 = vrot.lane.b32.xlu0 %v8064, 127
  %v8099 = vpop.permute.xlu0 %8098
  %8100 = vrot.lane.b32.xlu0 %v8065, 127
  %v8101 = vpop.permute.xlu0 %8100
  %8102 = vrot.lane.b32.xlu0 %v8086, 127
  %v8103 = vpop.permute.xlu0 %8102
  %8104 = vrot.lane.b32.xlu0 %v8085, 127
  %v8105 = vpop.permute.xlu0 %8104
  %8106 = vrot.lane.b32.xlu0 %v8067, 127
  %v8107 = vpop.permute.xlu0 %8106
  %8108 = vrot.lane.b32.xlu0 %v8068, 127
  %v8109 = vpop.permute.xlu0 %8108
  %8110 = vrot.lane.b32.xlu0 %v8069, 127
  %v8111 = vpop.permute.xlu0 %8110
  %8112 = vrot.lane.b32.xlu0 %v8070, 127
  %v8113 = vpop.permute.xlu0 %8112
  %8114 = vrot.lane.b32.xlu0 %v8087, 127
  %v8115 = vpop.permute.xlu0 %8114
  %v8116 = vsel %vm150, %v8093, %v8095
  %v8117 = vsel %vm150, %v8095, %v8097
  %v8118 = vsel %vm150, %v8097, %v8099
  %v8119 = vsel %vm150, %v8099, %v8101
  %v8120 = vsel %vm150, %v8101, %v8103
  %v8121 = vsel %vm150, %v8105, %v8107
  %v8122 = vsel %vm150, %v8107, %v8109
  %v8123 = vsel %vm150, %v8109, %v8111
  %v8124 = vsel %vm150, %v8111, %v8113
  %v8125 = vsel %vm150, %v8113, %v8115
  %8138 = vrot.lane.b32.xlu0 %v8084, 126
  %v8139 = vpop.permute.xlu0 %8138
  %8140 = vrot.lane.b32.xlu0 %v8062, 126
  %v8141 = vpop.permute.xlu0 %8140
  %8142 = vrot.lane.b32.xlu0 %v8063, 126
  %v8143 = vpop.permute.xlu0 %8142
  %8144 = vrot.lane.b32.xlu0 %v8064, 126
  %v8145 = vpop.permute.xlu0 %8144
  %8146 = vrot.lane.b32.xlu0 %v8065, 126
  %v8147 = vpop.permute.xlu0 %8146
  %8148 = vrot.lane.b32.xlu0 %v8086, 126
  %v8149 = vpop.permute.xlu0 %8148
  %8150 = vrot.lane.b32.xlu0 %v8085, 126
  %v8151 = vpop.permute.xlu0 %8150
  %8152 = vrot.lane.b32.xlu0 %v8067, 126
  %v8153 = vpop.permute.xlu0 %8152
  %8154 = vrot.lane.b32.xlu0 %v8068, 126
  %v8155 = vpop.permute.xlu0 %8154
  %8156 = vrot.lane.b32.xlu0 %v8069, 126
  %v8157 = vpop.permute.xlu0 %8156
  %8158 = vrot.lane.b32.xlu0 %v8070, 126
  %v8159 = vpop.permute.xlu0 %8158
  %8160 = vrot.lane.b32.xlu0 %v8087, 126
  %v8161 = vpop.permute.xlu0 %8160
  %v8162 = vsel %vm197, %v8139, %v8141
  %v8163 = vsel %vm197, %v8141, %v8143
  %v8164 = vsel %vm197, %v8143, %v8145
  %v8165 = vsel %vm197, %v8145, %v8147
  %v8166 = vsel %vm197, %v8147, %v8149
  %v8167 = vsel %vm197, %v8151, %v8153
  %v8168 = vsel %vm197, %v8153, %v8155
  %v8169 = vsel %vm197, %v8155, %v8157
  %v8170 = vsel %vm197, %v8157, %v8159
  %v8171 = vsel %vm197, %v8159, %v8161
  %8184 = vrot.lane.b32.xlu0 %v8084, 110
  %v8185 = vpop.permute.xlu0 %8184
  %8186 = vrot.lane.b32.xlu0 %v8062, 110
  %v8187 = vpop.permute.xlu0 %8186
  %8188 = vrot.lane.b32.xlu0 %v8063, 110
  %v8189 = vpop.permute.xlu0 %8188
  %8190 = vrot.lane.b32.xlu0 %v8064, 110
  %v8191 = vpop.permute.xlu0 %8190
  %8192 = vrot.lane.b32.xlu0 %v8065, 110
  %v8193 = vpop.permute.xlu0 %8192
  %8194 = vrot.lane.b32.xlu0 %v8086, 110
  %v8195 = vpop.permute.xlu0 %8194
  %8196 = vrot.lane.b32.xlu0 %v8085, 110
  %v8197 = vpop.permute.xlu0 %8196
  %8198 = vrot.lane.b32.xlu0 %v8067, 110
  %v8199 = vpop.permute.xlu0 %8198
  %8200 = vrot.lane.b32.xlu0 %v8068, 110
  %v8201 = vpop.permute.xlu0 %8200
  %8202 = vrot.lane.b32.xlu0 %v8069, 110
  %v8203 = vpop.permute.xlu0 %8202
  %8204 = vrot.lane.b32.xlu0 %v8070, 110
  %v8205 = vpop.permute.xlu0 %8204
  %8206 = vrot.lane.b32.xlu0 %v8087, 110
  %v8207 = vpop.permute.xlu0 %8206
  %v8208 = vsel %vm244, %v8185, %v8187
  %v8209 = vsel %vm244, %v8187, %v8189
  %v8210 = vsel %vm244, %v8189, %v8191
  %v8211 = vsel %vm244, %v8191, %v8193
  %v8212 = vsel %vm244, %v8193, %v8195
  %v8213 = vsel %vm244, %v8197, %v8199
  %v8214 = vsel %vm244, %v8199, %v8201
  %v8215 = vsel %vm244, %v8201, %v8203
  %v8216 = vsel %vm244, %v8203, %v8205
  %v8217 = vsel %vm244, %v8205, %v8207
  %8230 = vrot.lane.b32.xlu0 %v8084, 109
  %v8231 = vpop.permute.xlu0 %8230
  %8232 = vrot.lane.b32.xlu0 %v8062, 109
  %v8233 = vpop.permute.xlu0 %8232
  %8234 = vrot.lane.b32.xlu0 %v8063, 109
  %v8235 = vpop.permute.xlu0 %8234
  %8236 = vrot.lane.b32.xlu0 %v8064, 109
  %v8237 = vpop.permute.xlu0 %8236
  %8238 = vrot.lane.b32.xlu0 %v8065, 109
  %v8239 = vpop.permute.xlu0 %8238
  %8240 = vrot.lane.b32.xlu0 %v8086, 109
  %v8241 = vpop.permute.xlu0 %8240
  %8242 = vrot.lane.b32.xlu0 %v8085, 109
  %v8243 = vpop.permute.xlu0 %8242
  %8244 = vrot.lane.b32.xlu0 %v8067, 109
  %v8245 = vpop.permute.xlu0 %8244
  %8246 = vrot.lane.b32.xlu0 %v8068, 109
  %v8247 = vpop.permute.xlu0 %8246
  %8248 = vrot.lane.b32.xlu0 %v8069, 109
  %v8249 = vpop.permute.xlu0 %8248
  %8250 = vrot.lane.b32.xlu0 %v8070, 109
  %v8251 = vpop.permute.xlu0 %8250
  %8252 = vrot.lane.b32.xlu0 %v8087, 109
  %v8253 = vpop.permute.xlu0 %8252
  %v8254 = vsel %vm291, %v8231, %v8233
  %v8255 = vsel %vm291, %v8233, %v8235
  %v8256 = vsel %vm291, %v8235, %v8237
  %v8257 = vsel %vm291, %v8237, %v8239
  %v8258 = vsel %vm291, %v8239, %v8241
  %v8259 = vsel %vm291, %v8243, %v8245
  %v8260 = vsel %vm291, %v8245, %v8247
  %v8261 = vsel %vm291, %v8247, %v8249
  %v8262 = vsel %vm291, %v8249, %v8251
  %v8263 = vsel %vm291, %v8251, %v8253
  %8276 = vrot.lane.b32.xlu0 %v8084, 108
  %v8277 = vpop.permute.xlu0 %8276
  %8278 = vrot.lane.b32.xlu0 %v8062, 108
  %v8279 = vpop.permute.xlu0 %8278
  %8280 = vrot.lane.b32.xlu0 %v8063, 108
  %v8281 = vpop.permute.xlu0 %8280
  %8282 = vrot.lane.b32.xlu0 %v8064, 108
  %v8283 = vpop.permute.xlu0 %8282
  %8284 = vrot.lane.b32.xlu0 %v8065, 108
  %v8285 = vpop.permute.xlu0 %8284
  %8286 = vrot.lane.b32.xlu0 %v8086, 108
  %v8287 = vpop.permute.xlu0 %8286
  %8288 = vrot.lane.b32.xlu0 %v8085, 108
  %v8289 = vpop.permute.xlu0 %8288
  %8290 = vrot.lane.b32.xlu0 %v8067, 108
  %v8291 = vpop.permute.xlu0 %8290
  %8292 = vrot.lane.b32.xlu0 %v8068, 108
  %v8293 = vpop.permute.xlu0 %8292
  %8294 = vrot.lane.b32.xlu0 %v8069, 108
  %v8295 = vpop.permute.xlu0 %8294
  %8296 = vrot.lane.b32.xlu0 %v8070, 108
  %v8297 = vpop.permute.xlu0 %8296
  %8298 = vrot.lane.b32.xlu0 %v8087, 108
  %v8299 = vpop.permute.xlu0 %8298
  %v8300 = vsel %vm338, %v8277, %v8279
  %v8301 = vsel %vm338, %v8279, %v8281
  %v8302 = vsel %vm338, %v8281, %v8283
  %v8303 = vsel %vm338, %v8283, %v8285
  %v8304 = vsel %vm338, %v8285, %v8287
  %v8305 = vsel %vm338, %v8289, %v8291
  %v8306 = vsel %vm338, %v8291, %v8293
  %v8307 = vsel %vm338, %v8293, %v8295
  %v8308 = vsel %vm338, %v8295, %v8297
  %v8309 = vsel %vm338, %v8297, %v8299
  %8322 = vrot.lane.b32.xlu0 %v8084, 92
  %v8323 = vpop.permute.xlu0 %8322
  %8324 = vrot.lane.b32.xlu0 %v8062, 92
  %v8325 = vpop.permute.xlu0 %8324
  %8326 = vrot.lane.b32.xlu0 %v8063, 92
  %v8327 = vpop.permute.xlu0 %8326
  %8328 = vrot.lane.b32.xlu0 %v8064, 92
  %v8329 = vpop.permute.xlu0 %8328
  %8330 = vrot.lane.b32.xlu0 %v8065, 92
  %v8331 = vpop.permute.xlu0 %8330
  %8332 = vrot.lane.b32.xlu0 %v8086, 92
  %v8333 = vpop.permute.xlu0 %8332
  %8334 = vrot.lane.b32.xlu0 %v8085, 92
  %v8335 = vpop.permute.xlu0 %8334
  %8336 = vrot.lane.b32.xlu0 %v8067, 92
  %v8337 = vpop.permute.xlu0 %8336
  %8338 = vrot.lane.b32.xlu0 %v8068, 92
  %v8339 = vpop.permute.xlu0 %8338
  %8340 = vrot.lane.b32.xlu0 %v8069, 92
  %v8341 = vpop.permute.xlu0 %8340
  %8342 = vrot.lane.b32.xlu0 %v8070, 92
  %v8343 = vpop.permute.xlu0 %8342
  %8344 = vrot.lane.b32.xlu0 %v8087, 92
  %v8345 = vpop.permute.xlu0 %8344
  %v8346 = vsel %vm385, %v8323, %v8325
  %v8347 = vsel %vm385, %v8325, %v8327
  %v8348 = vsel %vm385, %v8327, %v8329
  %v8349 = vsel %vm385, %v8329, %v8331
  %v8350 = vsel %vm385, %v8331, %v8333
  %v8351 = vsel %vm385, %v8335, %v8337
  %v8352 = vsel %vm385, %v8337, %v8339
  %v8353 = vsel %vm385, %v8339, %v8341
  %v8354 = vsel %vm385, %v8341, %v8343
  %v8355 = vsel %vm385, %v8343, %v8345
  %8368 = vrot.lane.b32.xlu0 %v8084, 91
  %v8369 = vpop.permute.xlu0 %8368
  %8370 = vrot.lane.b32.xlu0 %v8062, 91
  %v8371 = vpop.permute.xlu0 %8370
  %8372 = vrot.lane.b32.xlu0 %v8063, 91
  %v8373 = vpop.permute.xlu0 %8372
  %8374 = vrot.lane.b32.xlu0 %v8064, 91
  %v8375 = vpop.permute.xlu0 %8374
  %8376 = vrot.lane.b32.xlu0 %v8065, 91
  %v8377 = vpop.permute.xlu0 %8376
  %8378 = vrot.lane.b32.xlu0 %v8086, 91
  %v8379 = vpop.permute.xlu0 %8378
  %8380 = vrot.lane.b32.xlu0 %v8085, 91
  %v8381 = vpop.permute.xlu0 %8380
  %8382 = vrot.lane.b32.xlu0 %v8067, 91
  %v8383 = vpop.permute.xlu0 %8382
  %8384 = vrot.lane.b32.xlu0 %v8068, 91
  %v8385 = vpop.permute.xlu0 %8384
  %8386 = vrot.lane.b32.xlu0 %v8069, 91
  %v8387 = vpop.permute.xlu0 %8386
  %8388 = vrot.lane.b32.xlu0 %v8070, 91
  %v8389 = vpop.permute.xlu0 %8388
  %8390 = vrot.lane.b32.xlu0 %v8087, 91
  %v8391 = vpop.permute.xlu0 %8390
  %v8392 = vsel %vm432, %v8369, %v8371
  %v8393 = vsel %vm432, %v8371, %v8373
  %v8394 = vsel %vm432, %v8373, %v8375
  %v8395 = vsel %vm432, %v8375, %v8377
  %v8396 = vsel %vm432, %v8377, %v8379
  %v8397 = vsel %vm432, %v8381, %v8383
  %v8398 = vsel %vm432, %v8383, %v8385
  %v8399 = vsel %vm432, %v8385, %v8387
  %v8400 = vsel %vm432, %v8387, %v8389
  %v8401 = vsel %vm432, %v8389, %v8391
  %8414 = vrot.lane.b32.xlu0 %v8084, 90
  %v8415 = vpop.permute.xlu0 %8414
  %8416 = vrot.lane.b32.xlu0 %v8062, 90
  %v8417 = vpop.permute.xlu0 %8416
  %8418 = vrot.lane.b32.xlu0 %v8063, 90
  %v8419 = vpop.permute.xlu0 %8418
  %8420 = vrot.lane.b32.xlu0 %v8064, 90
  %v8421 = vpop.permute.xlu0 %8420
  %8422 = vrot.lane.b32.xlu0 %v8065, 90
  %v8423 = vpop.permute.xlu0 %8422
  %8424 = vrot.lane.b32.xlu0 %v8086, 90
  %v8425 = vpop.permute.xlu0 %8424
  %8426 = vrot.lane.b32.xlu0 %v8085, 90
  %v8427 = vpop.permute.xlu0 %8426
  %8428 = vrot.lane.b32.xlu0 %v8067, 90
  %v8429 = vpop.permute.xlu0 %8428
  %8430 = vrot.lane.b32.xlu0 %v8068, 90
  %v8431 = vpop.permute.xlu0 %8430
  %8432 = vrot.lane.b32.xlu0 %v8069, 90
  %v8433 = vpop.permute.xlu0 %8432
  %8434 = vrot.lane.b32.xlu0 %v8070, 90
  %v8435 = vpop.permute.xlu0 %8434
  %8436 = vrot.lane.b32.xlu0 %v8087, 90
  %v8437 = vpop.permute.xlu0 %8436
  %v8438 = vsel %vm479, %v8415, %v8417
  %v8439 = vsel %vm479, %v8417, %v8419
  %v8440 = vsel %vm479, %v8419, %v8421
  %v8441 = vsel %vm479, %v8421, %v8423
  %v8442 = vsel %vm479, %v8423, %v8425
  %v8443 = vsel %vm479, %v8427, %v8429
  %v8444 = vsel %vm479, %v8429, %v8431
  %v8445 = vsel %vm479, %v8431, %v8433
  %v8446 = vsel %vm479, %v8433, %v8435
  %v8447 = vsel %vm479, %v8435, %v8437
  %v8460 = vld [vmem:[%s1 + $0x40] sm:$0xff]
  %v8461 = vld [vmem:[%s1 + $0x48] sm:$0xff]
  %v8462 = vld [vmem:[%s1 + $0x50] sm:$0xff]
  %v8463 = vld [vmem:[%s1 + $0x58] sm:$0xff]
  %v8465 = vsel %vm506, %v8461, 0
  %v8468 = vsel %vm506, %v8463, 0
  %v8470 = vand.u32 %v8397, 4294901760
  %8471 = vmatpush.msra.mxu0 %v8470
  %v8472 = vand.u32 %v8392, 4294901760
  %8473 = vmatpush.msra.mxu0 %v8472
  %v8474 = vand.u32 %v8351, 4294901760
  %8475 = vmatpush.msra.mxu0 %v8474
  %v8476 = vand.u32 %v8346, 4294901760
  %8477 = vmatpush.msra.mxu0 %v8476
  %v8478 = vand.u32 %v8305, 4294901760
  %8479 = vmatpush.msra.mxu0 %v8478
  %v8480 = vand.u32 %v8300, 4294901760
  %8481 = vmatpush.msra.mxu0 %v8480
  %v8482 = vand.u32 %v8259, 4294901760
  %8483 = vmatpush.msra.mxu0 %v8482
  %v8484 = vand.u32 %v8254, 4294901760
  %8485 = vmatpush.msra.mxu0 %v8484
  %v8486 = vand.u32 %v8213, 4294901760
  %8487 = vmatpush.msra.mxu0 %v8486
  %v8488 = vand.u32 %v8208, 4294901760
  %8489 = vmatpush.msra.mxu0 %v8488
  %v8490 = vand.u32 %v8167, 4294901760
  %8491 = vmatpush.msra.mxu0 %v8490
  %v8492 = vand.u32 %v8162, 4294901760
  %8493 = vmatpush.msra.mxu0 %v8492
  %v8494 = vand.u32 %v8121, 4294901760
  %8495 = vmatpush.msra.mxu0 %v8494
  %v8496 = vand.u32 %v8116, 4294901760
  %8497 = vmatpush.msra.mxu0 %v8496
  %v8498 = vand.u32 %v8085, 4294901760
  %8499 = vmatpush.msra.mxu0 %v8498
  %v8500 = vand.u32 %v8084, 4294901760
  %8501 = vmatpush.msra.mxu0 %v8500
  %v8502 = vand.u32 %v8460, 4294901760
  %v8503 = vsub.f32 %v8460, %v8502
  %v8504 = vand.u32 %v8503, 4294901760
  %v8505 = vsub.f32 %v8503, %v8504
  %v8506 = vand.u32 %v8505, 4294901760
  %8507 = vmatmul.f32.gmra.mxu0 %v8506
  %v8508 = vpop.f32.mrf.mxu0
  %v8509 = vadd.f32 0.0, %v8508
  %v8510 = vand.u32 %v8462, 4294901760
  %v8511 = vsub.f32 %v8462, %v8510
  %v8512 = vand.u32 %v8511, 4294901760
  %v8513 = vsub.f32 %v8511, %v8512
  %v8514 = vand.u32 %v8513, 4294901760
  %8515 = vmatmul.f32.gmra.mxu0 %v8514
  %v8516 = vpop.f32.mrf.mxu0
  %v8517 = vadd.f32 0.0, %v8516
  %8518 = vdwg.mxu0
  %v8519 = vand.u32 %v8397, 4294901760
  %v8520 = vsub.f32 %v8397, %v8519
  %v8521 = vand.u32 %v8520, 4294901760
  %v8522 = vsub.f32 %v8520, %v8521
  %v8523 = vand.u32 %v8522, 4294901760
  %8524 = vmatpush.msra.mxu0 %v8523
  %v8525 = vand.u32 %v8392, 4294901760
  %v8526 = vsub.f32 %v8392, %v8525
  %v8527 = vand.u32 %v8526, 4294901760
  %v8528 = vsub.f32 %v8526, %v8527
  %v8529 = vand.u32 %v8528, 4294901760
  %8530 = vmatpush.msra.mxu0 %v8529
  %v8531 = vand.u32 %v8351, 4294901760
  %v8532 = vsub.f32 %v8351, %v8531
  %v8533 = vand.u32 %v8532, 4294901760
  %v8534 = vsub.f32 %v8532, %v8533
  %v8535 = vand.u32 %v8534, 4294901760
  %8536 = vmatpush.msra.mxu0 %v8535
  %v8537 = vand.u32 %v8346, 4294901760
  %v8538 = vsub.f32 %v8346, %v8537
  %v8539 = vand.u32 %v8538, 4294901760
  %v8540 = vsub.f32 %v8538, %v8539
  %v8541 = vand.u32 %v8540, 4294901760
  %8542 = vmatpush.msra.mxu0 %v8541
  %v8543 = vand.u32 %v8305, 4294901760
  %v8544 = vsub.f32 %v8305, %v8543
  %v8545 = vand.u32 %v8544, 4294901760
  %v8546 = vsub.f32 %v8544, %v8545
  %v8547 = vand.u32 %v8546, 4294901760
  %8548 = vmatpush.msra.mxu0 %v8547
  %v8549 = vand.u32 %v8300, 4294901760
  %v8550 = vsub.f32 %v8300, %v8549
  %v8551 = vand.u32 %v8550, 4294901760
  %v8552 = vsub.f32 %v8550, %v8551
  %v8553 = vand.u32 %v8552, 4294901760
  %8554 = vmatpush.msra.mxu0 %v8553
  %v8555 = vand.u32 %v8259, 4294901760
  %v8556 = vsub.f32 %v8259, %v8555
  %v8557 = vand.u32 %v8556, 4294901760
  %v8558 = vsub.f32 %v8556, %v8557
  %v8559 = vand.u32 %v8558, 4294901760
  %8560 = vmatpush.msra.mxu0 %v8559
  %v8561 = vand.u32 %v8254, 4294901760
  %v8562 = vsub.f32 %v8254, %v8561
  %v8563 = vand.u32 %v8562, 4294901760
  %v8564 = vsub.f32 %v8562, %v8563
  %v8565 = vand.u32 %v8564, 4294901760
  %8566 = vmatpush.msra.mxu0 %v8565
  %v8567 = vand.u32 %v8213, 4294901760
  %v8568 = vsub.f32 %v8213, %v8567
  %v8569 = vand.u32 %v8568, 4294901760
  %v8570 = vsub.f32 %v8568, %v8569
  %v8571 = vand.u32 %v8570, 4294901760
  %8572 = vmatpush.msra.mxu0 %v8571
  %v8573 = vand.u32 %v8208, 4294901760
  %v8574 = vsub.f32 %v8208, %v8573
  %v8575 = vand.u32 %v8574, 4294901760
  %v8576 = vsub.f32 %v8574, %v8575
  %v8577 = vand.u32 %v8576, 4294901760
  %8578 = vmatpush.msra.mxu0 %v8577
  %v8579 = vand.u32 %v8167, 4294901760
  %v8580 = vsub.f32 %v8167, %v8579
  %v8581 = vand.u32 %v8580, 4294901760
  %v8582 = vsub.f32 %v8580, %v8581
  %v8583 = vand.u32 %v8582, 4294901760
  %8584 = vmatpush.msra.mxu0 %v8583
  %v8585 = vand.u32 %v8162, 4294901760
  %v8586 = vsub.f32 %v8162, %v8585
  %v8587 = vand.u32 %v8586, 4294901760
  %v8588 = vsub.f32 %v8586, %v8587
  %v8589 = vand.u32 %v8588, 4294901760
  %8590 = vmatpush.msra.mxu0 %v8589
  %v8591 = vand.u32 %v8121, 4294901760
  %v8592 = vsub.f32 %v8121, %v8591
  %v8593 = vand.u32 %v8592, 4294901760
  %v8594 = vsub.f32 %v8592, %v8593
  %v8595 = vand.u32 %v8594, 4294901760
  %8596 = vmatpush.msra.mxu0 %v8595
  %v8597 = vand.u32 %v8116, 4294901760
  %v8598 = vsub.f32 %v8116, %v8597
  %v8599 = vand.u32 %v8598, 4294901760
  %v8600 = vsub.f32 %v8598, %v8599
  %v8601 = vand.u32 %v8600, 4294901760
  %8602 = vmatpush.msra.mxu0 %v8601
  %v8603 = vand.u32 %v8085, 4294901760
  %v8604 = vsub.f32 %v8085, %v8603
  %v8605 = vand.u32 %v8604, 4294901760
  %v8606 = vsub.f32 %v8604, %v8605
  %v8607 = vand.u32 %v8606, 4294901760
  %8608 = vmatpush.msra.mxu0 %v8607
  %v8609 = vand.u32 %v8084, 4294901760
  %v8610 = vsub.f32 %v8084, %v8609
  %v8611 = vand.u32 %v8610, 4294901760
  %v8612 = vsub.f32 %v8610, %v8611
  %v8613 = vand.u32 %v8612, 4294901760
  %8614 = vmatpush.msra.mxu0 %v8613
  %v8615 = vand.u32 %v8460, 4294901760
  %8616 = vmatmul.f32.gmra.mxu0 %v8615
  %v8617 = vpop.f32.mrf.mxu0
  %v8618 = vadd.f32 %v8509, %v8617
  %v8619 = vand.u32 %v8462, 4294901760
  %8620 = vmatmul.f32.gmra.mxu0 %v8619
  %v8621 = vpop.f32.mrf.mxu0
  %v8622 = vadd.f32 %v8517, %v8621
  %8623 = vdwg.mxu0
  %v8624 = vand.u32 %v8397, 4294901760
  %v8625 = vsub.f32 %v8397, %v8624
  %8626 = vmatpush.msra.mxu0 %v8625
  %v8627 = vand.u32 %v8392, 4294901760
  %v8628 = vsub.f32 %v8392, %v8627
  %8629 = vmatpush.msra.mxu0 %v8628
  %v8630 = vand.u32 %v8351, 4294901760
  %v8631 = vsub.f32 %v8351, %v8630
  %8632 = vmatpush.msra.mxu0 %v8631
  %v8633 = vand.u32 %v8346, 4294901760
  %v8634 = vsub.f32 %v8346, %v8633
  %8635 = vmatpush.msra.mxu0 %v8634
  %v8636 = vand.u32 %v8305, 4294901760
  %v8637 = vsub.f32 %v8305, %v8636
  %8638 = vmatpush.msra.mxu0 %v8637
  %v8639 = vand.u32 %v8300, 4294901760
  %v8640 = vsub.f32 %v8300, %v8639
  %8641 = vmatpush.msra.mxu0 %v8640
  %v8642 = vand.u32 %v8259, 4294901760
  %v8643 = vsub.f32 %v8259, %v8642
  %8644 = vmatpush.msra.mxu0 %v8643
  %v8645 = vand.u32 %v8254, 4294901760
  %v8646 = vsub.f32 %v8254, %v8645
  %8647 = vmatpush.msra.mxu0 %v8646
  %v8648 = vand.u32 %v8213, 4294901760
  %v8649 = vsub.f32 %v8213, %v8648
  %8650 = vmatpush.msra.mxu0 %v8649
  %v8651 = vand.u32 %v8208, 4294901760
  %v8652 = vsub.f32 %v8208, %v8651
  %8653 = vmatpush.msra.mxu0 %v8652
  %v8654 = vand.u32 %v8167, 4294901760
  %v8655 = vsub.f32 %v8167, %v8654
  %8656 = vmatpush.msra.mxu0 %v8655
  %v8657 = vand.u32 %v8162, 4294901760
  %v8658 = vsub.f32 %v8162, %v8657
  %8659 = vmatpush.msra.mxu0 %v8658
  %v8660 = vand.u32 %v8121, 4294901760
  %v8661 = vsub.f32 %v8121, %v8660
  %8662 = vmatpush.msra.mxu0 %v8661
  %v8663 = vand.u32 %v8116, 4294901760
  %v8664 = vsub.f32 %v8116, %v8663
  %8665 = vmatpush.msra.mxu0 %v8664
  %v8666 = vand.u32 %v8085, 4294901760
  %v8667 = vsub.f32 %v8085, %v8666
  %8668 = vmatpush.msra.mxu0 %v8667
  %v8669 = vand.u32 %v8084, 4294901760
  %v8670 = vsub.f32 %v8084, %v8669
  %8671 = vmatpush.msra.mxu0 %v8670
  %v8672 = vand.u32 %v8460, 4294901760
  %v8673 = vsub.f32 %v8460, %v8672
  %8674 = vmatmul.f32.gmra.mxu0 %v8673
  %v8675 = vpop.f32.mrf.mxu0
  %v8676 = vadd.f32 %v8618, %v8675
  %v8677 = vand.u32 %v8462, 4294901760
  %v8678 = vsub.f32 %v8462, %v8677
  %8679 = vmatmul.f32.gmra.mxu0 %v8678
  %v8680 = vpop.f32.mrf.mxu0
  %v8681 = vadd.f32 %v8622, %v8680
  %8682 = vdwg.mxu0
  %v8683 = vand.u32 %v8397, 4294901760
  %8684 = vmatpush.msra.mxu0 %v8683
  %v8685 = vand.u32 %v8392, 4294901760
  %8686 = vmatpush.msra.mxu0 %v8685
  %v8687 = vand.u32 %v8351, 4294901760
  %8688 = vmatpush.msra.mxu0 %v8687
  %v8689 = vand.u32 %v8346, 4294901760
  %8690 = vmatpush.msra.mxu0 %v8689
  %v8691 = vand.u32 %v8305, 4294901760
  %8692 = vmatpush.msra.mxu0 %v8691
  %v8693 = vand.u32 %v8300, 4294901760
  %8694 = vmatpush.msra.mxu0 %v8693
  %v8695 = vand.u32 %v8259, 4294901760
  %8696 = vmatpush.msra.mxu0 %v8695
  %v8697 = vand.u32 %v8254, 4294901760
  %8698 = vmatpush.msra.mxu0 %v8697
  %v8699 = vand.u32 %v8213, 4294901760
  %8700 = vmatpush.msra.mxu0 %v8699
  %v8701 = vand.u32 %v8208, 4294901760
  %8702 = vmatpush.msra.mxu0 %v8701
  %v8703 = vand.u32 %v8167, 4294901760
  %8704 = vmatpush.msra.mxu0 %v8703
  %v8705 = vand.u32 %v8162, 4294901760
  %8706 = vmatpush.msra.mxu0 %v8705
  %v8707 = vand.u32 %v8121, 4294901760
  %8708 = vmatpush.msra.mxu0 %v8707
  %v8709 = vand.u32 %v8116, 4294901760
  %8710 = vmatpush.msra.mxu0 %v8709
  %v8711 = vand.u32 %v8085, 4294901760
  %8712 = vmatpush.msra.mxu0 %v8711
  %v8713 = vand.u32 %v8084, 4294901760
  %8714 = vmatpush.msra.mxu0 %v8713
  %v8715 = vand.u32 %v8460, 4294901760
  %v8716 = vsub.f32 %v8460, %v8715
  %v8717 = vand.u32 %v8716, 4294901760
  %8718 = vmatmul.f32.gmra.mxu0 %v8717
  %v8719 = vpop.f32.mrf.mxu0
  %v8720 = vadd.f32 %v8676, %v8719
  %v8721 = vand.u32 %v8462, 4294901760
  %v8722 = vsub.f32 %v8462, %v8721
  %v8723 = vand.u32 %v8722, 4294901760
  %8724 = vmatmul.f32.gmra.mxu0 %v8723
  %v8725 = vpop.f32.mrf.mxu0
  %v8726 = vadd.f32 %v8681, %v8725
  %8727 = vdwg.mxu0
  %v8728 = vand.u32 %v8397, 4294901760
  %v8729 = vsub.f32 %v8397, %v8728
  %v8730 = vand.u32 %v8729, 4294901760
  %8731 = vmatpush.msra.mxu0 %v8730
  %v8732 = vand.u32 %v8392, 4294901760
  %v8733 = vsub.f32 %v8392, %v8732
  %v8734 = vand.u32 %v8733, 4294901760
  %8735 = vmatpush.msra.mxu0 %v8734
  %v8736 = vand.u32 %v8351, 4294901760
  %v8737 = vsub.f32 %v8351, %v8736
  %v8738 = vand.u32 %v8737, 4294901760
  %8739 = vmatpush.msra.mxu0 %v8738
  %v8740 = vand.u32 %v8346, 4294901760
  %v8741 = vsub.f32 %v8346, %v8740
  %v8742 = vand.u32 %v8741, 4294901760
  %8743 = vmatpush.msra.mxu0 %v8742
  %v8744 = vand.u32 %v8305, 4294901760
  %v8745 = vsub.f32 %v8305, %v8744
  %v8746 = vand.u32 %v8745, 4294901760
  %8747 = vmatpush.msra.mxu0 %v8746
  %v8748 = vand.u32 %v8300, 4294901760
  %v8749 = vsub.f32 %v8300, %v8748
  %v8750 = vand.u32 %v8749, 4294901760
  %8751 = vmatpush.msra.mxu0 %v8750
  %v8752 = vand.u32 %v8259, 4294901760
  %v8753 = vsub.f32 %v8259, %v8752
  %v8754 = vand.u32 %v8753, 4294901760
  %8755 = vmatpush.msra.mxu0 %v8754
  %v8756 = vand.u32 %v8254, 4294901760
  %v8757 = vsub.f32 %v8254, %v8756
  %v8758 = vand.u32 %v8757, 4294901760
  %8759 = vmatpush.msra.mxu0 %v8758
  %v8760 = vand.u32 %v8213, 4294901760
  %v8761 = vsub.f32 %v8213, %v8760
  %v8762 = vand.u32 %v8761, 4294901760
  %8763 = vmatpush.msra.mxu0 %v8762
  %v8764 = vand.u32 %v8208, 4294901760
  %v8765 = vsub.f32 %v8208, %v8764
  %v8766 = vand.u32 %v8765, 4294901760
  %8767 = vmatpush.msra.mxu0 %v8766
  %v8768 = vand.u32 %v8167, 4294901760
  %v8769 = vsub.f32 %v8167, %v8768
  %v8770 = vand.u32 %v8769, 4294901760
  %8771 = vmatpush.msra.mxu0 %v8770
  %v8772 = vand.u32 %v8162, 4294901760
  %v8773 = vsub.f32 %v8162, %v8772
  %v8774 = vand.u32 %v8773, 4294901760
  %8775 = vmatpush.msra.mxu0 %v8774
  %v8776 = vand.u32 %v8121, 4294901760
  %v8777 = vsub.f32 %v8121, %v8776
  %v8778 = vand.u32 %v8777, 4294901760
  %8779 = vmatpush.msra.mxu0 %v8778
  %v8780 = vand.u32 %v8116, 4294901760
  %v8781 = vsub.f32 %v8116, %v8780
  %v8782 = vand.u32 %v8781, 4294901760
  %8783 = vmatpush.msra.mxu0 %v8782
  %v8784 = vand.u32 %v8085, 4294901760
  %v8785 = vsub.f32 %v8085, %v8784
  %v8786 = vand.u32 %v8785, 4294901760
  %8787 = vmatpush.msra.mxu0 %v8786
  %v8788 = vand.u32 %v8084, 4294901760
  %v8789 = vsub.f32 %v8084, %v8788
  %v8790 = vand.u32 %v8789, 4294901760
  %8791 = vmatpush.msra.mxu0 %v8790
  %v8792 = vand.u32 %v8460, 4294901760
  %8793 = vmatmul.f32.gmra.mxu0 %v8792
  %v8794 = vpop.f32.mrf.mxu0
  %v8795 = vadd.f32 %v8720, %v8794
  %v8796 = vand.u32 %v8462, 4294901760
  %8797 = vmatmul.f32.gmra.mxu0 %v8796
  %v8798 = vpop.f32.mrf.mxu0
  %v8799 = vadd.f32 %v8726, %v8798
  %8800 = vdwg.mxu0
  %v8801 = vand.u32 %v8397, 4294901760
  %8802 = vmatpush.msra.mxu0 %v8801
  %v8803 = vand.u32 %v8392, 4294901760
  %8804 = vmatpush.msra.mxu0 %v8803
  %v8805 = vand.u32 %v8351, 4294901760
  %8806 = vmatpush.msra.mxu0 %v8805
  %v8807 = vand.u32 %v8346, 4294901760
  %8808 = vmatpush.msra.mxu0 %v8807
  %v8809 = vand.u32 %v8305, 4294901760
  %8810 = vmatpush.msra.mxu0 %v8809
  %v8811 = vand.u32 %v8300, 4294901760
  %8812 = vmatpush.msra.mxu0 %v8811
  %v8813 = vand.u32 %v8259, 4294901760
  %8814 = vmatpush.msra.mxu0 %v8813
  %v8815 = vand.u32 %v8254, 4294901760
  %8816 = vmatpush.msra.mxu0 %v8815
  %v8817 = vand.u32 %v8213, 4294901760
  %8818 = vmatpush.msra.mxu0 %v8817
  %v8819 = vand.u32 %v8208, 4294901760
  %8820 = vmatpush.msra.mxu0 %v8819
  %v8821 = vand.u32 %v8167, 4294901760
  %8822 = vmatpush.msra.mxu0 %v8821
  %v8823 = vand.u32 %v8162, 4294901760
  %8824 = vmatpush.msra.mxu0 %v8823
  %v8825 = vand.u32 %v8121, 4294901760
  %8826 = vmatpush.msra.mxu0 %v8825
  %v8827 = vand.u32 %v8116, 4294901760
  %8828 = vmatpush.msra.mxu0 %v8827
  %v8829 = vand.u32 %v8085, 4294901760
  %8830 = vmatpush.msra.mxu0 %v8829
  %v8831 = vand.u32 %v8084, 4294901760
  %8832 = vmatpush.msra.mxu0 %v8831
  %v8833 = vand.u32 %v8460, 4294901760
  %8834 = vmatmul.f32.gmra.mxu0 %v8833
  %v8835 = vpop.f32.mrf.mxu0
  %v8836 = vadd.f32 %v8795, %v8835
  %v8837 = vand.u32 %v8462, 4294901760
  %8838 = vmatmul.f32.gmra.mxu0 %v8837
  %v8839 = vpop.f32.mrf.mxu0
  %v8840 = vadd.f32 %v8799, %v8839
  %8841 = vdwg.mxu0
  %8842 = vmatpush.msra.mxu0 0.0
  %8843 = vmatpush.msra.mxu0 0.0
  %8844 = vmatpush.msra.mxu0 0.0
  %8845 = vmatpush.msra.mxu0 0.0
  %8846 = vmatpush.msra.mxu0 0.0
  %8847 = vmatpush.msra.mxu0 0.0
  %8848 = vmatpush.msra.mxu0 0.0
  %8849 = vmatpush.msra.mxu0 0.0
  %8850 = vmatpush.msra.mxu0 0.0
  %8851 = vmatpush.msra.mxu0 0.0
  %8852 = vmatpush.msra.mxu0 0.0
  %8853 = vmatpush.msra.mxu0 0.0
  %8854 = vmatpush.msra.mxu0 0.0
  %8855 = vmatpush.msra.mxu0 0.0
  %v8856 = vand.u32 %v8443, 4294901760
  %8857 = vmatpush.msra.mxu0 %v8856
  %v8858 = vand.u32 %v8438, 4294901760
  %8859 = vmatpush.msra.mxu0 %v8858
  %v8860 = vand.u32 %v8465, 4294901760
  %v8861 = vsub.f32 %v8465, %v8860
  %v8862 = vand.u32 %v8861, 4294901760
  %v8863 = vsub.f32 %v8861, %v8862
  %v8864 = vand.u32 %v8863, 4294901760
  %8865 = vmatmul.f32.gmra.mxu0 %v8864
  %v8866 = vpop.f32.mrf.mxu0
  %v8867 = vadd.f32 %v8836, %v8866
  %v8868 = vand.u32 %v8468, 4294901760
  %v8869 = vsub.f32 %v8468, %v8868
  %v8870 = vand.u32 %v8869, 4294901760
  %v8871 = vsub.f32 %v8869, %v8870
  %v8872 = vand.u32 %v8871, 4294901760
  %8873 = vmatmul.f32.gmra.mxu0 %v8872
  %v8874 = vpop.f32.mrf.mxu0
  %v8875 = vadd.f32 %v8840, %v8874
  %8876 = vdwg.mxu0
  %8877 = vmatpush.msra.mxu0 0.0
  %8878 = vmatpush.msra.mxu0 0.0
  %8879 = vmatpush.msra.mxu0 0.0
  %8880 = vmatpush.msra.mxu0 0.0
  %8881 = vmatpush.msra.mxu0 0.0
  %8882 = vmatpush.msra.mxu0 0.0
  %8883 = vmatpush.msra.mxu0 0.0
  %8884 = vmatpush.msra.mxu0 0.0
  %8885 = vmatpush.msra.mxu0 0.0
  %8886 = vmatpush.msra.mxu0 0.0
  %8887 = vmatpush.msra.mxu0 0.0
  %8888 = vmatpush.msra.mxu0 0.0
  %8889 = vmatpush.msra.mxu0 0.0
  %8890 = vmatpush.msra.mxu0 0.0
  %v8891 = vand.u32 %v8443, 4294901760
  %v8892 = vsub.f32 %v8443, %v8891
  %v8893 = vand.u32 %v8892, 4294901760
  %v8894 = vsub.f32 %v8892, %v8893
  %v8895 = vand.u32 %v8894, 4294901760
  %8896 = vmatpush.msra.mxu0 %v8895
  %v8897 = vand.u32 %v8438, 4294901760
  %v8898 = vsub.f32 %v8438, %v8897
  %v8899 = vand.u32 %v8898, 4294901760
  %v8900 = vsub.f32 %v8898, %v8899
  %v8901 = vand.u32 %v8900, 4294901760
  %8902 = vmatpush.msra.mxu0 %v8901
  %v8903 = vand.u32 %v8465, 4294901760
  %8904 = vmatmul.f32.gmra.mxu0 %v8903
  %v8905 = vpop.f32.mrf.mxu0
  %v8906 = vadd.f32 %v8867, %v8905
  %v8907 = vand.u32 %v8468, 4294901760
  %8908 = vmatmul.f32.gmra.mxu0 %v8907
  %v8909 = vpop.f32.mrf.mxu0
  %v8910 = vadd.f32 %v8875, %v8909
  %8911 = vdwg.mxu0
  %8912 = vmatpush.msra.mxu0 0.0
  %8913 = vmatpush.msra.mxu0 0.0
  %8914 = vmatpush.msra.mxu0 0.0
  %8915 = vmatpush.msra.mxu0 0.0
  %8916 = vmatpush.msra.mxu0 0.0
  %8917 = vmatpush.msra.mxu0 0.0
  %8918 = vmatpush.msra.mxu0 0.0
  %8919 = vmatpush.msra.mxu0 0.0
  %8920 = vmatpush.msra.mxu0 0.0
  %8921 = vmatpush.msra.mxu0 0.0
  %8922 = vmatpush.msra.mxu0 0.0
  %8923 = vmatpush.msra.mxu0 0.0
  %8924 = vmatpush.msra.mxu0 0.0
  %8925 = vmatpush.msra.mxu0 0.0
  %v8926 = vand.u32 %v8443, 4294901760
  %v8927 = vsub.f32 %v8443, %v8926
  %8928 = vmatpush.msra.mxu0 %v8927
  %v8929 = vand.u32 %v8438, 4294901760
  %v8930 = vsub.f32 %v8438, %v8929
  %8931 = vmatpush.msra.mxu0 %v8930
  %v8932 = vand.u32 %v8465, 4294901760
  %v8933 = vsub.f32 %v8465, %v8932
  %8934 = vmatmul.f32.gmra.mxu0 %v8933
  %v8935 = vpop.f32.mrf.mxu0
  %v8936 = vadd.f32 %v8906, %v8935
  %v8937 = vand.u32 %v8468, 4294901760
  %v8938 = vsub.f32 %v8468, %v8937
  %8939 = vmatmul.f32.gmra.mxu0 %v8938
  %v8940 = vpop.f32.mrf.mxu0
  %v8941 = vadd.f32 %v8910, %v8940
  %8942 = vdwg.mxu0
  %8943 = vmatpush.msra.mxu0 0.0
  %8944 = vmatpush.msra.mxu0 0.0
  %8945 = vmatpush.msra.mxu0 0.0
  %8946 = vmatpush.msra.mxu0 0.0
  %8947 = vmatpush.msra.mxu0 0.0
  %8948 = vmatpush.msra.mxu0 0.0
  %8949 = vmatpush.msra.mxu0 0.0
  %8950 = vmatpush.msra.mxu0 0.0
  %8951 = vmatpush.msra.mxu0 0.0
  %8952 = vmatpush.msra.mxu0 0.0
  %8953 = vmatpush.msra.mxu0 0.0
  %8954 = vmatpush.msra.mxu0 0.0
  %8955 = vmatpush.msra.mxu0 0.0
  %8956 = vmatpush.msra.mxu0 0.0
  %v8957 = vand.u32 %v8443, 4294901760
  %8958 = vmatpush.msra.mxu0 %v8957
  %v8959 = vand.u32 %v8438, 4294901760
  %8960 = vmatpush.msra.mxu0 %v8959
  %v8961 = vand.u32 %v8465, 4294901760
  %v8962 = vsub.f32 %v8465, %v8961
  %v8963 = vand.u32 %v8962, 4294901760
  %8964 = vmatmul.f32.gmra.mxu0 %v8963
  %v8965 = vpop.f32.mrf.mxu0
  %v8966 = vadd.f32 %v8936, %v8965
  %v8967 = vand.u32 %v8468, 4294901760
  %v8968 = vsub.f32 %v8468, %v8967
  %v8969 = vand.u32 %v8968, 4294901760
  %8970 = vmatmul.f32.gmra.mxu0 %v8969
  %v8971 = vpop.f32.mrf.mxu0
  %v8972 = vadd.f32 %v8941, %v8971
  %8973 = vdwg.mxu0
  %8974 = vmatpush.msra.mxu0 0.0
  %8975 = vmatpush.msra.mxu0 0.0
  %8976 = vmatpush.msra.mxu0 0.0
  %8977 = vmatpush.msra.mxu0 0.0
  %8978 = vmatpush.msra.mxu0 0.0
  %8979 = vmatpush.msra.mxu0 0.0
  %8980 = vmatpush.msra.mxu0 0.0
  %8981 = vmatpush.msra.mxu0 0.0
  %8982 = vmatpush.msra.mxu0 0.0
  %8983 = vmatpush.msra.mxu0 0.0
  %8984 = vmatpush.msra.mxu0 0.0
  %8985 = vmatpush.msra.mxu0 0.0
  %8986 = vmatpush.msra.mxu0 0.0
  %8987 = vmatpush.msra.mxu0 0.0
  %v8988 = vand.u32 %v8443, 4294901760
  %v8989 = vsub.f32 %v8443, %v8988
  %v8990 = vand.u32 %v8989, 4294901760
  %8991 = vmatpush.msra.mxu0 %v8990
  %v8992 = vand.u32 %v8438, 4294901760
  %v8993 = vsub.f32 %v8438, %v8992
  %v8994 = vand.u32 %v8993, 4294901760
  %8995 = vmatpush.msra.mxu0 %v8994
  %v8996 = vand.u32 %v8465, 4294901760
  %8997 = vmatmul.f32.gmra.mxu0 %v8996
  %v8998 = vpop.f32.mrf.mxu0
  %v8999 = vadd.f32 %v8966, %v8998
  %v9000 = vand.u32 %v8468, 4294901760
  %9001 = vmatmul.f32.gmra.mxu0 %v9000
  %v9002 = vpop.f32.mrf.mxu0
  %v9003 = vadd.f32 %v8972, %v9002
  %9004 = vdwg.mxu0
  %9005 = vmatpush.msra.mxu0 0.0
  %9006 = vmatpush.msra.mxu0 0.0
  %9007 = vmatpush.msra.mxu0 0.0
  %9008 = vmatpush.msra.mxu0 0.0
  %9009 = vmatpush.msra.mxu0 0.0
  %9010 = vmatpush.msra.mxu0 0.0
  %9011 = vmatpush.msra.mxu0 0.0
  %9012 = vmatpush.msra.mxu0 0.0
  %9013 = vmatpush.msra.mxu0 0.0
  %9014 = vmatpush.msra.mxu0 0.0
  %9015 = vmatpush.msra.mxu0 0.0
  %9016 = vmatpush.msra.mxu0 0.0
  %9017 = vmatpush.msra.mxu0 0.0
  %9018 = vmatpush.msra.mxu0 0.0
  %v9019 = vand.u32 %v8443, 4294901760
  %9020 = vmatpush.msra.mxu0 %v9019
  %v9021 = vand.u32 %v8438, 4294901760
  %9022 = vmatpush.msra.mxu0 %v9021
  %v9023 = vand.u32 %v8465, 4294901760
  %9024 = vmatmul.f32.gmra.mxu0 %v9023
  %v9025 = vpop.f32.mrf.mxu0
  %v9026 = vadd.f32 %v8999, %v9025
  %v9027 = vand.u32 %v8468, 4294901760
  %9028 = vmatmul.f32.gmra.mxu0 %v9027
  %v9029 = vpop.f32.mrf.mxu0
  %v9030 = vadd.f32 %v9003, %v9029
  %9031 = vdwg.mxu0
  %v9032 = vand.u32 %v8398, 4294901760
  %9033 = vmatpush.msra.mxu0 %v9032
  %v9034 = vand.u32 %v8393, 4294901760
  %9035 = vmatpush.msra.mxu0 %v9034
  %v9036 = vand.u32 %v8352, 4294901760
  %9037 = vmatpush.msra.mxu0 %v9036
  %v9038 = vand.u32 %v8347, 4294901760
  %9039 = vmatpush.msra.mxu0 %v9038
  %v9040 = vand.u32 %v8306, 4294901760
  %9041 = vmatpush.msra.mxu0 %v9040
  %v9042 = vand.u32 %v8301, 4294901760
  %9043 = vmatpush.msra.mxu0 %v9042
  %v9044 = vand.u32 %v8260, 4294901760
  %9045 = vmatpush.msra.mxu0 %v9044
  %v9046 = vand.u32 %v8255, 4294901760
  %9047 = vmatpush.msra.mxu0 %v9046
  %v9048 = vand.u32 %v8214, 4294901760
  %9049 = vmatpush.msra.mxu0 %v9048
  %v9050 = vand.u32 %v8209, 4294901760
  %9051 = vmatpush.msra.mxu0 %v9050
  %v9052 = vand.u32 %v8168, 4294901760
  %9053 = vmatpush.msra.mxu0 %v9052
  %v9054 = vand.u32 %v8163, 4294901760
  %9055 = vmatpush.msra.mxu0 %v9054
  %v9056 = vand.u32 %v8122, 4294901760
  %9057 = vmatpush.msra.mxu0 %v9056
  %v9058 = vand.u32 %v8117, 4294901760
  %9059 = vmatpush.msra.mxu0 %v9058
  %v9060 = vand.u32 %v8067, 4294901760
  %9061 = vmatpush.msra.mxu0 %v9060
  %v9062 = vand.u32 %v8062, 4294901760
  %9063 = vmatpush.msra.mxu0 %v9062
  %v9064 = vand.u32 %v8460, 4294901760
  %v9065 = vsub.f32 %v8460, %v9064
  %v9066 = vand.u32 %v9065, 4294901760
  %v9067 = vsub.f32 %v9065, %v9066
  %v9068 = vand.u32 %v9067, 4294901760
  %9069 = vmatmul.f32.gmra.mxu0 %v9068
  %v9070 = vpop.f32.mrf.mxu0
  %v9071 = vadd.f32 0.0, %v9070
  %v9072 = vand.u32 %v8462, 4294901760
  %v9073 = vsub.f32 %v8462, %v9072
  %v9074 = vand.u32 %v9073, 4294901760
  %v9075 = vsub.f32 %v9073, %v9074
  %v9076 = vand.u32 %v9075, 4294901760
  %9077 = vmatmul.f32.gmra.mxu0 %v9076
  %v9078 = vpop.f32.mrf.mxu0
  %v9079 = vadd.f32 0.0, %v9078
  %9080 = vdwg.mxu0
  %v9081 = vand.u32 %v8398, 4294901760
  %v9082 = vsub.f32 %v8398, %v9081
  %v9083 = vand.u32 %v9082, 4294901760
  %v9084 = vsub.f32 %v9082, %v9083
  %v9085 = vand.u32 %v9084, 4294901760
  %9086 = vmatpush.msra.mxu0 %v9085
  %v9087 = vand.u32 %v8393, 4294901760
  %v9088 = vsub.f32 %v8393, %v9087
  %v9089 = vand.u32 %v9088, 4294901760
  %v9090 = vsub.f32 %v9088, %v9089
  %v9091 = vand.u32 %v9090, 4294901760
  %9092 = vmatpush.msra.mxu0 %v9091
  %v9093 = vand.u32 %v8352, 4294901760
  %v9094 = vsub.f32 %v8352, %v9093
  %v9095 = vand.u32 %v9094, 4294901760
  %v9096 = vsub.f32 %v9094, %v9095
  %v9097 = vand.u32 %v9096, 4294901760
  %9098 = vmatpush.msra.mxu0 %v9097
  %v9099 = vand.u32 %v8347, 4294901760
  %v9100 = vsub.f32 %v8347, %v9099
  %v9101 = vand.u32 %v9100, 4294901760
  %v9102 = vsub.f32 %v9100, %v9101
  %v9103 = vand.u32 %v9102, 4294901760
  %9104 = vmatpush.msra.mxu0 %v9103
  %v9105 = vand.u32 %v8306, 4294901760
  %v9106 = vsub.f32 %v8306, %v9105
  %v9107 = vand.u32 %v9106, 4294901760
  %v9108 = vsub.f32 %v9106, %v9107
  %v9109 = vand.u32 %v9108, 4294901760
  %9110 = vmatpush.msra.mxu0 %v9109
  %v9111 = vand.u32 %v8301, 4294901760
  %v9112 = vsub.f32 %v8301, %v9111
  %v9113 = vand.u32 %v9112, 4294901760
  %v9114 = vsub.f32 %v9112, %v9113
  %v9115 = vand.u32 %v9114, 4294901760
  %9116 = vmatpush.msra.mxu0 %v9115
  %v9117 = vand.u32 %v8260, 4294901760
  %v9118 = vsub.f32 %v8260, %v9117
  %v9119 = vand.u32 %v9118, 4294901760
  %v9120 = vsub.f32 %v9118, %v9119
  %v9121 = vand.u32 %v9120, 4294901760
  %9122 = vmatpush.msra.mxu0 %v9121
  %v9123 = vand.u32 %v8255, 4294901760
  %v9124 = vsub.f32 %v8255, %v9123
  %v9125 = vand.u32 %v9124, 4294901760
  %v9126 = vsub.f32 %v9124, %v9125
  %v9127 = vand.u32 %v9126, 4294901760
  %9128 = vmatpush.msra.mxu0 %v9127
  %v9129 = vand.u32 %v8214, 4294901760
  %v9130 = vsub.f32 %v8214, %v9129
  %v9131 = vand.u32 %v9130, 4294901760
  %v9132 = vsub.f32 %v9130, %v9131
  %v9133 = vand.u32 %v9132, 4294901760
  %9134 = vmatpush.msra.mxu0 %v9133
  %v9135 = vand.u32 %v8209, 4294901760
  %v9136 = vsub.f32 %v8209, %v9135
  %v9137 = vand.u32 %v9136, 4294901760
  %v9138 = vsub.f32 %v9136, %v9137
  %v9139 = vand.u32 %v9138, 4294901760
  %9140 = vmatpush.msra.mxu0 %v9139
  %v9141 = vand.u32 %v8168, 4294901760
  %v9142 = vsub.f32 %v8168, %v9141
  %v9143 = vand.u32 %v9142, 4294901760
  %v9144 = vsub.f32 %v9142, %v9143
  %v9145 = vand.u32 %v9144, 4294901760
  %9146 = vmatpush.msra.mxu0 %v9145
  %v9147 = vand.u32 %v8163, 4294901760
  %v9148 = vsub.f32 %v8163, %v9147
  %v9149 = vand.u32 %v9148, 4294901760
  %v9150 = vsub.f32 %v9148, %v9149
  %v9151 = vand.u32 %v9150, 4294901760
  %9152 = vmatpush.msra.mxu0 %v9151
  %v9153 = vand.u32 %v8122, 4294901760
  %v9154 = vsub.f32 %v8122, %v9153
  %v9155 = vand.u32 %v9154, 4294901760
  %v9156 = vsub.f32 %v9154, %v9155
  %v9157 = vand.u32 %v9156, 4294901760
  %9158 = vmatpush.msra.mxu0 %v9157
  %v9159 = vand.u32 %v8117, 4294901760
  %v9160 = vsub.f32 %v8117, %v9159
  %v9161 = vand.u32 %v9160, 4294901760
  %v9162 = vsub.f32 %v9160, %v9161
  %v9163 = vand.u32 %v9162, 4294901760
  %9164 = vmatpush.msra.mxu0 %v9163
  %v9165 = vand.u32 %v8067, 4294901760
  %v9166 = vsub.f32 %v8067, %v9165
  %v9167 = vand.u32 %v9166, 4294901760
  %v9168 = vsub.f32 %v9166, %v9167
  %v9169 = vand.u32 %v9168, 4294901760
  %9170 = vmatpush.msra.mxu0 %v9169
  %v9171 = vand.u32 %v8062, 4294901760
  %v9172 = vsub.f32 %v8062, %v9171
  %v9173 = vand.u32 %v9172, 4294901760
  %v9174 = vsub.f32 %v9172, %v9173
  %v9175 = vand.u32 %v9174, 4294901760
  %9176 = vmatpush.msra.mxu0 %v9175
  %v9177 = vand.u32 %v8460, 4294901760
  %9178 = vmatmul.f32.gmra.mxu0 %v9177
  %v9179 = vpop.f32.mrf.mxu0
  %v9180 = vadd.f32 %v9071, %v9179
  %v9181 = vand.u32 %v8462, 4294901760
  %9182 = vmatmul.f32.gmra.mxu0 %v9181
  %v9183 = vpop.f32.mrf.mxu0
  %v9184 = vadd.f32 %v9079, %v9183
  %9185 = vdwg.mxu0
  %v9186 = vand.u32 %v8398, 4294901760
  %v9187 = vsub.f32 %v8398, %v9186
  %9188 = vmatpush.msra.mxu0 %v9187
  %v9189 = vand.u32 %v8393, 4294901760
  %v9190 = vsub.f32 %v8393, %v9189
  %9191 = vmatpush.msra.mxu0 %v9190
  %v9192 = vand.u32 %v8352, 4294901760
  %v9193 = vsub.f32 %v8352, %v9192
  %9194 = vmatpush.msra.mxu0 %v9193
  %v9195 = vand.u32 %v8347, 4294901760
  %v9196 = vsub.f32 %v8347, %v9195
  %9197 = vmatpush.msra.mxu0 %v9196
  %v9198 = vand.u32 %v8306, 4294901760
  %v9199 = vsub.f32 %v8306, %v9198
  %9200 = vmatpush.msra.mxu0 %v9199
  %v9201 = vand.u32 %v8301, 4294901760
  %v9202 = vsub.f32 %v8301, %v9201
  %9203 = vmatpush.msra.mxu0 %v9202
  %v9204 = vand.u32 %v8260, 4294901760
  %v9205 = vsub.f32 %v8260, %v9204
  %9206 = vmatpush.msra.mxu0 %v9205
  %v9207 = vand.u32 %v8255, 4294901760
  %v9208 = vsub.f32 %v8255, %v9207
  %9209 = vmatpush.msra.mxu0 %v9208
  %v9210 = vand.u32 %v8214, 4294901760
  %v9211 = vsub.f32 %v8214, %v9210
  %9212 = vmatpush.msra.mxu0 %v9211
  %v9213 = vand.u32 %v8209, 4294901760
  %v9214 = vsub.f32 %v8209, %v9213
  %9215 = vmatpush.msra.mxu0 %v9214
  %v9216 = vand.u32 %v8168, 4294901760
  %v9217 = vsub.f32 %v8168, %v9216
  %9218 = vmatpush.msra.mxu0 %v9217
  %v9219 = vand.u32 %v8163, 4294901760
  %v9220 = vsub.f32 %v8163, %v9219
  %9221 = vmatpush.msra.mxu0 %v9220
  %v9222 = vand.u32 %v8122, 4294901760
  %v9223 = vsub.f32 %v8122, %v9222
  %9224 = vmatpush.msra.mxu0 %v9223
  %v9225 = vand.u32 %v8117, 4294901760
  %v9226 = vsub.f32 %v8117, %v9225
  %9227 = vmatpush.msra.mxu0 %v9226
  %v9228 = vand.u32 %v8067, 4294901760
  %v9229 = vsub.f32 %v8067, %v9228
  %9230 = vmatpush.msra.mxu0 %v9229
  %v9231 = vand.u32 %v8062, 4294901760
  %v9232 = vsub.f32 %v8062, %v9231
  %9233 = vmatpush.msra.mxu0 %v9232
  %v9234 = vand.u32 %v8460, 4294901760
  %v9235 = vsub.f32 %v8460, %v9234
  %9236 = vmatmul.f32.gmra.mxu0 %v9235
  %v9237 = vpop.f32.mrf.mxu0
  %v9238 = vadd.f32 %v9180, %v9237
  %v9239 = vand.u32 %v8462, 4294901760
  %v9240 = vsub.f32 %v8462, %v9239
  %9241 = vmatmul.f32.gmra.mxu0 %v9240
  %v9242 = vpop.f32.mrf.mxu0
  %v9243 = vadd.f32 %v9184, %v9242
  %9244 = vdwg.mxu0
  %v9245 = vand.u32 %v8398, 4294901760
  %9246 = vmatpush.msra.mxu0 %v9245
  %v9247 = vand.u32 %v8393, 4294901760
  %9248 = vmatpush.msra.mxu0 %v9247
  %v9249 = vand.u32 %v8352, 4294901760
  %9250 = vmatpush.msra.mxu0 %v9249
  %v9251 = vand.u32 %v8347, 4294901760
  %9252 = vmatpush.msra.mxu0 %v9251
  %v9253 = vand.u32 %v8306, 4294901760
  %9254 = vmatpush.msra.mxu0 %v9253
  %v9255 = vand.u32 %v8301, 4294901760
  %9256 = vmatpush.msra.mxu0 %v9255
  %v9257 = vand.u32 %v8260, 4294901760
  %9258 = vmatpush.msra.mxu0 %v9257
  %v9259 = vand.u32 %v8255, 4294901760
  %9260 = vmatpush.msra.mxu0 %v9259
  %v9261 = vand.u32 %v8214, 4294901760
  %9262 = vmatpush.msra.mxu0 %v9261
  %v9263 = vand.u32 %v8209, 4294901760
  %9264 = vmatpush.msra.mxu0 %v9263
  %v9265 = vand.u32 %v8168, 4294901760
  %9266 = vmatpush.msra.mxu0 %v9265
  %v9267 = vand.u32 %v8163, 4294901760
  %9268 = vmatpush.msra.mxu0 %v9267
  %v9269 = vand.u32 %v8122, 4294901760
  %9270 = vmatpush.msra.mxu0 %v9269
  %v9271 = vand.u32 %v8117, 4294901760
  %9272 = vmatpush.msra.mxu0 %v9271
  %v9273 = vand.u32 %v8067, 4294901760
  %9274 = vmatpush.msra.mxu0 %v9273
  %v9275 = vand.u32 %v8062, 4294901760
  %9276 = vmatpush.msra.mxu0 %v9275
  %v9277 = vand.u32 %v8460, 4294901760
  %v9278 = vsub.f32 %v8460, %v9277
  %v9279 = vand.u32 %v9278, 4294901760
  %9280 = vmatmul.f32.gmra.mxu0 %v9279
  %v9281 = vpop.f32.mrf.mxu0
  %v9282 = vadd.f32 %v9238, %v9281
  %v9283 = vand.u32 %v8462, 4294901760
  %v9284 = vsub.f32 %v8462, %v9283
  %v9285 = vand.u32 %v9284, 4294901760
  %9286 = vmatmul.f32.gmra.mxu0 %v9285
  %v9287 = vpop.f32.mrf.mxu0
  %v9288 = vadd.f32 %v9243, %v9287
  %9289 = vdwg.mxu0
  %v9290 = vand.u32 %v8398, 4294901760
  %v9291 = vsub.f32 %v8398, %v9290
  %v9292 = vand.u32 %v9291, 4294901760
  %9293 = vmatpush.msra.mxu0 %v9292
  %v9294 = vand.u32 %v8393, 4294901760
  %v9295 = vsub.f32 %v8393, %v9294
  %v9296 = vand.u32 %v9295, 4294901760
  %9297 = vmatpush.msra.mxu0 %v9296
  %v9298 = vand.u32 %v8352, 4294901760
  %v9299 = vsub.f32 %v8352, %v9298
  %v9300 = vand.u32 %v9299, 4294901760
  %9301 = vmatpush.msra.mxu0 %v9300
  %v9302 = vand.u32 %v8347, 4294901760
  %v9303 = vsub.f32 %v8347, %v9302
  %v9304 = vand.u32 %v9303, 4294901760
  %9305 = vmatpush.msra.mxu0 %v9304
  %v9306 = vand.u32 %v8306, 4294901760
  %v9307 = vsub.f32 %v8306, %v9306
  %v9308 = vand.u32 %v9307, 4294901760
  %9309 = vmatpush.msra.mxu0 %v9308
  %v9310 = vand.u32 %v8301, 4294901760
  %v9311 = vsub.f32 %v8301, %v9310
  %v9312 = vand.u32 %v9311, 4294901760
  %9313 = vmatpush.msra.mxu0 %v9312
  %v9314 = vand.u32 %v8260, 4294901760
  %v9315 = vsub.f32 %v8260, %v9314
  %v9316 = vand.u32 %v9315, 4294901760
  %9317 = vmatpush.msra.mxu0 %v9316
  %v9318 = vand.u32 %v8255, 4294901760
  %v9319 = vsub.f32 %v8255, %v9318
  %v9320 = vand.u32 %v9319, 4294901760
  %9321 = vmatpush.msra.mxu0 %v9320
  %v9322 = vand.u32 %v8214, 4294901760
  %v9323 = vsub.f32 %v8214, %v9322
  %v9324 = vand.u32 %v9323, 4294901760
  %9325 = vmatpush.msra.mxu0 %v9324
  %v9326 = vand.u32 %v8209, 4294901760
  %v9327 = vsub.f32 %v8209, %v9326
  %v9328 = vand.u32 %v9327, 4294901760
  %9329 = vmatpush.msra.mxu0 %v9328
  %v9330 = vand.u32 %v8168, 4294901760
  %v9331 = vsub.f32 %v8168, %v9330
  %v9332 = vand.u32 %v9331, 4294901760
  %9333 = vmatpush.msra.mxu0 %v9332
  %v9334 = vand.u32 %v8163, 4294901760
  %v9335 = vsub.f32 %v8163, %v9334
  %v9336 = vand.u32 %v9335, 4294901760
  %9337 = vmatpush.msra.mxu0 %v9336
  %v9338 = vand.u32 %v8122, 4294901760
  %v9339 = vsub.f32 %v8122, %v9338
  %v9340 = vand.u32 %v9339, 4294901760
  %9341 = vmatpush.msra.mxu0 %v9340
  %v9342 = vand.u32 %v8117, 4294901760
  %v9343 = vsub.f32 %v8117, %v9342
  %v9344 = vand.u32 %v9343, 4294901760
  %9345 = vmatpush.msra.mxu0 %v9344
  %v9346 = vand.u32 %v8067, 4294901760
  %v9347 = vsub.f32 %v8067, %v9346
  %v9348 = vand.u32 %v9347, 4294901760
  %9349 = vmatpush.msra.mxu0 %v9348
  %v9350 = vand.u32 %v8062, 4294901760
  %v9351 = vsub.f32 %v8062, %v9350
  %v9352 = vand.u32 %v9351, 4294901760
  %9353 = vmatpush.msra.mxu0 %v9352
  %v9354 = vand.u32 %v8460, 4294901760
  %9355 = vmatmul.f32.gmra.mxu0 %v9354
  %v9356 = vpop.f32.mrf.mxu0
  %v9357 = vadd.f32 %v9282, %v9356
  %v9358 = vand.u32 %v8462, 4294901760
  %9359 = vmatmul.f32.gmra.mxu0 %v9358
  %v9360 = vpop.f32.mrf.mxu0
  %v9361 = vadd.f32 %v9288, %v9360
  %9362 = vdwg.mxu0
  %v9363 = vand.u32 %v8398, 4294901760
  %9364 = vmatpush.msra.mxu0 %v9363
  %v9365 = vand.u32 %v8393, 4294901760
  %9366 = vmatpush.msra.mxu0 %v9365
  %v9367 = vand.u32 %v8352, 4294901760
  %9368 = vmatpush.msra.mxu0 %v9367
  %v9369 = vand.u32 %v8347, 4294901760
  %9370 = vmatpush.msra.mxu0 %v9369
  %v9371 = vand.u32 %v8306, 4294901760
  %9372 = vmatpush.msra.mxu0 %v9371
  %v9373 = vand.u32 %v8301, 4294901760
  %9374 = vmatpush.msra.mxu0 %v9373
  %v9375 = vand.u32 %v8260, 4294901760
  %9376 = vmatpush.msra.mxu0 %v9375
  %v9377 = vand.u32 %v8255, 4294901760
  %9378 = vmatpush.msra.mxu0 %v9377
  %v9379 = vand.u32 %v8214, 4294901760
  %9380 = vmatpush.msra.mxu0 %v9379
  %v9381 = vand.u32 %v8209, 4294901760
  %9382 = vmatpush.msra.mxu0 %v9381
  %v9383 = vand.u32 %v8168, 4294901760
  %9384 = vmatpush.msra.mxu0 %v9383
  %v9385 = vand.u32 %v8163, 4294901760
  %9386 = vmatpush.msra.mxu0 %v9385
  %v9387 = vand.u32 %v8122, 4294901760
  %9388 = vmatpush.msra.mxu0 %v9387
  %v9389 = vand.u32 %v8117, 4294901760
  %9390 = vmatpush.msra.mxu0 %v9389
  %v9391 = vand.u32 %v8067, 4294901760
  %9392 = vmatpush.msra.mxu0 %v9391
  %v9393 = vand.u32 %v8062, 4294901760
  %9394 = vmatpush.msra.mxu0 %v9393
  %v9395 = vand.u32 %v8460, 4294901760
  %9396 = vmatmul.f32.gmra.mxu0 %v9395
  %v9397 = vpop.f32.mrf.mxu0
  %v9398 = vadd.f32 %v9357, %v9397
  %v9399 = vand.u32 %v8462, 4294901760
  %9400 = vmatmul.f32.gmra.mxu0 %v9399
  %v9401 = vpop.f32.mrf.mxu0
  %v9402 = vadd.f32 %v9361, %v9401
  %9403 = vdwg.mxu0
  %9404 = vmatpush.msra.mxu0 0.0
  %9405 = vmatpush.msra.mxu0 0.0
  %9406 = vmatpush.msra.mxu0 0.0
  %9407 = vmatpush.msra.mxu0 0.0
  %9408 = vmatpush.msra.mxu0 0.0
  %9409 = vmatpush.msra.mxu0 0.0
  %9410 = vmatpush.msra.mxu0 0.0
  %9411 = vmatpush.msra.mxu0 0.0
  %9412 = vmatpush.msra.mxu0 0.0
  %9413 = vmatpush.msra.mxu0 0.0
  %9414 = vmatpush.msra.mxu0 0.0
  %9415 = vmatpush.msra.mxu0 0.0
  %9416 = vmatpush.msra.mxu0 0.0
  %9417 = vmatpush.msra.mxu0 0.0
  %v9418 = vand.u32 %v8444, 4294901760
  %9419 = vmatpush.msra.mxu0 %v9418
  %v9420 = vand.u32 %v8439, 4294901760
  %9421 = vmatpush.msra.mxu0 %v9420
  %v9422 = vand.u32 %v8465, 4294901760
  %v9423 = vsub.f32 %v8465, %v9422
  %v9424 = vand.u32 %v9423, 4294901760
  %v9425 = vsub.f32 %v9423, %v9424
  %v9426 = vand.u32 %v9425, 4294901760
  %9427 = vmatmul.f32.gmra.mxu0 %v9426
  %v9428 = vpop.f32.mrf.mxu0
  %v9429 = vadd.f32 %v9398, %v9428
  %v9430 = vand.u32 %v8468, 4294901760
  %v9431 = vsub.f32 %v8468, %v9430
  %v9432 = vand.u32 %v9431, 4294901760
  %v9433 = vsub.f32 %v9431, %v9432
  %v9434 = vand.u32 %v9433, 4294901760
  %9435 = vmatmul.f32.gmra.mxu0 %v9434
  %v9436 = vpop.f32.mrf.mxu0
  %v9437 = vadd.f32 %v9402, %v9436
  %9438 = vdwg.mxu0
  %9439 = vmatpush.msra.mxu0 0.0
  %9440 = vmatpush.msra.mxu0 0.0
  %9441 = vmatpush.msra.mxu0 0.0
  %9442 = vmatpush.msra.mxu0 0.0
  %9443 = vmatpush.msra.mxu0 0.0
  %9444 = vmatpush.msra.mxu0 0.0
  %9445 = vmatpush.msra.mxu0 0.0
  %9446 = vmatpush.msra.mxu0 0.0
  %9447 = vmatpush.msra.mxu0 0.0
  %9448 = vmatpush.msra.mxu0 0.0
  %9449 = vmatpush.msra.mxu0 0.0
  %9450 = vmatpush.msra.mxu0 0.0
  %9451 = vmatpush.msra.mxu0 0.0
  %9452 = vmatpush.msra.mxu0 0.0
  %v9453 = vand.u32 %v8444, 4294901760
  %v9454 = vsub.f32 %v8444, %v9453
  %v9455 = vand.u32 %v9454, 4294901760
  %v9456 = vsub.f32 %v9454, %v9455
  %v9457 = vand.u32 %v9456, 4294901760
  %9458 = vmatpush.msra.mxu0 %v9457
  %v9459 = vand.u32 %v8439, 4294901760
  %v9460 = vsub.f32 %v8439, %v9459
  %v9461 = vand.u32 %v9460, 4294901760
  %v9462 = vsub.f32 %v9460, %v9461
  %v9463 = vand.u32 %v9462, 4294901760
  %9464 = vmatpush.msra.mxu0 %v9463
  %v9465 = vand.u32 %v8465, 4294901760
  %9466 = vmatmul.f32.gmra.mxu0 %v9465
  %v9467 = vpop.f32.mrf.mxu0
  %v9468 = vadd.f32 %v9429, %v9467
  %v9469 = vand.u32 %v8468, 4294901760
  %9470 = vmatmul.f32.gmra.mxu0 %v9469
  %v9471 = vpop.f32.mrf.mxu0
  %v9472 = vadd.f32 %v9437, %v9471
  %9473 = vdwg.mxu0
  %9474 = vmatpush.msra.mxu0 0.0
  %9475 = vmatpush.msra.mxu0 0.0
  %9476 = vmatpush.msra.mxu0 0.0
  %9477 = vmatpush.msra.mxu0 0.0
  %9478 = vmatpush.msra.mxu0 0.0
  %9479 = vmatpush.msra.mxu0 0.0
  %9480 = vmatpush.msra.mxu0 0.0
  %9481 = vmatpush.msra.mxu0 0.0
  %9482 = vmatpush.msra.mxu0 0.0
  %9483 = vmatpush.msra.mxu0 0.0
  %9484 = vmatpush.msra.mxu0 0.0
  %9485 = vmatpush.msra.mxu0 0.0
  %9486 = vmatpush.msra.mxu0 0.0
  %9487 = vmatpush.msra.mxu0 0.0
  %v9488 = vand.u32 %v8444, 4294901760
  %v9489 = vsub.f32 %v8444, %v9488
  %9490 = vmatpush.msra.mxu0 %v9489
  %v9491 = vand.u32 %v8439, 4294901760
  %v9492 = vsub.f32 %v8439, %v9491
  %9493 = vmatpush.msra.mxu0 %v9492
  %v9494 = vand.u32 %v8465, 4294901760
  %v9495 = vsub.f32 %v8465, %v9494
  %9496 = vmatmul.f32.gmra.mxu0 %v9495
  %v9497 = vpop.f32.mrf.mxu0
  %v9498 = vadd.f32 %v9468, %v9497
  %v9499 = vand.u32 %v8468, 4294901760
  %v9500 = vsub.f32 %v8468, %v9499
  %9501 = vmatmul.f32.gmra.mxu0 %v9500
  %v9502 = vpop.f32.mrf.mxu0
  %v9503 = vadd.f32 %v9472, %v9502
  %9504 = vdwg.mxu0
  %9505 = vmatpush.msra.mxu0 0.0
  %9506 = vmatpush.msra.mxu0 0.0
  %9507 = vmatpush.msra.mxu0 0.0
  %9508 = vmatpush.msra.mxu0 0.0
  %9509 = vmatpush.msra.mxu0 0.0
  %9510 = vmatpush.msra.mxu0 0.0
  %9511 = vmatpush.msra.mxu0 0.0
  %9512 = vmatpush.msra.mxu0 0.0
  %9513 = vmatpush.msra.mxu0 0.0
  %9514 = vmatpush.msra.mxu0 0.0
  %9515 = vmatpush.msra.mxu0 0.0
  %9516 = vmatpush.msra.mxu0 0.0
  %9517 = vmatpush.msra.mxu0 0.0
  %9518 = vmatpush.msra.mxu0 0.0
  %v9519 = vand.u32 %v8444, 4294901760
  %9520 = vmatpush.msra.mxu0 %v9519
  %v9521 = vand.u32 %v8439, 4294901760
  %9522 = vmatpush.msra.mxu0 %v9521
  %v9523 = vand.u32 %v8465, 4294901760
  %v9524 = vsub.f32 %v8465, %v9523
  %v9525 = vand.u32 %v9524, 4294901760
  %9526 = vmatmul.f32.gmra.mxu0 %v9525
  %v9527 = vpop.f32.mrf.mxu0
  %v9528 = vadd.f32 %v9498, %v9527
  %v9529 = vand.u32 %v8468, 4294901760
  %v9530 = vsub.f32 %v8468, %v9529
  %v9531 = vand.u32 %v9530, 4294901760
  %9532 = vmatmul.f32.gmra.mxu0 %v9531
  %v9533 = vpop.f32.mrf.mxu0
  %v9534 = vadd.f32 %v9503, %v9533
  %9535 = vdwg.mxu0
  %9536 = vmatpush.msra.mxu0 0.0
  %9537 = vmatpush.msra.mxu0 0.0
  %9538 = vmatpush.msra.mxu0 0.0
  %9539 = vmatpush.msra.mxu0 0.0
  %9540 = vmatpush.msra.mxu0 0.0
  %9541 = vmatpush.msra.mxu0 0.0
  %9542 = vmatpush.msra.mxu0 0.0
  %9543 = vmatpush.msra.mxu0 0.0
  %9544 = vmatpush.msra.mxu0 0.0
  %9545 = vmatpush.msra.mxu0 0.0
  %9546 = vmatpush.msra.mxu0 0.0
  %9547 = vmatpush.msra.mxu0 0.0
  %9548 = vmatpush.msra.mxu0 0.0
  %9549 = vmatpush.msra.mxu0 0.0
  %v9550 = vand.u32 %v8444, 4294901760
  %v9551 = vsub.f32 %v8444, %v9550
  %v9552 = vand.u32 %v9551, 4294901760
  %9553 = vmatpush.msra.mxu0 %v9552
  %v9554 = vand.u32 %v8439, 4294901760
  %v9555 = vsub.f32 %v8439, %v9554
  %v9556 = vand.u32 %v9555, 4294901760
  %9557 = vmatpush.msra.mxu0 %v9556
  %v9558 = vand.u32 %v8465, 4294901760
  %9559 = vmatmul.f32.gmra.mxu0 %v9558
  %v9560 = vpop.f32.mrf.mxu0
  %v9561 = vadd.f32 %v9528, %v9560
  %v9562 = vand.u32 %v8468, 4294901760
  %9563 = vmatmul.f32.gmra.mxu0 %v9562
  %v9564 = vpop.f32.mrf.mxu0
  %v9565 = vadd.f32 %v9534, %v9564
  %9566 = vdwg.mxu0
  %9567 = vmatpush.msra.mxu0 0.0
  %9568 = vmatpush.msra.mxu0 0.0
  %9569 = vmatpush.msra.mxu0 0.0
  %9570 = vmatpush.msra.mxu0 0.0
  %9571 = vmatpush.msra.mxu0 0.0
  %9572 = vmatpush.msra.mxu0 0.0
  %9573 = vmatpush.msra.mxu0 0.0
  %9574 = vmatpush.msra.mxu0 0.0
  %9575 = vmatpush.msra.mxu0 0.0
  %9576 = vmatpush.msra.mxu0 0.0
  %9577 = vmatpush.msra.mxu0 0.0
  %9578 = vmatpush.msra.mxu0 0.0
  %9579 = vmatpush.msra.mxu0 0.0
  %9580 = vmatpush.msra.mxu0 0.0
  %v9581 = vand.u32 %v8444, 4294901760
  %9582 = vmatpush.msra.mxu0 %v9581
  %v9583 = vand.u32 %v8439, 4294901760
  %9584 = vmatpush.msra.mxu0 %v9583
  %v9585 = vand.u32 %v8465, 4294901760
  %9586 = vmatmul.f32.gmra.mxu0 %v9585
  %v9587 = vpop.f32.mrf.mxu0
  %v9588 = vadd.f32 %v9561, %v9587
  %v9589 = vand.u32 %v8468, 4294901760
  %9590 = vmatmul.f32.gmra.mxu0 %v9589
  %v9591 = vpop.f32.mrf.mxu0
  %v9592 = vadd.f32 %v9565, %v9591
  %9593 = vdwg.mxu0
  %v9594 = vand.u32 %v8399, 4294901760
  %9595 = vmatpush.msra.mxu0 %v9594
  %v9596 = vand.u32 %v8394, 4294901760
  %9597 = vmatpush.msra.mxu0 %v9596
  %v9598 = vand.u32 %v8353, 4294901760
  %9599 = vmatpush.msra.mxu0 %v9598
  %v9600 = vand.u32 %v8348, 4294901760
  %9601 = vmatpush.msra.mxu0 %v9600
  %v9602 = vand.u32 %v8307, 4294901760
  %9603 = vmatpush.msra.mxu0 %v9602
  %v9604 = vand.u32 %v8302, 4294901760
  %9605 = vmatpush.msra.mxu0 %v9604
  %v9606 = vand.u32 %v8261, 4294901760
  %9607 = vmatpush.msra.mxu0 %v9606
  %v9608 = vand.u32 %v8256, 4294901760
  %9609 = vmatpush.msra.mxu0 %v9608
  %v9610 = vand.u32 %v8215, 4294901760
  %9611 = vmatpush.msra.mxu0 %v9610
  %v9612 = vand.u32 %v8210, 4294901760
  %9613 = vmatpush.msra.mxu0 %v9612
  %v9614 = vand.u32 %v8169, 4294901760
  %9615 = vmatpush.msra.mxu0 %v9614
  %v9616 = vand.u32 %v8164, 4294901760
  %9617 = vmatpush.msra.mxu0 %v9616
  %v9618 = vand.u32 %v8123, 4294901760
  %9619 = vmatpush.msra.mxu0 %v9618
  %v9620 = vand.u32 %v8118, 4294901760
  %9621 = vmatpush.msra.mxu0 %v9620
  %v9622 = vand.u32 %v8068, 4294901760
  %9623 = vmatpush.msra.mxu0 %v9622
  %v9624 = vand.u32 %v8063, 4294901760
  %9625 = vmatpush.msra.mxu0 %v9624
  %v9626 = vand.u32 %v8460, 4294901760
  %v9627 = vsub.f32 %v8460, %v9626
  %v9628 = vand.u32 %v9627, 4294901760
  %v9629 = vsub.f32 %v9627, %v9628
  %v9630 = vand.u32 %v9629, 4294901760
  %9631 = vmatmul.f32.gmra.mxu0 %v9630
  %v9632 = vpop.f32.mrf.mxu0
  %v9633 = vadd.f32 0.0, %v9632
  %v9634 = vand.u32 %v8462, 4294901760
  %v9635 = vsub.f32 %v8462, %v9634
  %v9636 = vand.u32 %v9635, 4294901760
  %v9637 = vsub.f32 %v9635, %v9636
  %v9638 = vand.u32 %v9637, 4294901760
  %9639 = vmatmul.f32.gmra.mxu0 %v9638
  %v9640 = vpop.f32.mrf.mxu0
  %v9641 = vadd.f32 0.0, %v9640
  %9642 = vdwg.mxu0
  %v9643 = vand.u32 %v8399, 4294901760
  %v9644 = vsub.f32 %v8399, %v9643
  %v9645 = vand.u32 %v9644, 4294901760
  %v9646 = vsub.f32 %v9644, %v9645
  %v9647 = vand.u32 %v9646, 4294901760
  %9648 = vmatpush.msra.mxu0 %v9647
  %v9649 = vand.u32 %v8394, 4294901760
  %v9650 = vsub.f32 %v8394, %v9649
  %v9651 = vand.u32 %v9650, 4294901760
  %v9652 = vsub.f32 %v9650, %v9651
  %v9653 = vand.u32 %v9652, 4294901760
  %9654 = vmatpush.msra.mxu0 %v9653
  %v9655 = vand.u32 %v8353, 4294901760
  %v9656 = vsub.f32 %v8353, %v9655
  %v9657 = vand.u32 %v9656, 4294901760
  %v9658 = vsub.f32 %v9656, %v9657
  %v9659 = vand.u32 %v9658, 4294901760
  %9660 = vmatpush.msra.mxu0 %v9659
  %v9661 = vand.u32 %v8348, 4294901760
  %v9662 = vsub.f32 %v8348, %v9661
  %v9663 = vand.u32 %v9662, 4294901760
  %v9664 = vsub.f32 %v9662, %v9663
  %v9665 = vand.u32 %v9664, 4294901760
  %9666 = vmatpush.msra.mxu0 %v9665
  %v9667 = vand.u32 %v8307, 4294901760
  %v9668 = vsub.f32 %v8307, %v9667
  %v9669 = vand.u32 %v9668, 4294901760
  %v9670 = vsub.f32 %v9668, %v9669
  %v9671 = vand.u32 %v9670, 4294901760
  %9672 = vmatpush.msra.mxu0 %v9671
  %v9673 = vand.u32 %v8302, 4294901760
  %v9674 = vsub.f32 %v8302, %v9673
  %v9675 = vand.u32 %v9674, 4294901760
  %v9676 = vsub.f32 %v9674, %v9675
  %v9677 = vand.u32 %v9676, 4294901760
  %9678 = vmatpush.msra.mxu0 %v9677
  %v9679 = vand.u32 %v8261, 4294901760
  %v9680 = vsub.f32 %v8261, %v9679
  %v9681 = vand.u32 %v9680, 4294901760
  %v9682 = vsub.f32 %v9680, %v9681
  %v9683 = vand.u32 %v9682, 4294901760
  %9684 = vmatpush.msra.mxu0 %v9683
  %v9685 = vand.u32 %v8256, 4294901760
  %v9686 = vsub.f32 %v8256, %v9685
  %v9687 = vand.u32 %v9686, 4294901760
  %v9688 = vsub.f32 %v9686, %v9687
  %v9689 = vand.u32 %v9688, 4294901760
  %9690 = vmatpush.msra.mxu0 %v9689
  %v9691 = vand.u32 %v8215, 4294901760
  %v9692 = vsub.f32 %v8215, %v9691
  %v9693 = vand.u32 %v9692, 4294901760
  %v9694 = vsub.f32 %v9692, %v9693
  %v9695 = vand.u32 %v9694, 4294901760
  %9696 = vmatpush.msra.mxu0 %v9695
  %v9697 = vand.u32 %v8210, 4294901760
  %v9698 = vsub.f32 %v8210, %v9697
  %v9699 = vand.u32 %v9698, 4294901760
  %v9700 = vsub.f32 %v9698, %v9699
  %v9701 = vand.u32 %v9700, 4294901760
  %9702 = vmatpush.msra.mxu0 %v9701
  %v9703 = vand.u32 %v8169, 4294901760
  %v9704 = vsub.f32 %v8169, %v9703
  %v9705 = vand.u32 %v9704, 4294901760
  %v9706 = vsub.f32 %v9704, %v9705
  %v9707 = vand.u32 %v9706, 4294901760
  %9708 = vmatpush.msra.mxu0 %v9707
  %v9709 = vand.u32 %v8164, 4294901760
  %v9710 = vsub.f32 %v8164, %v9709
  %v9711 = vand.u32 %v9710, 4294901760
  %v9712 = vsub.f32 %v9710, %v9711
  %v9713 = vand.u32 %v9712, 4294901760
  %9714 = vmatpush.msra.mxu0 %v9713
  %v9715 = vand.u32 %v8123, 4294901760
  %v9716 = vsub.f32 %v8123, %v9715
  %v9717 = vand.u32 %v9716, 4294901760
  %v9718 = vsub.f32 %v9716, %v9717
  %v9719 = vand.u32 %v9718, 4294901760
  %9720 = vmatpush.msra.mxu0 %v9719
  %v9721 = vand.u32 %v8118, 4294901760
  %v9722 = vsub.f32 %v8118, %v9721
  %v9723 = vand.u32 %v9722, 4294901760
  %v9724 = vsub.f32 %v9722, %v9723
  %v9725 = vand.u32 %v9724, 4294901760
  %9726 = vmatpush.msra.mxu0 %v9725
  %v9727 = vand.u32 %v8068, 4294901760
  %v9728 = vsub.f32 %v8068, %v9727
  %v9729 = vand.u32 %v9728, 4294901760
  %v9730 = vsub.f32 %v9728, %v9729
  %v9731 = vand.u32 %v9730, 4294901760
  %9732 = vmatpush.msra.mxu0 %v9731
  %v9733 = vand.u32 %v8063, 4294901760
  %v9734 = vsub.f32 %v8063, %v9733
  %v9735 = vand.u32 %v9734, 4294901760
  %v9736 = vsub.f32 %v9734, %v9735
  %v9737 = vand.u32 %v9736, 4294901760
  %9738 = vmatpush.msra.mxu0 %v9737
  %v9739 = vand.u32 %v8460, 4294901760
  %9740 = vmatmul.f32.gmra.mxu0 %v9739
  %v9741 = vpop.f32.mrf.mxu0
  %v9742 = vadd.f32 %v9633, %v9741
  %v9743 = vand.u32 %v8462, 4294901760
  %9744 = vmatmul.f32.gmra.mxu0 %v9743
  %v9745 = vpop.f32.mrf.mxu0
  %v9746 = vadd.f32 %v9641, %v9745
  %9747 = vdwg.mxu0
  %v9748 = vand.u32 %v8399, 4294901760
  %v9749 = vsub.f32 %v8399, %v9748
  %9750 = vmatpush.msra.mxu0 %v9749
  %v9751 = vand.u32 %v8394, 4294901760
  %v9752 = vsub.f32 %v8394, %v9751
  %9753 = vmatpush.msra.mxu0 %v9752
  %v9754 = vand.u32 %v8353, 4294901760
  %v9755 = vsub.f32 %v8353, %v9754
  %9756 = vmatpush.msra.mxu0 %v9755
  %v9757 = vand.u32 %v8348, 4294901760
  %v9758 = vsub.f32 %v8348, %v9757
  %9759 = vmatpush.msra.mxu0 %v9758
  %v9760 = vand.u32 %v8307, 4294901760
  %v9761 = vsub.f32 %v8307, %v9760
  %9762 = vmatpush.msra.mxu0 %v9761
  %v9763 = vand.u32 %v8302, 4294901760
  %v9764 = vsub.f32 %v8302, %v9763
  %9765 = vmatpush.msra.mxu0 %v9764
  %v9766 = vand.u32 %v8261, 4294901760
  %v9767 = vsub.f32 %v8261, %v9766
  %9768 = vmatpush.msra.mxu0 %v9767
  %v9769 = vand.u32 %v8256, 4294901760
  %v9770 = vsub.f32 %v8256, %v9769
  %9771 = vmatpush.msra.mxu0 %v9770
  %v9772 = vand.u32 %v8215, 4294901760
  %v9773 = vsub.f32 %v8215, %v9772
  %9774 = vmatpush.msra.mxu0 %v9773
  %v9775 = vand.u32 %v8210, 4294901760
  %v9776 = vsub.f32 %v8210, %v9775
  %9777 = vmatpush.msra.mxu0 %v9776
  %v9778 = vand.u32 %v8169, 4294901760
  %v9779 = vsub.f32 %v8169, %v9778
  %9780 = vmatpush.msra.mxu0 %v9779
  %v9781 = vand.u32 %v8164, 4294901760
  %v9782 = vsub.f32 %v8164, %v9781
  %9783 = vmatpush.msra.mxu0 %v9782
  %v9784 = vand.u32 %v8123, 4294901760
  %v9785 = vsub.f32 %v8123, %v9784
  %9786 = vmatpush.msra.mxu0 %v9785
  %v9787 = vand.u32 %v8118, 4294901760
  %v9788 = vsub.f32 %v8118, %v9787
  %9789 = vmatpush.msra.mxu0 %v9788
  %v9790 = vand.u32 %v8068, 4294901760
  %v9791 = vsub.f32 %v8068, %v9790
  %9792 = vmatpush.msra.mxu0 %v9791
  %v9793 = vand.u32 %v8063, 4294901760
  %v9794 = vsub.f32 %v8063, %v9793
  %9795 = vmatpush.msra.mxu0 %v9794
  %v9796 = vand.u32 %v8460, 4294901760
  %v9797 = vsub.f32 %v8460, %v9796
  %9798 = vmatmul.f32.gmra.mxu0 %v9797
  %v9799 = vpop.f32.mrf.mxu0
  %v9800 = vadd.f32 %v9742, %v9799
  %v9801 = vand.u32 %v8462, 4294901760
  %v9802 = vsub.f32 %v8462, %v9801
  %9803 = vmatmul.f32.gmra.mxu0 %v9802
  %v9804 = vpop.f32.mrf.mxu0
  %v9805 = vadd.f32 %v9746, %v9804
  %9806 = vdwg.mxu0
  %v9807 = vand.u32 %v8399, 4294901760
  %9808 = vmatpush.msra.mxu0 %v9807
  %v9809 = vand.u32 %v8394, 4294901760
  %9810 = vmatpush.msra.mxu0 %v9809
  %v9811 = vand.u32 %v8353, 4294901760
  %9812 = vmatpush.msra.mxu0 %v9811
  %v9813 = vand.u32 %v8348, 4294901760
  %9814 = vmatpush.msra.mxu0 %v9813
  %v9815 = vand.u32 %v8307, 4294901760
  %9816 = vmatpush.msra.mxu0 %v9815
  %v9817 = vand.u32 %v8302, 4294901760
  %9818 = vmatpush.msra.mxu0 %v9817
  %v9819 = vand.u32 %v8261, 4294901760
  %9820 = vmatpush.msra.mxu0 %v9819
  %v9821 = vand.u32 %v8256, 4294901760
  %9822 = vmatpush.msra.mxu0 %v9821
  %v9823 = vand.u32 %v8215, 4294901760
  %9824 = vmatpush.msra.mxu0 %v9823
  %v9825 = vand.u32 %v8210, 4294901760
  %9826 = vmatpush.msra.mxu0 %v9825
  %v9827 = vand.u32 %v8169, 4294901760
  %9828 = vmatpush.msra.mxu0 %v9827
  %v9829 = vand.u32 %v8164, 4294901760
  %9830 = vmatpush.msra.mxu0 %v9829
  %v9831 = vand.u32 %v8123, 4294901760
  %9832 = vmatpush.msra.mxu0 %v9831
  %v9833 = vand.u32 %v8118, 4294901760
  %9834 = vmatpush.msra.mxu0 %v9833
  %v9835 = vand.u32 %v8068, 4294901760
  %9836 = vmatpush.msra.mxu0 %v9835
  %v9837 = vand.u32 %v8063, 4294901760
  %9838 = vmatpush.msra.mxu0 %v9837
  %v9839 = vand.u32 %v8460, 4294901760
  %v9840 = vsub.f32 %v8460, %v9839
  %v9841 = vand.u32 %v9840, 4294901760
  %9842 = vmatmul.f32.gmra.mxu0 %v9841
  %v9843 = vpop.f32.mrf.mxu0
  %v9844 = vadd.f32 %v9800, %v9843
  %v9845 = vand.u32 %v8462, 4294901760
  %v9846 = vsub.f32 %v8462, %v9845
  %v9847 = vand.u32 %v9846, 4294901760
  %9848 = vmatmul.f32.gmra.mxu0 %v9847
  %v9849 = vpop.f32.mrf.mxu0
  %v9850 = vadd.f32 %v9805, %v9849
  %9851 = vdwg.mxu0
  %v9852 = vand.u32 %v8399, 4294901760
  %v9853 = vsub.f32 %v8399, %v9852
  %v9854 = vand.u32 %v9853, 4294901760
  %9855 = vmatpush.msra.mxu0 %v9854
  %v9856 = vand.u32 %v8394, 4294901760
  %v9857 = vsub.f32 %v8394, %v9856
  %v9858 = vand.u32 %v9857, 4294901760
  %9859 = vmatpush.msra.mxu0 %v9858
  %v9860 = vand.u32 %v8353, 4294901760
  %v9861 = vsub.f32 %v8353, %v9860
  %v9862 = vand.u32 %v9861, 4294901760
  %9863 = vmatpush.msra.mxu0 %v9862
  %v9864 = vand.u32 %v8348, 4294901760
  %v9865 = vsub.f32 %v8348, %v9864
  %v9866 = vand.u32 %v9865, 4294901760
  %9867 = vmatpush.msra.mxu0 %v9866
  %v9868 = vand.u32 %v8307, 4294901760
  %v9869 = vsub.f32 %v8307, %v9868
  %v9870 = vand.u32 %v9869, 4294901760
  %9871 = vmatpush.msra.mxu0 %v9870
  %v9872 = vand.u32 %v8302, 4294901760
  %v9873 = vsub.f32 %v8302, %v9872
  %v9874 = vand.u32 %v9873, 4294901760
  %9875 = vmatpush.msra.mxu0 %v9874
  %v9876 = vand.u32 %v8261, 4294901760
  %v9877 = vsub.f32 %v8261, %v9876
  %v9878 = vand.u32 %v9877, 4294901760
  %9879 = vmatpush.msra.mxu0 %v9878
  %v9880 = vand.u32 %v8256, 4294901760
  %v9881 = vsub.f32 %v8256, %v9880
  %v9882 = vand.u32 %v9881, 4294901760
  %9883 = vmatpush.msra.mxu0 %v9882
  %v9884 = vand.u32 %v8215, 4294901760
  %v9885 = vsub.f32 %v8215, %v9884
  %v9886 = vand.u32 %v9885, 4294901760
  %9887 = vmatpush.msra.mxu0 %v9886
  %v9888 = vand.u32 %v8210, 4294901760
  %v9889 = vsub.f32 %v8210, %v9888
  %v9890 = vand.u32 %v9889, 4294901760
  %9891 = vmatpush.msra.mxu0 %v9890
  %v9892 = vand.u32 %v8169, 4294901760
  %v9893 = vsub.f32 %v8169, %v9892
  %v9894 = vand.u32 %v9893, 4294901760
  %9895 = vmatpush.msra.mxu0 %v9894
  %v9896 = vand.u32 %v8164, 4294901760
  %v9897 = vsub.f32 %v8164, %v9896
  %v9898 = vand.u32 %v9897, 4294901760
  %9899 = vmatpush.msra.mxu0 %v9898
  %v9900 = vand.u32 %v8123, 4294901760
  %v9901 = vsub.f32 %v8123, %v9900
  %v9902 = vand.u32 %v9901, 4294901760
  %9903 = vmatpush.msra.mxu0 %v9902
  %v9904 = vand.u32 %v8118, 4294901760
  %v9905 = vsub.f32 %v8118, %v9904
  %v9906 = vand.u32 %v9905, 4294901760
  %9907 = vmatpush.msra.mxu0 %v9906
  %v9908 = vand.u32 %v8068, 4294901760
  %v9909 = vsub.f32 %v8068, %v9908
  %v9910 = vand.u32 %v9909, 4294901760
  %9911 = vmatpush.msra.mxu0 %v9910
  %v9912 = vand.u32 %v8063, 4294901760
  %v9913 = vsub.f32 %v8063, %v9912
  %v9914 = vand.u32 %v9913, 4294901760
  %9915 = vmatpush.msra.mxu0 %v9914
  %v9916 = vand.u32 %v8460, 4294901760
  %9917 = vmatmul.f32.gmra.mxu0 %v9916
  %v9918 = vpop.f32.mrf.mxu0
  %v9919 = vadd.f32 %v9844, %v9918
  %v9920 = vand.u32 %v8462, 4294901760
  %9921 = vmatmul.f32.gmra.mxu0 %v9920
  %v9922 = vpop.f32.mrf.mxu0
  %v9923 = vadd.f32 %v9850, %v9922
  %9924 = vdwg.mxu0
  %v9925 = vand.u32 %v8399, 4294901760
  %9926 = vmatpush.msra.mxu0 %v9925
  %v9927 = vand.u32 %v8394, 4294901760
  %9928 = vmatpush.msra.mxu0 %v9927
  %v9929 = vand.u32 %v8353, 4294901760
  %9930 = vmatpush.msra.mxu0 %v9929
  %v9931 = vand.u32 %v8348, 4294901760
  %9932 = vmatpush.msra.mxu0 %v9931
  %v9933 = vand.u32 %v8307, 4294901760
  %9934 = vmatpush.msra.mxu0 %v9933
  %v9935 = vand.u32 %v8302, 4294901760
  %9936 = vmatpush.msra.mxu0 %v9935
  %v9937 = vand.u32 %v8261, 4294901760
  %9938 = vmatpush.msra.mxu0 %v9937
  %v9939 = vand.u32 %v8256, 4294901760
  %9940 = vmatpush.msra.mxu0 %v9939
  %v9941 = vand.u32 %v8215, 4294901760
  %9942 = vmatpush.msra.mxu0 %v9941
  %v9943 = vand.u32 %v8210, 4294901760
  %9944 = vmatpush.msra.mxu0 %v9943
  %v9945 = vand.u32 %v8169, 4294901760
  %9946 = vmatpush.msra.mxu0 %v9945
  %v9947 = vand.u32 %v8164, 4294901760
  %9948 = vmatpush.msra.mxu0 %v9947
  %v9949 = vand.u32 %v8123, 4294901760
  %9950 = vmatpush.msra.mxu0 %v9949
  %v9951 = vand.u32 %v8118, 4294901760
  %9952 = vmatpush.msra.mxu0 %v9951
  %v9953 = vand.u32 %v8068, 4294901760
  %9954 = vmatpush.msra.mxu0 %v9953
  %v9955 = vand.u32 %v8063, 4294901760
  %9956 = vmatpush.msra.mxu0 %v9955
  %v9957 = vand.u32 %v8460, 4294901760
  %9958 = vmatmul.f32.gmra.mxu0 %v9957
  %v9959 = vpop.f32.mrf.mxu0
  %v9960 = vadd.f32 %v9919, %v9959
  %v9961 = vand.u32 %v8462, 4294901760
  %9962 = vmatmul.f32.gmra.mxu0 %v9961
  %v9963 = vpop.f32.mrf.mxu0
  %v9964 = vadd.f32 %v9923, %v9963
  %9965 = vdwg.mxu0
  %9966 = vmatpush.msra.mxu0 0.0
  %9967 = vmatpush.msra.mxu0 0.0
  %9968 = vmatpush.msra.mxu0 0.0
  %9969 = vmatpush.msra.mxu0 0.0
  %9970 = vmatpush.msra.mxu0 0.0
  %9971 = vmatpush.msra.mxu0 0.0
  %9972 = vmatpush.msra.mxu0 0.0
  %9973 = vmatpush.msra.mxu0 0.0
  %9974 = vmatpush.msra.mxu0 0.0
  %9975 = vmatpush.msra.mxu0 0.0
  %9976 = vmatpush.msra.mxu0 0.0
  %9977 = vmatpush.msra.mxu0 0.0
  %9978 = vmatpush.msra.mxu0 0.0
  %9979 = vmatpush.msra.mxu0 0.0
  %v9980 = vand.u32 %v8445, 4294901760
  %9981 = vmatpush.msra.mxu0 %v9980
  %v9982 = vand.u32 %v8440, 4294901760
  %9983 = vmatpush.msra.mxu0 %v9982
  %v9984 = vand.u32 %v8465, 4294901760
  %v9985 = vsub.f32 %v8465, %v9984
  %v9986 = vand.u32 %v9985, 4294901760
  %v9987 = vsub.f32 %v9985, %v9986
  %v9988 = vand.u32 %v9987, 4294901760
  %9989 = vmatmul.f32.gmra.mxu0 %v9988
  %v9990 = vpop.f32.mrf.mxu0
  %v9991 = vadd.f32 %v9960, %v9990
  %v9992 = vand.u32 %v8468, 4294901760
  %v9993 = vsub.f32 %v8468, %v9992
  %v9994 = vand.u32 %v9993, 4294901760
  %v9995 = vsub.f32 %v9993, %v9994
  %v9996 = vand.u32 %v9995, 4294901760
  %9997 = vmatmul.f32.gmra.mxu0 %v9996
  %v9998 = vpop.f32.mrf.mxu0
  %v9999 = vadd.f32 %v9964, %v9998
  %10000 = vdwg.mxu0
  %10001 = vmatpush.msra.mxu0 0.0
  %10002 = vmatpush.msra.mxu0 0.0
  %10003 = vmatpush.msra.mxu0 0.0
  %10004 = vmatpush.msra.mxu0 0.0
  %10005 = vmatpush.msra.mxu0 0.0
  %10006 = vmatpush.msra.mxu0 0.0
  %10007 = vmatpush.msra.mxu0 0.0
  %10008 = vmatpush.msra.mxu0 0.0
  %10009 = vmatpush.msra.mxu0 0.0
  %10010 = vmatpush.msra.mxu0 0.0
  %10011 = vmatpush.msra.mxu0 0.0
  %10012 = vmatpush.msra.mxu0 0.0
  %10013 = vmatpush.msra.mxu0 0.0
  %10014 = vmatpush.msra.mxu0 0.0
  %v10015 = vand.u32 %v8445, 4294901760
  %v10016 = vsub.f32 %v8445, %v10015
  %v10017 = vand.u32 %v10016, 4294901760
  %v10018 = vsub.f32 %v10016, %v10017
  %v10019 = vand.u32 %v10018, 4294901760
  %10020 = vmatpush.msra.mxu0 %v10019
  %v10021 = vand.u32 %v8440, 4294901760
  %v10022 = vsub.f32 %v8440, %v10021
  %v10023 = vand.u32 %v10022, 4294901760
  %v10024 = vsub.f32 %v10022, %v10023
  %v10025 = vand.u32 %v10024, 4294901760
  %10026 = vmatpush.msra.mxu0 %v10025
  %v10027 = vand.u32 %v8465, 4294901760
  %10028 = vmatmul.f32.gmra.mxu0 %v10027
  %v10029 = vpop.f32.mrf.mxu0
  %v10030 = vadd.f32 %v9991, %v10029
  %v10031 = vand.u32 %v8468, 4294901760
  %10032 = vmatmul.f32.gmra.mxu0 %v10031
  %v10033 = vpop.f32.mrf.mxu0
  %v10034 = vadd.f32 %v9999, %v10033
  %10035 = vdwg.mxu0
  %10036 = vmatpush.msra.mxu0 0.0
  %10037 = vmatpush.msra.mxu0 0.0
  %10038 = vmatpush.msra.mxu0 0.0
  %10039 = vmatpush.msra.mxu0 0.0
  %10040 = vmatpush.msra.mxu0 0.0
  %10041 = vmatpush.msra.mxu0 0.0
  %10042 = vmatpush.msra.mxu0 0.0
  %10043 = vmatpush.msra.mxu0 0.0
  %10044 = vmatpush.msra.mxu0 0.0
  %10045 = vmatpush.msra.mxu0 0.0
  %10046 = vmatpush.msra.mxu0 0.0
  %10047 = vmatpush.msra.mxu0 0.0
  %10048 = vmatpush.msra.mxu0 0.0
  %10049 = vmatpush.msra.mxu0 0.0
  %v10050 = vand.u32 %v8445, 4294901760
  %v10051 = vsub.f32 %v8445, %v10050
  %10052 = vmatpush.msra.mxu0 %v10051
  %v10053 = vand.u32 %v8440, 4294901760
  %v10054 = vsub.f32 %v8440, %v10053
  %10055 = vmatpush.msra.mxu0 %v10054
  %v10056 = vand.u32 %v8465, 4294901760
  %v10057 = vsub.f32 %v8465, %v10056
  %10058 = vmatmul.f32.gmra.mxu0 %v10057
  %v10059 = vpop.f32.mrf.mxu0
  %v10060 = vadd.f32 %v10030, %v10059
  %v10061 = vand.u32 %v8468, 4294901760
  %v10062 = vsub.f32 %v8468, %v10061
  %10063 = vmatmul.f32.gmra.mxu0 %v10062
  %v10064 = vpop.f32.mrf.mxu0
  %v10065 = vadd.f32 %v10034, %v10064
  %10066 = vdwg.mxu0
  %10067 = vmatpush.msra.mxu0 0.0
  %10068 = vmatpush.msra.mxu0 0.0
  %10069 = vmatpush.msra.mxu0 0.0
  %10070 = vmatpush.msra.mxu0 0.0
  %10071 = vmatpush.msra.mxu0 0.0
  %10072 = vmatpush.msra.mxu0 0.0
  %10073 = vmatpush.msra.mxu0 0.0
  %10074 = vmatpush.msra.mxu0 0.0
  %10075 = vmatpush.msra.mxu0 0.0
  %10076 = vmatpush.msra.mxu0 0.0
  %10077 = vmatpush.msra.mxu0 0.0
  %10078 = vmatpush.msra.mxu0 0.0
  %10079 = vmatpush.msra.mxu0 0.0
  %10080 = vmatpush.msra.mxu0 0.0
  %v10081 = vand.u32 %v8445, 4294901760
  %10082 = vmatpush.msra.mxu0 %v10081
  %v10083 = vand.u32 %v8440, 4294901760
  %10084 = vmatpush.msra.mxu0 %v10083
  %v10085 = vand.u32 %v8465, 4294901760
  %v10086 = vsub.f32 %v8465, %v10085
  %v10087 = vand.u32 %v10086, 4294901760
  %10088 = vmatmul.f32.gmra.mxu0 %v10087
  %v10089 = vpop.f32.mrf.mxu0
  %v10090 = vadd.f32 %v10060, %v10089
  %v10091 = vand.u32 %v8468, 4294901760
  %v10092 = vsub.f32 %v8468, %v10091
  %v10093 = vand.u32 %v10092, 4294901760
  %10094 = vmatmul.f32.gmra.mxu0 %v10093
  %v10095 = vpop.f32.mrf.mxu0
  %v10096 = vadd.f32 %v10065, %v10095
  %10097 = vdwg.mxu0
  %10098 = vmatpush.msra.mxu0 0.0
  %10099 = vmatpush.msra.mxu0 0.0
  %10100 = vmatpush.msra.mxu0 0.0
  %10101 = vmatpush.msra.mxu0 0.0
  %10102 = vmatpush.msra.mxu0 0.0
  %10103 = vmatpush.msra.mxu0 0.0
  %10104 = vmatpush.msra.mxu0 0.0
  %10105 = vmatpush.msra.mxu0 0.0
  %10106 = vmatpush.msra.mxu0 0.0
  %10107 = vmatpush.msra.mxu0 0.0
  %10108 = vmatpush.msra.mxu0 0.0
  %10109 = vmatpush.msra.mxu0 0.0
  %10110 = vmatpush.msra.mxu0 0.0
  %10111 = vmatpush.msra.mxu0 0.0
  %v10112 = vand.u32 %v8445, 4294901760
  %v10113 = vsub.f32 %v8445, %v10112
  %v10114 = vand.u32 %v10113, 4294901760
  %10115 = vmatpush.msra.mxu0 %v10114
  %v10116 = vand.u32 %v8440, 4294901760
  %v10117 = vsub.f32 %v8440, %v10116
  %v10118 = vand.u32 %v10117, 4294901760
  %10119 = vmatpush.msra.mxu0 %v10118
  %v10120 = vand.u32 %v8465, 4294901760
  %10121 = vmatmul.f32.gmra.mxu0 %v10120
  %v10122 = vpop.f32.mrf.mxu0
  %v10123 = vadd.f32 %v10090, %v10122
  %v10124 = vand.u32 %v8468, 4294901760
  %10125 = vmatmul.f32.gmra.mxu0 %v10124
  %v10126 = vpop.f32.mrf.mxu0
  %v10127 = vadd.f32 %v10096, %v10126
  %10128 = vdwg.mxu0
  %10129 = vmatpush.msra.mxu0 0.0
  %10130 = vmatpush.msra.mxu0 0.0
  %10131 = vmatpush.msra.mxu0 0.0
  %10132 = vmatpush.msra.mxu0 0.0
  %10133 = vmatpush.msra.mxu0 0.0
  %10134 = vmatpush.msra.mxu0 0.0
  %10135 = vmatpush.msra.mxu0 0.0
  %10136 = vmatpush.msra.mxu0 0.0
  %10137 = vmatpush.msra.mxu0 0.0
  %10138 = vmatpush.msra.mxu0 0.0
  %10139 = vmatpush.msra.mxu0 0.0
  %10140 = vmatpush.msra.mxu0 0.0
  %10141 = vmatpush.msra.mxu0 0.0
  %10142 = vmatpush.msra.mxu0 0.0
  %v10143 = vand.u32 %v8445, 4294901760
  %10144 = vmatpush.msra.mxu0 %v10143
  %v10145 = vand.u32 %v8440, 4294901760
  %10146 = vmatpush.msra.mxu0 %v10145
  %v10147 = vand.u32 %v8465, 4294901760
  %10148 = vmatmul.f32.gmra.mxu0 %v10147
  %v10149 = vpop.f32.mrf.mxu0
  %v10150 = vadd.f32 %v10123, %v10149
  %v10151 = vand.u32 %v8468, 4294901760
  %10152 = vmatmul.f32.gmra.mxu0 %v10151
  %v10153 = vpop.f32.mrf.mxu0
  %v10154 = vadd.f32 %v10127, %v10153
  %10155 = vdwg.mxu0
  %v10156 = vand.u32 %v8400, 4294901760
  %10157 = vmatpush.msra.mxu0 %v10156
  %v10158 = vand.u32 %v8395, 4294901760
  %10159 = vmatpush.msra.mxu0 %v10158
  %v10160 = vand.u32 %v8354, 4294901760
  %10161 = vmatpush.msra.mxu0 %v10160
  %v10162 = vand.u32 %v8349, 4294901760
  %10163 = vmatpush.msra.mxu0 %v10162
  %v10164 = vand.u32 %v8308, 4294901760
  %10165 = vmatpush.msra.mxu0 %v10164
  %v10166 = vand.u32 %v8303, 4294901760
  %10167 = vmatpush.msra.mxu0 %v10166
  %v10168 = vand.u32 %v8262, 4294901760
  %10169 = vmatpush.msra.mxu0 %v10168
  %v10170 = vand.u32 %v8257, 4294901760
  %10171 = vmatpush.msra.mxu0 %v10170
  %v10172 = vand.u32 %v8216, 4294901760
  %10173 = vmatpush.msra.mxu0 %v10172
  %v10174 = vand.u32 %v8211, 4294901760
  %10175 = vmatpush.msra.mxu0 %v10174
  %v10176 = vand.u32 %v8170, 4294901760
  %10177 = vmatpush.msra.mxu0 %v10176
  %v10178 = vand.u32 %v8165, 4294901760
  %10179 = vmatpush.msra.mxu0 %v10178
  %v10180 = vand.u32 %v8124, 4294901760
  %10181 = vmatpush.msra.mxu0 %v10180
  %v10182 = vand.u32 %v8119, 4294901760
  %10183 = vmatpush.msra.mxu0 %v10182
  %v10184 = vand.u32 %v8069, 4294901760
  %10185 = vmatpush.msra.mxu0 %v10184
  %v10186 = vand.u32 %v8064, 4294901760
  %10187 = vmatpush.msra.mxu0 %v10186
  %v10188 = vand.u32 %v8460, 4294901760
  %v10189 = vsub.f32 %v8460, %v10188
  %v10190 = vand.u32 %v10189, 4294901760
  %v10191 = vsub.f32 %v10189, %v10190
  %v10192 = vand.u32 %v10191, 4294901760
  %10193 = vmatmul.f32.gmra.mxu0 %v10192
  %v10194 = vpop.f32.mrf.mxu0
  %v10195 = vadd.f32 0.0, %v10194
  %v10196 = vand.u32 %v8462, 4294901760
  %v10197 = vsub.f32 %v8462, %v10196
  %v10198 = vand.u32 %v10197, 4294901760
  %v10199 = vsub.f32 %v10197, %v10198
  %v10200 = vand.u32 %v10199, 4294901760
  %10201 = vmatmul.f32.gmra.mxu0 %v10200
  %v10202 = vpop.f32.mrf.mxu0
  %v10203 = vadd.f32 0.0, %v10202
  %10204 = vdwg.mxu0
  %v10205 = vand.u32 %v8400, 4294901760
  %v10206 = vsub.f32 %v8400, %v10205
  %v10207 = vand.u32 %v10206, 4294901760
  %v10208 = vsub.f32 %v10206, %v10207
  %v10209 = vand.u32 %v10208, 4294901760
  %10210 = vmatpush.msra.mxu0 %v10209
  %v10211 = vand.u32 %v8395, 4294901760
  %v10212 = vsub.f32 %v8395, %v10211
  %v10213 = vand.u32 %v10212, 4294901760
  %v10214 = vsub.f32 %v10212, %v10213
  %v10215 = vand.u32 %v10214, 4294901760
  %10216 = vmatpush.msra.mxu0 %v10215
  %v10217 = vand.u32 %v8354, 4294901760
  %v10218 = vsub.f32 %v8354, %v10217
  %v10219 = vand.u32 %v10218, 4294901760
  %v10220 = vsub.f32 %v10218, %v10219
  %v10221 = vand.u32 %v10220, 4294901760
  %10222 = vmatpush.msra.mxu0 %v10221
  %v10223 = vand.u32 %v8349, 4294901760
  %v10224 = vsub.f32 %v8349, %v10223
  %v10225 = vand.u32 %v10224, 4294901760
  %v10226 = vsub.f32 %v10224, %v10225
  %v10227 = vand.u32 %v10226, 4294901760
  %10228 = vmatpush.msra.mxu0 %v10227
  %v10229 = vand.u32 %v8308, 4294901760
  %v10230 = vsub.f32 %v8308, %v10229
  %v10231 = vand.u32 %v10230, 4294901760
  %v10232 = vsub.f32 %v10230, %v10231
  %v10233 = vand.u32 %v10232, 4294901760
  %10234 = vmatpush.msra.mxu0 %v10233
  %v10235 = vand.u32 %v8303, 4294901760
  %v10236 = vsub.f32 %v8303, %v10235
  %v10237 = vand.u32 %v10236, 4294901760
  %v10238 = vsub.f32 %v10236, %v10237
  %v10239 = vand.u32 %v10238, 4294901760
  %10240 = vmatpush.msra.mxu0 %v10239
  %v10241 = vand.u32 %v8262, 4294901760
  %v10242 = vsub.f32 %v8262, %v10241
  %v10243 = vand.u32 %v10242, 4294901760
  %v10244 = vsub.f32 %v10242, %v10243
  %v10245 = vand.u32 %v10244, 4294901760
  %10246 = vmatpush.msra.mxu0 %v10245
  %v10247 = vand.u32 %v8257, 4294901760
  %v10248 = vsub.f32 %v8257, %v10247
  %v10249 = vand.u32 %v10248, 4294901760
  %v10250 = vsub.f32 %v10248, %v10249
  %v10251 = vand.u32 %v10250, 4294901760
  %10252 = vmatpush.msra.mxu0 %v10251
  %v10253 = vand.u32 %v8216, 4294901760
  %v10254 = vsub.f32 %v8216, %v10253
  %v10255 = vand.u32 %v10254, 4294901760
  %v10256 = vsub.f32 %v10254, %v10255
  %v10257 = vand.u32 %v10256, 4294901760
  %10258 = vmatpush.msra.mxu0 %v10257
  %v10259 = vand.u32 %v8211, 4294901760
  %v10260 = vsub.f32 %v8211, %v10259
  %v10261 = vand.u32 %v10260, 4294901760
  %v10262 = vsub.f32 %v10260, %v10261
  %v10263 = vand.u32 %v10262, 4294901760
  %10264 = vmatpush.msra.mxu0 %v10263
  %v10265 = vand.u32 %v8170, 4294901760
  %v10266 = vsub.f32 %v8170, %v10265
  %v10267 = vand.u32 %v10266, 4294901760
  %v10268 = vsub.f32 %v10266, %v10267
  %v10269 = vand.u32 %v10268, 4294901760
  %10270 = vmatpush.msra.mxu0 %v10269
  %v10271 = vand.u32 %v8165, 4294901760
  %v10272 = vsub.f32 %v8165, %v10271
  %v10273 = vand.u32 %v10272, 4294901760
  %v10274 = vsub.f32 %v10272, %v10273
  %v10275 = vand.u32 %v10274, 4294901760
  %10276 = vmatpush.msra.mxu0 %v10275
  %v10277 = vand.u32 %v8124, 4294901760
  %v10278 = vsub.f32 %v8124, %v10277
  %v10279 = vand.u32 %v10278, 4294901760
  %v10280 = vsub.f32 %v10278, %v10279
  %v10281 = vand.u32 %v10280, 4294901760
  %10282 = vmatpush.msra.mxu0 %v10281
  %v10283 = vand.u32 %v8119, 4294901760
  %v10284 = vsub.f32 %v8119, %v10283
  %v10285 = vand.u32 %v10284, 4294901760
  %v10286 = vsub.f32 %v10284, %v10285
  %v10287 = vand.u32 %v10286, 4294901760
  %10288 = vmatpush.msra.mxu0 %v10287
  %v10289 = vand.u32 %v8069, 4294901760
  %v10290 = vsub.f32 %v8069, %v10289
  %v10291 = vand.u32 %v10290, 4294901760
  %v10292 = vsub.f32 %v10290, %v10291
  %v10293 = vand.u32 %v10292, 4294901760
  %10294 = vmatpush.msra.mxu0 %v10293
  %v10295 = vand.u32 %v8064, 4294901760
  %v10296 = vsub.f32 %v8064, %v10295
  %v10297 = vand.u32 %v10296, 4294901760
  %v10298 = vsub.f32 %v10296, %v10297
  %v10299 = vand.u32 %v10298, 4294901760
  %10300 = vmatpush.msra.mxu0 %v10299
  %v10301 = vand.u32 %v8460, 4294901760
  %10302 = vmatmul.f32.gmra.mxu0 %v10301
  %v10303 = vpop.f32.mrf.mxu0
  %v10304 = vadd.f32 %v10195, %v10303
  %v10305 = vand.u32 %v8462, 4294901760
  %10306 = vmatmul.f32.gmra.mxu0 %v10305
  %v10307 = vpop.f32.mrf.mxu0
  %v10308 = vadd.f32 %v10203, %v10307
  %10309 = vdwg.mxu0
  %v10310 = vand.u32 %v8400, 4294901760
  %v10311 = vsub.f32 %v8400, %v10310
  %10312 = vmatpush.msra.mxu0 %v10311
  %v10313 = vand.u32 %v8395, 4294901760
  %v10314 = vsub.f32 %v8395, %v10313
  %10315 = vmatpush.msra.mxu0 %v10314
  %v10316 = vand.u32 %v8354, 4294901760
  %v10317 = vsub.f32 %v8354, %v10316
  %10318 = vmatpush.msra.mxu0 %v10317
  %v10319 = vand.u32 %v8349, 4294901760
  %v10320 = vsub.f32 %v8349, %v10319
  %10321 = vmatpush.msra.mxu0 %v10320
  %v10322 = vand.u32 %v8308, 4294901760
  %v10323 = vsub.f32 %v8308, %v10322
  %10324 = vmatpush.msra.mxu0 %v10323
  %v10325 = vand.u32 %v8303, 4294901760
  %v10326 = vsub.f32 %v8303, %v10325
  %10327 = vmatpush.msra.mxu0 %v10326
  %v10328 = vand.u32 %v8262, 4294901760
  %v10329 = vsub.f32 %v8262, %v10328
  %10330 = vmatpush.msra.mxu0 %v10329
  %v10331 = vand.u32 %v8257, 4294901760
  %v10332 = vsub.f32 %v8257, %v10331
  %10333 = vmatpush.msra.mxu0 %v10332
  %v10334 = vand.u32 %v8216, 4294901760
  %v10335 = vsub.f32 %v8216, %v10334
  %10336 = vmatpush.msra.mxu0 %v10335
  %v10337 = vand.u32 %v8211, 4294901760
  %v10338 = vsub.f32 %v8211, %v10337
  %10339 = vmatpush.msra.mxu0 %v10338
  %v10340 = vand.u32 %v8170, 4294901760
  %v10341 = vsub.f32 %v8170, %v10340
  %10342 = vmatpush.msra.mxu0 %v10341
  %v10343 = vand.u32 %v8165, 4294901760
  %v10344 = vsub.f32 %v8165, %v10343
  %10345 = vmatpush.msra.mxu0 %v10344
  %v10346 = vand.u32 %v8124, 4294901760
  %v10347 = vsub.f32 %v8124, %v10346
  %10348 = vmatpush.msra.mxu0 %v10347
  %v10349 = vand.u32 %v8119, 4294901760
  %v10350 = vsub.f32 %v8119, %v10349
  %10351 = vmatpush.msra.mxu0 %v10350
  %v10352 = vand.u32 %v8069, 4294901760
  %v10353 = vsub.f32 %v8069, %v10352
  %10354 = vmatpush.msra.mxu0 %v10353
  %v10355 = vand.u32 %v8064, 4294901760
  %v10356 = vsub.f32 %v8064, %v10355
  %10357 = vmatpush.msra.mxu0 %v10356
  %v10358 = vand.u32 %v8460, 4294901760
  %v10359 = vsub.f32 %v8460, %v10358
  %10360 = vmatmul.f32.gmra.mxu0 %v10359
  %v10361 = vpop.f32.mrf.mxu0
  %v10362 = vadd.f32 %v10304, %v10361
  %v10363 = vand.u32 %v8462, 4294901760
  %v10364 = vsub.f32 %v8462, %v10363
  %10365 = vmatmul.f32.gmra.mxu0 %v10364
  %v10366 = vpop.f32.mrf.mxu0
  %v10367 = vadd.f32 %v10308, %v10366
  %10368 = vdwg.mxu0
  %v10369 = vand.u32 %v8400, 4294901760
  %10370 = vmatpush.msra.mxu0 %v10369
  %v10371 = vand.u32 %v8395, 4294901760
  %10372 = vmatpush.msra.mxu0 %v10371
  %v10373 = vand.u32 %v8354, 4294901760
  %10374 = vmatpush.msra.mxu0 %v10373
  %v10375 = vand.u32 %v8349, 4294901760
  %10376 = vmatpush.msra.mxu0 %v10375
  %v10377 = vand.u32 %v8308, 4294901760
  %10378 = vmatpush.msra.mxu0 %v10377
  %v10379 = vand.u32 %v8303, 4294901760
  %10380 = vmatpush.msra.mxu0 %v10379
  %v10381 = vand.u32 %v8262, 4294901760
  %10382 = vmatpush.msra.mxu0 %v10381
  %v10383 = vand.u32 %v8257, 4294901760
  %10384 = vmatpush.msra.mxu0 %v10383
  %v10385 = vand.u32 %v8216, 4294901760
  %10386 = vmatpush.msra.mxu0 %v10385
  %v10387 = vand.u32 %v8211, 4294901760
  %10388 = vmatpush.msra.mxu0 %v10387
  %v10389 = vand.u32 %v8170, 4294901760
  %10390 = vmatpush.msra.mxu0 %v10389
  %v10391 = vand.u32 %v8165, 4294901760
  %10392 = vmatpush.msra.mxu0 %v10391
  %v10393 = vand.u32 %v8124, 4294901760
  %10394 = vmatpush.msra.mxu0 %v10393
  %v10395 = vand.u32 %v8119, 4294901760
  %10396 = vmatpush.msra.mxu0 %v10395
  %v10397 = vand.u32 %v8069, 4294901760
  %10398 = vmatpush.msra.mxu0 %v10397
  %v10399 = vand.u32 %v8064, 4294901760
  %10400 = vmatpush.msra.mxu0 %v10399
  %v10401 = vand.u32 %v8460, 4294901760
  %v10402 = vsub.f32 %v8460, %v10401
  %v10403 = vand.u32 %v10402, 4294901760
  %10404 = vmatmul.f32.gmra.mxu0 %v10403
  %v10405 = vpop.f32.mrf.mxu0
  %v10406 = vadd.f32 %v10362, %v10405
  %v10407 = vand.u32 %v8462, 4294901760
  %v10408 = vsub.f32 %v8462, %v10407
  %v10409 = vand.u32 %v10408, 4294901760
  %10410 = vmatmul.f32.gmra.mxu0 %v10409
  %v10411 = vpop.f32.mrf.mxu0
  %v10412 = vadd.f32 %v10367, %v10411
  %10413 = vdwg.mxu0
  %v10414 = vand.u32 %v8400, 4294901760
  %v10415 = vsub.f32 %v8400, %v10414
  %v10416 = vand.u32 %v10415, 4294901760
  %10417 = vmatpush.msra.mxu0 %v10416
  %v10418 = vand.u32 %v8395, 4294901760
  %v10419 = vsub.f32 %v8395, %v10418
  %v10420 = vand.u32 %v10419, 4294901760
  %10421 = vmatpush.msra.mxu0 %v10420
  %v10422 = vand.u32 %v8354, 4294901760
  %v10423 = vsub.f32 %v8354, %v10422
  %v10424 = vand.u32 %v10423, 4294901760
  %10425 = vmatpush.msra.mxu0 %v10424
  %v10426 = vand.u32 %v8349, 4294901760
  %v10427 = vsub.f32 %v8349, %v10426
  %v10428 = vand.u32 %v10427, 4294901760
  %10429 = vmatpush.msra.mxu0 %v10428
  %v10430 = vand.u32 %v8308, 4294901760
  %v10431 = vsub.f32 %v8308, %v10430
  %v10432 = vand.u32 %v10431, 4294901760
  %10433 = vmatpush.msra.mxu0 %v10432
  %v10434 = vand.u32 %v8303, 4294901760
  %v10435 = vsub.f32 %v8303, %v10434
  %v10436 = vand.u32 %v10435, 4294901760
  %10437 = vmatpush.msra.mxu0 %v10436
  %v10438 = vand.u32 %v8262, 4294901760
  %v10439 = vsub.f32 %v8262, %v10438
  %v10440 = vand.u32 %v10439, 4294901760
  %10441 = vmatpush.msra.mxu0 %v10440
  %v10442 = vand.u32 %v8257, 4294901760
  %v10443 = vsub.f32 %v8257, %v10442
  %v10444 = vand.u32 %v10443, 4294901760
  %10445 = vmatpush.msra.mxu0 %v10444
  %v10446 = vand.u32 %v8216, 4294901760
  %v10447 = vsub.f32 %v8216, %v10446
  %v10448 = vand.u32 %v10447, 4294901760
  %10449 = vmatpush.msra.mxu0 %v10448
  %v10450 = vand.u32 %v8211, 4294901760
  %v10451 = vsub.f32 %v8211, %v10450
  %v10452 = vand.u32 %v10451, 4294901760
  %10453 = vmatpush.msra.mxu0 %v10452
  %v10454 = vand.u32 %v8170, 4294901760
  %v10455 = vsub.f32 %v8170, %v10454
  %v10456 = vand.u32 %v10455, 4294901760
  %10457 = vmatpush.msra.mxu0 %v10456
  %v10458 = vand.u32 %v8165, 4294901760
  %v10459 = vsub.f32 %v8165, %v10458
  %v10460 = vand.u32 %v10459, 4294901760
  %10461 = vmatpush.msra.mxu0 %v10460
  %v10462 = vand.u32 %v8124, 4294901760
  %v10463 = vsub.f32 %v8124, %v10462
  %v10464 = vand.u32 %v10463, 4294901760
  %10465 = vmatpush.msra.mxu0 %v10464
  %v10466 = vand.u32 %v8119, 4294901760
  %v10467 = vsub.f32 %v8119, %v10466
  %v10468 = vand.u32 %v10467, 4294901760
  %10469 = vmatpush.msra.mxu0 %v10468
  %v10470 = vand.u32 %v8069, 4294901760
  %v10471 = vsub.f32 %v8069, %v10470
  %v10472 = vand.u32 %v10471, 4294901760
  %10473 = vmatpush.msra.mxu0 %v10472
  %v10474 = vand.u32 %v8064, 4294901760
  %v10475 = vsub.f32 %v8064, %v10474
  %v10476 = vand.u32 %v10475, 4294901760
  %10477 = vmatpush.msra.mxu0 %v10476
  %v10478 = vand.u32 %v8460, 4294901760
  %10479 = vmatmul.f32.gmra.mxu0 %v10478
  %v10480 = vpop.f32.mrf.mxu0
  %v10481 = vadd.f32 %v10406, %v10480
  %v10482 = vand.u32 %v8462, 4294901760
  %10483 = vmatmul.f32.gmra.mxu0 %v10482
  %v10484 = vpop.f32.mrf.mxu0
  %v10485 = vadd.f32 %v10412, %v10484
  %10486 = vdwg.mxu0
  %v10487 = vand.u32 %v8400, 4294901760
  %10488 = vmatpush.msra.mxu0 %v10487
  %v10489 = vand.u32 %v8395, 4294901760
  %10490 = vmatpush.msra.mxu0 %v10489
  %v10491 = vand.u32 %v8354, 4294901760
  %10492 = vmatpush.msra.mxu0 %v10491
  %v10493 = vand.u32 %v8349, 4294901760
  %10494 = vmatpush.msra.mxu0 %v10493
  %v10495 = vand.u32 %v8308, 4294901760
  %10496 = vmatpush.msra.mxu0 %v10495
  %v10497 = vand.u32 %v8303, 4294901760
  %10498 = vmatpush.msra.mxu0 %v10497
  %v10499 = vand.u32 %v8262, 4294901760
  %10500 = vmatpush.msra.mxu0 %v10499
  %v10501 = vand.u32 %v8257, 4294901760
  %10502 = vmatpush.msra.mxu0 %v10501
  %v10503 = vand.u32 %v8216, 4294901760
  %10504 = vmatpush.msra.mxu0 %v10503
  %v10505 = vand.u32 %v8211, 4294901760
  %10506 = vmatpush.msra.mxu0 %v10505
  %v10507 = vand.u32 %v8170, 4294901760
  %10508 = vmatpush.msra.mxu0 %v10507
  %v10509 = vand.u32 %v8165, 4294901760
  %10510 = vmatpush.msra.mxu0 %v10509
  %v10511 = vand.u32 %v8124, 4294901760
  %10512 = vmatpush.msra.mxu0 %v10511
  %v10513 = vand.u32 %v8119, 4294901760
  %10514 = vmatpush.msra.mxu0 %v10513
  %v10515 = vand.u32 %v8069, 4294901760
  %10516 = vmatpush.msra.mxu0 %v10515
  %v10517 = vand.u32 %v8064, 4294901760
  %10518 = vmatpush.msra.mxu0 %v10517
  %v10519 = vand.u32 %v8460, 4294901760
  %10520 = vmatmul.f32.gmra.mxu0 %v10519
  %v10521 = vpop.f32.mrf.mxu0
  %v10522 = vadd.f32 %v10481, %v10521
  %v10523 = vand.u32 %v8462, 4294901760
  %10524 = vmatmul.f32.gmra.mxu0 %v10523
  %v10525 = vpop.f32.mrf.mxu0
  %v10526 = vadd.f32 %v10485, %v10525
  %10527 = vdwg.mxu0
  %10528 = vmatpush.msra.mxu0 0.0
  %10529 = vmatpush.msra.mxu0 0.0
  %10530 = vmatpush.msra.mxu0 0.0
  %10531 = vmatpush.msra.mxu0 0.0
  %10532 = vmatpush.msra.mxu0 0.0
  %10533 = vmatpush.msra.mxu0 0.0
  %10534 = vmatpush.msra.mxu0 0.0
  %10535 = vmatpush.msra.mxu0 0.0
  %10536 = vmatpush.msra.mxu0 0.0
  %10537 = vmatpush.msra.mxu0 0.0
  %10538 = vmatpush.msra.mxu0 0.0
  %10539 = vmatpush.msra.mxu0 0.0
  %10540 = vmatpush.msra.mxu0 0.0
  %10541 = vmatpush.msra.mxu0 0.0
  %v10542 = vand.u32 %v8446, 4294901760
  %10543 = vmatpush.msra.mxu0 %v10542
  %v10544 = vand.u32 %v8441, 4294901760
  %10545 = vmatpush.msra.mxu0 %v10544
  %v10546 = vand.u32 %v8465, 4294901760
  %v10547 = vsub.f32 %v8465, %v10546
  %v10548 = vand.u32 %v10547, 4294901760
  %v10549 = vsub.f32 %v10547, %v10548
  %v10550 = vand.u32 %v10549, 4294901760
  %10551 = vmatmul.f32.gmra.mxu0 %v10550
  %v10552 = vpop.f32.mrf.mxu0
  %v10553 = vadd.f32 %v10522, %v10552
  %v10554 = vand.u32 %v8468, 4294901760
  %v10555 = vsub.f32 %v8468, %v10554
  %v10556 = vand.u32 %v10555, 4294901760
  %v10557 = vsub.f32 %v10555, %v10556
  %v10558 = vand.u32 %v10557, 4294901760
  %10559 = vmatmul.f32.gmra.mxu0 %v10558
  %v10560 = vpop.f32.mrf.mxu0
  %v10561 = vadd.f32 %v10526, %v10560
  %10562 = vdwg.mxu0
  %10563 = vmatpush.msra.mxu0 0.0
  %10564 = vmatpush.msra.mxu0 0.0
  %10565 = vmatpush.msra.mxu0 0.0
  %10566 = vmatpush.msra.mxu0 0.0
  %10567 = vmatpush.msra.mxu0 0.0
  %10568 = vmatpush.msra.mxu0 0.0
  %10569 = vmatpush.msra.mxu0 0.0
  %10570 = vmatpush.msra.mxu0 0.0
  %10571 = vmatpush.msra.mxu0 0.0
  %10572 = vmatpush.msra.mxu0 0.0
  %10573 = vmatpush.msra.mxu0 0.0
  %10574 = vmatpush.msra.mxu0 0.0
  %10575 = vmatpush.msra.mxu0 0.0
  %10576 = vmatpush.msra.mxu0 0.0
  %v10577 = vand.u32 %v8446, 4294901760
  %v10578 = vsub.f32 %v8446, %v10577
  %v10579 = vand.u32 %v10578, 4294901760
  %v10580 = vsub.f32 %v10578, %v10579
  %v10581 = vand.u32 %v10580, 4294901760
  %10582 = vmatpush.msra.mxu0 %v10581
  %v10583 = vand.u32 %v8441, 4294901760
  %v10584 = vsub.f32 %v8441, %v10583
  %v10585 = vand.u32 %v10584, 4294901760
  %v10586 = vsub.f32 %v10584, %v10585
  %v10587 = vand.u32 %v10586, 4294901760
  %10588 = vmatpush.msra.mxu0 %v10587
  %v10589 = vand.u32 %v8465, 4294901760
  %10590 = vmatmul.f32.gmra.mxu0 %v10589
  %v10591 = vpop.f32.mrf.mxu0
  %v10592 = vadd.f32 %v10553, %v10591
  %v10593 = vand.u32 %v8468, 4294901760
  %10594 = vmatmul.f32.gmra.mxu0 %v10593
  %v10595 = vpop.f32.mrf.mxu0
  %v10596 = vadd.f32 %v10561, %v10595
  %10597 = vdwg.mxu0
  %10598 = vmatpush.msra.mxu0 0.0
  %10599 = vmatpush.msra.mxu0 0.0
  %10600 = vmatpush.msra.mxu0 0.0
  %10601 = vmatpush.msra.mxu0 0.0
  %10602 = vmatpush.msra.mxu0 0.0
  %10603 = vmatpush.msra.mxu0 0.0
  %10604 = vmatpush.msra.mxu0 0.0
  %10605 = vmatpush.msra.mxu0 0.0
  %10606 = vmatpush.msra.mxu0 0.0
  %10607 = vmatpush.msra.mxu0 0.0
  %10608 = vmatpush.msra.mxu0 0.0
  %10609 = vmatpush.msra.mxu0 0.0
  %10610 = vmatpush.msra.mxu0 0.0
  %10611 = vmatpush.msra.mxu0 0.0
  %v10612 = vand.u32 %v8446, 4294901760
  %v10613 = vsub.f32 %v8446, %v10612
  %10614 = vmatpush.msra.mxu0 %v10613
  %v10615 = vand.u32 %v8441, 4294901760
  %v10616 = vsub.f32 %v8441, %v10615
  %10617 = vmatpush.msra.mxu0 %v10616
  %v10618 = vand.u32 %v8465, 4294901760
  %v10619 = vsub.f32 %v8465, %v10618
  %10620 = vmatmul.f32.gmra.mxu0 %v10619
  %v10621 = vpop.f32.mrf.mxu0
  %v10622 = vadd.f32 %v10592, %v10621
  %v10623 = vand.u32 %v8468, 4294901760
  %v10624 = vsub.f32 %v8468, %v10623
  %10625 = vmatmul.f32.gmra.mxu0 %v10624
  %v10626 = vpop.f32.mrf.mxu0
  %v10627 = vadd.f32 %v10596, %v10626
  %10628 = vdwg.mxu0
  %10629 = vmatpush.msra.mxu0 0.0
  %10630 = vmatpush.msra.mxu0 0.0
  %10631 = vmatpush.msra.mxu0 0.0
  %10632 = vmatpush.msra.mxu0 0.0
  %10633 = vmatpush.msra.mxu0 0.0
  %10634 = vmatpush.msra.mxu0 0.0
  %10635 = vmatpush.msra.mxu0 0.0
  %10636 = vmatpush.msra.mxu0 0.0
  %10637 = vmatpush.msra.mxu0 0.0
  %10638 = vmatpush.msra.mxu0 0.0
  %10639 = vmatpush.msra.mxu0 0.0
  %10640 = vmatpush.msra.mxu0 0.0
  %10641 = vmatpush.msra.mxu0 0.0
  %10642 = vmatpush.msra.mxu0 0.0
  %v10643 = vand.u32 %v8446, 4294901760
  %10644 = vmatpush.msra.mxu0 %v10643
  %v10645 = vand.u32 %v8441, 4294901760
  %10646 = vmatpush.msra.mxu0 %v10645
  %v10647 = vand.u32 %v8465, 4294901760
  %v10648 = vsub.f32 %v8465, %v10647
  %v10649 = vand.u32 %v10648, 4294901760
  %10650 = vmatmul.f32.gmra.mxu0 %v10649
  %v10651 = vpop.f32.mrf.mxu0
  %v10652 = vadd.f32 %v10622, %v10651
  %v10653 = vand.u32 %v8468, 4294901760
  %v10654 = vsub.f32 %v8468, %v10653
  %v10655 = vand.u32 %v10654, 4294901760
  %10656 = vmatmul.f32.gmra.mxu0 %v10655
  %v10657 = vpop.f32.mrf.mxu0
  %v10658 = vadd.f32 %v10627, %v10657
  %10659 = vdwg.mxu0
  %10660 = vmatpush.msra.mxu0 0.0
  %10661 = vmatpush.msra.mxu0 0.0
  %10662 = vmatpush.msra.mxu0 0.0
  %10663 = vmatpush.msra.mxu0 0.0
  %10664 = vmatpush.msra.mxu0 0.0
  %10665 = vmatpush.msra.mxu0 0.0
  %10666 = vmatpush.msra.mxu0 0.0
  %10667 = vmatpush.msra.mxu0 0.0
  %10668 = vmatpush.msra.mxu0 0.0
  %10669 = vmatpush.msra.mxu0 0.0
  %10670 = vmatpush.msra.mxu0 0.0
  %10671 = vmatpush.msra.mxu0 0.0
  %10672 = vmatpush.msra.mxu0 0.0
  %10673 = vmatpush.msra.mxu0 0.0
  %v10674 = vand.u32 %v8446, 4294901760
  %v10675 = vsub.f32 %v8446, %v10674
  %v10676 = vand.u32 %v10675, 4294901760
  %10677 = vmatpush.msra.mxu0 %v10676
  %v10678 = vand.u32 %v8441, 4294901760
  %v10679 = vsub.f32 %v8441, %v10678
  %v10680 = vand.u32 %v10679, 4294901760
  %10681 = vmatpush.msra.mxu0 %v10680
  %v10682 = vand.u32 %v8465, 4294901760
  %10683 = vmatmul.f32.gmra.mxu0 %v10682
  %v10684 = vpop.f32.mrf.mxu0
  %v10685 = vadd.f32 %v10652, %v10684
  %v10686 = vand.u32 %v8468, 4294901760
  %10687 = vmatmul.f32.gmra.mxu0 %v10686
  %v10688 = vpop.f32.mrf.mxu0
  %v10689 = vadd.f32 %v10658, %v10688
  %10690 = vdwg.mxu0
  %10691 = vmatpush.msra.mxu0 0.0
  %10692 = vmatpush.msra.mxu0 0.0
  %10693 = vmatpush.msra.mxu0 0.0
  %10694 = vmatpush.msra.mxu0 0.0
  %10695 = vmatpush.msra.mxu0 0.0
  %10696 = vmatpush.msra.mxu0 0.0
  %10697 = vmatpush.msra.mxu0 0.0
  %10698 = vmatpush.msra.mxu0 0.0
  %10699 = vmatpush.msra.mxu0 0.0
  %10700 = vmatpush.msra.mxu0 0.0
  %10701 = vmatpush.msra.mxu0 0.0
  %10702 = vmatpush.msra.mxu0 0.0
  %10703 = vmatpush.msra.mxu0 0.0
  %10704 = vmatpush.msra.mxu0 0.0
  %v10705 = vand.u32 %v8446, 4294901760
  %10706 = vmatpush.msra.mxu0 %v10705
  %v10707 = vand.u32 %v8441, 4294901760
  %10708 = vmatpush.msra.mxu0 %v10707
  %v10709 = vand.u32 %v8465, 4294901760
  %10710 = vmatmul.f32.gmra.mxu0 %v10709
  %v10711 = vpop.f32.mrf.mxu0
  %v10712 = vadd.f32 %v10685, %v10711
  %v10713 = vand.u32 %v8468, 4294901760
  %10714 = vmatmul.f32.gmra.mxu0 %v10713
  %v10715 = vpop.f32.mrf.mxu0
  %v10716 = vadd.f32 %v10689, %v10715
  %10717 = vdwg.mxu0
  %v10718 = vand.u32 %v8401, 4294901760
  %10719 = vmatpush.msra.mxu0 %v10718
  %v10720 = vand.u32 %v8396, 4294901760
  %10721 = vmatpush.msra.mxu0 %v10720
  %v10722 = vand.u32 %v8355, 4294901760
  %10723 = vmatpush.msra.mxu0 %v10722
  %v10724 = vand.u32 %v8350, 4294901760
  %10725 = vmatpush.msra.mxu0 %v10724
  %v10726 = vand.u32 %v8309, 4294901760
  %10727 = vmatpush.msra.mxu0 %v10726
  %v10728 = vand.u32 %v8304, 4294901760
  %10729 = vmatpush.msra.mxu0 %v10728
  %v10730 = vand.u32 %v8263, 4294901760
  %10731 = vmatpush.msra.mxu0 %v10730
  %v10732 = vand.u32 %v8258, 4294901760
  %10733 = vmatpush.msra.mxu0 %v10732
  %v10734 = vand.u32 %v8217, 4294901760
  %10735 = vmatpush.msra.mxu0 %v10734
  %v10736 = vand.u32 %v8212, 4294901760
  %10737 = vmatpush.msra.mxu0 %v10736
  %v10738 = vand.u32 %v8171, 4294901760
  %10739 = vmatpush.msra.mxu0 %v10738
  %v10740 = vand.u32 %v8166, 4294901760
  %10741 = vmatpush.msra.mxu0 %v10740
  %v10742 = vand.u32 %v8125, 4294901760
  %10743 = vmatpush.msra.mxu0 %v10742
  %v10744 = vand.u32 %v8120, 4294901760
  %10745 = vmatpush.msra.mxu0 %v10744
  %v10746 = vand.u32 %v8070, 4294901760
  %10747 = vmatpush.msra.mxu0 %v10746
  %v10748 = vand.u32 %v8065, 4294901760
  %10749 = vmatpush.msra.mxu0 %v10748
  %v10750 = vand.u32 %v8460, 4294901760
  %v10751 = vsub.f32 %v8460, %v10750
  %v10752 = vand.u32 %v10751, 4294901760
  %v10753 = vsub.f32 %v10751, %v10752
  %v10754 = vand.u32 %v10753, 4294901760
  %10755 = vmatmul.f32.gmra.mxu0 %v10754
  %v10756 = vpop.f32.mrf.mxu0
  %v10757 = vadd.f32 0.0, %v10756
  %v10758 = vand.u32 %v8462, 4294901760
  %v10759 = vsub.f32 %v8462, %v10758
  %v10760 = vand.u32 %v10759, 4294901760
  %v10761 = vsub.f32 %v10759, %v10760
  %v10762 = vand.u32 %v10761, 4294901760
  %10763 = vmatmul.f32.gmra.mxu0 %v10762
  %v10764 = vpop.f32.mrf.mxu0
  %v10765 = vadd.f32 0.0, %v10764
  %10766 = vdwg.mxu0
  %v10767 = vand.u32 %v8401, 4294901760
  %v10768 = vsub.f32 %v8401, %v10767
  %v10769 = vand.u32 %v10768, 4294901760
  %v10770 = vsub.f32 %v10768, %v10769
  %v10771 = vand.u32 %v10770, 4294901760
  %10772 = vmatpush.msra.mxu0 %v10771
  %v10773 = vand.u32 %v8396, 4294901760
  %v10774 = vsub.f32 %v8396, %v10773
  %v10775 = vand.u32 %v10774, 4294901760
  %v10776 = vsub.f32 %v10774, %v10775
  %v10777 = vand.u32 %v10776, 4294901760
  %10778 = vmatpush.msra.mxu0 %v10777
  %v10779 = vand.u32 %v8355, 4294901760
  %v10780 = vsub.f32 %v8355, %v10779
  %v10781 = vand.u32 %v10780, 4294901760
  %v10782 = vsub.f32 %v10780, %v10781
  %v10783 = vand.u32 %v10782, 4294901760
  %10784 = vmatpush.msra.mxu0 %v10783
  %v10785 = vand.u32 %v8350, 4294901760
  %v10786 = vsub.f32 %v8350, %v10785
  %v10787 = vand.u32 %v10786, 4294901760
  %v10788 = vsub.f32 %v10786, %v10787
  %v10789 = vand.u32 %v10788, 4294901760
  %10790 = vmatpush.msra.mxu0 %v10789
  %v10791 = vand.u32 %v8309, 4294901760
  %v10792 = vsub.f32 %v8309, %v10791
  %v10793 = vand.u32 %v10792, 4294901760
  %v10794 = vsub.f32 %v10792, %v10793
  %v10795 = vand.u32 %v10794, 4294901760
  %10796 = vmatpush.msra.mxu0 %v10795
  %v10797 = vand.u32 %v8304, 4294901760
  %v10798 = vsub.f32 %v8304, %v10797
  %v10799 = vand.u32 %v10798, 4294901760
  %v10800 = vsub.f32 %v10798, %v10799
  %v10801 = vand.u32 %v10800, 4294901760
  %10802 = vmatpush.msra.mxu0 %v10801
  %v10803 = vand.u32 %v8263, 4294901760
  %v10804 = vsub.f32 %v8263, %v10803
  %v10805 = vand.u32 %v10804, 4294901760
  %v10806 = vsub.f32 %v10804, %v10805
  %v10807 = vand.u32 %v10806, 4294901760
  %10808 = vmatpush.msra.mxu0 %v10807
  %v10809 = vand.u32 %v8258, 4294901760
  %v10810 = vsub.f32 %v8258, %v10809
  %v10811 = vand.u32 %v10810, 4294901760
  %v10812 = vsub.f32 %v10810, %v10811
  %v10813 = vand.u32 %v10812, 4294901760
  %10814 = vmatpush.msra.mxu0 %v10813
  %v10815 = vand.u32 %v8217, 4294901760
  %v10816 = vsub.f32 %v8217, %v10815
  %v10817 = vand.u32 %v10816, 4294901760
  %v10818 = vsub.f32 %v10816, %v10817
  %v10819 = vand.u32 %v10818, 4294901760
  %10820 = vmatpush.msra.mxu0 %v10819
  %v10821 = vand.u32 %v8212, 4294901760
  %v10822 = vsub.f32 %v8212, %v10821
  %v10823 = vand.u32 %v10822, 4294901760
  %v10824 = vsub.f32 %v10822, %v10823
  %v10825 = vand.u32 %v10824, 4294901760
  %10826 = vmatpush.msra.mxu0 %v10825
  %v10827 = vand.u32 %v8171, 4294901760
  %v10828 = vsub.f32 %v8171, %v10827
  %v10829 = vand.u32 %v10828, 4294901760
  %v10830 = vsub.f32 %v10828, %v10829
  %v10831 = vand.u32 %v10830, 4294901760
  %10832 = vmatpush.msra.mxu0 %v10831
  %v10833 = vand.u32 %v8166, 4294901760
  %v10834 = vsub.f32 %v8166, %v10833
  %v10835 = vand.u32 %v10834, 4294901760
  %v10836 = vsub.f32 %v10834, %v10835
  %v10837 = vand.u32 %v10836, 4294901760
  %10838 = vmatpush.msra.mxu0 %v10837
  %v10839 = vand.u32 %v8125, 4294901760
  %v10840 = vsub.f32 %v8125, %v10839
  %v10841 = vand.u32 %v10840, 4294901760
  %v10842 = vsub.f32 %v10840, %v10841
  %v10843 = vand.u32 %v10842, 4294901760
  %10844 = vmatpush.msra.mxu0 %v10843
  %v10845 = vand.u32 %v8120, 4294901760
  %v10846 = vsub.f32 %v8120, %v10845
  %v10847 = vand.u32 %v10846, 4294901760
  %v10848 = vsub.f32 %v10846, %v10847
  %v10849 = vand.u32 %v10848, 4294901760
  %10850 = vmatpush.msra.mxu0 %v10849
  %v10851 = vand.u32 %v8070, 4294901760
  %v10852 = vsub.f32 %v8070, %v10851
  %v10853 = vand.u32 %v10852, 4294901760
  %v10854 = vsub.f32 %v10852, %v10853
  %v10855 = vand.u32 %v10854, 4294901760
  %10856 = vmatpush.msra.mxu0 %v10855
  %v10857 = vand.u32 %v8065, 4294901760
  %v10858 = vsub.f32 %v8065, %v10857
  %v10859 = vand.u32 %v10858, 4294901760
  %v10860 = vsub.f32 %v10858, %v10859
  %v10861 = vand.u32 %v10860, 4294901760
  %10862 = vmatpush.msra.mxu0 %v10861
  %v10863 = vand.u32 %v8460, 4294901760
  %10864 = vmatmul.f32.gmra.mxu0 %v10863
  %v10865 = vpop.f32.mrf.mxu0
  %v10866 = vadd.f32 %v10757, %v10865
  %v10867 = vand.u32 %v8462, 4294901760
  %10868 = vmatmul.f32.gmra.mxu0 %v10867
  %v10869 = vpop.f32.mrf.mxu0
  %v10870 = vadd.f32 %v10765, %v10869
  %10871 = vdwg.mxu0
  %v10872 = vand.u32 %v8401, 4294901760
  %v10873 = vsub.f32 %v8401, %v10872
  %10874 = vmatpush.msra.mxu0 %v10873
  %v10875 = vand.u32 %v8396, 4294901760
  %v10876 = vsub.f32 %v8396, %v10875
  %10877 = vmatpush.msra.mxu0 %v10876
  %v10878 = vand.u32 %v8355, 4294901760
  %v10879 = vsub.f32 %v8355, %v10878
  %10880 = vmatpush.msra.mxu0 %v10879
  %v10881 = vand.u32 %v8350, 4294901760
  %v10882 = vsub.f32 %v8350, %v10881
  %10883 = vmatpush.msra.mxu0 %v10882
  %v10884 = vand.u32 %v8309, 4294901760
  %v10885 = vsub.f32 %v8309, %v10884
  %10886 = vmatpush.msra.mxu0 %v10885
  %v10887 = vand.u32 %v8304, 4294901760
  %v10888 = vsub.f32 %v8304, %v10887
  %10889 = vmatpush.msra.mxu0 %v10888
  %v10890 = vand.u32 %v8263, 4294901760
  %v10891 = vsub.f32 %v8263, %v10890
  %10892 = vmatpush.msra.mxu0 %v10891
  %v10893 = vand.u32 %v8258, 4294901760
  %v10894 = vsub.f32 %v8258, %v10893
  %10895 = vmatpush.msra.mxu0 %v10894
  %v10896 = vand.u32 %v8217, 4294901760
  %v10897 = vsub.f32 %v8217, %v10896
  %10898 = vmatpush.msra.mxu0 %v10897
  %v10899 = vand.u32 %v8212, 4294901760
  %v10900 = vsub.f32 %v8212, %v10899
  %10901 = vmatpush.msra.mxu0 %v10900
  %v10902 = vand.u32 %v8171, 4294901760
  %v10903 = vsub.f32 %v8171, %v10902
  %10904 = vmatpush.msra.mxu0 %v10903
  %v10905 = vand.u32 %v8166, 4294901760
  %v10906 = vsub.f32 %v8166, %v10905
  %10907 = vmatpush.msra.mxu0 %v10906
  %v10908 = vand.u32 %v8125, 4294901760
  %v10909 = vsub.f32 %v8125, %v10908
  %10910 = vmatpush.msra.mxu0 %v10909
  %v10911 = vand.u32 %v8120, 4294901760
  %v10912 = vsub.f32 %v8120, %v10911
  %10913 = vmatpush.msra.mxu0 %v10912
  %v10914 = vand.u32 %v8070, 4294901760
  %v10915 = vsub.f32 %v8070, %v10914
  %10916 = vmatpush.msra.mxu0 %v10915
  %v10917 = vand.u32 %v8065, 4294901760
  %v10918 = vsub.f32 %v8065, %v10917
  %10919 = vmatpush.msra.mxu0 %v10918
  %v10920 = vand.u32 %v8460, 4294901760
  %v10921 = vsub.f32 %v8460, %v10920
  %10922 = vmatmul.f32.gmra.mxu0 %v10921
  %v10923 = vpop.f32.mrf.mxu0
  %v10924 = vadd.f32 %v10866, %v10923
  %v10925 = vand.u32 %v8462, 4294901760
  %v10926 = vsub.f32 %v8462, %v10925
  %10927 = vmatmul.f32.gmra.mxu0 %v10926
  %v10928 = vpop.f32.mrf.mxu0
  %v10929 = vadd.f32 %v10870, %v10928
  %10930 = vdwg.mxu0
  %v10931 = vand.u32 %v8401, 4294901760
  %10932 = vmatpush.msra.mxu0 %v10931
  %v10933 = vand.u32 %v8396, 4294901760
  %10934 = vmatpush.msra.mxu0 %v10933
  %v10935 = vand.u32 %v8355, 4294901760
  %10936 = vmatpush.msra.mxu0 %v10935
  %v10937 = vand.u32 %v8350, 4294901760
  %10938 = vmatpush.msra.mxu0 %v10937
  %v10939 = vand.u32 %v8309, 4294901760
  %10940 = vmatpush.msra.mxu0 %v10939
  %v10941 = vand.u32 %v8304, 4294901760
  %10942 = vmatpush.msra.mxu0 %v10941
  %v10943 = vand.u32 %v8263, 4294901760
  %10944 = vmatpush.msra.mxu0 %v10943
  %v10945 = vand.u32 %v8258, 4294901760
  %10946 = vmatpush.msra.mxu0 %v10945
  %v10947 = vand.u32 %v8217, 4294901760
  %10948 = vmatpush.msra.mxu0 %v10947
  %v10949 = vand.u32 %v8212, 4294901760
  %10950 = vmatpush.msra.mxu0 %v10949
  %v10951 = vand.u32 %v8171, 4294901760
  %10952 = vmatpush.msra.mxu0 %v10951
  %v10953 = vand.u32 %v8166, 4294901760
  %10954 = vmatpush.msra.mxu0 %v10953
  %v10955 = vand.u32 %v8125, 4294901760
  %10956 = vmatpush.msra.mxu0 %v10955
  %v10957 = vand.u32 %v8120, 4294901760
  %10958 = vmatpush.msra.mxu0 %v10957
  %v10959 = vand.u32 %v8070, 4294901760
  %10960 = vmatpush.msra.mxu0 %v10959
  %v10961 = vand.u32 %v8065, 4294901760
  %10962 = vmatpush.msra.mxu0 %v10961
  %v10963 = vand.u32 %v8460, 4294901760
  %v10964 = vsub.f32 %v8460, %v10963
  %v10965 = vand.u32 %v10964, 4294901760
  %10966 = vmatmul.f32.gmra.mxu0 %v10965
  %v10967 = vpop.f32.mrf.mxu0
  %v10968 = vadd.f32 %v10924, %v10967
  %v10969 = vand.u32 %v8462, 4294901760
  %v10970 = vsub.f32 %v8462, %v10969
  %v10971 = vand.u32 %v10970, 4294901760
  %10972 = vmatmul.f32.gmra.mxu0 %v10971
  %v10973 = vpop.f32.mrf.mxu0
  %v10974 = vadd.f32 %v10929, %v10973
  %10975 = vdwg.mxu0
  %v10976 = vand.u32 %v8401, 4294901760
  %v10977 = vsub.f32 %v8401, %v10976
  %v10978 = vand.u32 %v10977, 4294901760
  %10979 = vmatpush.msra.mxu0 %v10978
  %v10980 = vand.u32 %v8396, 4294901760
  %v10981 = vsub.f32 %v8396, %v10980
  %v10982 = vand.u32 %v10981, 4294901760
  %10983 = vmatpush.msra.mxu0 %v10982
  %v10984 = vand.u32 %v8355, 4294901760
  %v10985 = vsub.f32 %v8355, %v10984
  %v10986 = vand.u32 %v10985, 4294901760
  %10987 = vmatpush.msra.mxu0 %v10986
  %v10988 = vand.u32 %v8350, 4294901760
  %v10989 = vsub.f32 %v8350, %v10988
  %v10990 = vand.u32 %v10989, 4294901760
  %10991 = vmatpush.msra.mxu0 %v10990
  %v10992 = vand.u32 %v8309, 4294901760
  %v10993 = vsub.f32 %v8309, %v10992
  %v10994 = vand.u32 %v10993, 4294901760
  %10995 = vmatpush.msra.mxu0 %v10994
  %v10996 = vand.u32 %v8304, 4294901760
  %v10997 = vsub.f32 %v8304, %v10996
  %v10998 = vand.u32 %v10997, 4294901760
  %10999 = vmatpush.msra.mxu0 %v10998
  %v11000 = vand.u32 %v8263, 4294901760
  %v11001 = vsub.f32 %v8263, %v11000
  %v11002 = vand.u32 %v11001, 4294901760
  %11003 = vmatpush.msra.mxu0 %v11002
  %v11004 = vand.u32 %v8258, 4294901760
  %v11005 = vsub.f32 %v8258, %v11004
  %v11006 = vand.u32 %v11005, 4294901760
  %11007 = vmatpush.msra.mxu0 %v11006
  %v11008 = vand.u32 %v8217, 4294901760
  %v11009 = vsub.f32 %v8217, %v11008
  %v11010 = vand.u32 %v11009, 4294901760
  %11011 = vmatpush.msra.mxu0 %v11010
  %v11012 = vand.u32 %v8212, 4294901760
  %v11013 = vsub.f32 %v8212, %v11012
  %v11014 = vand.u32 %v11013, 4294901760
  %11015 = vmatpush.msra.mxu0 %v11014
  %v11016 = vand.u32 %v8171, 4294901760
  %v11017 = vsub.f32 %v8171, %v11016
  %v11018 = vand.u32 %v11017, 4294901760
  %11019 = vmatpush.msra.mxu0 %v11018
  %v11020 = vand.u32 %v8166, 4294901760
  %v11021 = vsub.f32 %v8166, %v11020
  %v11022 = vand.u32 %v11021, 4294901760
  %11023 = vmatpush.msra.mxu0 %v11022
  %v11024 = vand.u32 %v8125, 4294901760
  %v11025 = vsub.f32 %v8125, %v11024
  %v11026 = vand.u32 %v11025, 4294901760
  %11027 = vmatpush.msra.mxu0 %v11026
  %v11028 = vand.u32 %v8120, 4294901760
  %v11029 = vsub.f32 %v8120, %v11028
  %v11030 = vand.u32 %v11029, 4294901760
  %11031 = vmatpush.msra.mxu0 %v11030
  %v11032 = vand.u32 %v8070, 4294901760
  %v11033 = vsub.f32 %v8070, %v11032
  %v11034 = vand.u32 %v11033, 4294901760
  %11035 = vmatpush.msra.mxu0 %v11034
  %v11036 = vand.u32 %v8065, 4294901760
  %v11037 = vsub.f32 %v8065, %v11036
  %v11038 = vand.u32 %v11037, 4294901760
  %11039 = vmatpush.msra.mxu0 %v11038
  %v11040 = vand.u32 %v8460, 4294901760
  %11041 = vmatmul.f32.gmra.mxu0 %v11040
  %v11042 = vpop.f32.mrf.mxu0
  %v11043 = vadd.f32 %v10968, %v11042
  %v11044 = vand.u32 %v8462, 4294901760
  %11045 = vmatmul.f32.gmra.mxu0 %v11044
  %v11046 = vpop.f32.mrf.mxu0
  %v11047 = vadd.f32 %v10974, %v11046
  %11048 = vdwg.mxu0
  %v11049 = vand.u32 %v8401, 4294901760
  %11050 = vmatpush.msra.mxu0 %v11049
  %v11051 = vand.u32 %v8396, 4294901760
  %11052 = vmatpush.msra.mxu0 %v11051
  %v11053 = vand.u32 %v8355, 4294901760
  %11054 = vmatpush.msra.mxu0 %v11053
  %v11055 = vand.u32 %v8350, 4294901760
  %11056 = vmatpush.msra.mxu0 %v11055
  %v11057 = vand.u32 %v8309, 4294901760
  %11058 = vmatpush.msra.mxu0 %v11057
  %v11059 = vand.u32 %v8304, 4294901760
  %11060 = vmatpush.msra.mxu0 %v11059
  %v11061 = vand.u32 %v8263, 4294901760
  %11062 = vmatpush.msra.mxu0 %v11061
  %v11063 = vand.u32 %v8258, 4294901760
  %11064 = vmatpush.msra.mxu0 %v11063
  %v11065 = vand.u32 %v8217, 4294901760
  %11066 = vmatpush.msra.mxu0 %v11065
  %v11067 = vand.u32 %v8212, 4294901760
  %11068 = vmatpush.msra.mxu0 %v11067
  %v11069 = vand.u32 %v8171, 4294901760
  %11070 = vmatpush.msra.mxu0 %v11069
  %v11071 = vand.u32 %v8166, 4294901760
  %11072 = vmatpush.msra.mxu0 %v11071
  %v11073 = vand.u32 %v8125, 4294901760
  %11074 = vmatpush.msra.mxu0 %v11073
  %v11075 = vand.u32 %v8120, 4294901760
  %11076 = vmatpush.msra.mxu0 %v11075
  %v11077 = vand.u32 %v8070, 4294901760
  %11078 = vmatpush.msra.mxu0 %v11077
  %v11079 = vand.u32 %v8065, 4294901760
  %11080 = vmatpush.msra.mxu0 %v11079
  %v11081 = vand.u32 %v8460, 4294901760
  %11082 = vmatmul.f32.gmra.mxu0 %v11081
  %v11083 = vpop.f32.mrf.mxu0
  %v11084 = vadd.f32 %v11043, %v11083
  %v11085 = vand.u32 %v8462, 4294901760
  %11086 = vmatmul.f32.gmra.mxu0 %v11085
  %v11087 = vpop.f32.mrf.mxu0
  %v11088 = vadd.f32 %v11047, %v11087
  %11089 = vdwg.mxu0
  %11090 = vmatpush.msra.mxu0 0.0
  %11091 = vmatpush.msra.mxu0 0.0
  %11092 = vmatpush.msra.mxu0 0.0
  %11093 = vmatpush.msra.mxu0 0.0
  %11094 = vmatpush.msra.mxu0 0.0
  %11095 = vmatpush.msra.mxu0 0.0
  %11096 = vmatpush.msra.mxu0 0.0
  %11097 = vmatpush.msra.mxu0 0.0
  %11098 = vmatpush.msra.mxu0 0.0
  %11099 = vmatpush.msra.mxu0 0.0
  %11100 = vmatpush.msra.mxu0 0.0
  %11101 = vmatpush.msra.mxu0 0.0
  %11102 = vmatpush.msra.mxu0 0.0
  %11103 = vmatpush.msra.mxu0 0.0
  %v11104 = vand.u32 %v8447, 4294901760
  %11105 = vmatpush.msra.mxu0 %v11104
  %v11106 = vand.u32 %v8442, 4294901760
  %11107 = vmatpush.msra.mxu0 %v11106
  %v11108 = vand.u32 %v8465, 4294901760
  %v11109 = vsub.f32 %v8465, %v11108
  %v11110 = vand.u32 %v11109, 4294901760
  %v11111 = vsub.f32 %v11109, %v11110
  %v11112 = vand.u32 %v11111, 4294901760
  %11113 = vmatmul.f32.gmra.mxu0 %v11112
  %v11114 = vpop.f32.mrf.mxu0
  %v11115 = vadd.f32 %v11084, %v11114
  %v11116 = vand.u32 %v8468, 4294901760
  %v11117 = vsub.f32 %v8468, %v11116
  %v11118 = vand.u32 %v11117, 4294901760
  %v11119 = vsub.f32 %v11117, %v11118
  %v11120 = vand.u32 %v11119, 4294901760
  %11121 = vmatmul.f32.gmra.mxu0 %v11120
  %v11122 = vpop.f32.mrf.mxu0
  %v11123 = vadd.f32 %v11088, %v11122
  %11124 = vdwg.mxu0
  %11125 = vmatpush.msra.mxu0 0.0
  %11126 = vmatpush.msra.mxu0 0.0
  %11127 = vmatpush.msra.mxu0 0.0
  %11128 = vmatpush.msra.mxu0 0.0
  %11129 = vmatpush.msra.mxu0 0.0
  %11130 = vmatpush.msra.mxu0 0.0
  %11131 = vmatpush.msra.mxu0 0.0
  %11132 = vmatpush.msra.mxu0 0.0
  %11133 = vmatpush.msra.mxu0 0.0
  %11134 = vmatpush.msra.mxu0 0.0
  %11135 = vmatpush.msra.mxu0 0.0
  %11136 = vmatpush.msra.mxu0 0.0
  %11137 = vmatpush.msra.mxu0 0.0
  %11138 = vmatpush.msra.mxu0 0.0
  %v11139 = vand.u32 %v8447, 4294901760
  %v11140 = vsub.f32 %v8447, %v11139
  %v11141 = vand.u32 %v11140, 4294901760
  %v11142 = vsub.f32 %v11140, %v11141
  %v11143 = vand.u32 %v11142, 4294901760
  %11144 = vmatpush.msra.mxu0 %v11143
  %v11145 = vand.u32 %v8442, 4294901760
  %v11146 = vsub.f32 %v8442, %v11145
  %v11147 = vand.u32 %v11146, 4294901760
  %v11148 = vsub.f32 %v11146, %v11147
  %v11149 = vand.u32 %v11148, 4294901760
  %11150 = vmatpush.msra.mxu0 %v11149
  %v11151 = vand.u32 %v8465, 4294901760
  %11152 = vmatmul.f32.gmra.mxu0 %v11151
  %v11153 = vpop.f32.mrf.mxu0
  %v11154 = vadd.f32 %v11115, %v11153
  %v11155 = vand.u32 %v8468, 4294901760
  %11156 = vmatmul.f32.gmra.mxu0 %v11155
  %v11157 = vpop.f32.mrf.mxu0
  %v11158 = vadd.f32 %v11123, %v11157
  %11159 = vdwg.mxu0
  %11160 = vmatpush.msra.mxu0 0.0
  %11161 = vmatpush.msra.mxu0 0.0
  %11162 = vmatpush.msra.mxu0 0.0
  %11163 = vmatpush.msra.mxu0 0.0
  %11164 = vmatpush.msra.mxu0 0.0
  %11165 = vmatpush.msra.mxu0 0.0
  %11166 = vmatpush.msra.mxu0 0.0
  %11167 = vmatpush.msra.mxu0 0.0
  %11168 = vmatpush.msra.mxu0 0.0
  %11169 = vmatpush.msra.mxu0 0.0
  %11170 = vmatpush.msra.mxu0 0.0
  %11171 = vmatpush.msra.mxu0 0.0
  %11172 = vmatpush.msra.mxu0 0.0
  %11173 = vmatpush.msra.mxu0 0.0
  %v11174 = vand.u32 %v8447, 4294901760
  %v11175 = vsub.f32 %v8447, %v11174
  %11176 = vmatpush.msra.mxu0 %v11175
  %v11177 = vand.u32 %v8442, 4294901760
  %v11178 = vsub.f32 %v8442, %v11177
  %11179 = vmatpush.msra.mxu0 %v11178
  %v11180 = vand.u32 %v8465, 4294901760
  %v11181 = vsub.f32 %v8465, %v11180
  %11182 = vmatmul.f32.gmra.mxu0 %v11181
  %v11183 = vpop.f32.mrf.mxu0
  %v11184 = vadd.f32 %v11154, %v11183
  %v11185 = vand.u32 %v8468, 4294901760
  %v11186 = vsub.f32 %v8468, %v11185
  %11187 = vmatmul.f32.gmra.mxu0 %v11186
  %v11188 = vpop.f32.mrf.mxu0
  %v11189 = vadd.f32 %v11158, %v11188
  %11190 = vdwg.mxu0
  %11191 = vmatpush.msra.mxu0 0.0
  %11192 = vmatpush.msra.mxu0 0.0
  %11193 = vmatpush.msra.mxu0 0.0
  %11194 = vmatpush.msra.mxu0 0.0
  %11195 = vmatpush.msra.mxu0 0.0
  %11196 = vmatpush.msra.mxu0 0.0
  %11197 = vmatpush.msra.mxu0 0.0
  %11198 = vmatpush.msra.mxu0 0.0
  %11199 = vmatpush.msra.mxu0 0.0
  %11200 = vmatpush.msra.mxu0 0.0
  %11201 = vmatpush.msra.mxu0 0.0
  %11202 = vmatpush.msra.mxu0 0.0
  %11203 = vmatpush.msra.mxu0 0.0
  %11204 = vmatpush.msra.mxu0 0.0
  %v11205 = vand.u32 %v8447, 4294901760
  %11206 = vmatpush.msra.mxu0 %v11205
  %v11207 = vand.u32 %v8442, 4294901760
  %11208 = vmatpush.msra.mxu0 %v11207
  %v11209 = vand.u32 %v8465, 4294901760
  %v11210 = vsub.f32 %v8465, %v11209
  %v11211 = vand.u32 %v11210, 4294901760
  %11212 = vmatmul.f32.gmra.mxu0 %v11211
  %v11213 = vpop.f32.mrf.mxu0
  %v11214 = vadd.f32 %v11184, %v11213
  %v11215 = vand.u32 %v8468, 4294901760
  %v11216 = vsub.f32 %v8468, %v11215
  %v11217 = vand.u32 %v11216, 4294901760
  %11218 = vmatmul.f32.gmra.mxu0 %v11217
  %v11219 = vpop.f32.mrf.mxu0
  %v11220 = vadd.f32 %v11189, %v11219
  %11221 = vdwg.mxu0
  %11222 = vmatpush.msra.mxu0 0.0
  %11223 = vmatpush.msra.mxu0 0.0
  %11224 = vmatpush.msra.mxu0 0.0
  %11225 = vmatpush.msra.mxu0 0.0
  %11226 = vmatpush.msra.mxu0 0.0
  %11227 = vmatpush.msra.mxu0 0.0
  %11228 = vmatpush.msra.mxu0 0.0
  %11229 = vmatpush.msra.mxu0 0.0
  %11230 = vmatpush.msra.mxu0 0.0
  %11231 = vmatpush.msra.mxu0 0.0
  %11232 = vmatpush.msra.mxu0 0.0
  %11233 = vmatpush.msra.mxu0 0.0
  %11234 = vmatpush.msra.mxu0 0.0
  %11235 = vmatpush.msra.mxu0 0.0
  %v11236 = vand.u32 %v8447, 4294901760
  %v11237 = vsub.f32 %v8447, %v11236
  %v11238 = vand.u32 %v11237, 4294901760
  %11239 = vmatpush.msra.mxu0 %v11238
  %v11240 = vand.u32 %v8442, 4294901760
  %v11241 = vsub.f32 %v8442, %v11240
  %v11242 = vand.u32 %v11241, 4294901760
  %11243 = vmatpush.msra.mxu0 %v11242
  %v11244 = vand.u32 %v8465, 4294901760
  %11245 = vmatmul.f32.gmra.mxu0 %v11244
  %v11246 = vpop.f32.mrf.mxu0
  %v11247 = vadd.f32 %v11214, %v11246
  %v11248 = vand.u32 %v8468, 4294901760
  %11249 = vmatmul.f32.gmra.mxu0 %v11248
  %v11250 = vpop.f32.mrf.mxu0
  %v11251 = vadd.f32 %v11220, %v11250
  %11252 = vdwg.mxu0
  %11253 = vmatpush.msra.mxu0 0.0
  %11254 = vmatpush.msra.mxu0 0.0
  %11255 = vmatpush.msra.mxu0 0.0
  %11256 = vmatpush.msra.mxu0 0.0
  %11257 = vmatpush.msra.mxu0 0.0
  %11258 = vmatpush.msra.mxu0 0.0
  %11259 = vmatpush.msra.mxu0 0.0
  %11260 = vmatpush.msra.mxu0 0.0
  %11261 = vmatpush.msra.mxu0 0.0
  %11262 = vmatpush.msra.mxu0 0.0
  %11263 = vmatpush.msra.mxu0 0.0
  %11264 = vmatpush.msra.mxu0 0.0
  %11265 = vmatpush.msra.mxu0 0.0
  %11266 = vmatpush.msra.mxu0 0.0
  %v11267 = vand.u32 %v8447, 4294901760
  %11268 = vmatpush.msra.mxu0 %v11267
  %v11269 = vand.u32 %v8442, 4294901760
  %11270 = vmatpush.msra.mxu0 %v11269
  %v11271 = vand.u32 %v8465, 4294901760
  %11272 = vmatmul.f32.gmra.mxu0 %v11271
  %v11273 = vpop.f32.mrf.mxu0
  %v11274 = vadd.f32 %v11247, %v11273
  %v11275 = vand.u32 %v8468, 4294901760
  %11276 = vmatmul.f32.gmra.mxu0 %v11275
  %v11277 = vpop.f32.mrf.mxu0
  %v11278 = vadd.f32 %v11251, %v11277
  %11279 = vdwg.mxu0
  %v11280 = vand.u32 %v8391, 4294901760
  %11281 = vmatpush.msra.mxu0 %v11280
  %v11282 = vand.u32 %v8379, 4294901760
  %11283 = vmatpush.msra.mxu0 %v11282
  %v11284 = vand.u32 %v8345, 4294901760
  %11285 = vmatpush.msra.mxu0 %v11284
  %v11286 = vand.u32 %v8333, 4294901760
  %11287 = vmatpush.msra.mxu0 %v11286
  %v11288 = vand.u32 %v8299, 4294901760
  %11289 = vmatpush.msra.mxu0 %v11288
  %v11290 = vand.u32 %v8287, 4294901760
  %11291 = vmatpush.msra.mxu0 %v11290
  %v11292 = vand.u32 %v8253, 4294901760
  %11293 = vmatpush.msra.mxu0 %v11292
  %v11294 = vand.u32 %v8241, 4294901760
  %11295 = vmatpush.msra.mxu0 %v11294
  %v11296 = vand.u32 %v8207, 4294901760
  %11297 = vmatpush.msra.mxu0 %v11296
  %v11298 = vand.u32 %v8195, 4294901760
  %11299 = vmatpush.msra.mxu0 %v11298
  %v11300 = vand.u32 %v8161, 4294901760
  %11301 = vmatpush.msra.mxu0 %v11300
  %v11302 = vand.u32 %v8149, 4294901760
  %11303 = vmatpush.msra.mxu0 %v11302
  %v11304 = vand.u32 %v8115, 4294901760
  %11305 = vmatpush.msra.mxu0 %v11304
  %v11306 = vand.u32 %v8103, 4294901760
  %11307 = vmatpush.msra.mxu0 %v11306
  %v11308 = vand.u32 %v8087, 4294901760
  %11309 = vmatpush.msra.mxu0 %v11308
  %v11310 = vand.u32 %v8086, 4294901760
  %11311 = vmatpush.msra.mxu0 %v11310
  %v11312 = vand.u32 %v8460, 4294901760
  %v11313 = vsub.f32 %v8460, %v11312
  %v11314 = vand.u32 %v11313, 4294901760
  %v11315 = vsub.f32 %v11313, %v11314
  %v11316 = vand.u32 %v11315, 4294901760
  %11317 = vmatmul.f32.gmra.mxu0 %v11316
  %v11318 = vpop.f32.mrf.mxu0
  %v11319 = vadd.f32 0.0, %v11318
  %v11320 = vand.u32 %v8462, 4294901760
  %v11321 = vsub.f32 %v8462, %v11320
  %v11322 = vand.u32 %v11321, 4294901760
  %v11323 = vsub.f32 %v11321, %v11322
  %v11324 = vand.u32 %v11323, 4294901760
  %11325 = vmatmul.f32.gmra.mxu0 %v11324
  %v11326 = vpop.f32.mrf.mxu0
  %v11327 = vadd.f32 0.0, %v11326
  %11328 = vdwg.mxu0
  %v11329 = vand.u32 %v8391, 4294901760
  %v11330 = vsub.f32 %v8391, %v11329
  %v11331 = vand.u32 %v11330, 4294901760
  %v11332 = vsub.f32 %v11330, %v11331
  %v11333 = vand.u32 %v11332, 4294901760
  %11334 = vmatpush.msra.mxu0 %v11333
  %v11335 = vand.u32 %v8379, 4294901760
  %v11336 = vsub.f32 %v8379, %v11335
  %v11337 = vand.u32 %v11336, 4294901760
  %v11338 = vsub.f32 %v11336, %v11337
  %v11339 = vand.u32 %v11338, 4294901760
  %11340 = vmatpush.msra.mxu0 %v11339
  %v11341 = vand.u32 %v8345, 4294901760
  %v11342 = vsub.f32 %v8345, %v11341
  %v11343 = vand.u32 %v11342, 4294901760
  %v11344 = vsub.f32 %v11342, %v11343
  %v11345 = vand.u32 %v11344, 4294901760
  %11346 = vmatpush.msra.mxu0 %v11345
  %v11347 = vand.u32 %v8333, 4294901760
  %v11348 = vsub.f32 %v8333, %v11347
  %v11349 = vand.u32 %v11348, 4294901760
  %v11350 = vsub.f32 %v11348, %v11349
  %v11351 = vand.u32 %v11350, 4294901760
  %11352 = vmatpush.msra.mxu0 %v11351
  %v11353 = vand.u32 %v8299, 4294901760
  %v11354 = vsub.f32 %v8299, %v11353
  %v11355 = vand.u32 %v11354, 4294901760
  %v11356 = vsub.f32 %v11354, %v11355
  %v11357 = vand.u32 %v11356, 4294901760
  %11358 = vmatpush.msra.mxu0 %v11357
  %v11359 = vand.u32 %v8287, 4294901760
  %v11360 = vsub.f32 %v8287, %v11359
  %v11361 = vand.u32 %v11360, 4294901760
  %v11362 = vsub.f32 %v11360, %v11361
  %v11363 = vand.u32 %v11362, 4294901760
  %11364 = vmatpush.msra.mxu0 %v11363
  %v11365 = vand.u32 %v8253, 4294901760
  %v11366 = vsub.f32 %v8253, %v11365
  %v11367 = vand.u32 %v11366, 4294901760
  %v11368 = vsub.f32 %v11366, %v11367
  %v11369 = vand.u32 %v11368, 4294901760
  %11370 = vmatpush.msra.mxu0 %v11369
  %v11371 = vand.u32 %v8241, 4294901760
  %v11372 = vsub.f32 %v8241, %v11371
  %v11373 = vand.u32 %v11372, 4294901760
  %v11374 = vsub.f32 %v11372, %v11373
  %v11375 = vand.u32 %v11374, 4294901760
  %11376 = vmatpush.msra.mxu0 %v11375
  %v11377 = vand.u32 %v8207, 4294901760
  %v11378 = vsub.f32 %v8207, %v11377
  %v11379 = vand.u32 %v11378, 4294901760
  %v11380 = vsub.f32 %v11378, %v11379
  %v11381 = vand.u32 %v11380, 4294901760
  %11382 = vmatpush.msra.mxu0 %v11381
  %v11383 = vand.u32 %v8195, 4294901760
  %v11384 = vsub.f32 %v8195, %v11383
  %v11385 = vand.u32 %v11384, 4294901760
  %v11386 = vsub.f32 %v11384, %v11385
  %v11387 = vand.u32 %v11386, 4294901760
  %11388 = vmatpush.msra.mxu0 %v11387
  %v11389 = vand.u32 %v8161, 4294901760
  %v11390 = vsub.f32 %v8161, %v11389
  %v11391 = vand.u32 %v11390, 4294901760
  %v11392 = vsub.f32 %v11390, %v11391
  %v11393 = vand.u32 %v11392, 4294901760
  %11394 = vmatpush.msra.mxu0 %v11393
  %v11395 = vand.u32 %v8149, 4294901760
  %v11396 = vsub.f32 %v8149, %v11395
  %v11397 = vand.u32 %v11396, 4294901760
  %v11398 = vsub.f32 %v11396, %v11397
  %v11399 = vand.u32 %v11398, 4294901760
  %11400 = vmatpush.msra.mxu0 %v11399
  %v11401 = vand.u32 %v8115, 4294901760
  %v11402 = vsub.f32 %v8115, %v11401
  %v11403 = vand.u32 %v11402, 4294901760
  %v11404 = vsub.f32 %v11402, %v11403
  %v11405 = vand.u32 %v11404, 4294901760
  %11406 = vmatpush.msra.mxu0 %v11405
  %v11407 = vand.u32 %v8103, 4294901760
  %v11408 = vsub.f32 %v8103, %v11407
  %v11409 = vand.u32 %v11408, 4294901760
  %v11410 = vsub.f32 %v11408, %v11409
  %v11411 = vand.u32 %v11410, 4294901760
  %11412 = vmatpush.msra.mxu0 %v11411
  %v11413 = vand.u32 %v8087, 4294901760
  %v11414 = vsub.f32 %v8087, %v11413
  %v11415 = vand.u32 %v11414, 4294901760
  %v11416 = vsub.f32 %v11414, %v11415
  %v11417 = vand.u32 %v11416, 4294901760
  %11418 = vmatpush.msra.mxu0 %v11417
  %v11419 = vand.u32 %v8086, 4294901760
  %v11420 = vsub.f32 %v8086, %v11419
  %v11421 = vand.u32 %v11420, 4294901760
  %v11422 = vsub.f32 %v11420, %v11421
  %v11423 = vand.u32 %v11422, 4294901760
  %11424 = vmatpush.msra.mxu0 %v11423
  %v11425 = vand.u32 %v8460, 4294901760
  %11426 = vmatmul.f32.gmra.mxu0 %v11425
  %v11427 = vpop.f32.mrf.mxu0
  %v11428 = vadd.f32 %v11319, %v11427
  %v11429 = vand.u32 %v8462, 4294901760
  %11430 = vmatmul.f32.gmra.mxu0 %v11429
  %v11431 = vpop.f32.mrf.mxu0
  %v11432 = vadd.f32 %v11327, %v11431
  %11433 = vdwg.mxu0
  %v11434 = vand.u32 %v8391, 4294901760
  %v11435 = vsub.f32 %v8391, %v11434
  %11436 = vmatpush.msra.mxu0 %v11435
  %v11437 = vand.u32 %v8379, 4294901760
  %v11438 = vsub.f32 %v8379, %v11437
  %11439 = vmatpush.msra.mxu0 %v11438
  %v11440 = vand.u32 %v8345, 4294901760
  %v11441 = vsub.f32 %v8345, %v11440
  %11442 = vmatpush.msra.mxu0 %v11441
  %v11443 = vand.u32 %v8333, 4294901760
  %v11444 = vsub.f32 %v8333, %v11443
  %11445 = vmatpush.msra.mxu0 %v11444
  %v11446 = vand.u32 %v8299, 4294901760
  %v11447 = vsub.f32 %v8299, %v11446
  %11448 = vmatpush.msra.mxu0 %v11447
  %v11449 = vand.u32 %v8287, 4294901760
  %v11450 = vsub.f32 %v8287, %v11449
  %11451 = vmatpush.msra.mxu0 %v11450
  %v11452 = vand.u32 %v8253, 4294901760
  %v11453 = vsub.f32 %v8253, %v11452
  %11454 = vmatpush.msra.mxu0 %v11453
  %v11455 = vand.u32 %v8241, 4294901760
  %v11456 = vsub.f32 %v8241, %v11455
  %11457 = vmatpush.msra.mxu0 %v11456
  %v11458 = vand.u32 %v8207, 4294901760
  %v11459 = vsub.f32 %v8207, %v11458
  %11460 = vmatpush.msra.mxu0 %v11459
  %v11461 = vand.u32 %v8195, 4294901760
  %v11462 = vsub.f32 %v8195, %v11461
  %11463 = vmatpush.msra.mxu0 %v11462
  %v11464 = vand.u32 %v8161, 4294901760
  %v11465 = vsub.f32 %v8161, %v11464
  %11466 = vmatpush.msra.mxu0 %v11465
  %v11467 = vand.u32 %v8149, 4294901760
  %v11468 = vsub.f32 %v8149, %v11467
  %11469 = vmatpush.msra.mxu0 %v11468
  %v11470 = vand.u32 %v8115, 4294901760
  %v11471 = vsub.f32 %v8115, %v11470
  %11472 = vmatpush.msra.mxu0 %v11471
  %v11473 = vand.u32 %v8103, 4294901760
  %v11474 = vsub.f32 %v8103, %v11473
  %11475 = vmatpush.msra.mxu0 %v11474
  %v11476 = vand.u32 %v8087, 4294901760
  %v11477 = vsub.f32 %v8087, %v11476
  %11478 = vmatpush.msra.mxu0 %v11477
  %v11479 = vand.u32 %v8086, 4294901760
  %v11480 = vsub.f32 %v8086, %v11479
  %11481 = vmatpush.msra.mxu0 %v11480
  %v11482 = vand.u32 %v8460, 4294901760
  %v11483 = vsub.f32 %v8460, %v11482
  %11484 = vmatmul.f32.gmra.mxu0 %v11483
  %v11485 = vpop.f32.mrf.mxu0
  %v11486 = vadd.f32 %v11428, %v11485
  %v11487 = vand.u32 %v8462, 4294901760
  %v11488 = vsub.f32 %v8462, %v11487
  %11489 = vmatmul.f32.gmra.mxu0 %v11488
  %v11490 = vpop.f32.mrf.mxu0
  %v11491 = vadd.f32 %v11432, %v11490
  %11492 = vdwg.mxu0
  %v11493 = vand.u32 %v8391, 4294901760
  %11494 = vmatpush.msra.mxu0 %v11493
  %v11495 = vand.u32 %v8379, 4294901760
  %11496 = vmatpush.msra.mxu0 %v11495
  %v11497 = vand.u32 %v8345, 4294901760
  %11498 = vmatpush.msra.mxu0 %v11497
  %v11499 = vand.u32 %v8333, 4294901760
  %11500 = vmatpush.msra.mxu0 %v11499
  %v11501 = vand.u32 %v8299, 4294901760
  %11502 = vmatpush.msra.mxu0 %v11501
  %v11503 = vand.u32 %v8287, 4294901760
  %11504 = vmatpush.msra.mxu0 %v11503
  %v11505 = vand.u32 %v8253, 4294901760
  %11506 = vmatpush.msra.mxu0 %v11505
  %v11507 = vand.u32 %v8241, 4294901760
  %11508 = vmatpush.msra.mxu0 %v11507
  %v11509 = vand.u32 %v8207, 4294901760
  %11510 = vmatpush.msra.mxu0 %v11509
  %v11511 = vand.u32 %v8195, 4294901760
  %11512 = vmatpush.msra.mxu0 %v11511
  %v11513 = vand.u32 %v8161, 4294901760
  %11514 = vmatpush.msra.mxu0 %v11513
  %v11515 = vand.u32 %v8149, 4294901760
  %11516 = vmatpush.msra.mxu0 %v11515
  %v11517 = vand.u32 %v8115, 4294901760
  %11518 = vmatpush.msra.mxu0 %v11517
  %v11519 = vand.u32 %v8103, 4294901760
  %11520 = vmatpush.msra.mxu0 %v11519
  %v11521 = vand.u32 %v8087, 4294901760
  %11522 = vmatpush.msra.mxu0 %v11521
  %v11523 = vand.u32 %v8086, 4294901760
  %11524 = vmatpush.msra.mxu0 %v11523
  %v11525 = vand.u32 %v8460, 4294901760
  %v11526 = vsub.f32 %v8460, %v11525
  %v11527 = vand.u32 %v11526, 4294901760
  %11528 = vmatmul.f32.gmra.mxu0 %v11527
  %v11529 = vpop.f32.mrf.mxu0
  %v11530 = vadd.f32 %v11486, %v11529
  %v11531 = vand.u32 %v8462, 4294901760
  %v11532 = vsub.f32 %v8462, %v11531
  %v11533 = vand.u32 %v11532, 4294901760
  %11534 = vmatmul.f32.gmra.mxu0 %v11533
  %v11535 = vpop.f32.mrf.mxu0
  %v11536 = vadd.f32 %v11491, %v11535
  %11537 = vdwg.mxu0
  %v11538 = vand.u32 %v8391, 4294901760
  %v11539 = vsub.f32 %v8391, %v11538
  %v11540 = vand.u32 %v11539, 4294901760
  %11541 = vmatpush.msra.mxu0 %v11540
  %v11542 = vand.u32 %v8379, 4294901760
  %v11543 = vsub.f32 %v8379, %v11542
  %v11544 = vand.u32 %v11543, 4294901760
  %11545 = vmatpush.msra.mxu0 %v11544
  %v11546 = vand.u32 %v8345, 4294901760
  %v11547 = vsub.f32 %v8345, %v11546
  %v11548 = vand.u32 %v11547, 4294901760
  %11549 = vmatpush.msra.mxu0 %v11548
  %v11550 = vand.u32 %v8333, 4294901760
  %v11551 = vsub.f32 %v8333, %v11550
  %v11552 = vand.u32 %v11551, 4294901760
  %11553 = vmatpush.msra.mxu0 %v11552
  %v11554 = vand.u32 %v8299, 4294901760
  %v11555 = vsub.f32 %v8299, %v11554
  %v11556 = vand.u32 %v11555, 4294901760
  %11557 = vmatpush.msra.mxu0 %v11556
  %v11558 = vand.u32 %v8287, 4294901760
  %v11559 = vsub.f32 %v8287, %v11558
  %v11560 = vand.u32 %v11559, 4294901760
  %11561 = vmatpush.msra.mxu0 %v11560
  %v11562 = vand.u32 %v8253, 4294901760
  %v11563 = vsub.f32 %v8253, %v11562
  %v11564 = vand.u32 %v11563, 4294901760
  %11565 = vmatpush.msra.mxu0 %v11564
  %v11566 = vand.u32 %v8241, 4294901760
  %v11567 = vsub.f32 %v8241, %v11566
  %v11568 = vand.u32 %v11567, 4294901760
  %11569 = vmatpush.msra.mxu0 %v11568
  %v11570 = vand.u32 %v8207, 4294901760
  %v11571 = vsub.f32 %v8207, %v11570
  %v11572 = vand.u32 %v11571, 4294901760
  %11573 = vmatpush.msra.mxu0 %v11572
  %v11574 = vand.u32 %v8195, 4294901760
  %v11575 = vsub.f32 %v8195, %v11574
  %v11576 = vand.u32 %v11575, 4294901760
  %11577 = vmatpush.msra.mxu0 %v11576
  %v11578 = vand.u32 %v8161, 4294901760
  %v11579 = vsub.f32 %v8161, %v11578
  %v11580 = vand.u32 %v11579, 4294901760
  %11581 = vmatpush.msra.mxu0 %v11580
  %v11582 = vand.u32 %v8149, 4294901760
  %v11583 = vsub.f32 %v8149, %v11582
  %v11584 = vand.u32 %v11583, 4294901760
  %11585 = vmatpush.msra.mxu0 %v11584
  %v11586 = vand.u32 %v8115, 4294901760
  %v11587 = vsub.f32 %v8115, %v11586
  %v11588 = vand.u32 %v11587, 4294901760
  %11589 = vmatpush.msra.mxu0 %v11588
  %v11590 = vand.u32 %v8103, 4294901760
  %v11591 = vsub.f32 %v8103, %v11590
  %v11592 = vand.u32 %v11591, 4294901760
  %11593 = vmatpush.msra.mxu0 %v11592
  %v11594 = vand.u32 %v8087, 4294901760
  %v11595 = vsub.f32 %v8087, %v11594
  %v11596 = vand.u32 %v11595, 4294901760
  %11597 = vmatpush.msra.mxu0 %v11596
  %v11598 = vand.u32 %v8086, 4294901760
  %v11599 = vsub.f32 %v8086, %v11598
  %v11600 = vand.u32 %v11599, 4294901760
  %11601 = vmatpush.msra.mxu0 %v11600
  %v11602 = vand.u32 %v8460, 4294901760
  %11603 = vmatmul.f32.gmra.mxu0 %v11602
  %v11604 = vpop.f32.mrf.mxu0
  %v11605 = vadd.f32 %v11530, %v11604
  %v11606 = vand.u32 %v8462, 4294901760
  %11607 = vmatmul.f32.gmra.mxu0 %v11606
  %v11608 = vpop.f32.mrf.mxu0
  %v11609 = vadd.f32 %v11536, %v11608
  %11610 = vdwg.mxu0
  %v11611 = vand.u32 %v8391, 4294901760
  %11612 = vmatpush.msra.mxu0 %v11611
  %v11613 = vand.u32 %v8379, 4294901760
  %11614 = vmatpush.msra.mxu0 %v11613
  %v11615 = vand.u32 %v8345, 4294901760
  %11616 = vmatpush.msra.mxu0 %v11615
  %v11617 = vand.u32 %v8333, 4294901760
  %11618 = vmatpush.msra.mxu0 %v11617
  %v11619 = vand.u32 %v8299, 4294901760
  %11620 = vmatpush.msra.mxu0 %v11619
  %v11621 = vand.u32 %v8287, 4294901760
  %11622 = vmatpush.msra.mxu0 %v11621
  %v11623 = vand.u32 %v8253, 4294901760
  %11624 = vmatpush.msra.mxu0 %v11623
  %v11625 = vand.u32 %v8241, 4294901760
  %11626 = vmatpush.msra.mxu0 %v11625
  %v11627 = vand.u32 %v8207, 4294901760
  %11628 = vmatpush.msra.mxu0 %v11627
  %v11629 = vand.u32 %v8195, 4294901760
  %11630 = vmatpush.msra.mxu0 %v11629
  %v11631 = vand.u32 %v8161, 4294901760
  %11632 = vmatpush.msra.mxu0 %v11631
  %v11633 = vand.u32 %v8149, 4294901760
  %11634 = vmatpush.msra.mxu0 %v11633
  %v11635 = vand.u32 %v8115, 4294901760
  %11636 = vmatpush.msra.mxu0 %v11635
  %v11637 = vand.u32 %v8103, 4294901760
  %11638 = vmatpush.msra.mxu0 %v11637
  %v11639 = vand.u32 %v8087, 4294901760
  %11640 = vmatpush.msra.mxu0 %v11639
  %v11641 = vand.u32 %v8086, 4294901760
  %11642 = vmatpush.msra.mxu0 %v11641
  %v11643 = vand.u32 %v8460, 4294901760
  %11644 = vmatmul.f32.gmra.mxu0 %v11643
  %v11645 = vpop.f32.mrf.mxu0
  %v11646 = vadd.f32 %v11605, %v11645
  %v11647 = vand.u32 %v8462, 4294901760
  %11648 = vmatmul.f32.gmra.mxu0 %v11647
  %v11649 = vpop.f32.mrf.mxu0
  %v11650 = vadd.f32 %v11609, %v11649
  %11651 = vdwg.mxu0
  %11652 = vmatpush.msra.mxu0 0.0
  %11653 = vmatpush.msra.mxu0 0.0
  %11654 = vmatpush.msra.mxu0 0.0
  %11655 = vmatpush.msra.mxu0 0.0
  %11656 = vmatpush.msra.mxu0 0.0
  %11657 = vmatpush.msra.mxu0 0.0
  %11658 = vmatpush.msra.mxu0 0.0
  %11659 = vmatpush.msra.mxu0 0.0
  %11660 = vmatpush.msra.mxu0 0.0
  %11661 = vmatpush.msra.mxu0 0.0
  %11662 = vmatpush.msra.mxu0 0.0
  %11663 = vmatpush.msra.mxu0 0.0
  %11664 = vmatpush.msra.mxu0 0.0
  %11665 = vmatpush.msra.mxu0 0.0
  %v11666 = vand.u32 %v8437, 4294901760
  %11667 = vmatpush.msra.mxu0 %v11666
  %v11668 = vand.u32 %v8425, 4294901760
  %11669 = vmatpush.msra.mxu0 %v11668
  %v11670 = vand.u32 %v8465, 4294901760
  %v11671 = vsub.f32 %v8465, %v11670
  %v11672 = vand.u32 %v11671, 4294901760
  %v11673 = vsub.f32 %v11671, %v11672
  %v11674 = vand.u32 %v11673, 4294901760
  %11675 = vmatmul.f32.gmra.mxu0 %v11674
  %v11676 = vpop.f32.mrf.mxu0
  %v11677 = vadd.f32 %v11646, %v11676
  %v11678 = vand.u32 %v8468, 4294901760
  %v11679 = vsub.f32 %v8468, %v11678
  %v11680 = vand.u32 %v11679, 4294901760
  %v11681 = vsub.f32 %v11679, %v11680
  %v11682 = vand.u32 %v11681, 4294901760
  %11683 = vmatmul.f32.gmra.mxu0 %v11682
  %v11684 = vpop.f32.mrf.mxu0
  %v11685 = vadd.f32 %v11650, %v11684
  %11686 = vdwg.mxu0
  %11687 = vmatpush.msra.mxu0 0.0
  %11688 = vmatpush.msra.mxu0 0.0
  %11689 = vmatpush.msra.mxu0 0.0
  %11690 = vmatpush.msra.mxu0 0.0
  %11691 = vmatpush.msra.mxu0 0.0
  %11692 = vmatpush.msra.mxu0 0.0
  %11693 = vmatpush.msra.mxu0 0.0
  %11694 = vmatpush.msra.mxu0 0.0
  %11695 = vmatpush.msra.mxu0 0.0
  %11696 = vmatpush.msra.mxu0 0.0
  %11697 = vmatpush.msra.mxu0 0.0
  %11698 = vmatpush.msra.mxu0 0.0
  %11699 = vmatpush.msra.mxu0 0.0
  %11700 = vmatpush.msra.mxu0 0.0
  %v11701 = vand.u32 %v8437, 4294901760
  %v11702 = vsub.f32 %v8437, %v11701
  %v11703 = vand.u32 %v11702, 4294901760
  %v11704 = vsub.f32 %v11702, %v11703
  %v11705 = vand.u32 %v11704, 4294901760
  %11706 = vmatpush.msra.mxu0 %v11705
  %v11707 = vand.u32 %v8425, 4294901760
  %v11708 = vsub.f32 %v8425, %v11707
  %v11709 = vand.u32 %v11708, 4294901760
  %v11710 = vsub.f32 %v11708, %v11709
  %v11711 = vand.u32 %v11710, 4294901760
  %11712 = vmatpush.msra.mxu0 %v11711
  %v11713 = vand.u32 %v8465, 4294901760
  %11714 = vmatmul.f32.gmra.mxu0 %v11713
  %v11715 = vpop.f32.mrf.mxu0
  %v11716 = vadd.f32 %v11677, %v11715
  %v11717 = vand.u32 %v8468, 4294901760
  %11718 = vmatmul.f32.gmra.mxu0 %v11717
  %v11719 = vpop.f32.mrf.mxu0
  %v11720 = vadd.f32 %v11685, %v11719
  %11721 = vdwg.mxu0
  %11722 = vmatpush.msra.mxu0 0.0
  %11723 = vmatpush.msra.mxu0 0.0
  %11724 = vmatpush.msra.mxu0 0.0
  %11725 = vmatpush.msra.mxu0 0.0
  %11726 = vmatpush.msra.mxu0 0.0
  %11727 = vmatpush.msra.mxu0 0.0
  %11728 = vmatpush.msra.mxu0 0.0
  %11729 = vmatpush.msra.mxu0 0.0
  %11730 = vmatpush.msra.mxu0 0.0
  %11731 = vmatpush.msra.mxu0 0.0
  %11732 = vmatpush.msra.mxu0 0.0
  %11733 = vmatpush.msra.mxu0 0.0
  %11734 = vmatpush.msra.mxu0 0.0
  %11735 = vmatpush.msra.mxu0 0.0
  %v11736 = vand.u32 %v8437, 4294901760
  %v11737 = vsub.f32 %v8437, %v11736
  %11738 = vmatpush.msra.mxu0 %v11737
  %v11739 = vand.u32 %v8425, 4294901760
  %v11740 = vsub.f32 %v8425, %v11739
  %11741 = vmatpush.msra.mxu0 %v11740
  %v11742 = vand.u32 %v8465, 4294901760
  %v11743 = vsub.f32 %v8465, %v11742
  %11744 = vmatmul.f32.gmra.mxu0 %v11743
  %v11745 = vpop.f32.mrf.mxu0
  %v11746 = vadd.f32 %v11716, %v11745
  %v11747 = vand.u32 %v8468, 4294901760
  %v11748 = vsub.f32 %v8468, %v11747
  %11749 = vmatmul.f32.gmra.mxu0 %v11748
  %v11750 = vpop.f32.mrf.mxu0
  %v11751 = vadd.f32 %v11720, %v11750
  %11752 = vdwg.mxu0
  %11753 = vmatpush.msra.mxu0 0.0
  %11754 = vmatpush.msra.mxu0 0.0
  %11755 = vmatpush.msra.mxu0 0.0
  %11756 = vmatpush.msra.mxu0 0.0
  %11757 = vmatpush.msra.mxu0 0.0
  %11758 = vmatpush.msra.mxu0 0.0
  %11759 = vmatpush.msra.mxu0 0.0
  %11760 = vmatpush.msra.mxu0 0.0
  %11761 = vmatpush.msra.mxu0 0.0
  %11762 = vmatpush.msra.mxu0 0.0
  %11763 = vmatpush.msra.mxu0 0.0
  %11764 = vmatpush.msra.mxu0 0.0
  %11765 = vmatpush.msra.mxu0 0.0
  %11766 = vmatpush.msra.mxu0 0.0
  %v11767 = vand.u32 %v8437, 4294901760
  %11768 = vmatpush.msra.mxu0 %v11767
  %v11769 = vand.u32 %v8425, 4294901760
  %11770 = vmatpush.msra.mxu0 %v11769
  %v11771 = vand.u32 %v8465, 4294901760
  %v11772 = vsub.f32 %v8465, %v11771
  %v11773 = vand.u32 %v11772, 4294901760
  %11774 = vmatmul.f32.gmra.mxu0 %v11773
  %v11775 = vpop.f32.mrf.mxu0
  %v11776 = vadd.f32 %v11746, %v11775
  %v11777 = vand.u32 %v8468, 4294901760
  %v11778 = vsub.f32 %v8468, %v11777
  %v11779 = vand.u32 %v11778, 4294901760
  %11780 = vmatmul.f32.gmra.mxu0 %v11779
  %v11781 = vpop.f32.mrf.mxu0
  %v11782 = vadd.f32 %v11751, %v11781
  %11783 = vdwg.mxu0
  %11784 = vmatpush.msra.mxu0 0.0
  %11785 = vmatpush.msra.mxu0 0.0
  %11786 = vmatpush.msra.mxu0 0.0
  %11787 = vmatpush.msra.mxu0 0.0
  %11788 = vmatpush.msra.mxu0 0.0
  %11789 = vmatpush.msra.mxu0 0.0
  %11790 = vmatpush.msra.mxu0 0.0
  %11791 = vmatpush.msra.mxu0 0.0
  %11792 = vmatpush.msra.mxu0 0.0
  %11793 = vmatpush.msra.mxu0 0.0
  %11794 = vmatpush.msra.mxu0 0.0
  %11795 = vmatpush.msra.mxu0 0.0
  %11796 = vmatpush.msra.mxu0 0.0
  %11797 = vmatpush.msra.mxu0 0.0
  %v11798 = vand.u32 %v8437, 4294901760
  %v11799 = vsub.f32 %v8437, %v11798
  %v11800 = vand.u32 %v11799, 4294901760
  %11801 = vmatpush.msra.mxu0 %v11800
  %v11802 = vand.u32 %v8425, 4294901760
  %v11803 = vsub.f32 %v8425, %v11802
  %v11804 = vand.u32 %v11803, 4294901760
  %11805 = vmatpush.msra.mxu0 %v11804
  %v11806 = vand.u32 %v8465, 4294901760
  %11807 = vmatmul.f32.gmra.mxu0 %v11806
  %v11808 = vpop.f32.mrf.mxu0
  %v11809 = vadd.f32 %v11776, %v11808
  %v11810 = vand.u32 %v8468, 4294901760
  %11811 = vmatmul.f32.gmra.mxu0 %v11810
  %v11812 = vpop.f32.mrf.mxu0
  %v11813 = vadd.f32 %v11782, %v11812
  %11814 = vdwg.mxu0
  %11815 = vmatpush.msra.mxu0 0.0
  %11816 = vmatpush.msra.mxu0 0.0
  %11817 = vmatpush.msra.mxu0 0.0
  %11818 = vmatpush.msra.mxu0 0.0
  %11819 = vmatpush.msra.mxu0 0.0
  %11820 = vmatpush.msra.mxu0 0.0
  %11821 = vmatpush.msra.mxu0 0.0
  %11822 = vmatpush.msra.mxu0 0.0
  %11823 = vmatpush.msra.mxu0 0.0
  %11824 = vmatpush.msra.mxu0 0.0
  %11825 = vmatpush.msra.mxu0 0.0
  %11826 = vmatpush.msra.mxu0 0.0
  %11827 = vmatpush.msra.mxu0 0.0
  %11828 = vmatpush.msra.mxu0 0.0
  %v11829 = vand.u32 %v8437, 4294901760
  %11830 = vmatpush.msra.mxu0 %v11829
  %v11831 = vand.u32 %v8425, 4294901760
  %11832 = vmatpush.msra.mxu0 %v11831
  %v11833 = vand.u32 %v8465, 4294901760
  %11834 = vmatmul.f32.gmra.mxu0 %v11833
  %v11835 = vpop.f32.mrf.mxu0
  %v11836 = vadd.f32 %v11809, %v11835
  %v11837 = vand.u32 %v8468, 4294901760
  %11838 = vmatmul.f32.gmra.mxu0 %v11837
  %v11839 = vpop.f32.mrf.mxu0
  %v11840 = vadd.f32 %v11813, %v11839
  %11841 = vdwg.mxu0
  %v11842 = vmul.f32 %v9026, %v34
  %v11843 = vmul.f32 %v9588, %v35
  %v11844 = vmul.f32 %v10150, %v36
  %v11845 = vmul.f32 %v10712, %v37
  %v11846 = vmul.f32 %v11274, %v38
  %v11847 = vmul.f32 %v11836, %v39
  %v11848 = vmul.f32 %v9030, %v34
  %v11849 = vmul.f32 %v9592, %v35
  %v11850 = vmul.f32 %v10154, %v36
  %v11851 = vmul.f32 %v10716, %v37
  %v11852 = vmul.f32 %v11278, %v38
  %v11853 = vmul.f32 %v11840, %v39
  %v11854 = vmul.f32 %v11842, %v11842
  %v11855 = vmul.f32 %v11843, %v11843
  %v11856 = vmul.f32 %v11844, %v11844
  %v11857 = vmul.f32 %v11845, %v11845
  %v11858 = vmul.f32 %v11846, %v11846
  %v11859 = vmul.f32 %v11847, %v11847
  %v11860 = vmul.f32 %v11848, %v11848
  %v11861 = vmul.f32 %v11849, %v11849
  %v11862 = vmul.f32 %v11850, %v11850
  %v11863 = vmul.f32 %v11851, %v11851
  %v11864 = vmul.f32 %v11852, %v11852
  %v11865 = vmul.f32 %v11853, %v11853
  %v11866 = vadd.f32 %v11842, %v11843
  %v11867 = vadd.f32 %v11866, %v11844
  %v11868 = vadd.f32 %v11867, %v11845
  %v11869 = vadd.f32 %v11868, %v11846
  %v11870 = vsel %vm3913, %v11847, 0.0
  %v11871 = vadd.f32 %v11869, %v11870
  %11872 = vadd.xlane.f32.xlu0 %v11871
  %v11873 = vpop.xlane.xlu0 %11872
  %v11874 = vadd.f32 %v11848, %v11849
  %v11875 = vadd.f32 %v11874, %v11850
  %v11876 = vadd.f32 %v11875, %v11851
  %v11877 = vadd.f32 %v11876, %v11852
  %v11878 = vsel %vm3913, %v11853, 0.0
  %v11879 = vadd.f32 %v11877, %v11878
  %11880 = vadd.xlane.f32.xlu0 %v11879
  %v11881 = vpop.xlane.xlu0 %11880
  %v11882 = vadd.f32 %v11854, %v11855
  %v11883 = vadd.f32 %v11882, %v11856
  %v11884 = vadd.f32 %v11883, %v11857
  %v11885 = vadd.f32 %v11884, %v11858
  %v11886 = vsel %vm3913, %v11859, 0.0
  %v11887 = vadd.f32 %v11885, %v11886
  %11888 = vadd.xlane.f32.xlu0 %v11887
  %v11889 = vpop.xlane.xlu0 %11888
  %v11890 = vadd.f32 %v11860, %v11861
  %v11891 = vadd.f32 %v11890, %v11862
  %v11892 = vadd.f32 %v11891, %v11863
  %v11893 = vadd.f32 %v11892, %v11864
  %v11894 = vsel %vm3913, %v11865, 0.0
  %v11895 = vadd.f32 %v11893, %v11894
  %11896 = vadd.xlane.f32.xlu0 %v11895
  %v11897 = vpop.xlane.xlu0 %11896
  %v11898 = vmul.f32 %v11873, 0.001953125
  %v11899 = vmul.f32 %v11881, 0.001953125
  %v11900 = vmul.f32 %v11889, 0.001953125
  %v11901 = vmul.f32 %v11897, 0.001953125
  %v11902 = vmul.f32 %v11898, %v11898
  %v11903 = vmul.f32 %v11899, %v11899
  %v11904 = vsub.f32 %v11900, %v11902
  %v11905 = vsub.f32 %v11901, %v11903
  %v11906 = vmax.f32 %v11904, 0.0
  %v11907 = vmax.f32 %v11905, 0.0
  %v11908 = vadd.f32 %v11906, 1e-05
  %v11909 = vadd.f32 %v11907, 1e-05
  %v11910 = vrsqrt.pop %v11908
  %v11911 = vmul.f32 %v11910, %v11908
  %v11912 = vmul.f32 %v11911, %v11910
  %v11913 = vmul.f32 0.5, %v11912
  %v11914 = vsub.f32 1.5, %v11913
  %v11915 = vmul.f32 %v11910, %v11914
  %vm11916 = vweird.f32 %v11908
  %vm11917 = vweird.f32 %v11910
  %vm11918 = vmor %vm11916, %vm11917
  %v11919 = vsel %vm11918, %v11910, %v11915
  %v11920 = vrsqrt.pop %v11909
  %v11921 = vmul.f32 %v11920, %v11909
  %v11922 = vmul.f32 %v11921, %v11920
  %v11923 = vmul.f32 0.5, %v11922
  %v11924 = vsub.f32 1.5, %v11923
  %v11925 = vmul.f32 %v11920, %v11924
  %vm11926 = vweird.f32 %v11909
  %vm11927 = vweird.f32 %v11920
  %vm11928 = vmor %vm11926, %vm11927
  %v11929 = vsel %vm11928, %v11920, %v11925
  %v11930 = vmul.f32 %v54, %v11919
  %v11931 = vmul.f32 %v55, %v11929
  %v11932 = vmul.f32 %v11898, %v11930
  %v11933 = vmul.f32 %v11899, %v11931
  %v11934 = vsub.f32 %v56, %v11932
  %v11935 = vsub.f32 %v57, %v11933
  %11937 = vset.pattern.permute.xlu0 0
  %11938 = vperm.xlu0 %11937, %v11930
  %v11939 = vpop.permute.xlu0 %11938
  %11942 = vset.pattern.permute.xlu0 0
  %11943 = vperm.xlu0 %11942, %v11931
  %v11944 = vpop.permute.xlu0 %11943
  %v11946 = vmul.f32 %v11842, %v11939
  %v11947 = vmul.f32 %v11843, %v11939
  %v11948 = vmul.f32 %v11844, %v11939
  %v11949 = vmul.f32 %v11845, %v11939
  %v11950 = vmul.f32 %v11846, %v11939
  %v11951 = vmul.f32 %v11847, %v11939
  %v11952 = vmul.f32 %v11848, %v11944
  %v11953 = vmul.f32 %v11849, %v11944
  %v11954 = vmul.f32 %v11850, %v11944
  %v11955 = vmul.f32 %v11851, %v11944
  %v11956 = vmul.f32 %v11852, %v11944
  %v11957 = vmul.f32 %v11853, %v11944
  %11959 = vset.pattern.permute.xlu0 0
  %11960 = vperm.xlu0 %11959, %v11934
  %v11961 = vpop.permute.xlu0 %11960
  %11964 = vset.pattern.permute.xlu0 0
  %11965 = vperm.xlu0 %11964, %v11935
  %v11966 = vpop.permute.xlu0 %11965
  %v11968 = vadd.f32 %v11946, %v11961
  %v11969 = vadd.f32 %v11947, %v11961
  %v11970 = vadd.f32 %v11948, %v11961
  %v11971 = vadd.f32 %v11949, %v11961
  %v11972 = vadd.f32 %v11950, %v11961
  %v11973 = vadd.f32 %v11951, %v11961
  %v11974 = vadd.f32 %v11952, %v11966
  %v11975 = vadd.f32 %v11953, %v11966
  %v11976 = vadd.f32 %v11954, %v11966
  %v11977 = vadd.f32 %v11955, %v11966
  %v11978 = vadd.f32 %v11956, %v11966
  %v11979 = vadd.f32 %v11957, %v11966
  %v11980 = vadd.f32 %v11968, %v4036
  %v11981 = vadd.f32 %v11969, %v4037
  %v11982 = vadd.f32 %v11970, %v4038
  %v11983 = vadd.f32 %v11971, %v4039
  %v11984 = vadd.f32 %v11972, %v4040
  %v11985 = vadd.f32 %v11973, %v4041
  %v11986 = vadd.f32 %v11974, %v4042
  %v11987 = vadd.f32 %v11975, %v4043
  %v11988 = vadd.f32 %v11976, %v4044
  %v11989 = vadd.f32 %v11977, %v4045
  %v11990 = vadd.f32 %v11978, %v4046
  %v11991 = vadd.f32 %v11979, %v4047
  %v11992 = vmax.f32 %v11980, 0.0
  %v11993 = vmax.f32 %v11981, 0.0
  %v11994 = vmax.f32 %v11982, 0.0
  %v11995 = vmax.f32 %v11983, 0.0
  %v11996 = vmax.f32 %v11984, 0.0
  %v11997 = vmax.f32 %v11985, 0.0
  %v11998 = vmax.f32 %v11986, 0.0
  %v11999 = vmax.f32 %v11987, 0.0
  %v12000 = vmax.f32 %v11988, 0.0
  %v12001 = vmax.f32 %v11989, 0.0
  %v12002 = vmax.f32 %v11990, 0.0
  %v12003 = vmax.f32 %v11991, 0.0
  %v12004 = vmul.f32 %v11992, %v34
  %v12005 = vmul.f32 %v11993, %v35
  %v12006 = vmul.f32 %v11994, %v36
  %v12007 = vmul.f32 %v11995, %v37
  %v12008 = vmul.f32 %v11996, %v38
  %v12009 = vmul.f32 %v11997, %v39
  %v12010 = vmul.f32 %v11998, %v34
  %v12011 = vmul.f32 %v11999, %v35
  %v12012 = vmul.f32 %v12000, %v36
  %v12013 = vmul.f32 %v12001, %v37
  %v12014 = vmul.f32 %v12002, %v38
  %v12015 = vmul.f32 %v12003, %v39
  %v12016 = vadd.f32 %v12004, %v12005
  %vm12017 = vcmask 556032
  %v12018 = vsel %vm12017, %v12006, 0.0
  %v12019 = vadd.f32 %v12016, %v12018
  %12020 = vadd.xlane.f32.xlu0 %v12019
  %v12021 = vpop.xlane.xlu0 %12020
  %v12022 = vadd.f32 %v12010, %v12011
  %v12023 = vsel %vm12017, %v12012, 0.0
  %v12024 = vadd.f32 %v12022, %v12023
  %12025 = vadd.xlane.f32.xlu0 %v12024
  %v12026 = vpop.xlane.xlu0 %12025
  %12035 = vrot.lane.b32.xlu0 %v12006, 60
  %v12036 = vpop.permute.xlu0 %12035
  %12037 = vrot.lane.b32.xlu0 %v12007, 60
  %v12038 = vpop.permute.xlu0 %12037
  %12039 = vrot.lane.b32.xlu0 %v12008, 60
  %v12040 = vpop.permute.xlu0 %12039
  %12041 = vrot.lane.b32.xlu0 %v12009, 60
  %v12042 = vpop.permute.xlu0 %12041
  %12043 = vrot.lane.b32.xlu0 %v12012, 60
  %v12044 = vpop.permute.xlu0 %12043
  %12045 = vrot.lane.b32.xlu0 %v12013, 60
  %v12046 = vpop.permute.xlu0 %12045
  %12047 = vrot.lane.b32.xlu0 %v12014, 60
  %v12048 = vpop.permute.xlu0 %12047
  %12049 = vrot.lane.b32.xlu0 %v12015, 60
  %v12050 = vpop.permute.xlu0 %12049
  %vm12051 = vcmask 490496
  %v12052 = vsel %vm12051, %v12036, %v12038
  %v12053 = vsel %vm12051, %v12038, %v12040
  %v12054 = vsel %vm12051, %v12040, %v12042
  %v12055 = vsel %vm12051, %v12044, %v12046
  %v12056 = vsel %vm12051, %v12046, %v12048
  %v12057 = vsel %vm12051, %v12048, %v12050
  %v12064 = vadd.f32 %v12052, %v12053
  %v12065 = vsel %vm12017, %v12054, 0.0
  %v12066 = vadd.f32 %v12064, %v12065
  %12067 = vadd.xlane.f32.xlu0 %v12066
  %v12068 = vpop.xlane.xlu0 %12067
  %v12069 = vadd.f32 %v12055, %v12056
  %v12070 = vsel %vm12017, %v12057, 0.0
  %v12071 = vadd.f32 %v12069, %v12070
  %12072 = vadd.xlane.f32.xlu0 %v12071
  %v12073 = vpop.xlane.xlu0 %12072
  %vm12074 = vcmask 7168
  %v12075 = vsel %vm12074, %v12021, %v12068
  %v12076 = vsel %vm12074, %v12026, %v12073
  %v12077 = vmul.f32 %v12075, 0.00390625
  %v12078 = vmul.f32 %v12076, 0.00390625
  %v12079 = vld [vmem:[%s3] sm:$0xff]
  %v12080 = vld [vmem:[%s3 + $0x8] sm:$0xff]
  %v12081 = vld [vmem:[%s3 + $0x10] sm:$0xff]
  %v12082 = vld [vmem:[%s3 + $0x18] sm:$0xff]
  %v12083 = vld [vmem:[%s3 + $0x20] sm:$0xff]
  %v12084 = vld [vmem:[%s3 + $0x28] sm:$0xff]
  %v12085 = vld [vmem:[%s3 + $0x30] sm:$0xff]
  %v12086 = vld [vmem:[%s3 + $0x38] sm:$0xff]
  %v12087 = vld [vmem:[%s3 + $0x40] sm:$0xff]
  %v12088 = vld [vmem:[%s3 + $0x48] sm:$0xff]
  %v12089 = vld [vmem:[%s3 + $0x50] sm:$0xff]
  %v12090 = vld [vmem:[%s3 + $0x58] sm:$0xff]
  %v12091 = vld [vmem:[%s3 + $0x60] sm:$0xff]
  %v12092 = vld [vmem:[%s3 + $0x68] sm:$0xff]
  %v12093 = vld [vmem:[%s3 + $0x70] sm:$0xff]
  %v12094 = vld [vmem:[%s3 + $0x78] sm:$0xff]
  %12096 = vset.pattern.permute.xlu0 16
  %12097 = vperm.xlu0 %12096, %v12079
  %v12098 = vpop.permute.xlu0 %12097
  %12101 = vset.pattern.permute.xlu0 16
  %12102 = vperm.xlu0 %12101, %v12080
  %v12103 = vpop.permute.xlu0 %12102
  %12106 = vset.pattern.permute.xlu0 16
  %12107 = vperm.xlu0 %12106, %v12081
  %v12108 = vpop.permute.xlu0 %12107
  %12111 = vset.pattern.permute.xlu0 16
  %12112 = vperm.xlu0 %12111, %v12082
  %v12113 = vpop.permute.xlu0 %12112
  %12116 = vset.pattern.permute.xlu0 16
  %12117 = vperm.xlu0 %12116, %v12083
  %v12118 = vpop.permute.xlu0 %12117
  %12121 = vset.pattern.permute.xlu0 16
  %12122 = vperm.xlu0 %12121, %v12084
  %v12123 = vpop.permute.xlu0 %12122
  %12126 = vset.pattern.permute.xlu0 16
  %12127 = vperm.xlu0 %12126, %v12085
  %v12128 = vpop.permute.xlu0 %12127
  %12131 = vset.pattern.permute.xlu0 16
  %12132 = vperm.xlu0 %12131, %v12086
  %v12133 = vpop.permute.xlu0 %12132
  %12136 = vset.pattern.permute.xlu0 16
  %12137 = vperm.xlu0 %12136, %v12087
  %v12138 = vpop.permute.xlu0 %12137
  %12141 = vset.pattern.permute.xlu0 16
  %12142 = vperm.xlu0 %12141, %v12088
  %v12143 = vpop.permute.xlu0 %12142
  %12146 = vset.pattern.permute.xlu0 16
  %12147 = vperm.xlu0 %12146, %v12089
  %v12148 = vpop.permute.xlu0 %12147
  %12151 = vset.pattern.permute.xlu0 16
  %12152 = vperm.xlu0 %12151, %v12090
  %v12153 = vpop.permute.xlu0 %12152
  %12156 = vset.pattern.permute.xlu0 16
  %12157 = vperm.xlu0 %12156, %v12091
  %v12158 = vpop.permute.xlu0 %12157
  %12161 = vset.pattern.permute.xlu0 16
  %12162 = vperm.xlu0 %12161, %v12092
  %v12163 = vpop.permute.xlu0 %12162
  %12166 = vset.pattern.permute.xlu0 16
  %12167 = vperm.xlu0 %12166, %v12093
  %v12168 = vpop.permute.xlu0 %12167
  %12171 = vset.pattern.permute.xlu0 16
  %12172 = vperm.xlu0 %12171, %v12094
  %v12173 = vpop.permute.xlu0 %12172
  %v12175 = vsel %vm506, %v12079, 0
  %v12177 = vsel %vm506, %v12080, 0
  %v12179 = vsel %vm506, %v12081, 0
  %v12181 = vsel %vm506, %v12082, 0
  %v12183 = vsel %vm506, %v12083, 0
  %v12185 = vsel %vm506, %v12084, 0
  %v12187 = vsel %vm506, %v12085, 0
  %v12189 = vsel %vm506, %v12086, 0
  %v12191 = vsel %vm506, %v12087, 0
  %v12193 = vsel %vm506, %v12088, 0
  %v12195 = vsel %vm506, %v12089, 0
  %v12197 = vsel %vm506, %v12090, 0
  %v12199 = vsel %vm506, %v12091, 0
  %v12201 = vsel %vm506, %v12092, 0
  %v12203 = vsel %vm506, %v12093, 0
  %v12205 = vsel %vm506, %v12094, 0
  %12207 = vmatpush.msra.mxu0 0.0
  %12208 = vmatpush.msra.mxu0 0.0
  %12209 = vmatpush.msra.mxu0 0.0
  %12210 = vmatpush.msra.mxu0 0.0
  %12211 = vmatpush.msra.mxu0 0.0
  %12212 = vmatpush.msra.mxu0 0.0
  %12213 = vmatpush.msra.mxu0 0.0
  %12214 = vmatpush.msra.mxu0 0.0
  %12215 = vmatpush.msra.mxu0 0.0
  %12216 = vmatpush.msra.mxu0 0.0
  %12217 = vmatpush.msra.mxu0 0.0
  %12218 = vmatpush.msra.mxu0 0.0
  %12219 = vmatpush.msra.mxu0 0.0
  %12220 = vmatpush.msra.mxu0 0.0
  %v12221 = vand.u32 %v12078, 4294901760
  %12222 = vmatpush.msra.mxu0 %v12221
  %v12223 = vand.u32 %v12077, 4294901760
  %12224 = vmatpush.msra.mxu0 %v12223
  %v12225 = vand.u32 %v12175, 4294901760
  %v12226 = vsub.f32 %v12175, %v12225
  %v12227 = vand.u32 %v12226, 4294901760
  %v12228 = vsub.f32 %v12226, %v12227
  %v12229 = vand.u32 %v12228, 4294901760
  %12230 = vmatmul.f32.gmra.mxu0 %v12229
  %v12231 = vpop.f32.mrf.mxu0
  %v12232 = vadd.f32 %v12098, %v12231
  %v12233 = vand.u32 %v12177, 4294901760
  %v12234 = vsub.f32 %v12177, %v12233
  %v12235 = vand.u32 %v12234, 4294901760
  %v12236 = vsub.f32 %v12234, %v12235
  %v12237 = vand.u32 %v12236, 4294901760
  %12238 = vmatmul.f32.gmra.mxu0 %v12237
  %v12239 = vpop.f32.mrf.mxu0
  %v12240 = vadd.f32 %v12103, %v12239
  %v12241 = vand.u32 %v12179, 4294901760
  %v12242 = vsub.f32 %v12179, %v12241
  %v12243 = vand.u32 %v12242, 4294901760
  %v12244 = vsub.f32 %v12242, %v12243
  %v12245 = vand.u32 %v12244, 4294901760
  %12246 = vmatmul.f32.gmra.mxu0 %v12245
  %v12247 = vpop.f32.mrf.mxu0
  %v12248 = vadd.f32 %v12108, %v12247
  %v12249 = vand.u32 %v12181, 4294901760
  %v12250 = vsub.f32 %v12181, %v12249
  %v12251 = vand.u32 %v12250, 4294901760
  %v12252 = vsub.f32 %v12250, %v12251
  %v12253 = vand.u32 %v12252, 4294901760
  %12254 = vmatmul.f32.gmra.mxu0 %v12253
  %v12255 = vpop.f32.mrf.mxu0
  %v12256 = vadd.f32 %v12113, %v12255
  %v12257 = vand.u32 %v12183, 4294901760
  %v12258 = vsub.f32 %v12183, %v12257
  %v12259 = vand.u32 %v12258, 4294901760
  %v12260 = vsub.f32 %v12258, %v12259
  %v12261 = vand.u32 %v12260, 4294901760
  %12262 = vmatmul.f32.gmra.mxu0 %v12261
  %v12263 = vpop.f32.mrf.mxu0
  %v12264 = vadd.f32 %v12118, %v12263
  %v12265 = vand.u32 %v12185, 4294901760
  %v12266 = vsub.f32 %v12185, %v12265
  %v12267 = vand.u32 %v12266, 4294901760
  %v12268 = vsub.f32 %v12266, %v12267
  %v12269 = vand.u32 %v12268, 4294901760
  %12270 = vmatmul.f32.gmra.mxu0 %v12269
  %v12271 = vpop.f32.mrf.mxu0
  %v12272 = vadd.f32 %v12123, %v12271
  %v12273 = vand.u32 %v12187, 4294901760
  %v12274 = vsub.f32 %v12187, %v12273
  %v12275 = vand.u32 %v12274, 4294901760
  %v12276 = vsub.f32 %v12274, %v12275
  %v12277 = vand.u32 %v12276, 4294901760
  %12278 = vmatmul.f32.gmra.mxu0 %v12277
  %v12279 = vpop.f32.mrf.mxu0
  %v12280 = vadd.f32 %v12128, %v12279
  %v12281 = vand.u32 %v12189, 4294901760
  %v12282 = vsub.f32 %v12189, %v12281
  %v12283 = vand.u32 %v12282, 4294901760
  %v12284 = vsub.f32 %v12282, %v12283
  %v12285 = vand.u32 %v12284, 4294901760
  %12286 = vmatmul.f32.gmra.mxu0 %v12285
  %v12287 = vpop.f32.mrf.mxu0
  %v12288 = vadd.f32 %v12133, %v12287
  %v12289 = vand.u32 %v12191, 4294901760
  %v12290 = vsub.f32 %v12191, %v12289
  %v12291 = vand.u32 %v12290, 4294901760
  %v12292 = vsub.f32 %v12290, %v12291
  %v12293 = vand.u32 %v12292, 4294901760
  %12294 = vmatmul.f32.gmra.mxu0 %v12293
  %v12295 = vpop.f32.mrf.mxu0
  %v12296 = vadd.f32 %v12138, %v12295
  %v12297 = vand.u32 %v12193, 4294901760
  %v12298 = vsub.f32 %v12193, %v12297
  %v12299 = vand.u32 %v12298, 4294901760
  %v12300 = vsub.f32 %v12298, %v12299
  %v12301 = vand.u32 %v12300, 4294901760
  %12302 = vmatmul.f32.gmra.mxu0 %v12301
  %v12303 = vpop.f32.mrf.mxu0
  %v12304 = vadd.f32 %v12143, %v12303
  %v12305 = vand.u32 %v12195, 4294901760
  %v12306 = vsub.f32 %v12195, %v12305
  %v12307 = vand.u32 %v12306, 4294901760
  %v12308 = vsub.f32 %v12306, %v12307
  %v12309 = vand.u32 %v12308, 4294901760
  %12310 = vmatmul.f32.gmra.mxu0 %v12309
  %v12311 = vpop.f32.mrf.mxu0
  %v12312 = vadd.f32 %v12148, %v12311
  %v12313 = vand.u32 %v12197, 4294901760
  %v12314 = vsub.f32 %v12197, %v12313
  %v12315 = vand.u32 %v12314, 4294901760
  %v12316 = vsub.f32 %v12314, %v12315
  %v12317 = vand.u32 %v12316, 4294901760
  %12318 = vmatmul.f32.gmra.mxu0 %v12317
  %v12319 = vpop.f32.mrf.mxu0
  %v12320 = vadd.f32 %v12153, %v12319
  %v12321 = vand.u32 %v12199, 4294901760
  %v12322 = vsub.f32 %v12199, %v12321
  %v12323 = vand.u32 %v12322, 4294901760
  %v12324 = vsub.f32 %v12322, %v12323
  %v12325 = vand.u32 %v12324, 4294901760
  %12326 = vmatmul.f32.gmra.mxu0 %v12325
  %v12327 = vpop.f32.mrf.mxu0
  %v12328 = vadd.f32 %v12158, %v12327
  %v12329 = vand.u32 %v12201, 4294901760
  %v12330 = vsub.f32 %v12201, %v12329
  %v12331 = vand.u32 %v12330, 4294901760
  %v12332 = vsub.f32 %v12330, %v12331
  %v12333 = vand.u32 %v12332, 4294901760
  %12334 = vmatmul.f32.gmra.mxu0 %v12333
  %v12335 = vpop.f32.mrf.mxu0
  %v12336 = vadd.f32 %v12163, %v12335
  %v12337 = vand.u32 %v12203, 4294901760
  %v12338 = vsub.f32 %v12203, %v12337
  %v12339 = vand.u32 %v12338, 4294901760
  %v12340 = vsub.f32 %v12338, %v12339
  %v12341 = vand.u32 %v12340, 4294901760
  %12342 = vmatmul.f32.gmra.mxu0 %v12341
  %v12343 = vpop.f32.mrf.mxu0
  %v12344 = vadd.f32 %v12168, %v12343
  %v12345 = vand.u32 %v12205, 4294901760
  %v12346 = vsub.f32 %v12205, %v12345
  %v12347 = vand.u32 %v12346, 4294901760
  %v12348 = vsub.f32 %v12346, %v12347
  %v12349 = vand.u32 %v12348, 4294901760
  %12350 = vmatmul.f32.gmra.mxu0 %v12349
  %v12351 = vpop.f32.mrf.mxu0
  %v12352 = vadd.f32 %v12173, %v12351
  %12353 = vdwg.mxu0
  %12354 = vmatpush.msra.mxu0 0.0
  %12355 = vmatpush.msra.mxu0 0.0
  %12356 = vmatpush.msra.mxu0 0.0
  %12357 = vmatpush.msra.mxu0 0.0
  %12358 = vmatpush.msra.mxu0 0.0
  %12359 = vmatpush.msra.mxu0 0.0
  %12360 = vmatpush.msra.mxu0 0.0
  %12361 = vmatpush.msra.mxu0 0.0
  %12362 = vmatpush.msra.mxu0 0.0
  %12363 = vmatpush.msra.mxu0 0.0
  %12364 = vmatpush.msra.mxu0 0.0
  %12365 = vmatpush.msra.mxu0 0.0
  %12366 = vmatpush.msra.mxu0 0.0
  %12367 = vmatpush.msra.mxu0 0.0
  %v12368 = vand.u32 %v12078, 4294901760
  %v12369 = vsub.f32 %v12078, %v12368
  %v12370 = vand.u32 %v12369, 4294901760
  %v12371 = vsub.f32 %v12369, %v12370
  %v12372 = vand.u32 %v12371, 4294901760
  %12373 = vmatpush.msra.mxu0 %v12372
  %v12374 = vand.u32 %v12077, 4294901760
  %v12375 = vsub.f32 %v12077, %v12374
  %v12376 = vand.u32 %v12375, 4294901760
  %v12377 = vsub.f32 %v12375, %v12376
  %v12378 = vand.u32 %v12377, 4294901760
  %12379 = vmatpush.msra.mxu0 %v12378
  %v12380 = vand.u32 %v12175, 4294901760
  %12381 = vmatmul.f32.gmra.mxu0 %v12380
  %v12382 = vpop.f32.mrf.mxu0
  %v12383 = vadd.f32 %v12232, %v12382
  %v12384 = vand.u32 %v12177, 4294901760
  %12385 = vmatmul.f32.gmra.mxu0 %v12384
  %v12386 = vpop.f32.mrf.mxu0
  %v12387 = vadd.f32 %v12240, %v12386
  %v12388 = vand.u32 %v12179, 4294901760
  %12389 = vmatmul.f32.gmra.mxu0 %v12388
  %v12390 = vpop.f32.mrf.mxu0
  %v12391 = vadd.f32 %v12248, %v12390
  %v12392 = vand.u32 %v12181, 4294901760
  %12393 = vmatmul.f32.gmra.mxu0 %v12392
  %v12394 = vpop.f32.mrf.mxu0
  %v12395 = vadd.f32 %v12256, %v12394
  %v12396 = vand.u32 %v12183, 4294901760
  %12397 = vmatmul.f32.gmra.mxu0 %v12396
  %v12398 = vpop.f32.mrf.mxu0
  %v12399 = vadd.f32 %v12264, %v12398
  %v12400 = vand.u32 %v12185, 4294901760
  %12401 = vmatmul.f32.gmra.mxu0 %v12400
  %v12402 = vpop.f32.mrf.mxu0
  %v12403 = vadd.f32 %v12272, %v12402
  %v12404 = vand.u32 %v12187, 4294901760
  %12405 = vmatmul.f32.gmra.mxu0 %v12404
  %v12406 = vpop.f32.mrf.mxu0
  %v12407 = vadd.f32 %v12280, %v12406
  %v12408 = vand.u32 %v12189, 4294901760
  %12409 = vmatmul.f32.gmra.mxu0 %v12408
  %v12410 = vpop.f32.mrf.mxu0
  %v12411 = vadd.f32 %v12288, %v12410
  %v12412 = vand.u32 %v12191, 4294901760
  %12413 = vmatmul.f32.gmra.mxu0 %v12412
  %v12414 = vpop.f32.mrf.mxu0
  %v12415 = vadd.f32 %v12296, %v12414
  %v12416 = vand.u32 %v12193, 4294901760
  %12417 = vmatmul.f32.gmra.mxu0 %v12416
  %v12418 = vpop.f32.mrf.mxu0
  %v12419 = vadd.f32 %v12304, %v12418
  %v12420 = vand.u32 %v12195, 4294901760
  %12421 = vmatmul.f32.gmra.mxu0 %v12420
  %v12422 = vpop.f32.mrf.mxu0
  %v12423 = vadd.f32 %v12312, %v12422
  %v12424 = vand.u32 %v12197, 4294901760
  %12425 = vmatmul.f32.gmra.mxu0 %v12424
  %v12426 = vpop.f32.mrf.mxu0
  %v12427 = vadd.f32 %v12320, %v12426
  %v12428 = vand.u32 %v12199, 4294901760
  %12429 = vmatmul.f32.gmra.mxu0 %v12428
  %v12430 = vpop.f32.mrf.mxu0
  %v12431 = vadd.f32 %v12328, %v12430
  %v12432 = vand.u32 %v12201, 4294901760
  %12433 = vmatmul.f32.gmra.mxu0 %v12432
  %v12434 = vpop.f32.mrf.mxu0
  %v12435 = vadd.f32 %v12336, %v12434
  %v12436 = vand.u32 %v12203, 4294901760
  %12437 = vmatmul.f32.gmra.mxu0 %v12436
  %v12438 = vpop.f32.mrf.mxu0
  %v12439 = vadd.f32 %v12344, %v12438
  %v12440 = vand.u32 %v12205, 4294901760
  %12441 = vmatmul.f32.gmra.mxu0 %v12440
  %v12442 = vpop.f32.mrf.mxu0
  %v12443 = vadd.f32 %v12352, %v12442
  %12444 = vdwg.mxu0
  %12445 = vmatpush.msra.mxu0 0.0
  %12446 = vmatpush.msra.mxu0 0.0
  %12447 = vmatpush.msra.mxu0 0.0
  %12448 = vmatpush.msra.mxu0 0.0
  %12449 = vmatpush.msra.mxu0 0.0
  %12450 = vmatpush.msra.mxu0 0.0
  %12451 = vmatpush.msra.mxu0 0.0
  %12452 = vmatpush.msra.mxu0 0.0
  %12453 = vmatpush.msra.mxu0 0.0
  %12454 = vmatpush.msra.mxu0 0.0
  %12455 = vmatpush.msra.mxu0 0.0
  %12456 = vmatpush.msra.mxu0 0.0
  %12457 = vmatpush.msra.mxu0 0.0
  %12458 = vmatpush.msra.mxu0 0.0
  %v12459 = vand.u32 %v12078, 4294901760
  %v12460 = vsub.f32 %v12078, %v12459
  %12461 = vmatpush.msra.mxu0 %v12460
  %v12462 = vand.u32 %v12077, 4294901760
  %v12463 = vsub.f32 %v12077, %v12462
  %12464 = vmatpush.msra.mxu0 %v12463
  %v12465 = vand.u32 %v12175, 4294901760
  %v12466 = vsub.f32 %v12175, %v12465
  %12467 = vmatmul.f32.gmra.mxu0 %v12466
  %v12468 = vpop.f32.mrf.mxu0
  %v12469 = vadd.f32 %v12383, %v12468
  %v12470 = vand.u32 %v12177, 4294901760
  %v12471 = vsub.f32 %v12177, %v12470
  %12472 = vmatmul.f32.gmra.mxu0 %v12471
  %v12473 = vpop.f32.mrf.mxu0
  %v12474 = vadd.f32 %v12387, %v12473
  %v12475 = vand.u32 %v12179, 4294901760
  %v12476 = vsub.f32 %v12179, %v12475
  %12477 = vmatmul.f32.gmra.mxu0 %v12476
  %v12478 = vpop.f32.mrf.mxu0
  %v12479 = vadd.f32 %v12391, %v12478
  %v12480 = vand.u32 %v12181, 4294901760
  %v12481 = vsub.f32 %v12181, %v12480
  %12482 = vmatmul.f32.gmra.mxu0 %v12481
  %v12483 = vpop.f32.mrf.mxu0
  %v12484 = vadd.f32 %v12395, %v12483
  %v12485 = vand.u32 %v12183, 4294901760
  %v12486 = vsub.f32 %v12183, %v12485
  %12487 = vmatmul.f32.gmra.mxu0 %v12486
  %v12488 = vpop.f32.mrf.mxu0
  %v12489 = vadd.f32 %v12399, %v12488
  %v12490 = vand.u32 %v12185, 4294901760
  %v12491 = vsub.f32 %v12185, %v12490
  %12492 = vmatmul.f32.gmra.mxu0 %v12491
  %v12493 = vpop.f32.mrf.mxu0
  %v12494 = vadd.f32 %v12403, %v12493
  %v12495 = vand.u32 %v12187, 4294901760
  %v12496 = vsub.f32 %v12187, %v12495
  %12497 = vmatmul.f32.gmra.mxu0 %v12496
  %v12498 = vpop.f32.mrf.mxu0
  %v12499 = vadd.f32 %v12407, %v12498
  %v12500 = vand.u32 %v12189, 4294901760
  %v12501 = vsub.f32 %v12189, %v12500
  %12502 = vmatmul.f32.gmra.mxu0 %v12501
  %v12503 = vpop.f32.mrf.mxu0
  %v12504 = vadd.f32 %v12411, %v12503
  %v12505 = vand.u32 %v12191, 4294901760
  %v12506 = vsub.f32 %v12191, %v12505
  %12507 = vmatmul.f32.gmra.mxu0 %v12506
  %v12508 = vpop.f32.mrf.mxu0
  %v12509 = vadd.f32 %v12415, %v12508
  %v12510 = vand.u32 %v12193, 4294901760
  %v12511 = vsub.f32 %v12193, %v12510
  %12512 = vmatmul.f32.gmra.mxu0 %v12511
  %v12513 = vpop.f32.mrf.mxu0
  %v12514 = vadd.f32 %v12419, %v12513
  %v12515 = vand.u32 %v12195, 4294901760
  %v12516 = vsub.f32 %v12195, %v12515
  %12517 = vmatmul.f32.gmra.mxu0 %v12516
  %v12518 = vpop.f32.mrf.mxu0
  %v12519 = vadd.f32 %v12423, %v12518
  %v12520 = vand.u32 %v12197, 4294901760
  %v12521 = vsub.f32 %v12197, %v12520
  %12522 = vmatmul.f32.gmra.mxu0 %v12521
  %v12523 = vpop.f32.mrf.mxu0
  %v12524 = vadd.f32 %v12427, %v12523
  %v12525 = vand.u32 %v12199, 4294901760
  %v12526 = vsub.f32 %v12199, %v12525
  %12527 = vmatmul.f32.gmra.mxu0 %v12526
  %v12528 = vpop.f32.mrf.mxu0
  %v12529 = vadd.f32 %v12431, %v12528
  %v12530 = vand.u32 %v12201, 4294901760
  %v12531 = vsub.f32 %v12201, %v12530
  %12532 = vmatmul.f32.gmra.mxu0 %v12531
  %v12533 = vpop.f32.mrf.mxu0
  %v12534 = vadd.f32 %v12435, %v12533
  %v12535 = vand.u32 %v12203, 4294901760
  %v12536 = vsub.f32 %v12203, %v12535
  %12537 = vmatmul.f32.gmra.mxu0 %v12536
  %v12538 = vpop.f32.mrf.mxu0
  %v12539 = vadd.f32 %v12439, %v12538
  %v12540 = vand.u32 %v12205, 4294901760
  %v12541 = vsub.f32 %v12205, %v12540
  %12542 = vmatmul.f32.gmra.mxu0 %v12541
  %v12543 = vpop.f32.mrf.mxu0
  %v12544 = vadd.f32 %v12443, %v12543
  %12545 = vdwg.mxu0
  %12546 = vmatpush.msra.mxu0 0.0
  %12547 = vmatpush.msra.mxu0 0.0
  %12548 = vmatpush.msra.mxu0 0.0
  %12549 = vmatpush.msra.mxu0 0.0
  %12550 = vmatpush.msra.mxu0 0.0
  %12551 = vmatpush.msra.mxu0 0.0
  %12552 = vmatpush.msra.mxu0 0.0
  %12553 = vmatpush.msra.mxu0 0.0
  %12554 = vmatpush.msra.mxu0 0.0
  %12555 = vmatpush.msra.mxu0 0.0
  %12556 = vmatpush.msra.mxu0 0.0
  %12557 = vmatpush.msra.mxu0 0.0
  %12558 = vmatpush.msra.mxu0 0.0
  %12559 = vmatpush.msra.mxu0 0.0
  %v12560 = vand.u32 %v12078, 4294901760
  %12561 = vmatpush.msra.mxu0 %v12560
  %v12562 = vand.u32 %v12077, 4294901760
  %12563 = vmatpush.msra.mxu0 %v12562
  %v12564 = vand.u32 %v12175, 4294901760
  %v12565 = vsub.f32 %v12175, %v12564
  %v12566 = vand.u32 %v12565, 4294901760
  %12567 = vmatmul.f32.gmra.mxu0 %v12566
  %v12568 = vpop.f32.mrf.mxu0
  %v12569 = vadd.f32 %v12469, %v12568
  %v12570 = vand.u32 %v12177, 4294901760
  %v12571 = vsub.f32 %v12177, %v12570
  %v12572 = vand.u32 %v12571, 4294901760
  %12573 = vmatmul.f32.gmra.mxu0 %v12572
  %v12574 = vpop.f32.mrf.mxu0
  %v12575 = vadd.f32 %v12474, %v12574
  %v12576 = vand.u32 %v12179, 4294901760
  %v12577 = vsub.f32 %v12179, %v12576
  %v12578 = vand.u32 %v12577, 4294901760
  %12579 = vmatmul.f32.gmra.mxu0 %v12578
  %v12580 = vpop.f32.mrf.mxu0
  %v12581 = vadd.f32 %v12479, %v12580
  %v12582 = vand.u32 %v12181, 4294901760
  %v12583 = vsub.f32 %v12181, %v12582
  %v12584 = vand.u32 %v12583, 4294901760
  %12585 = vmatmul.f32.gmra.mxu0 %v12584
  %v12586 = vpop.f32.mrf.mxu0
  %v12587 = vadd.f32 %v12484, %v12586
  %v12588 = vand.u32 %v12183, 4294901760
  %v12589 = vsub.f32 %v12183, %v12588
  %v12590 = vand.u32 %v12589, 4294901760
  %12591 = vmatmul.f32.gmra.mxu0 %v12590
  %v12592 = vpop.f32.mrf.mxu0
  %v12593 = vadd.f32 %v12489, %v12592
  %v12594 = vand.u32 %v12185, 4294901760
  %v12595 = vsub.f32 %v12185, %v12594
  %v12596 = vand.u32 %v12595, 4294901760
  %12597 = vmatmul.f32.gmra.mxu0 %v12596
  %v12598 = vpop.f32.mrf.mxu0
  %v12599 = vadd.f32 %v12494, %v12598
  %v12600 = vand.u32 %v12187, 4294901760
  %v12601 = vsub.f32 %v12187, %v12600
  %v12602 = vand.u32 %v12601, 4294901760
  %12603 = vmatmul.f32.gmra.mxu0 %v12602
  %v12604 = vpop.f32.mrf.mxu0
  %v12605 = vadd.f32 %v12499, %v12604
  %v12606 = vand.u32 %v12189, 4294901760
  %v12607 = vsub.f32 %v12189, %v12606
  %v12608 = vand.u32 %v12607, 4294901760
  %12609 = vmatmul.f32.gmra.mxu0 %v12608
  %v12610 = vpop.f32.mrf.mxu0
  %v12611 = vadd.f32 %v12504, %v12610
  %v12612 = vand.u32 %v12191, 4294901760
  %v12613 = vsub.f32 %v12191, %v12612
  %v12614 = vand.u32 %v12613, 4294901760
  %12615 = vmatmul.f32.gmra.mxu0 %v12614
  %v12616 = vpop.f32.mrf.mxu0
  %v12617 = vadd.f32 %v12509, %v12616
  %v12618 = vand.u32 %v12193, 4294901760
  %v12619 = vsub.f32 %v12193, %v12618
  %v12620 = vand.u32 %v12619, 4294901760
  %12621 = vmatmul.f32.gmra.mxu0 %v12620
  %v12622 = vpop.f32.mrf.mxu0
  %v12623 = vadd.f32 %v12514, %v12622
  %v12624 = vand.u32 %v12195, 4294901760
  %v12625 = vsub.f32 %v12195, %v12624
  %v12626 = vand.u32 %v12625, 4294901760
  %12627 = vmatmul.f32.gmra.mxu0 %v12626
  %v12628 = vpop.f32.mrf.mxu0
  %v12629 = vadd.f32 %v12519, %v12628
  %v12630 = vand.u32 %v12197, 4294901760
  %v12631 = vsub.f32 %v12197, %v12630
  %v12632 = vand.u32 %v12631, 4294901760
  %12633 = vmatmul.f32.gmra.mxu0 %v12632
  %v12634 = vpop.f32.mrf.mxu0
  %v12635 = vadd.f32 %v12524, %v12634
  %v12636 = vand.u32 %v12199, 4294901760
  %v12637 = vsub.f32 %v12199, %v12636
  %v12638 = vand.u32 %v12637, 4294901760
  %12639 = vmatmul.f32.gmra.mxu0 %v12638
  %v12640 = vpop.f32.mrf.mxu0
  %v12641 = vadd.f32 %v12529, %v12640
  %v12642 = vand.u32 %v12201, 4294901760
  %v12643 = vsub.f32 %v12201, %v12642
  %v12644 = vand.u32 %v12643, 4294901760
  %12645 = vmatmul.f32.gmra.mxu0 %v12644
  %v12646 = vpop.f32.mrf.mxu0
  %v12647 = vadd.f32 %v12534, %v12646
  %v12648 = vand.u32 %v12203, 4294901760
  %v12649 = vsub.f32 %v12203, %v12648
  %v12650 = vand.u32 %v12649, 4294901760
  %12651 = vmatmul.f32.gmra.mxu0 %v12650
  %v12652 = vpop.f32.mrf.mxu0
  %v12653 = vadd.f32 %v12539, %v12652
  %v12654 = vand.u32 %v12205, 4294901760
  %v12655 = vsub.f32 %v12205, %v12654
  %v12656 = vand.u32 %v12655, 4294901760
  %12657 = vmatmul.f32.gmra.mxu0 %v12656
  %v12658 = vpop.f32.mrf.mxu0
  %v12659 = vadd.f32 %v12544, %v12658
  %12660 = vdwg.mxu0
  %12661 = vmatpush.msra.mxu0 0.0
  %12662 = vmatpush.msra.mxu0 0.0
  %12663 = vmatpush.msra.mxu0 0.0
  %12664 = vmatpush.msra.mxu0 0.0
  %12665 = vmatpush.msra.mxu0 0.0
  %12666 = vmatpush.msra.mxu0 0.0
  %12667 = vmatpush.msra.mxu0 0.0
  %12668 = vmatpush.msra.mxu0 0.0
  %12669 = vmatpush.msra.mxu0 0.0
  %12670 = vmatpush.msra.mxu0 0.0
  %12671 = vmatpush.msra.mxu0 0.0
  %12672 = vmatpush.msra.mxu0 0.0
  %12673 = vmatpush.msra.mxu0 0.0
  %12674 = vmatpush.msra.mxu0 0.0
  %v12675 = vand.u32 %v12078, 4294901760
  %v12676 = vsub.f32 %v12078, %v12675
  %v12677 = vand.u32 %v12676, 4294901760
  %12678 = vmatpush.msra.mxu0 %v12677
  %v12679 = vand.u32 %v12077, 4294901760
  %v12680 = vsub.f32 %v12077, %v12679
  %v12681 = vand.u32 %v12680, 4294901760
  %12682 = vmatpush.msra.mxu0 %v12681
  %v12683 = vand.u32 %v12175, 4294901760
  %12684 = vmatmul.f32.gmra.mxu0 %v12683
  %v12685 = vpop.f32.mrf.mxu0
  %v12686 = vadd.f32 %v12569, %v12685
  %v12687 = vand.u32 %v12177, 4294901760
  %12688 = vmatmul.f32.gmra.mxu0 %v12687
  %v12689 = vpop.f32.mrf.mxu0
  %v12690 = vadd.f32 %v12575, %v12689
  %v12691 = vand.u32 %v12179, 4294901760
  %12692 = vmatmul.f32.gmra.mxu0 %v12691
  %v12693 = vpop.f32.mrf.mxu0
  %v12694 = vadd.f32 %v12581, %v12693
  %v12695 = vand.u32 %v12181, 4294901760
  %12696 = vmatmul.f32.gmra.mxu0 %v12695
  %v12697 = vpop.f32.mrf.mxu0
  %v12698 = vadd.f32 %v12587, %v12697
  %v12699 = vand.u32 %v12183, 4294901760
  %12700 = vmatmul.f32.gmra.mxu0 %v12699
  %v12701 = vpop.f32.mrf.mxu0
  %v12702 = vadd.f32 %v12593, %v12701
  %v12703 = vand.u32 %v12185, 4294901760
  %12704 = vmatmul.f32.gmra.mxu0 %v12703
  %v12705 = vpop.f32.mrf.mxu0
  %v12706 = vadd.f32 %v12599, %v12705
  %v12707 = vand.u32 %v12187, 4294901760
  %12708 = vmatmul.f32.gmra.mxu0 %v12707
  %v12709 = vpop.f32.mrf.mxu0
  %v12710 = vadd.f32 %v12605, %v12709
  %v12711 = vand.u32 %v12189, 4294901760
  %12712 = vmatmul.f32.gmra.mxu0 %v12711
  %v12713 = vpop.f32.mrf.mxu0
  %v12714 = vadd.f32 %v12611, %v12713
  %v12715 = vand.u32 %v12191, 4294901760
  %12716 = vmatmul.f32.gmra.mxu0 %v12715
  %v12717 = vpop.f32.mrf.mxu0
  %v12718 = vadd.f32 %v12617, %v12717
  %v12719 = vand.u32 %v12193, 4294901760
  %12720 = vmatmul.f32.gmra.mxu0 %v12719
  %v12721 = vpop.f32.mrf.mxu0
  %v12722 = vadd.f32 %v12623, %v12721
  %v12723 = vand.u32 %v12195, 4294901760
  %12724 = vmatmul.f32.gmra.mxu0 %v12723
  %v12725 = vpop.f32.mrf.mxu0
  %v12726 = vadd.f32 %v12629, %v12725
  %v12727 = vand.u32 %v12197, 4294901760
  %12728 = vmatmul.f32.gmra.mxu0 %v12727
  %v12729 = vpop.f32.mrf.mxu0
  %v12730 = vadd.f32 %v12635, %v12729
  %v12731 = vand.u32 %v12199, 4294901760
  %12732 = vmatmul.f32.gmra.mxu0 %v12731
  %v12733 = vpop.f32.mrf.mxu0
  %v12734 = vadd.f32 %v12641, %v12733
  %v12735 = vand.u32 %v12201, 4294901760
  %12736 = vmatmul.f32.gmra.mxu0 %v12735
  %v12737 = vpop.f32.mrf.mxu0
  %v12738 = vadd.f32 %v12647, %v12737
  %v12739 = vand.u32 %v12203, 4294901760
  %12740 = vmatmul.f32.gmra.mxu0 %v12739
  %v12741 = vpop.f32.mrf.mxu0
  %v12742 = vadd.f32 %v12653, %v12741
  %v12743 = vand.u32 %v12205, 4294901760
  %12744 = vmatmul.f32.gmra.mxu0 %v12743
  %v12745 = vpop.f32.mrf.mxu0
  %v12746 = vadd.f32 %v12659, %v12745
  %12747 = vdwg.mxu0
  %12748 = vmatpush.msra.mxu0 0.0
  %12749 = vmatpush.msra.mxu0 0.0
  %12750 = vmatpush.msra.mxu0 0.0
  %12751 = vmatpush.msra.mxu0 0.0
  %12752 = vmatpush.msra.mxu0 0.0
  %12753 = vmatpush.msra.mxu0 0.0
  %12754 = vmatpush.msra.mxu0 0.0
  %12755 = vmatpush.msra.mxu0 0.0
  %12756 = vmatpush.msra.mxu0 0.0
  %12757 = vmatpush.msra.mxu0 0.0
  %12758 = vmatpush.msra.mxu0 0.0
  %12759 = vmatpush.msra.mxu0 0.0
  %12760 = vmatpush.msra.mxu0 0.0
  %12761 = vmatpush.msra.mxu0 0.0
  %v12762 = vand.u32 %v12078, 4294901760
  %12763 = vmatpush.msra.mxu0 %v12762
  %v12764 = vand.u32 %v12077, 4294901760
  %12765 = vmatpush.msra.mxu0 %v12764
  %v12766 = vand.u32 %v12175, 4294901760
  %12767 = vmatmul.f32.gmra.mxu0 %v12766
  %v12768 = vpop.f32.mrf.mxu0
  %v12769 = vadd.f32 %v12686, %v12768
  %v12770 = vand.u32 %v12177, 4294901760
  %12771 = vmatmul.f32.gmra.mxu0 %v12770
  %v12772 = vpop.f32.mrf.mxu0
  %v12773 = vadd.f32 %v12690, %v12772
  %v12774 = vand.u32 %v12179, 4294901760
  %12775 = vmatmul.f32.gmra.mxu0 %v12774
  %v12776 = vpop.f32.mrf.mxu0
  %v12777 = vadd.f32 %v12694, %v12776
  %v12778 = vand.u32 %v12181, 4294901760
  %12779 = vmatmul.f32.gmra.mxu0 %v12778
  %v12780 = vpop.f32.mrf.mxu0
  %v12781 = vadd.f32 %v12698, %v12780
  %v12782 = vand.u32 %v12183, 4294901760
  %12783 = vmatmul.f32.gmra.mxu0 %v12782
  %v12784 = vpop.f32.mrf.mxu0
  %v12785 = vadd.f32 %v12702, %v12784
  %v12786 = vand.u32 %v12185, 4294901760
  %12787 = vmatmul.f32.gmra.mxu0 %v12786
  %v12788 = vpop.f32.mrf.mxu0
  %v12789 = vadd.f32 %v12706, %v12788
  %v12790 = vand.u32 %v12187, 4294901760
  %12791 = vmatmul.f32.gmra.mxu0 %v12790
  %v12792 = vpop.f32.mrf.mxu0
  %v12793 = vadd.f32 %v12710, %v12792
  %v12794 = vand.u32 %v12189, 4294901760
  %12795 = vmatmul.f32.gmra.mxu0 %v12794
  %v12796 = vpop.f32.mrf.mxu0
  %v12797 = vadd.f32 %v12714, %v12796
  %v12798 = vand.u32 %v12191, 4294901760
  %12799 = vmatmul.f32.gmra.mxu0 %v12798
  %v12800 = vpop.f32.mrf.mxu0
  %v12801 = vadd.f32 %v12718, %v12800
  %v12802 = vand.u32 %v12193, 4294901760
  %12803 = vmatmul.f32.gmra.mxu0 %v12802
  %v12804 = vpop.f32.mrf.mxu0
  %v12805 = vadd.f32 %v12722, %v12804
  %v12806 = vand.u32 %v12195, 4294901760
  %12807 = vmatmul.f32.gmra.mxu0 %v12806
  %v12808 = vpop.f32.mrf.mxu0
  %v12809 = vadd.f32 %v12726, %v12808
  %v12810 = vand.u32 %v12197, 4294901760
  %12811 = vmatmul.f32.gmra.mxu0 %v12810
  %v12812 = vpop.f32.mrf.mxu0
  %v12813 = vadd.f32 %v12730, %v12812
  %v12814 = vand.u32 %v12199, 4294901760
  %12815 = vmatmul.f32.gmra.mxu0 %v12814
  %v12816 = vpop.f32.mrf.mxu0
  %v12817 = vadd.f32 %v12734, %v12816
  %v12818 = vand.u32 %v12201, 4294901760
  %12819 = vmatmul.f32.gmra.mxu0 %v12818
  %v12820 = vpop.f32.mrf.mxu0
  %v12821 = vadd.f32 %v12738, %v12820
  %v12822 = vand.u32 %v12203, 4294901760
  %12823 = vmatmul.f32.gmra.mxu0 %v12822
  %v12824 = vpop.f32.mrf.mxu0
  %v12825 = vadd.f32 %v12742, %v12824
  %v12826 = vand.u32 %v12205, 4294901760
  %12827 = vmatmul.f32.gmra.mxu0 %v12826
  %v12828 = vpop.f32.mrf.mxu0
  %v12829 = vadd.f32 %v12746, %v12828
  %12830 = vdwg.mxu0
  %vm12831 = vcmask 15360
  %12832 = vst.msk [vmem:[%s4] sm:$0xff] %vm12831, %v12769
  %12833 = vst.msk [vmem:[%s4 + $0x8] sm:$0xff] %vm12831, %v12773
  %12834 = vst.msk [vmem:[%s4 + $0x10] sm:$0xff] %vm12831, %v12777
  %12835 = vst.msk [vmem:[%s4 + $0x18] sm:$0xff] %vm12831, %v12781
  %12836 = vst.msk [vmem:[%s4 + $0x20] sm:$0xff] %vm12831, %v12785
  %12837 = vst.msk [vmem:[%s4 + $0x28] sm:$0xff] %vm12831, %v12789
  %12838 = vst.msk [vmem:[%s4 + $0x30] sm:$0xff] %vm12831, %v12793
  %12839 = vst.msk [vmem:[%s4 + $0x38] sm:$0xff] %vm12831, %v12797
  %12840 = vst.msk [vmem:[%s4 + $0x40] sm:$0xff] %vm12831, %v12801
  %12841 = vst.msk [vmem:[%s4 + $0x48] sm:$0xff] %vm12831, %v12805
  %12842 = vst.msk [vmem:[%s4 + $0x50] sm:$0xff] %vm12831, %v12809
  %12843 = vst.msk [vmem:[%s4 + $0x58] sm:$0xff] %vm12831, %v12813
  %12844 = vst.msk [vmem:[%s4 + $0x60] sm:$0xff] %vm12831, %v12817
  %12845 = vst.msk [vmem:[%s4 + $0x68] sm:$0xff] %vm12831, %v12821
  %12846 = vst.msk [vmem:[%s4 + $0x70] sm:$0xff] %vm12831, %v12825
  %12847 = vst.msk [vmem:[%s4 + $0x78] sm:$0xff] %vm12831, %v12829
  // Predicated region
  $region18: #{modified_residual_student_forward.1} parent=0 // pred_check
    _
  $region19: #{modified_residual_student_forward.1} parent=0 // pred_check_branch
    %12849 = sbr.rel (0) target = $region21
  $region20: #{modified_residual_student_forward.1} parent=0 // pred_region
    _
  $region21: #{modified_residual_student_forward.1} parent=0 // pred_fallthru
    _
  // Predicated region
  $region22: #{modified_residual_student_forward.1} parent=0 // pred_check
    _
  $region23: #{modified_residual_student_forward.1} parent=0 // pred_check_branch
    %12851 = sbr.rel (0) target = $region25
  $region24: #{modified_residual_student_forward.1} parent=0 // pred_region
    _
  $region25: #{modified_residual_student_forward.1} parent=0 // pred_fallthru
    _

</llo_original>
